<compile_context>
chip_gen: v5e
topology: v5e:2x2
jax: 0.10.0
libtpu: 0.0.40
codegen_flags: <defaults>
</compile_context>

<pallas_src>
import functools

import jax
import jax.numpy as jnp
from jax import lax
from jax.experimental import pallas as pl
from jax.experimental.pallas import tpu as pltpu


def _round_up(x, m):
    return ((x + m - 1) // m) * m


def _lstm_kernel(x_ref, wih_ref, whh_ref, bias_ref, out_ref, cn_ref,
                 h_sc, c_sc, *, seq_len):
    """One grid step == one block of T timesteps of the LSTM.

    x_ref    : (T, Bp, Ip)   padded input block
    wih_ref  : (Ip, 4*Hp)    W_ih^T, gate-blocked along lanes [i|f|g|o] (resident)
    whh_ref  : (Hp, 4*Hp)    W_hh^T, gate-blocked along lanes (resident)
    bias_ref : (1, 4*Hp)     b_ih + b_hh, gate-blocked along lanes
    out_ref  : (T, Bp, Hp)   hidden states for this block
    cn_ref   : (Bp, Hp)      cell state at the last real timestep (seq_len-1)
    h_sc/c_sc: (Bp, Hp) f32  recurrent carry, persists across grid steps
    """
    s = pl.program_id(0)
    T = x_ref.shape[0]
    Hp = whh_ref.shape[0]

    @pl.when(s == 0)
    def _init():
        h_sc[...] = jnp.zeros_like(h_sc)
        c_sc[...] = jnp.zeros_like(c_sc)

    bias = bias_ref[...]  # (1, 4*Hp) — hoisted out of the loop

    def step(t, carry):
        h, c = carry
        # Off the critical path: x_t @ W_ih^T + bias (independent of h chain).
        gx = jnp.dot(x_ref[t], wih_ref[...],
                     preferred_element_type=jnp.float32) + bias
        # Serial part: one fused lane-dense (Bp,Hp)x(Hp,4Hp) matmul.
        gates = gx + jnp.dot(h, whh_ref[...],
                             preferred_element_type=jnp.float32)

        i_t = jax.nn.sigmoid(gates[:, 0 * Hp:1 * Hp])
        f_t = jax.nn.sigmoid(gates[:, 1 * Hp:2 * Hp])
        g_t = jnp.tanh(gates[:, 2 * Hp:3 * Hp])
        o_t = jax.nn.sigmoid(gates[:, 3 * Hp:4 * Hp])

        c_new = f_t * c + i_t * g_t
        h_new = o_t * jnp.tanh(c_new)

        out_ref[t] = h_new.astype(out_ref.dtype)

        # Capture c_n exactly at the last *real* timestep (the tail of the
        # last block may be sequence padding when seq_len % T != 0).
        @pl.when(s * T + t == seq_len - 1)
        def _emit_cn():
            cn_ref[...] = c_new.astype(cn_ref.dtype)

        return h_new, c_new

    # Fully unrolled inner loop (small Bp*Hp tiles; cap unroll for large H).
    h_fin, c_fin = lax.fori_loop(0, T, step, (h_sc[...], c_sc[...]),
                                 unroll=True)

    # Persist the carry for the next time block.
    h_sc[...] = h_fin
    c_sc[...] = c_fin


def prepare_lstm_params(w_ih, w_hh, b_ih, b_hh, input_size, hidden_size):
    """One-time parameter prep (run once, NOT per forward call).

    PyTorch layouts: w_ih (4H, I), w_hh (4H, H), biases (4H,), gate order [i,f,g,o].
    Returns zero-padded, gate-blocked, transposed weights:
      wih_t (Ip, 4*Hp), whh_t (Hp, 4*Hp), bias (1, 4*Hp)
    with Hp = round_up(H, 128), Ip = round_up(I, 8).
    """
    H, I = hidden_size, input_size
    Hp = _round_up(H, 128)
    Ip = _round_up(I, 8)

    w_ih4 = w_ih.reshape(4, H, I).astype(jnp.float32)
    wih_p = jnp.zeros((4, Hp, Ip), jnp.float32).at[:, :H, :I].set(w_ih4)
    wih_t = wih_p.transpose(2, 0, 1).reshape(Ip, 4 * Hp)          # [i, g*Hp+h]

    w_hh4 = w_hh.reshape(4, H, H).astype(jnp.float32)
    whh_p = jnp.zeros((4, Hp, Hp), jnp.float32).at[:, :H, :H].set(w_hh4)
    whh_t = whh_p.transpose(2, 0, 1).reshape(Hp, 4 * Hp)          # [h_in, g*Hp+h_out]

    b4 = (b_ih + b_hh).reshape(4, H).astype(jnp.float32)
    bias = jnp.zeros((4, Hp), jnp.float32).at[:, :H].set(b4).reshape(1, 4 * Hp)

    # NOTE(v6e/v7x): for large H, cast wih_t/whh_t to bf16 here (keep f32
    # accumulation via preferred_element_type) to halve weight VMEM and feed
    # the bf16 MXU at full rate; loosen the reference tolerance accordingly.
    return wih_t, whh_t, bias


@functools.partial(jax.jit, static_argnames=("hidden_size", "time_block"))
def lstm_encoder_forward(x, wih_t, whh_t, bias, *, hidden_size, time_block=16):
    """Pallas LSTM encoder forward (PyTorch nn.LSTM semantics).

    x : (seq_len, batch, input_size) float32
    returns (lstm_out, (h_n, c_n)).
    """
    S, B, I = x.shape
    H = hidden_size
    Ip = wih_t.shape[0]
    Hp = whh_t.shape[0]

    Bp = _round_up(max(B, 1), 8)
    T = max(1, min(time_block, S))
    Sp = _round_up(S, T)              # pad the sequence instead of shrinking T
    n_blocks = Sp // T

    # Zero padding is numerically inert: padded hidden units / batch rows /
    # input features stay 0 or are sliced off below.
    x_p = jnp.zeros((Sp, Bp, Ip), jnp.float32).at[:S, :B, :I].set(
        x.astype(jnp.float32))

    grid_spec = pltpu.PrefetchScalarGridSpec(
        num_scalar_prefetch=0,
        grid=(n_blocks,),
        in_specs=[
            pl.BlockSpec((T, Bp, Ip), lambda s: (s, 0, 0)),    # x block
            pl.BlockSpec((Ip, 4 * Hp), lambda s: (0, 0)),      # W_ih^T (resident)
            pl.BlockSpec((Hp, 4 * Hp), lambda s: (0, 0)),      # W_hh^T (resident)
            pl.BlockSpec((1, 4 * Hp), lambda s: (0, 0)),       # bias
        ],
        out_specs=[
            pl.BlockSpec((T, Bp, Hp), lambda s: (s, 0, 0)),    # lstm_out block
            pl.BlockSpec((Bp, Hp), lambda s: (0, 0)),          # c_n (constant idx)
        ],
        scratch_shapes=[
            pltpu.VMEM((Bp, Hp), jnp.float32),   # h carry
            pltpu.VMEM((Bp, Hp), jnp.float32),   # c carry
        ],
    )

    out_p, cn_p = pl.pallas_call(
        functools.partial(_lstm_kernel, seq_len=S),
        out_shape=(
            jax.ShapeDtypeStruct((Sp, Bp, Hp), jnp.float32),   # lstm_out (padded)
            jax.ShapeDtypeStruct((Bp, Hp), jnp.float32),       # final cell state
        ),
        grid_spec=grid_spec,
        compiler_params=pltpu.CompilerParams(
            dimension_semantics=("arbitrary",),        # time recurrence is serial
            vmem_limit_bytes=32 * 1024 * 1024,         # above v5e's 16 MiB default
        ),
    )(x_p, wih_t, whh_t, bias)

    lstm_out = out_p[:S, :B, :H]
    h_n = lstm_out[S - 1][None]       # (1, B, H) == last hidden state
    c_n = cn_p[:B, :H][None]          # (1, B, H)
    return lstm_out, (h_n, c_n)


def _reference_lstm(x, w_ih, w_hh, b_ih, b_hh, H):
    """Pure-JAX reference (PyTorch nn.LSTM semantics) for correctness check."""
    def step(carry, x_t):
        h, c = carry
        gates = x_t @ w_ih.T + h @ w_hh.T + b_ih + b_hh
        i = jax.nn.sigmoid(gates[:, 0 * H:1 * H])
        f = jax.nn.sigmoid(gates[:, 1 * H:2 * H])
        g = jnp.tanh(gates[:, 2 * H:3 * H])
        o = jax.nn.sigmoid(gates[:, 3 * H:4 * H])
        c_new = f * c + i * g
        h_new = o * jnp.tanh(c_new)
        return (h_new, c_new), h_new

    B = x.shape[1]
    h0 = jnp.zeros((B, H), jnp.float32)
    c0 = jnp.zeros((B, H), jnp.float32)
    (h_n, c_n), outs = jax.lax.scan(step, (h0, c0), x)
    return outs, h_n[None], c_n[None]


if __name__ == "__main__":
    # Small shapes consistent with the module: x_input (seq_len, batch, input_size).
    seq_len, batch, input_size, hidden_size = 16, 2, 4, 32

    key = jax.random.PRNGKey(0)
    kx, k1, k2, k3, k4 = jax.random.split(key, 5)

    # PyTorch-style uniform(-1/sqrt(H), 1/sqrt(H)) init.
    bound = 1.0 / jnp.sqrt(jnp.float32(hidden_size))
    x = jax.random.normal(kx, (seq_len, batch, input_size), jnp.float32)
    w_ih = jax.random.uniform(k1, (4 * hidden_size, input_size), jnp.float32, -bound, bound)
    w_hh = jax.random.uniform(k2, (4 * hidden_size, hidden_size), jnp.float32, -bound, bound)
    b_ih = jax.random.uniform(k3, (4 * hidden_size,), jnp.float32, -bound, bound)
    b_hh = jax.random.uniform(k4, (4 * hidden_size,), jnp.float32, -bound, bound)

    # One-time parameter prep (padding / transposes / gate-blocking).
    wih_t, whh_t, bias = prepare_lstm_params(
        w_ih, w_hh, b_ih, b_hh, input_size, hidden_size)

    lstm_out, (h_n, c_n) = lstm_encoder_forward(
        x, wih_t, whh_t, bias, hidden_size=hidden_size, time_block=16)
    jax.block_until_ready((lstm_out, h_n, c_n))

    # Correctness check against a pure-JAX reference.
    ref_out, ref_h, ref_c = _reference_lstm(x, w_ih, w_hh, b_ih, b_hh, hidden_size)
    assert lstm_out.shape == (seq_len, batch, hidden_size)
    assert h_n.shape == (1, batch, hidden_size)
    assert c_n.shape == (1, batch, hidden_size)
    assert jnp.allclose(lstm_out, ref_out, atol=1e-5, rtol=1e-5)
    assert jnp.allclose(h_n, ref_h, atol=1e-5, rtol=1e-5)
    assert jnp.allclose(c_n, ref_c, atol=1e-5, rtol=1e-5)

    print("KERNEL_OK")
</pallas_src>

<mosaic_0001>
module attributes {stable_mosaic.version = 11 : i64} {
  func.func @_lstm_kernel(%arg0: i32, %arg1: memref<16x8x8xf32, #tpu.memory_space<vmem>>, %arg2: memref<8x512xf32, #tpu.memory_space<vmem>>, %arg3: memref<128x512xf32, #tpu.memory_space<vmem>>, %arg4: memref<1x512xf32, #tpu.memory_space<vmem>>, %arg5: memref<16x8x128xf32, #tpu.memory_space<vmem>>, %arg6: memref<8x128xf32, #tpu.memory_space<vmem>>, %arg7: memref<8x128xf32, #tpu.memory_space<vmem>>, %arg8: memref<8x128xf32, #tpu.memory_space<vmem>>) attributes {dimension_semantics = [#tpu.dimension_semantics<arbitrary>], iteration_bounds = array<i64: 1>, scalar_prefetch = 0 : i64, scratch_operands = 2 : i64, tpu.core_type = #tpu.core_type<tc>, window_params = [{transform_indices = @transform_0, window_bounds = array<i64: 16, 8, 8>}, {pipeline_mode = #tpu.pipeline_mode<synchronous>, transform_indices = @transform_1, window_bounds = array<i64: 8, 512>}, {pipeline_mode = #tpu.pipeline_mode<synchronous>, transform_indices = @transform_2, window_bounds = array<i64: 128, 512>}, {pipeline_mode = #tpu.pipeline_mode<synchronous>, transform_indices = @transform_3, window_bounds = array<i64: 1, 512>}, {transform_indices = @transform_4, window_bounds = array<i64: 16, 8, 128>}, {pipeline_mode = #tpu.pipeline_mode<synchronous>, transform_indices = @transform_5, window_bounds = array<i64: 8, 128>}]} {
    %c0_i32 = arith.constant 0 : i32
    %0 = arith.cmpi eq, %arg0, %c0_i32 : i32
    %1 = arith.extui %0 : i1 to i32
    %c0_i32_0 = arith.constant 0 : i32
    %2 = arith.cmpi ne, %1, %c0_i32_0 : i32
    scf.if %2 {
      %cst_266 = arith.constant 0.000000e+00 : f32
      %712 = vector.broadcast %cst_266 : f32 to vector<8x128xf32>
      %c0_267 = arith.constant 0 : index
      %c0_268 = arith.constant 0 : index
      %713 = vector.load %arg7[%c0_267, %c0_268] : memref<8x128xf32, #tpu.memory_space<vmem>>, vector<8x128xf32>
      tpu.vector_store %arg7[%c0_267, %c0_268], %712 {strides = array<i32>} : memref<8x128xf32, #tpu.memory_space<vmem>>, vector<8x128xf32>,
      %cst_269 = arith.constant 0.000000e+00 : f32
      %714 = vector.broadcast %cst_269 : f32 to vector<8x128xf32>
      %c0_270 = arith.constant 0 : index
      %c0_271 = arith.constant 0 : index
      %715 = vector.load %arg8[%c0_270, %c0_271] : memref<8x128xf32, #tpu.memory_space<vmem>>, vector<8x128xf32>
      tpu.vector_store %arg8[%c0_270, %c0_271], %714 {strides = array<i32>} : memref<8x128xf32, #tpu.memory_space<vmem>>, vector<8x128xf32>,
    } else {
    }
    %c0 = arith.constant 0 : index
    %c0_1 = arith.constant 0 : index
    %3 = vector.load %arg4[%c0, %c0_1] : memref<1x512xf32, #tpu.memory_space<vmem>>, vector<1x512xf32>
    %c0_2 = arith.constant 0 : index
    %c0_3 = arith.constant 0 : index
    %4 = vector.load %arg7[%c0_2, %c0_3] : memref<8x128xf32, #tpu.memory_space<vmem>>, vector<8x128xf32>
    %c0_4 = arith.constant 0 : index
    %c0_5 = arith.constant 0 : index
    %5 = vector.load %arg8[%c0_4, %c0_5] : memref<8x128xf32, #tpu.memory_space<vmem>>, vector<8x128xf32>
    %c0_i32_6 = arith.constant 0 : i32
    %6 = arith.index_cast %c0_i32_6 : i32 to index
    %c0_7 = arith.constant 0 : index
    %c0_8 = arith.constant 0 : index
    %7 = vector.load %arg1[%6, %c0_7, %c0_8] : memref<16x8x8xf32, #tpu.memory_space<vmem>>, vector<1x8x8xf32>
    %8 = vector.shape_cast %7 : vector<1x8x8xf32> to vector<8x8xf32>
    %c0_9 = arith.constant 0 : index
    %c0_10 = arith.constant 0 : index
    %9 = vector.load %arg2[%c0_9, %c0_10] : memref<8x512xf32, #tpu.memory_space<vmem>>, vector<8x512xf32>
    %cst = arith.constant dense<0.000000e+00> : vector<8x512xf32>
    %10 = tpu.matmul %8, %9, %cst {dimension_numbers = #tpu.dot_dimension_numbers<[1], [0], [0], [1], [0, 0, 1, 1], [], []>} : vector<8x8xf32>, vector<8x512xf32>, vector<8x512xf32> -> vector<8x512xf32>
    %11 = vector.broadcast %3 : vector<1x512xf32> to vector<8x512xf32>
    %12 = arith.addf %10, %11 : vector<8x512xf32>
    %c0_11 = arith.constant 0 : index
    %c0_12 = arith.constant 0 : index
    %13 = vector.load %arg3[%c0_11, %c0_12] : memref<128x512xf32, #tpu.memory_space<vmem>>, vector<128x512xf32>
    %cst_13 = arith.constant dense<0.000000e+00> : vector<8x512xf32>
    %14 = tpu.matmul %4, %13, %cst_13 {dimension_numbers = #tpu.dot_dimension_numbers<[1], [0], [0], [1], [0, 0, 1, 1], [], []>} : vector<8x128xf32>, vector<128x512xf32>, vector<8x512xf32> -> vector<8x512xf32>
    %15 = arith.addf %12, %14 : vector<8x512xf32>
    %16 = vector.extract_strided_slice %15 {offsets = [0, 0], sizes = [8, 128], strides = [1, 1]} : vector<8x512xf32> to vector<8x128xf32>
    %17 = arith.negf %16 : vector<8x128xf32>
    %18 = math.exp %17 : vector<8x128xf32>
    %cst_14 = arith.constant 1.000000e+00 : f32
    %19 = vector.broadcast %cst_14 : f32 to vector<8x128xf32>
    %20 = arith.addf %19, %18 : vector<8x128xf32>
    %21 = arith.divf %19, %20 : vector<8x128xf32>
    %22 = vector.extract_strided_slice %15 {offsets = [0, 128], sizes = [8, 128], strides = [1, 1]} : vector<8x512xf32> to vector<8x128xf32>
    %23 = arith.negf %22 : vector<8x128xf32>
    %24 = math.exp %23 : vector<8x128xf32>
    %cst_15 = arith.constant 1.000000e+00 : f32
    %25 = vector.broadcast %cst_15 : f32 to vector<8x128xf32>
    %26 = arith.addf %25, %24 : vector<8x128xf32>
    %27 = arith.divf %25, %26 : vector<8x128xf32>
    %28 = vector.extract_strided_slice %15 {offsets = [0, 256], sizes = [8, 128], strides = [1, 1]} : vector<8x512xf32> to vector<8x128xf32>
    %29 = math.tanh %28 : vector<8x128xf32>
    %30 = vector.extract_strided_slice %15 {offsets = [0, 384], sizes = [8, 128], strides = [1, 1]} : vector<8x512xf32> to vector<8x128xf32>
    %31 = arith.negf %30 : vector<8x128xf32>
    %32 = math.exp %31 : vector<8x128xf32>
    %cst_16 = arith.constant 1.000000e+00 : f32
    %33 = vector.broadcast %cst_16 : f32 to vector<8x128xf32>
    %34 = arith.addf %33, %32 : vector<8x128xf32>
    %35 = arith.divf %33, %34 : vector<8x128xf32>
    %36 = arith.mulf %27, %5 : vector<8x128xf32>
    %37 = arith.mulf %21, %29 : vector<8x128xf32>
    %38 = arith.addf %36, %37 : vector<8x128xf32>
    %39 = math.tanh %38 : vector<8x128xf32>
    %40 = arith.mulf %35, %39 : vector<8x128xf32>
    %41 = arith.index_cast %c0_i32_6 : i32 to index
    %c0_17 = arith.constant 0 : index
    %c0_18 = arith.constant 0 : index
    %42 = vector.load %arg5[%41, %c0_17, %c0_18] : memref<16x8x128xf32, #tpu.memory_space<vmem>>, vector<1x8x128xf32>
    %43 = vector.shape_cast %42 : vector<1x8x128xf32> to vector<8x128xf32>
    %44 = vector.shape_cast %40 : vector<8x128xf32> to vector<1x8x128xf32>
    tpu.vector_store %arg5[%41, %c0_17, %c0_18], %44 {strides = array<i32>} : memref<16x8x128xf32, #tpu.memory_space<vmem>>, vector<1x8x128xf32>,
    %c16_i32 = arith.constant 16 : i32
    %45 = arith.muli %arg0, %c16_i32 : i32
    %46 = arith.addi %45, %c0_i32_6 : i32
    %c15_i32 = arith.constant 15 : i32
    %47 = arith.cmpi eq, %46, %c15_i32 : i32
    %48 = arith.extui %47 : i1 to i32
    %c0_i32_19 = arith.constant 0 : i32
    %49 = arith.cmpi ne, %48, %c0_i32_19 : i32
    scf.if %49 {
      %c0_266 = arith.constant 0 : index
      %c0_267 = arith.constant 0 : index
      %712 = vector.load %arg6[%c0_266, %c0_267] : memref<8x128xf32, #tpu.memory_space<vmem>>, vector<8x128xf32>
      tpu.vector_store %arg6[%c0_266, %c0_267], %38 {strides = array<i32>} : memref<8x128xf32, #tpu.memory_space<vmem>>, vector<8x128xf32>,
    } else {
    }
    %c1_i32 = arith.constant 1 : i32
    %50 = arith.index_cast %c1_i32 : i32 to index
    %c0_20 = arith.constant 0 : index
    %c0_21 = arith.constant 0 : index
    %51 = vector.load %arg1[%50, %c0_20, %c0_21] : memref<16x8x8xf32, #tpu.memory_space<vmem>>, vector<1x8x8xf32>
    %52 = vector.shape_cast %51 : vector<1x8x8xf32> to vector<8x8xf32>
    %c0_22 = arith.constant 0 : index
    %c0_23 = arith.constant 0 : index
    %53 = vector.load %arg2[%c0_22, %c0_23] : memref<8x512xf32, #tpu.memory_space<vmem>>, vector<8x512xf32>
    %cst_24 = arith.constant dense<0.000000e+00> : vector<8x512xf32>
    %54 = tpu.matmul %52, %53, %cst_24 {dimension_numbers = #tpu.dot_dimension_numbers<[1], [0], [0], [1], [0, 0, 1, 1], [], []>} : vector<8x8xf32>, vector<8x512xf32>, vector<8x512xf32> -> vector<8x512xf32>
    %55 = vector.broadcast %3 : vector<1x512xf32> to vector<8x512xf32>
    %56 = arith.addf %54, %55 : vector<8x512xf32>
    %c0_25 = arith.constant 0 : index
    %c0_26 = arith.constant 0 : index
    %57 = vector.load %arg3[%c0_25, %c0_26] : memref<128x512xf32, #tpu.memory_space<vmem>>, vector<128x512xf32>
    %cst_27 = arith.constant dense<0.000000e+00> : vector<8x512xf32>
    %58 = tpu.matmul %40, %57, %cst_27 {dimension_numbers = #tpu.dot_dimension_numbers<[1], [0], [0], [1], [0, 0, 1, 1], [], []>} : vector<8x128xf32>, vector<128x512xf32>, vector<8x512xf32> -> vector<8x512xf32>
    %59 = arith.addf %56, %58 : vector<8x512xf32>
    %60 = vector.extract_strided_slice %59 {offsets = [0, 0], sizes = [8, 128], strides = [1, 1]} : vector<8x512xf32> to vector<8x128xf32>
    %61 = arith.negf %60 : vector<8x128xf32>
    %62 = math.exp %61 : vector<8x128xf32>
    %cst_28 = arith.constant 1.000000e+00 : f32
    %63 = vector.broadcast %cst_28 : f32 to vector<8x128xf32>
    %64 = arith.addf %63, %62 : vector<8x128xf32>
    %65 = arith.divf %63, %64 : vector<8x128xf32>
    %66 = vector.extract_strided_slice %59 {offsets = [0, 128], sizes = [8, 128], strides = [1, 1]} : vector<8x512xf32> to vector<8x128xf32>
    %67 = arith.negf %66 : vector<8x128xf32>
    %68 = math.exp %67 : vector<8x128xf32>
    %cst_29 = arith.constant 1.000000e+00 : f32
    %69 = vector.broadcast %cst_29 : f32 to vector<8x128xf32>
    %70 = arith.addf %69, %68 : vector<8x128xf32>
    %71 = arith.divf %69, %70 : vector<8x128xf32>
    %72 = vector.extract_strided_slice %59 {offsets = [0, 256], sizes = [8, 128], strides = [1, 1]} : vector<8x512xf32> to vector<8x128xf32>
    %73 = math.tanh %72 : vector<8x128xf32>
    %74 = vector.extract_strided_slice %59 {offsets = [0, 384], sizes = [8, 128], strides = [1, 1]} : vector<8x512xf32> to vector<8x128xf32>
    %75 = arith.negf %74 : vector<8x128xf32>
    %76 = math.exp %75 : vector<8x128xf32>
    %cst_30 = arith.constant 1.000000e+00 : f32
    %77 = vector.broadcast %cst_30 : f32 to vector<8x128xf32>
    %78 = arith.addf %77, %76 : vector<8x128xf32>
    %79 = arith.divf %77, %78 : vector<8x128xf32>
    %80 = arith.mulf %71, %38 : vector<8x128xf32>
    %81 = arith.mulf %65, %73 : vector<8x128xf32>
    %82 = arith.addf %80, %81 : vector<8x128xf32>
    %83 = math.tanh %82 : vector<8x128xf32>
    %84 = arith.mulf %79, %83 : vector<8x128xf32>
    %85 = arith.index_cast %c1_i32 : i32 to index
    %c0_31 = arith.constant 0 : index
    %c0_32 = arith.constant 0 : index
    %86 = vector.load %arg5[%85, %c0_31, %c0_32] : memref<16x8x128xf32, #tpu.memory_space<vmem>>, vector<1x8x128xf32>
    %87 = vector.shape_cast %86 : vector<1x8x128xf32> to vector<8x128xf32>
    %88 = vector.shape_cast %84 : vector<8x128xf32> to vector<1x8x128xf32>
    tpu.vector_store %arg5[%85, %c0_31, %c0_32], %88 {strides = array<i32>} : memref<16x8x128xf32, #tpu.memory_space<vmem>>, vector<1x8x128xf32>,
    %c16_i32_33 = arith.constant 16 : i32
    %89 = arith.muli %arg0, %c16_i32_33 : i32
    %90 = arith.addi %89, %c1_i32 : i32
    %c15_i32_34 = arith.constant 15 : i32
    %91 = arith.cmpi eq, %90, %c15_i32_34 : i32
    %92 = arith.extui %91 : i1 to i32
    %c0_i32_35 = arith.constant 0 : i32
    %93 = arith.cmpi ne, %92, %c0_i32_35 : i32
    scf.if %93 {
      %c0_266 = arith.constant 0 : index
      %c0_267 = arith.constant 0 : index
      %712 = vector.load %arg6[%c0_266, %c0_267] : memref<8x128xf32, #tpu.memory_space<vmem>>, vector<8x128xf32>
      tpu.vector_store %arg6[%c0_266, %c0_267], %82 {strides = array<i32>} : memref<8x128xf32, #tpu.memory_space<vmem>>, vector<8x128xf32>,
    } else {
    }
    %c2_i32 = arith.constant 2 : i32
    %94 = arith.index_cast %c2_i32 : i32 to index
    %c0_36 = arith.constant 0 : index
    %c0_37 = arith.constant 0 : index
    %95 = vector.load %arg1[%94, %c0_36, %c0_37] : memref<16x8x8xf32, #tpu.memory_space<vmem>>, vector<1x8x8xf32>
    %96 = vector.shape_cast %95 : vector<1x8x8xf32> to vector<8x8xf32>
    %c0_38 = arith.constant 0 : index
    %c0_39 = arith.constant 0 : index
    %97 = vector.load %arg2[%c0_38, %c0_39] : memref<8x512xf32, #tpu.memory_space<vmem>>, vector<8x512xf32>
    %cst_40 = arith.constant dense<0.000000e+00> : vector<8x512xf32>
    %98 = tpu.matmul %96, %97, %cst_40 {dimension_numbers = #tpu.dot_dimension_numbers<[1], [0], [0], [1], [0, 0, 1, 1], [], []>} : vector<8x8xf32>, vector<8x512xf32>, vector<8x512xf32> -> vector<8x512xf32>
    %99 = vector.broadcast %3 : vector<1x512xf32> to vector<8x512xf32>
    %100 = arith.addf %98, %99 : vector<8x512xf32>
    %c0_41 = arith.constant 0 : index
    %c0_42 = arith.constant 0 : index
    %101 = vector.load %arg3[%c0_41, %c0_42] : memref<128x512xf32, #tpu.memory_space<vmem>>, vector<128x512xf32>
    %cst_43 = arith.constant dense<0.000000e+00> : vector<8x512xf32>
    %102 = tpu.matmul %84, %101, %cst_43 {dimension_numbers = #tpu.dot_dimension_numbers<[1], [0], [0], [1], [0, 0, 1, 1], [], []>} : vector<8x128xf32>, vector<128x512xf32>, vector<8x512xf32> -> vector<8x512xf32>
    %103 = arith.addf %100, %102 : vector<8x512xf32>
    %104 = vector.extract_strided_slice %103 {offsets = [0, 0], sizes = [8, 128], strides = [1, 1]} : vector<8x512xf32> to vector<8x128xf32>
    %105 = arith.negf %104 : vector<8x128xf32>
    %106 = math.exp %105 : vector<8x128xf32>
    %cst_44 = arith.constant 1.000000e+00 : f32
    %107 = vector.broadcast %cst_44 : f32 to vector<8x128xf32>
    %108 = arith.addf %107, %106 : vector<8x128xf32>
    %109 = arith.divf %107, %108 : vector<8x128xf32>
    %110 = vector.extract_strided_slice %103 {offsets = [0, 128], sizes = [8, 128], strides = [1, 1]} : vector<8x512xf32> to vector<8x128xf32>
    %111 = arith.negf %110 : vector<8x128xf32>
    %112 = math.exp %111 : vector<8x128xf32>
    %cst_45 = arith.constant 1.000000e+00 : f32
    %113 = vector.broadcast %cst_45 : f32 to vector<8x128xf32>
    %114 = arith.addf %113, %112 : vector<8x128xf32>
    %115 = arith.divf %113, %114 : vector<8x128xf32>
    %116 = vector.extract_strided_slice %103 {offsets = [0, 256], sizes = [8, 128], strides = [1, 1]} : vector<8x512xf32> to vector<8x128xf32>
    %117 = math.tanh %116 : vector<8x128xf32>
    %118 = vector.extract_strided_slice %103 {offsets = [0, 384], sizes = [8, 128], strides = [1, 1]} : vector<8x512xf32> to vector<8x128xf32>
    %119 = arith.negf %118 : vector<8x128xf32>
    %120 = math.exp %119 : vector<8x128xf32>
    %cst_46 = arith.constant 1.000000e+00 : f32
    %121 = vector.broadcast %cst_46 : f32 to vector<8x128xf32>
    %122 = arith.addf %121, %120 : vector<8x128xf32>
    %123 = arith.divf %121, %122 : vector<8x128xf32>
    %124 = arith.mulf %115, %82 : vector<8x128xf32>
    %125 = arith.mulf %109, %117 : vector<8x128xf32>
    %126 = arith.addf %124, %125 : vector<8x128xf32>
    %127 = math.tanh %126 : vector<8x128xf32>
    %128 = arith.mulf %123, %127 : vector<8x128xf32>
    %129 = arith.index_cast %c2_i32 : i32 to index
    %c0_47 = arith.constant 0 : index
    %c0_48 = arith.constant 0 : index
    %130 = vector.load %arg5[%129, %c0_47, %c0_48] : memref<16x8x128xf32, #tpu.memory_space<vmem>>, vector<1x8x128xf32>
    %131 = vector.shape_cast %130 : vector<1x8x128xf32> to vector<8x128xf32>
    %132 = vector.shape_cast %128 : vector<8x128xf32> to vector<1x8x128xf32>
    tpu.vector_store %arg5[%129, %c0_47, %c0_48], %132 {strides = array<i32>} : memref<16x8x128xf32, #tpu.memory_space<vmem>>, vector<1x8x128xf32>,
    %c16_i32_49 = arith.constant 16 : i32
    %133 = arith.muli %arg0, %c16_i32_49 : i32
    %134 = arith.addi %133, %c2_i32 : i32
    %c15_i32_50 = arith.constant 15 : i32
    %135 = arith.cmpi eq, %134, %c15_i32_50 : i32
    %136 = arith.extui %135 : i1 to i32
    %c0_i32_51 = arith.constant 0 : i32
    %137 = arith.cmpi ne, %136, %c0_i32_51 : i32
    scf.if %137 {
      %c0_266 = arith.constant 0 : index
      %c0_267 = arith.constant 0 : index
      %712 = vector.load %arg6[%c0_266, %c0_267] : memref<8x128xf32, #tpu.memory_space<vmem>>, vector<8x128xf32>
      tpu.vector_store %arg6[%c0_266, %c0_267], %126 {strides = array<i32>} : memref<8x128xf32, #tpu.memory_space<vmem>>, vector<8x128xf32>,
    } else {
    }
    %c3_i32 = arith.constant 3 : i32
    %138 = arith.index_cast %c3_i32 : i32 to index
    %c0_52 = arith.constant 0 : index
    %c0_53 = arith.constant 0 : index
    %139 = vector.load %arg1[%138, %c0_52, %c0_53] : memref<16x8x8xf32, #tpu.memory_space<vmem>>, vector<1x8x8xf32>
    %140 = vector.shape_cast %139 : vector<1x8x8xf32> to vector<8x8xf32>
    %c0_54 = arith.constant 0 : index
    %c0_55 = arith.constant 0 : index
    %141 = vector.load %arg2[%c0_54, %c0_55] : memref<8x512xf32, #tpu.memory_space<vmem>>, vector<8x512xf32>
    %cst_56 = arith.constant dense<0.000000e+00> : vector<8x512xf32>
    %142 = tpu.matmul %140, %141, %cst_56 {dimension_numbers = #tpu.dot_dimension_numbers<[1], [0], [0], [1], [0, 0, 1, 1], [], []>} : vector<8x8xf32>, vector<8x512xf32>, vector<8x512xf32> -> vector<8x512xf32>
    %143 = vector.broadcast %3 : vector<1x512xf32> to vector<8x512xf32>
    %144 = arith.addf %142, %143 : vector<8x512xf32>
    %c0_57 = arith.constant 0 : index
    %c0_58 = arith.constant 0 : index
    %145 = vector.load %arg3[%c0_57, %c0_58] : memref<128x512xf32, #tpu.memory_space<vmem>>, vector<128x512xf32>
    %cst_59 = arith.constant dense<0.000000e+00> : vector<8x512xf32>
    %146 = tpu.matmul %128, %145, %cst_59 {dimension_numbers = #tpu.dot_dimension_numbers<[1], [0], [0], [1], [0, 0, 1, 1], [], []>} : vector<8x128xf32>, vector<128x512xf32>, vector<8x512xf32> -> vector<8x512xf32>
    %147 = arith.addf %144, %146 : vector<8x512xf32>
    %148 = vector.extract_strided_slice %147 {offsets = [0, 0], sizes = [8, 128], strides = [1, 1]} : vector<8x512xf32> to vector<8x128xf32>
    %149 = arith.negf %148 : vector<8x128xf32>
    %150 = math.exp %149 : vector<8x128xf32>
    %cst_60 = arith.constant 1.000000e+00 : f32
    %151 = vector.broadcast %cst_60 : f32 to vector<8x128xf32>
    %152 = arith.addf %151, %150 : vector<8x128xf32>
    %153 = arith.divf %151, %152 : vector<8x128xf32>
    %154 = vector.extract_strided_slice %147 {offsets = [0, 128], sizes = [8, 128], strides = [1, 1]} : vector<8x512xf32> to vector<8x128xf32>
    %155 = arith.negf %154 : vector<8x128xf32>
    %156 = math.exp %155 : vector<8x128xf32>
    %cst_61 = arith.constant 1.000000e+00 : f32
    %157 = vector.broadcast %cst_61 : f32 to vector<8x128xf32>
    %158 = arith.addf %157, %156 : vector<8x128xf32>
    %159 = arith.divf %157, %158 : vector<8x128xf32>
    %160 = vector.extract_strided_slice %147 {offsets = [0, 256], sizes = [8, 128], strides = [1, 1]} : vector<8x512xf32> to vector<8x128xf32>
    %161 = math.tanh %160 : vector<8x128xf32>
    %162 = vector.extract_strided_slice %147 {offsets = [0, 384], sizes = [8, 128], strides = [1, 1]} : vector<8x512xf32> to vector<8x128xf32>
    %163 = arith.negf %162 : vector<8x128xf32>
    %164 = math.exp %163 : vector<8x128xf32>
    %cst_62 = arith.constant 1.000000e+00 : f32
    %165 = vector.broadcast %cst_62 : f32 to vector<8x128xf32>
    %166 = arith.addf %165, %164 : vector<8x128xf32>
    %167 = arith.divf %165, %166 : vector<8x128xf32>
    %168 = arith.mulf %159, %126 : vector<8x128xf32>
    %169 = arith.mulf %153, %161 : vector<8x128xf32>
    %170 = arith.addf %168, %169 : vector<8x128xf32>
    %171 = math.tanh %170 : vector<8x128xf32>
    %172 = arith.mulf %167, %171 : vector<8x128xf32>
    %173 = arith.index_cast %c3_i32 : i32 to index
    %c0_63 = arith.constant 0 : index
    %c0_64 = arith.constant 0 : index
    %174 = vector.load %arg5[%173, %c0_63, %c0_64] : memref<16x8x128xf32, #tpu.memory_space<vmem>>, vector<1x8x128xf32>
    %175 = vector.shape_cast %174 : vector<1x8x128xf32> to vector<8x128xf32>
    %176 = vector.shape_cast %172 : vector<8x128xf32> to vector<1x8x128xf32>
    tpu.vector_store %arg5[%173, %c0_63, %c0_64], %176 {strides = array<i32>} : memref<16x8x128xf32, #tpu.memory_space<vmem>>, vector<1x8x128xf32>,
    %c16_i32_65 = arith.constant 16 : i32
    %177 = arith.muli %arg0, %c16_i32_65 : i32
    %178 = arith.addi %177, %c3_i32 : i32
    %c15_i32_66 = arith.constant 15 : i32
    %179 = arith.cmpi eq, %178, %c15_i32_66 : i32
    %180 = arith.extui %179 : i1 to i32
    %c0_i32_67 = arith.constant 0 : i32
    %181 = arith.cmpi ne, %180, %c0_i32_67 : i32
    scf.if %181 {
      %c0_266 = arith.constant 0 : index
      %c0_267 = arith.constant 0 : index
      %712 = vector.load %arg6[%c0_266, %c0_267] : memref<8x128xf32, #tpu.memory_space<vmem>>, vector<8x128xf32>
      tpu.vector_store %arg6[%c0_266, %c0_267], %170 {strides = array<i32>} : memref<8x128xf32, #tpu.memory_space<vmem>>, vector<8x128xf32>,
    } else {
    }
    %c4_i32 = arith.constant 4 : i32
    %182 = arith.index_cast %c4_i32 : i32 to index
    %c0_68 = arith.constant 0 : index
    %c0_69 = arith.constant 0 : index
    %183 = vector.load %arg1[%182, %c0_68, %c0_69] : memref<16x8x8xf32, #tpu.memory_space<vmem>>, vector<1x8x8xf32>
    %184 = vector.shape_cast %183 : vector<1x8x8xf32> to vector<8x8xf32>
    %c0_70 = arith.constant 0 : index
    %c0_71 = arith.constant 0 : index
    %185 = vector.load %arg2[%c0_70, %c0_71] : memref<8x512xf32, #tpu.memory_space<vmem>>, vector<8x512xf32>
    %cst_72 = arith.constant dense<0.000000e+00> : vector<8x512xf32>
    %186 = tpu.matmul %184, %185, %cst_72 {dimension_numbers = #tpu.dot_dimension_numbers<[1], [0], [0], [1], [0, 0, 1, 1], [], []>} : vector<8x8xf32>, vector<8x512xf32>, vector<8x512xf32> -> vector<8x512xf32>
    %187 = vector.broadcast %3 : vector<1x512xf32> to vector<8x512xf32>
    %188 = arith.addf %186, %187 : vector<8x512xf32>
    %c0_73 = arith.constant 0 : index
    %c0_74 = arith.constant 0 : index
    %189 = vector.load %arg3[%c0_73, %c0_74] : memref<128x512xf32, #tpu.memory_space<vmem>>, vector<128x512xf32>
    %cst_75 = arith.constant dense<0.000000e+00> : vector<8x512xf32>
    %190 = tpu.matmul %172, %189, %cst_75 {dimension_numbers = #tpu.dot_dimension_numbers<[1], [0], [0], [1], [0, 0, 1, 1], [], []>} : vector<8x128xf32>, vector<128x512xf32>, vector<8x512xf32> -> vector<8x512xf32>
    %191 = arith.addf %188, %190 : vector<8x512xf32>
    %192 = vector.extract_strided_slice %191 {offsets = [0, 0], sizes = [8, 128], strides = [1, 1]} : vector<8x512xf32> to vector<8x128xf32>
    %193 = arith.negf %192 : vector<8x128xf32>
    %194 = math.exp %193 : vector<8x128xf32>
    %cst_76 = arith.constant 1.000000e+00 : f32
    %195 = vector.broadcast %cst_76 : f32 to vector<8x128xf32>
    %196 = arith.addf %195, %194 : vector<8x128xf32>
    %197 = arith.divf %195, %196 : vector<8x128xf32>
    %198 = vector.extract_strided_slice %191 {offsets = [0, 128], sizes = [8, 128], strides = [1, 1]} : vector<8x512xf32> to vector<8x128xf32>
    %199 = arith.negf %198 : vector<8x128xf32>
    %200 = math.exp %199 : vector<8x128xf32>
    %cst_77 = arith.constant 1.000000e+00 : f32
    %201 = vector.broadcast %cst_77 : f32 to vector<8x128xf32>
    %202 = arith.addf %201, %200 : vector<8x128xf32>
    %203 = arith.divf %201, %202 : vector<8x128xf32>
    %204 = vector.extract_strided_slice %191 {offsets = [0, 256], sizes = [8, 128], strides = [1, 1]} : vector<8x512xf32> to vector<8x128xf32>
    %205 = math.tanh %204 : vector<8x128xf32>
    %206 = vector.extract_strided_slice %191 {offsets = [0, 384], sizes = [8, 128], strides = [1, 1]} : vector<8x512xf32> to vector<8x128xf32>
    %207 = arith.negf %206 : vector<8x128xf32>
    %208 = math.exp %207 : vector<8x128xf32>
    %cst_78 = arith.constant 1.000000e+00 : f32
    %209 = vector.broadcast %cst_78 : f32 to vector<8x128xf32>
    %210 = arith.addf %209, %208 : vector<8x128xf32>
    %211 = arith.divf %209, %210 : vector<8x128xf32>
    %212 = arith.mulf %203, %170 : vector<8x128xf32>
    %213 = arith.mulf %197, %205 : vector<8x128xf32>
    %214 = arith.addf %212, %213 : vector<8x128xf32>
    %215 = math.tanh %214 : vector<8x128xf32>
    %216 = arith.mulf %211, %215 : vector<8x128xf32>
    %217 = arith.index_cast %c4_i32 : i32 to index
    %c0_79 = arith.constant 0 : index
    %c0_80 = arith.constant 0 : index
    %218 = vector.load %arg5[%217, %c0_79, %c0_80] : memref<16x8x128xf32, #tpu.memory_space<vmem>>, vector<1x8x128xf32>
    %219 = vector.shape_cast %218 : vector<1x8x128xf32> to vector<8x128xf32>
    %220 = vector.shape_cast %216 : vector<8x128xf32> to vector<1x8x128xf32>
    tpu.vector_store %arg5[%217, %c0_79, %c0_80], %220 {strides = array<i32>} : memref<16x8x128xf32, #tpu.memory_space<vmem>>, vector<1x8x128xf32>,
    %c16_i32_81 = arith.constant 16 : i32
    %221 = arith.muli %arg0, %c16_i32_81 : i32
    %222 = arith.addi %221, %c4_i32 : i32
    %c15_i32_82 = arith.constant 15 : i32
    %223 = arith.cmpi eq, %222, %c15_i32_82 : i32
    %224 = arith.extui %223 : i1 to i32
    %c0_i32_83 = arith.constant 0 : i32
    %225 = arith.cmpi ne, %224, %c0_i32_83 : i32
    scf.if %225 {
      %c0_266 = arith.constant 0 : index
      %c0_267 = arith.constant 0 : index
      %712 = vector.load %arg6[%c0_266, %c0_267] : memref<8x128xf32, #tpu.memory_space<vmem>>, vector<8x128xf32>
      tpu.vector_store %arg6[%c0_266, %c0_267], %214 {strides = array<i32>} : memref<8x128xf32, #tpu.memory_space<vmem>>, vector<8x128xf32>,
    } else {
    }
    %c5_i32 = arith.constant 5 : i32
    %226 = arith.index_cast %c5_i32 : i32 to index
    %c0_84 = arith.constant 0 : index
    %c0_85 = arith.constant 0 : index
    %227 = vector.load %arg1[%226, %c0_84, %c0_85] : memref<16x8x8xf32, #tpu.memory_space<vmem>>, vector<1x8x8xf32>
    %228 = vector.shape_cast %227 : vector<1x8x8xf32> to vector<8x8xf32>
    %c0_86 = arith.constant 0 : index
    %c0_87 = arith.constant 0 : index
    %229 = vector.load %arg2[%c0_86, %c0_87] : memref<8x512xf32, #tpu.memory_space<vmem>>, vector<8x512xf32>
    %cst_88 = arith.constant dense<0.000000e+00> : vector<8x512xf32>
    %230 = tpu.matmul %228, %229, %cst_88 {dimension_numbers = #tpu.dot_dimension_numbers<[1], [0], [0], [1], [0, 0, 1, 1], [], []>} : vector<8x8xf32>, vector<8x512xf32>, vector<8x512xf32> -> vector<8x512xf32>
    %231 = vector.broadcast %3 : vector<1x512xf32> to vector<8x512xf32>
    %232 = arith.addf %230, %231 : vector<8x512xf32>
    %c0_89 = arith.constant 0 : index
    %c0_90 = arith.constant 0 : index
    %233 = vector.load %arg3[%c0_89, %c0_90] : memref<128x512xf32, #tpu.memory_space<vmem>>, vector<128x512xf32>
    %cst_91 = arith.constant dense<0.000000e+00> : vector<8x512xf32>
    %234 = tpu.matmul %216, %233, %cst_91 {dimension_numbers = #tpu.dot_dimension_numbers<[1], [0], [0], [1], [0, 0, 1, 1], [], []>} : vector<8x128xf32>, vector<128x512xf32>, vector<8x512xf32> -> vector<8x512xf32>
    %235 = arith.addf %232, %234 : vector<8x512xf32>
    %236 = vector.extract_strided_slice %235 {offsets = [0, 0], sizes = [8, 128], strides = [1, 1]} : vector<8x512xf32> to vector<8x128xf32>
    %237 = arith.negf %236 : vector<8x128xf32>
    %238 = math.exp %237 : vector<8x128xf32>
    %cst_92 = arith.constant 1.000000e+00 : f32
    %239 = vector.broadcast %cst_92 : f32 to vector<8x128xf32>
    %240 = arith.addf %239, %238 : vector<8x128xf32>
    %241 = arith.divf %239, %240 : vector<8x128xf32>
    %242 = vector.extract_strided_slice %235 {offsets = [0, 128], sizes = [8, 128], strides = [1, 1]} : vector<8x512xf32> to vector<8x128xf32>
    %243 = arith.negf %242 : vector<8x128xf32>
    %244 = math.exp %243 : vector<8x128xf32>
    %cst_93 = arith.constant 1.000000e+00 : f32
    %245 = vector.broadcast %cst_93 : f32 to vector<8x128xf32>
    %246 = arith.addf %245, %244 : vector<8x128xf32>
    %247 = arith.divf %245, %246 : vector<8x128xf32>
    %248 = vector.extract_strided_slice %235 {offsets = [0, 256], sizes = [8, 128], strides = [1, 1]} : vector<8x512xf32> to vector<8x128xf32>
    %249 = math.tanh %248 : vector<8x128xf32>
    %250 = vector.extract_strided_slice %235 {offsets = [0, 384], sizes = [8, 128], strides = [1, 1]} : vector<8x512xf32> to vector<8x128xf32>
    %251 = arith.negf %250 : vector<8x128xf32>
    %252 = math.exp %251 : vector<8x128xf32>
    %cst_94 = arith.constant 1.000000e+00 : f32
    %253 = vector.broadcast %cst_94 : f32 to vector<8x128xf32>
    %254 = arith.addf %253, %252 : vector<8x128xf32>
    %255 = arith.divf %253, %254 : vector<8x128xf32>
    %256 = arith.mulf %247, %214 : vector<8x128xf32>
    %257 = arith.mulf %241, %249 : vector<8x128xf32>
    %258 = arith.addf %256, %257 : vector<8x128xf32>
    %259 = math.tanh %258 : vector<8x128xf32>
    %260 = arith.mulf %255, %259 : vector<8x128xf32>
    %261 = arith.index_cast %c5_i32 : i32 to index
    %c0_95 = arith.constant 0 : index
    %c0_96 = arith.constant 0 : index
    %262 = vector.load %arg5[%261, %c0_95, %c0_96] : memref<16x8x128xf32, #tpu.memory_space<vmem>>, vector<1x8x128xf32>
    %263 = vector.shape_cast %262 : vector<1x8x128xf32> to vector<8x128xf32>
    %264 = vector.shape_cast %260 : vector<8x128xf32> to vector<1x8x128xf32>
    tpu.vector_store %arg5[%261, %c0_95, %c0_96], %264 {strides = array<i32>} : memref<16x8x128xf32, #tpu.memory_space<vmem>>, vector<1x8x128xf32>,
    %c16_i32_97 = arith.constant 16 : i32
    %265 = arith.muli %arg0, %c16_i32_97 : i32
    %266 = arith.addi %265, %c5_i32 : i32
    %c15_i32_98 = arith.constant 15 : i32
    %267 = arith.cmpi eq, %266, %c15_i32_98 : i32
    %268 = arith.extui %267 : i1 to i32
    %c0_i32_99 = arith.constant 0 : i32
    %269 = arith.cmpi ne, %268, %c0_i32_99 : i32
    scf.if %269 {
      %c0_266 = arith.constant 0 : index
      %c0_267 = arith.constant 0 : index
      %712 = vector.load %arg6[%c0_266, %c0_267] : memref<8x128xf32, #tpu.memory_space<vmem>>, vector<8x128xf32>
      tpu.vector_store %arg6[%c0_266, %c0_267], %258 {strides = array<i32>} : memref<8x128xf32, #tpu.memory_space<vmem>>, vector<8x128xf32>,
    } else {
    }
    %c6_i32 = arith.constant 6 : i32
    %270 = arith.index_cast %c6_i32 : i32 to index
    %c0_100 = arith.constant 0 : index
    %c0_101 = arith.constant 0 : index
    %271 = vector.load %arg1[%270, %c0_100, %c0_101] : memref<16x8x8xf32, #tpu.memory_space<vmem>>, vector<1x8x8xf32>
    %272 = vector.shape_cast %271 : vector<1x8x8xf32> to vector<8x8xf32>
    %c0_102 = arith.constant 0 : index
    %c0_103 = arith.constant 0 : index
    %273 = vector.load %arg2[%c0_102, %c0_103] : memref<8x512xf32, #tpu.memory_space<vmem>>, vector<8x512xf32>
    %cst_104 = arith.constant dense<0.000000e+00> : vector<8x512xf32>
    %274 = tpu.matmul %272, %273, %cst_104 {dimension_numbers = #tpu.dot_dimension_numbers<[1], [0], [0], [1], [0, 0, 1, 1], [], []>} : vector<8x8xf32>, vector<8x512xf32>, vector<8x512xf32> -> vector<8x512xf32>
    %275 = vector.broadcast %3 : vector<1x512xf32> to vector<8x512xf32>
    %276 = arith.addf %274, %275 : vector<8x512xf32>
    %c0_105 = arith.constant 0 : index
    %c0_106 = arith.constant 0 : index
    %277 = vector.load %arg3[%c0_105, %c0_106] : memref<128x512xf32, #tpu.memory_space<vmem>>, vector<128x512xf32>
    %cst_107 = arith.constant dense<0.000000e+00> : vector<8x512xf32>
    %278 = tpu.matmul %260, %277, %cst_107 {dimension_numbers = #tpu.dot_dimension_numbers<[1], [0], [0], [1], [0, 0, 1, 1], [], []>} : vector<8x128xf32>, vector<128x512xf32>, vector<8x512xf32> -> vector<8x512xf32>
    %279 = arith.addf %276, %278 : vector<8x512xf32>
    %280 = vector.extract_strided_slice %279 {offsets = [0, 0], sizes = [8, 128], strides = [1, 1]} : vector<8x512xf32> to vector<8x128xf32>
    %281 = arith.negf %280 : vector<8x128xf32>
    %282 = math.exp %281 : vector<8x128xf32>
    %cst_108 = arith.constant 1.000000e+00 : f32
    %283 = vector.broadcast %cst_108 : f32 to vector<8x128xf32>
    %284 = arith.addf %283, %282 : vector<8x128xf32>
    %285 = arith.divf %283, %284 : vector<8x128xf32>
    %286 = vector.extract_strided_slice %279 {offsets = [0, 128], sizes = [8, 128], strides = [1, 1]} : vector<8x512xf32> to vector<8x128xf32>
    %287 = arith.negf %286 : vector<8x128xf32>
    %288 = math.exp %287 : vector<8x128xf32>
    %cst_109 = arith.constant 1.000000e+00 : f32
    %289 = vector.broadcast %cst_109 : f32 to vector<8x128xf32>
    %290 = arith.addf %289, %288 : vector<8x128xf32>
    %291 = arith.divf %289, %290 : vector<8x128xf32>
    %292 = vector.extract_strided_slice %279 {offsets = [0, 256], sizes = [8, 128], strides = [1, 1]} : vector<8x512xf32> to vector<8x128xf32>
    %293 = math.tanh %292 : vector<8x128xf32>
    %294 = vector.extract_strided_slice %279 {offsets = [0, 384], sizes = [8, 128], strides = [1, 1]} : vector<8x512xf32> to vector<8x128xf32>
    %295 = arith.negf %294 : vector<8x128xf32>
    %296 = math.exp %295 : vector<8x128xf32>
    %cst_110 = arith.constant 1.000000e+00 : f32
    %297 = vector.broadcast %cst_110 : f32 to vector<8x128xf32>
    %298 = arith.addf %297, %296 : vector<8x128xf32>
    %299 = arith.divf %297, %298 : vector<8x128xf32>
    %300 = arith.mulf %291, %258 : vector<8x128xf32>
    %301 = arith.mulf %285, %293 : vector<8x128xf32>
    %302 = arith.addf %300, %301 : vector<8x128xf32>
    %303 = math.tanh %302 : vector<8x128xf32>
    %304 = arith.mulf %299, %303 : vector<8x128xf32>
    %305 = arith.index_cast %c6_i32 : i32 to index
    %c0_111 = arith.constant 0 : index
    %c0_112 = arith.constant 0 : index
    %306 = vector.load %arg5[%305, %c0_111, %c0_112] : memref<16x8x128xf32, #tpu.memory_space<vmem>>, vector<1x8x128xf32>
    %307 = vector.shape_cast %306 : vector<1x8x128xf32> to vector<8x128xf32>
    %308 = vector.shape_cast %304 : vector<8x128xf32> to vector<1x8x128xf32>
    tpu.vector_store %arg5[%305, %c0_111, %c0_112], %308 {strides = array<i32>} : memref<16x8x128xf32, #tpu.memory_space<vmem>>, vector<1x8x128xf32>,
    %c16_i32_113 = arith.constant 16 : i32
    %309 = arith.muli %arg0, %c16_i32_113 : i32
    %310 = arith.addi %309, %c6_i32 : i32
    %c15_i32_114 = arith.constant 15 : i32
    %311 = arith.cmpi eq, %310, %c15_i32_114 : i32
    %312 = arith.extui %311 : i1 to i32
    %c0_i32_115 = arith.constant 0 : i32
    %313 = arith.cmpi ne, %312, %c0_i32_115 : i32
    scf.if %313 {
      %c0_266 = arith.constant 0 : index
      %c0_267 = arith.constant 0 : index
      %712 = vector.load %arg6[%c0_266, %c0_267] : memref<8x128xf32, #tpu.memory_space<vmem>>, vector<8x128xf32>
      tpu.vector_store %arg6[%c0_266, %c0_267], %302 {strides = array<i32>} : memref<8x128xf32, #tpu.memory_space<vmem>>, vector<8x128xf32>,
    } else {
    }
    %c7_i32 = arith.constant 7 : i32
    %314 = arith.index_cast %c7_i32 : i32 to index
    %c0_116 = arith.constant 0 : index
    %c0_117 = arith.constant 0 : index
    %315 = vector.load %arg1[%314, %c0_116, %c0_117] : memref<16x8x8xf32, #tpu.memory_space<vmem>>, vector<1x8x8xf32>
    %316 = vector.shape_cast %315 : vector<1x8x8xf32> to vector<8x8xf32>
    %c0_118 = arith.constant 0 : index
    %c0_119 = arith.constant 0 : index
    %317 = vector.load %arg2[%c0_118, %c0_119] : memref<8x512xf32, #tpu.memory_space<vmem>>, vector<8x512xf32>
    %cst_120 = arith.constant dense<0.000000e+00> : vector<8x512xf32>
    %318 = tpu.matmul %316, %317, %cst_120 {dimension_numbers = #tpu.dot_dimension_numbers<[1], [0], [0], [1], [0, 0, 1, 1], [], []>} : vector<8x8xf32>, vector<8x512xf32>, vector<8x512xf32> -> vector<8x512xf32>
    %319 = vector.broadcast %3 : vector<1x512xf32> to vector<8x512xf32>
    %320 = arith.addf %318, %319 : vector<8x512xf32>
    %c0_121 = arith.constant 0 : index
    %c0_122 = arith.constant 0 : index
    %321 = vector.load %arg3[%c0_121, %c0_122] : memref<128x512xf32, #tpu.memory_space<vmem>>, vector<128x512xf32>
    %cst_123 = arith.constant dense<0.000000e+00> : vector<8x512xf32>
    %322 = tpu.matmul %304, %321, %cst_123 {dimension_numbers = #tpu.dot_dimension_numbers<[1], [0], [0], [1], [0, 0, 1, 1], [], []>} : vector<8x128xf32>, vector<128x512xf32>, vector<8x512xf32> -> vector<8x512xf32>
    %323 = arith.addf %320, %322 : vector<8x512xf32>
    %324 = vector.extract_strided_slice %323 {offsets = [0, 0], sizes = [8, 128], strides = [1, 1]} : vector<8x512xf32> to vector<8x128xf32>
    %325 = arith.negf %324 : vector<8x128xf32>
    %326 = math.exp %325 : vector<8x128xf32>
    %cst_124 = arith.constant 1.000000e+00 : f32
    %327 = vector.broadcast %cst_124 : f32 to vector<8x128xf32>
    %328 = arith.addf %327, %326 : vector<8x128xf32>
    %329 = arith.divf %327, %328 : vector<8x128xf32>
    %330 = vector.extract_strided_slice %323 {offsets = [0, 128], sizes = [8, 128], strides = [1, 1]} : vector<8x512xf32> to vector<8x128xf32>
    %331 = arith.negf %330 : vector<8x128xf32>
    %332 = math.exp %331 : vector<8x128xf32>
    %cst_125 = arith.constant 1.000000e+00 : f32
    %333 = vector.broadcast %cst_125 : f32 to vector<8x128xf32>
    %334 = arith.addf %333, %332 : vector<8x128xf32>
    %335 = arith.divf %333, %334 : vector<8x128xf32>
    %336 = vector.extract_strided_slice %323 {offsets = [0, 256], sizes = [8, 128], strides = [1, 1]} : vector<8x512xf32> to vector<8x128xf32>
    %337 = math.tanh %336 : vector<8x128xf32>
    %338 = vector.extract_strided_slice %323 {offsets = [0, 384], sizes = [8, 128], strides = [1, 1]} : vector<8x512xf32> to vector<8x128xf32>
    %339 = arith.negf %338 : vector<8x128xf32>
    %340 = math.exp %339 : vector<8x128xf32>
    %cst_126 = arith.constant 1.000000e+00 : f32
    %341 = vector.broadcast %cst_126 : f32 to vector<8x128xf32>
    %342 = arith.addf %341, %340 : vector<8x128xf32>
    %343 = arith.divf %341, %342 : vector<8x128xf32>
    %344 = arith.mulf %335, %302 : vector<8x128xf32>
    %345 = arith.mulf %329, %337 : vector<8x128xf32>
    %346 = arith.addf %344, %345 : vector<8x128xf32>
    %347 = math.tanh %346 : vector<8x128xf32>
    %348 = arith.mulf %343, %347 : vector<8x128xf32>
    %349 = arith.index_cast %c7_i32 : i32 to index
    %c0_127 = arith.constant 0 : index
    %c0_128 = arith.constant 0 : index
    %350 = vector.load %arg5[%349, %c0_127, %c0_128] : memref<16x8x128xf32, #tpu.memory_space<vmem>>, vector<1x8x128xf32>
    %351 = vector.shape_cast %350 : vector<1x8x128xf32> to vector<8x128xf32>
    %352 = vector.shape_cast %348 : vector<8x128xf32> to vector<1x8x128xf32>
    tpu.vector_store %arg5[%349, %c0_127, %c0_128], %352 {strides = array<i32>} : memref<16x8x128xf32, #tpu.memory_space<vmem>>, vector<1x8x128xf32>,
    %c16_i32_129 = arith.constant 16 : i32
    %353 = arith.muli %arg0, %c16_i32_129 : i32
    %354 = arith.addi %353, %c7_i32 : i32
    %c15_i32_130 = arith.constant 15 : i32
    %355 = arith.cmpi eq, %354, %c15_i32_130 : i32
    %356 = arith.extui %355 : i1 to i32
    %c0_i32_131 = arith.constant 0 : i32
    %357 = arith.cmpi ne, %356, %c0_i32_131 : i32
    scf.if %357 {
      %c0_266 = arith.constant 0 : index
      %c0_267 = arith.constant 0 : index
      %712 = vector.load %arg6[%c0_266, %c0_267] : memref<8x128xf32, #tpu.memory_space<vmem>>, vector<8x128xf32>
      tpu.vector_store %arg6[%c0_266, %c0_267], %346 {strides = array<i32>} : memref<8x128xf32, #tpu.memory_space<vmem>>, vector<8x128xf32>,
    } else {
    }
    %c8_i32 = arith.constant 8 : i32
    %358 = arith.index_cast %c8_i32 : i32 to index
    %c0_132 = arith.constant 0 : index
    %c0_133 = arith.constant 0 : index
    %359 = vector.load %arg1[%358, %c0_132, %c0_133] : memref<16x8x8xf32, #tpu.memory_space<vmem>>, vector<1x8x8xf32>
    %360 = vector.shape_cast %359 : vector<1x8x8xf32> to vector<8x8xf32>
    %c0_134 = arith.constant 0 : index
    %c0_135 = arith.constant 0 : index
    %361 = vector.load %arg2[%c0_134, %c0_135] : memref<8x512xf32, #tpu.memory_space<vmem>>, vector<8x512xf32>
    %cst_136 = arith.constant dense<0.000000e+00> : vector<8x512xf32>
    %362 = tpu.matmul %360, %361, %cst_136 {dimension_numbers = #tpu.dot_dimension_numbers<[1], [0], [0], [1], [0, 0, 1, 1], [], []>} : vector<8x8xf32>, vector<8x512xf32>, vector<8x512xf32> -> vector<8x512xf32>
    %363 = vector.broadcast %3 : vector<1x512xf32> to vector<8x512xf32>
    %364 = arith.addf %362, %363 : vector<8x512xf32>
    %c0_137 = arith.constant 0 : index
    %c0_138 = arith.constant 0 : index
    %365 = vector.load %arg3[%c0_137, %c0_138] : memref<128x512xf32, #tpu.memory_space<vmem>>, vector<128x512xf32>
    %cst_139 = arith.constant dense<0.000000e+00> : vector<8x512xf32>
    %366 = tpu.matmul %348, %365, %cst_139 {dimension_numbers = #tpu.dot_dimension_numbers<[1], [0], [0], [1], [0, 0, 1, 1], [], []>} : vector<8x128xf32>, vector<128x512xf32>, vector<8x512xf32> -> vector<8x512xf32>
    %367 = arith.addf %364, %366 : vector<8x512xf32>
    %368 = vector.extract_strided_slice %367 {offsets = [0, 0], sizes = [8, 128], strides = [1, 1]} : vector<8x512xf32> to vector<8x128xf32>
    %369 = arith.negf %368 : vector<8x128xf32>
    %370 = math.exp %369 : vector<8x128xf32>
    %cst_140 = arith.constant 1.000000e+00 : f32
    %371 = vector.broadcast %cst_140 : f32 to vector<8x128xf32>
    %372 = arith.addf %371, %370 : vector<8x128xf32>
    %373 = arith.divf %371, %372 : vector<8x128xf32>
    %374 = vector.extract_strided_slice %367 {offsets = [0, 128], sizes = [8, 128], strides = [1, 1]} : vector<8x512xf32> to vector<8x128xf32>
    %375 = arith.negf %374 : vector<8x128xf32>
    %376 = math.exp %375 : vector<8x128xf32>
    %cst_141 = arith.constant 1.000000e+00 : f32
    %377 = vector.broadcast %cst_141 : f32 to vector<8x128xf32>
    %378 = arith.addf %377, %376 : vector<8x128xf32>
    %379 = arith.divf %377, %378 : vector<8x128xf32>
    %380 = vector.extract_strided_slice %367 {offsets = [0, 256], sizes = [8, 128], strides = [1, 1]} : vector<8x512xf32> to vector<8x128xf32>
    %381 = math.tanh %380 : vector<8x128xf32>
    %382 = vector.extract_strided_slice %367 {offsets = [0, 384], sizes = [8, 128], strides = [1, 1]} : vector<8x512xf32> to vector<8x128xf32>
    %383 = arith.negf %382 : vector<8x128xf32>
    %384 = math.exp %383 : vector<8x128xf32>
    %cst_142 = arith.constant 1.000000e+00 : f32
    %385 = vector.broadcast %cst_142 : f32 to vector<8x128xf32>
    %386 = arith.addf %385, %384 : vector<8x128xf32>
    %387 = arith.divf %385, %386 : vector<8x128xf32>
    %388 = arith.mulf %379, %346 : vector<8x128xf32>
    %389 = arith.mulf %373, %381 : vector<8x128xf32>
    %390 = arith.addf %388, %389 : vector<8x128xf32>
    %391 = math.tanh %390 : vector<8x128xf32>
    %392 = arith.mulf %387, %391 : vector<8x128xf32>
    %393 = arith.index_cast %c8_i32 : i32 to index
    %c0_143 = arith.constant 0 : index
    %c0_144 = arith.constant 0 : index
    %394 = vector.load %arg5[%393, %c0_143, %c0_144] : memref<16x8x128xf32, #tpu.memory_space<vmem>>, vector<1x8x128xf32>
    %395 = vector.shape_cast %394 : vector<1x8x128xf32> to vector<8x128xf32>
    %396 = vector.shape_cast %392 : vector<8x128xf32> to vector<1x8x128xf32>
    tpu.vector_store %arg5[%393, %c0_143, %c0_144], %396 {strides = array<i32>} : memref<16x8x128xf32, #tpu.memory_space<vmem>>, vector<1x8x128xf32>,
    %c16_i32_145 = arith.constant 16 : i32
    %397 = arith.muli %arg0, %c16_i32_145 : i32
    %398 = arith.addi %397, %c8_i32 : i32
    %c15_i32_146 = arith.constant 15 : i32
    %399 = arith.cmpi eq, %398, %c15_i32_146 : i32
    %400 = arith.extui %399 : i1 to i32
    %c0_i32_147 = arith.constant 0 : i32
    %401 = arith.cmpi ne, %400, %c0_i32_147 : i32
    scf.if %401 {
      %c0_266 = arith.constant 0 : index
      %c0_267 = arith.constant 0 : index
      %712 = vector.load %arg6[%c0_266, %c0_267] : memref<8x128xf32, #tpu.memory_space<vmem>>, vector<8x128xf32>
      tpu.vector_store %arg6[%c0_266, %c0_267], %390 {strides = array<i32>} : memref<8x128xf32, #tpu.memory_space<vmem>>, vector<8x128xf32>,
    } else {
    }
    %c9_i32 = arith.constant 9 : i32
    %402 = arith.index_cast %c9_i32 : i32 to index
    %c0_148 = arith.constant 0 : index
    %c0_149 = arith.constant 0 : index
    %403 = vector.load %arg1[%402, %c0_148, %c0_149] : memref<16x8x8xf32, #tpu.memory_space<vmem>>, vector<1x8x8xf32>
    %404 = vector.shape_cast %403 : vector<1x8x8xf32> to vector<8x8xf32>
    %c0_150 = arith.constant 0 : index
    %c0_151 = arith.constant 0 : index
    %405 = vector.load %arg2[%c0_150, %c0_151] : memref<8x512xf32, #tpu.memory_space<vmem>>, vector<8x512xf32>
    %cst_152 = arith.constant dense<0.000000e+00> : vector<8x512xf32>
    %406 = tpu.matmul %404, %405, %cst_152 {dimension_numbers = #tpu.dot_dimension_numbers<[1], [0], [0], [1], [0, 0, 1, 1], [], []>} : vector<8x8xf32>, vector<8x512xf32>, vector<8x512xf32> -> vector<8x512xf32>
    %407 = vector.broadcast %3 : vector<1x512xf32> to vector<8x512xf32>
    %408 = arith.addf %406, %407 : vector<8x512xf32>
    %c0_153 = arith.constant 0 : index
    %c0_154 = arith.constant 0 : index
    %409 = vector.load %arg3[%c0_153, %c0_154] : memref<128x512xf32, #tpu.memory_space<vmem>>, vector<128x512xf32>
    %cst_155 = arith.constant dense<0.000000e+00> : vector<8x512xf32>
    %410 = tpu.matmul %392, %409, %cst_155 {dimension_numbers = #tpu.dot_dimension_numbers<[1], [0], [0], [1], [0, 0, 1, 1], [], []>} : vector<8x128xf32>, vector<128x512xf32>, vector<8x512xf32> -> vector<8x512xf32>
    %411 = arith.addf %408, %410 : vector<8x512xf32>
    %412 = vector.extract_strided_slice %411 {offsets = [0, 0], sizes = [8, 128], strides = [1, 1]} : vector<8x512xf32> to vector<8x128xf32>
    %413 = arith.negf %412 : vector<8x128xf32>
    %414 = math.exp %413 : vector<8x128xf32>
    %cst_156 = arith.constant 1.000000e+00 : f32
    %415 = vector.broadcast %cst_156 : f32 to vector<8x128xf32>
    %416 = arith.addf %415, %414 : vector<8x128xf32>
    %417 = arith.divf %415, %416 : vector<8x128xf32>
    %418 = vector.extract_strided_slice %411 {offsets = [0, 128], sizes = [8, 128], strides = [1, 1]} : vector<8x512xf32> to vector<8x128xf32>
    %419 = arith.negf %418 : vector<8x128xf32>
    %420 = math.exp %419 : vector<8x128xf32>
    %cst_157 = arith.constant 1.000000e+00 : f32
    %421 = vector.broadcast %cst_157 : f32 to vector<8x128xf32>
    %422 = arith.addf %421, %420 : vector<8x128xf32>
    %423 = arith.divf %421, %422 : vector<8x128xf32>
    %424 = vector.extract_strided_slice %411 {offsets = [0, 256], sizes = [8, 128], strides = [1, 1]} : vector<8x512xf32> to vector<8x128xf32>
    %425 = math.tanh %424 : vector<8x128xf32>
    %426 = vector.extract_strided_slice %411 {offsets = [0, 384], sizes = [8, 128], strides = [1, 1]} : vector<8x512xf32> to vector<8x128xf32>
    %427 = arith.negf %426 : vector<8x128xf32>
    %428 = math.exp %427 : vector<8x128xf32>
    %cst_158 = arith.constant 1.000000e+00 : f32
    %429 = vector.broadcast %cst_158 : f32 to vector<8x128xf32>
    %430 = arith.addf %429, %428 : vector<8x128xf32>
    %431 = arith.divf %429, %430 : vector<8x128xf32>
    %432 = arith.mulf %423, %390 : vector<8x128xf32>
    %433 = arith.mulf %417, %425 : vector<8x128xf32>
    %434 = arith.addf %432, %433 : vector<8x128xf32>
    %435 = math.tanh %434 : vector<8x128xf32>
    %436 = arith.mulf %431, %435 : vector<8x128xf32>
    %437 = arith.index_cast %c9_i32 : i32 to index
    %c0_159 = arith.constant 0 : index
    %c0_160 = arith.constant 0 : index
    %438 = vector.load %arg5[%437, %c0_159, %c0_160] : memref<16x8x128xf32, #tpu.memory_space<vmem>>, vector<1x8x128xf32>
    %439 = vector.shape_cast %438 : vector<1x8x128xf32> to vector<8x128xf32>
    %440 = vector.shape_cast %436 : vector<8x128xf32> to vector<1x8x128xf32>
    tpu.vector_store %arg5[%437, %c0_159, %c0_160], %440 {strides = array<i32>} : memref<16x8x128xf32, #tpu.memory_space<vmem>>, vector<1x8x128xf32>,
    %c16_i32_161 = arith.constant 16 : i32
    %441 = arith.muli %arg0, %c16_i32_161 : i32
    %442 = arith.addi %441, %c9_i32 : i32
    %c15_i32_162 = arith.constant 15 : i32
    %443 = arith.cmpi eq, %442, %c15_i32_162 : i32
    %444 = arith.extui %443 : i1 to i32
    %c0_i32_163 = arith.constant 0 : i32
    %445 = arith.cmpi ne, %444, %c0_i32_163 : i32
    scf.if %445 {
      %c0_266 = arith.constant 0 : index
      %c0_267 = arith.constant 0 : index
      %712 = vector.load %arg6[%c0_266, %c0_267] : memref<8x128xf32, #tpu.memory_space<vmem>>, vector<8x128xf32>
      tpu.vector_store %arg6[%c0_266, %c0_267], %434 {strides = array<i32>} : memref<8x128xf32, #tpu.memory_space<vmem>>, vector<8x128xf32>,
    } else {
    }
    %c10_i32 = arith.constant 10 : i32
    %446 = arith.index_cast %c10_i32 : i32 to index
    %c0_164 = arith.constant 0 : index
    %c0_165 = arith.constant 0 : index
    %447 = vector.load %arg1[%446, %c0_164, %c0_165] : memref<16x8x8xf32, #tpu.memory_space<vmem>>, vector<1x8x8xf32>
    %448 = vector.shape_cast %447 : vector<1x8x8xf32> to vector<8x8xf32>
    %c0_166 = arith.constant 0 : index
    %c0_167 = arith.constant 0 : index
    %449 = vector.load %arg2[%c0_166, %c0_167] : memref<8x512xf32, #tpu.memory_space<vmem>>, vector<8x512xf32>
    %cst_168 = arith.constant dense<0.000000e+00> : vector<8x512xf32>
    %450 = tpu.matmul %448, %449, %cst_168 {dimension_numbers = #tpu.dot_dimension_numbers<[1], [0], [0], [1], [0, 0, 1, 1], [], []>} : vector<8x8xf32>, vector<8x512xf32>, vector<8x512xf32> -> vector<8x512xf32>
    %451 = vector.broadcast %3 : vector<1x512xf32> to vector<8x512xf32>
    %452 = arith.addf %450, %451 : vector<8x512xf32>
    %c0_169 = arith.constant 0 : index
    %c0_170 = arith.constant 0 : index
    %453 = vector.load %arg3[%c0_169, %c0_170] : memref<128x512xf32, #tpu.memory_space<vmem>>, vector<128x512xf32>
    %cst_171 = arith.constant dense<0.000000e+00> : vector<8x512xf32>
    %454 = tpu.matmul %436, %453, %cst_171 {dimension_numbers = #tpu.dot_dimension_numbers<[1], [0], [0], [1], [0, 0, 1, 1], [], []>} : vector<8x128xf32>, vector<128x512xf32>, vector<8x512xf32> -> vector<8x512xf32>
    %455 = arith.addf %452, %454 : vector<8x512xf32>
    %456 = vector.extract_strided_slice %455 {offsets = [0, 0], sizes = [8, 128], strides = [1, 1]} : vector<8x512xf32> to vector<8x128xf32>
    %457 = arith.negf %456 : vector<8x128xf32>
    %458 = math.exp %457 : vector<8x128xf32>
    %cst_172 = arith.constant 1.000000e+00 : f32
    %459 = vector.broadcast %cst_172 : f32 to vector<8x128xf32>
    %460 = arith.addf %459, %458 : vector<8x128xf32>
    %461 = arith.divf %459, %460 : vector<8x128xf32>
    %462 = vector.extract_strided_slice %455 {offsets = [0, 128], sizes = [8, 128], strides = [1, 1]} : vector<8x512xf32> to vector<8x128xf32>
    %463 = arith.negf %462 : vector<8x128xf32>
    %464 = math.exp %463 : vector<8x128xf32>
    %cst_173 = arith.constant 1.000000e+00 : f32
    %465 = vector.broadcast %cst_173 : f32 to vector<8x128xf32>
    %466 = arith.addf %465, %464 : vector<8x128xf32>
    %467 = arith.divf %465, %466 : vector<8x128xf32>
    %468 = vector.extract_strided_slice %455 {offsets = [0, 256], sizes = [8, 128], strides = [1, 1]} : vector<8x512xf32> to vector<8x128xf32>
    %469 = math.tanh %468 : vector<8x128xf32>
    %470 = vector.extract_strided_slice %455 {offsets = [0, 384], sizes = [8, 128], strides = [1, 1]} : vector<8x512xf32> to vector<8x128xf32>
    %471 = arith.negf %470 : vector<8x128xf32>
    %472 = math.exp %471 : vector<8x128xf32>
    %cst_174 = arith.constant 1.000000e+00 : f32
    %473 = vector.broadcast %cst_174 : f32 to vector<8x128xf32>
    %474 = arith.addf %473, %472 : vector<8x128xf32>
    %475 = arith.divf %473, %474 : vector<8x128xf32>
    %476 = arith.mulf %467, %434 : vector<8x128xf32>
    %477 = arith.mulf %461, %469 : vector<8x128xf32>
    %478 = arith.addf %476, %477 : vector<8x128xf32>
    %479 = math.tanh %478 : vector<8x128xf32>
    %480 = arith.mulf %475, %479 : vector<8x128xf32>
    %481 = arith.index_cast %c10_i32 : i32 to index
    %c0_175 = arith.constant 0 : index
    %c0_176 = arith.constant 0 : index
    %482 = vector.load %arg5[%481, %c0_175, %c0_176] : memref<16x8x128xf32, #tpu.memory_space<vmem>>, vector<1x8x128xf32>
    %483 = vector.shape_cast %482 : vector<1x8x128xf32> to vector<8x128xf32>
    %484 = vector.shape_cast %480 : vector<8x128xf32> to vector<1x8x128xf32>
    tpu.vector_store %arg5[%481, %c0_175, %c0_176], %484 {strides = array<i32>} : memref<16x8x128xf32, #tpu.memory_space<vmem>>, vector<1x8x128xf32>,
    %c16_i32_177 = arith.constant 16 : i32
    %485 = arith.muli %arg0, %c16_i32_177 : i32
    %486 = arith.addi %485, %c10_i32 : i32
    %c15_i32_178 = arith.constant 15 : i32
    %487 = arith.cmpi eq, %486, %c15_i32_178 : i32
    %488 = arith.extui %487 : i1 to i32
    %c0_i32_179 = arith.constant 0 : i32
    %489 = arith.cmpi ne, %488, %c0_i32_179 : i32
    scf.if %489 {
      %c0_266 = arith.constant 0 : index
      %c0_267 = arith.constant 0 : index
      %712 = vector.load %arg6[%c0_266, %c0_267] : memref<8x128xf32, #tpu.memory_space<vmem>>, vector<8x128xf32>
      tpu.vector_store %arg6[%c0_266, %c0_267], %478 {strides = array<i32>} : memref<8x128xf32, #tpu.memory_space<vmem>>, vector<8x128xf32>,
    } else {
    }
    %c11_i32 = arith.constant 11 : i32
    %490 = arith.index_cast %c11_i32 : i32 to index
    %c0_180 = arith.constant 0 : index
    %c0_181 = arith.constant 0 : index
    %491 = vector.load %arg1[%490, %c0_180, %c0_181] : memref<16x8x8xf32, #tpu.memory_space<vmem>>, vector<1x8x8xf32>
    %492 = vector.shape_cast %491 : vector<1x8x8xf32> to vector<8x8xf32>
    %c0_182 = arith.constant 0 : index
    %c0_183 = arith.constant 0 : index
    %493 = vector.load %arg2[%c0_182, %c0_183] : memref<8x512xf32, #tpu.memory_space<vmem>>, vector<8x512xf32>
    %cst_184 = arith.constant dense<0.000000e+00> : vector<8x512xf32>
    %494 = tpu.matmul %492, %493, %cst_184 {dimension_numbers = #tpu.dot_dimension_numbers<[1], [0], [0], [1], [0, 0, 1, 1], [], []>} : vector<8x8xf32>, vector<8x512xf32>, vector<8x512xf32> -> vector<8x512xf32>
    %495 = vector.broadcast %3 : vector<1x512xf32> to vector<8x512xf32>
    %496 = arith.addf %494, %495 : vector<8x512xf32>
    %c0_185 = arith.constant 0 : index
    %c0_186 = arith.constant 0 : index
    %497 = vector.load %arg3[%c0_185, %c0_186] : memref<128x512xf32, #tpu.memory_space<vmem>>, vector<128x512xf32>
    %cst_187 = arith.constant dense<0.000000e+00> : vector<8x512xf32>
    %498 = tpu.matmul %480, %497, %cst_187 {dimension_numbers = #tpu.dot_dimension_numbers<[1], [0], [0], [1], [0, 0, 1, 1], [], []>} : vector<8x128xf32>, vector<128x512xf32>, vector<8x512xf32> -> vector<8x512xf32>
    %499 = arith.addf %496, %498 : vector<8x512xf32>
    %500 = vector.extract_strided_slice %499 {offsets = [0, 0], sizes = [8, 128], strides = [1, 1]} : vector<8x512xf32> to vector<8x128xf32>
    %501 = arith.negf %500 : vector<8x128xf32>
    %502 = math.exp %501 : vector<8x128xf32>
    %cst_188 = arith.constant 1.000000e+00 : f32
    %503 = vector.broadcast %cst_188 : f32 to vector<8x128xf32>
    %504 = arith.addf %503, %502 : vector<8x128xf32>
    %505 = arith.divf %503, %504 : vector<8x128xf32>
    %506 = vector.extract_strided_slice %499 {offsets = [0, 128], sizes = [8, 128], strides = [1, 1]} : vector<8x512xf32> to vector<8x128xf32>
    %507 = arith.negf %506 : vector<8x128xf32>
    %508 = math.exp %507 : vector<8x128xf32>
    %cst_189 = arith.constant 1.000000e+00 : f32
    %509 = vector.broadcast %cst_189 : f32 to vector<8x128xf32>
    %510 = arith.addf %509, %508 : vector<8x128xf32>
    %511 = arith.divf %509, %510 : vector<8x128xf32>
    %512 = vector.extract_strided_slice %499 {offsets = [0, 256], sizes = [8, 128], strides = [1, 1]} : vector<8x512xf32> to vector<8x128xf32>
    %513 = math.tanh %512 : vector<8x128xf32>
    %514 = vector.extract_strided_slice %499 {offsets = [0, 384], sizes = [8, 128], strides = [1, 1]} : vector<8x512xf32> to vector<8x128xf32>
    %515 = arith.negf %514 : vector<8x128xf32>
    %516 = math.exp %515 : vector<8x128xf32>
    %cst_190 = arith.constant 1.000000e+00 : f32
    %517 = vector.broadcast %cst_190 : f32 to vector<8x128xf32>
    %518 = arith.addf %517, %516 : vector<8x128xf32>
    %519 = arith.divf %517, %518 : vector<8x128xf32>
    %520 = arith.mulf %511, %478 : vector<8x128xf32>
    %521 = arith.mulf %505, %513 : vector<8x128xf32>
    %522 = arith.addf %520, %521 : vector<8x128xf32>
    %523 = math.tanh %522 : vector<8x128xf32>
    %524 = arith.mulf %519, %523 : vector<8x128xf32>
    %525 = arith.index_cast %c11_i32 : i32 to index
    %c0_191 = arith.constant 0 : index
    %c0_192 = arith.constant 0 : index
    %526 = vector.load %arg5[%525, %c0_191, %c0_192] : memref<16x8x128xf32, #tpu.memory_space<vmem>>, vector<1x8x128xf32>
    %527 = vector.shape_cast %526 : vector<1x8x128xf32> to vector<8x128xf32>
    %528 = vector.shape_cast %524 : vector<8x128xf32> to vector<1x8x128xf32>
    tpu.vector_store %arg5[%525, %c0_191, %c0_192], %528 {strides = array<i32>} : memref<16x8x128xf32, #tpu.memory_space<vmem>>, vector<1x8x128xf32>,
    %c16_i32_193 = arith.constant 16 : i32
    %529 = arith.muli %arg0, %c16_i32_193 : i32
    %530 = arith.addi %529, %c11_i32 : i32
    %c15_i32_194 = arith.constant 15 : i32
    %531 = arith.cmpi eq, %530, %c15_i32_194 : i32
    %532 = arith.extui %531 : i1 to i32
    %c0_i32_195 = arith.constant 0 : i32
    %533 = arith.cmpi ne, %532, %c0_i32_195 : i32
    scf.if %533 {
      %c0_266 = arith.constant 0 : index
      %c0_267 = arith.constant 0 : index
      %712 = vector.load %arg6[%c0_266, %c0_267] : memref<8x128xf32, #tpu.memory_space<vmem>>, vector<8x128xf32>
      tpu.vector_store %arg6[%c0_266, %c0_267], %522 {strides = array<i32>} : memref<8x128xf32, #tpu.memory_space<vmem>>, vector<8x128xf32>,
    } else {
    }
    %c12_i32 = arith.constant 12 : i32
    %534 = arith.index_cast %c12_i32 : i32 to index
    %c0_196 = arith.constant 0 : index
    %c0_197 = arith.constant 0 : index
    %535 = vector.load %arg1[%534, %c0_196, %c0_197] : memref<16x8x8xf32, #tpu.memory_space<vmem>>, vector<1x8x8xf32>
    %536 = vector.shape_cast %535 : vector<1x8x8xf32> to vector<8x8xf32>
    %c0_198 = arith.constant 0 : index
    %c0_199 = arith.constant 0 : index
    %537 = vector.load %arg2[%c0_198, %c0_199] : memref<8x512xf32, #tpu.memory_space<vmem>>, vector<8x512xf32>
    %cst_200 = arith.constant dense<0.000000e+00> : vector<8x512xf32>
    %538 = tpu.matmul %536, %537, %cst_200 {dimension_numbers = #tpu.dot_dimension_numbers<[1], [0], [0], [1], [0, 0, 1, 1], [], []>} : vector<8x8xf32>, vector<8x512xf32>, vector<8x512xf32> -> vector<8x512xf32>
    %539 = vector.broadcast %3 : vector<1x512xf32> to vector<8x512xf32>
    %540 = arith.addf %538, %539 : vector<8x512xf32>
    %c0_201 = arith.constant 0 : index
    %c0_202 = arith.constant 0 : index
    %541 = vector.load %arg3[%c0_201, %c0_202] : memref<128x512xf32, #tpu.memory_space<vmem>>, vector<128x512xf32>
    %cst_203 = arith.constant dense<0.000000e+00> : vector<8x512xf32>
    %542 = tpu.matmul %524, %541, %cst_203 {dimension_numbers = #tpu.dot_dimension_numbers<[1], [0], [0], [1], [0, 0, 1, 1], [], []>} : vector<8x128xf32>, vector<128x512xf32>, vector<8x512xf32> -> vector<8x512xf32>
    %543 = arith.addf %540, %542 : vector<8x512xf32>
    %544 = vector.extract_strided_slice %543 {offsets = [0, 0], sizes = [8, 128], strides = [1, 1]} : vector<8x512xf32> to vector<8x128xf32>
    %545 = arith.negf %544 : vector<8x128xf32>
    %546 = math.exp %545 : vector<8x128xf32>
    %cst_204 = arith.constant 1.000000e+00 : f32
    %547 = vector.broadcast %cst_204 : f32 to vector<8x128xf32>
    %548 = arith.addf %547, %546 : vector<8x128xf32>
    %549 = arith.divf %547, %548 : vector<8x128xf32>
    %550 = vector.extract_strided_slice %543 {offsets = [0, 128], sizes = [8, 128], strides = [1, 1]} : vector<8x512xf32> to vector<8x128xf32>
    %551 = arith.negf %550 : vector<8x128xf32>
    %552 = math.exp %551 : vector<8x128xf32>
    %cst_205 = arith.constant 1.000000e+00 : f32
    %553 = vector.broadcast %cst_205 : f32 to vector<8x128xf32>
    %554 = arith.addf %553, %552 : vector<8x128xf32>
    %555 = arith.divf %553, %554 : vector<8x128xf32>
    %556 = vector.extract_strided_slice %543 {offsets = [0, 256], sizes = [8, 128], strides = [1, 1]} : vector<8x512xf32> to vector<8x128xf32>
    %557 = math.tanh %556 : vector<8x128xf32>
    %558 = vector.extract_strided_slice %543 {offsets = [0, 384], sizes = [8, 128], strides = [1, 1]} : vector<8x512xf32> to vector<8x128xf32>
    %559 = arith.negf %558 : vector<8x128xf32>
    %560 = math.exp %559 : vector<8x128xf32>
    %cst_206 = arith.constant 1.000000e+00 : f32
    %561 = vector.broadcast %cst_206 : f32 to vector<8x128xf32>
    %562 = arith.addf %561, %560 : vector<8x128xf32>
    %563 = arith.divf %561, %562 : vector<8x128xf32>
    %564 = arith.mulf %555, %522 : vector<8x128xf32>
    %565 = arith.mulf %549, %557 : vector<8x128xf32>
    %566 = arith.addf %564, %565 : vector<8x128xf32>
    %567 = math.tanh %566 : vector<8x128xf32>
    %568 = arith.mulf %563, %567 : vector<8x128xf32>
    %569 = arith.index_cast %c12_i32 : i32 to index
    %c0_207 = arith.constant 0 : index
    %c0_208 = arith.constant 0 : index
    %570 = vector.load %arg5[%569, %c0_207, %c0_208] : memref<16x8x128xf32, #tpu.memory_space<vmem>>, vector<1x8x128xf32>
    %571 = vector.shape_cast %570 : vector<1x8x128xf32> to vector<8x128xf32>
    %572 = vector.shape_cast %568 : vector<8x128xf32> to vector<1x8x128xf32>
    tpu.vector_store %arg5[%569, %c0_207, %c0_208], %572 {strides = array<i32>} : memref<16x8x128xf32, #tpu.memory_space<vmem>>, vector<1x8x128xf32>,
    %c16_i32_209 = arith.constant 16 : i32
    %573 = arith.muli %arg0, %c16_i32_209 : i32
    %574 = arith.addi %573, %c12_i32 : i32
    %c15_i32_210 = arith.constant 15 : i32
    %575 = arith.cmpi eq, %574, %c15_i32_210 : i32
    %576 = arith.extui %575 : i1 to i32
    %c0_i32_211 = arith.constant 0 : i32
    %577 = arith.cmpi ne, %576, %c0_i32_211 : i32
    scf.if %577 {
      %c0_266 = arith.constant 0 : index
      %c0_267 = arith.constant 0 : index
      %712 = vector.load %arg6[%c0_266, %c0_267] : memref<8x128xf32, #tpu.memory_space<vmem>>, vector<8x128xf32>
      tpu.vector_store %arg6[%c0_266, %c0_267], %566 {strides = array<i32>} : memref<8x128xf32, #tpu.memory_space<vmem>>, vector<8x128xf32>,
    } else {
    }
    %c13_i32 = arith.constant 13 : i32
    %578 = arith.index_cast %c13_i32 : i32 to index
    %c0_212 = arith.constant 0 : index
    %c0_213 = arith.constant 0 : index
    %579 = vector.load %arg1[%578, %c0_212, %c0_213] : memref<16x8x8xf32, #tpu.memory_space<vmem>>, vector<1x8x8xf32>
    %580 = vector.shape_cast %579 : vector<1x8x8xf32> to vector<8x8xf32>
    %c0_214 = arith.constant 0 : index
    %c0_215 = arith.constant 0 : index
    %581 = vector.load %arg2[%c0_214, %c0_215] : memref<8x512xf32, #tpu.memory_space<vmem>>, vector<8x512xf32>
    %cst_216 = arith.constant dense<0.000000e+00> : vector<8x512xf32>
    %582 = tpu.matmul %580, %581, %cst_216 {dimension_numbers = #tpu.dot_dimension_numbers<[1], [0], [0], [1], [0, 0, 1, 1], [], []>} : vector<8x8xf32>, vector<8x512xf32>, vector<8x512xf32> -> vector<8x512xf32>
    %583 = vector.broadcast %3 : vector<1x512xf32> to vector<8x512xf32>
    %584 = arith.addf %582, %583 : vector<8x512xf32>
    %c0_217 = arith.constant 0 : index
    %c0_218 = arith.constant 0 : index
    %585 = vector.load %arg3[%c0_217, %c0_218] : memref<128x512xf32, #tpu.memory_space<vmem>>, vector<128x512xf32>
    %cst_219 = arith.constant dense<0.000000e+00> : vector<8x512xf32>
    %586 = tpu.matmul %568, %585, %cst_219 {dimension_numbers = #tpu.dot_dimension_numbers<[1], [0], [0], [1], [0, 0, 1, 1], [], []>} : vector<8x128xf32>, vector<128x512xf32>, vector<8x512xf32> -> vector<8x512xf32>
    %587 = arith.addf %584, %586 : vector<8x512xf32>
    %588 = vector.extract_strided_slice %587 {offsets = [0, 0], sizes = [8, 128], strides = [1, 1]} : vector<8x512xf32> to vector<8x128xf32>
    %589 = arith.negf %588 : vector<8x128xf32>
    %590 = math.exp %589 : vector<8x128xf32>
    %cst_220 = arith.constant 1.000000e+00 : f32
    %591 = vector.broadcast %cst_220 : f32 to vector<8x128xf32>
    %592 = arith.addf %591, %590 : vector<8x128xf32>
    %593 = arith.divf %591, %592 : vector<8x128xf32>
    %594 = vector.extract_strided_slice %587 {offsets = [0, 128], sizes = [8, 128], strides = [1, 1]} : vector<8x512xf32> to vector<8x128xf32>
    %595 = arith.negf %594 : vector<8x128xf32>
    %596 = math.exp %595 : vector<8x128xf32>
    %cst_221 = arith.constant 1.000000e+00 : f32
    %597 = vector.broadcast %cst_221 : f32 to vector<8x128xf32>
    %598 = arith.addf %597, %596 : vector<8x128xf32>
    %599 = arith.divf %597, %598 : vector<8x128xf32>
    %600 = vector.extract_strided_slice %587 {offsets = [0, 256], sizes = [8, 128], strides = [1, 1]} : vector<8x512xf32> to vector<8x128xf32>
    %601 = math.tanh %600 : vector<8x128xf32>
    %602 = vector.extract_strided_slice %587 {offsets = [0, 384], sizes = [8, 128], strides = [1, 1]} : vector<8x512xf32> to vector<8x128xf32>
    %603 = arith.negf %602 : vector<8x128xf32>
    %604 = math.exp %603 : vector<8x128xf32>
    %cst_222 = arith.constant 1.000000e+00 : f32
    %605 = vector.broadcast %cst_222 : f32 to vector<8x128xf32>
    %606 = arith.addf %605, %604 : vector<8x128xf32>
    %607 = arith.divf %605, %606 : vector<8x128xf32>
    %608 = arith.mulf %599, %566 : vector<8x128xf32>
    %609 = arith.mulf %593, %601 : vector<8x128xf32>
    %610 = arith.addf %608, %609 : vector<8x128xf32>
    %611 = math.tanh %610 : vector<8x128xf32>
    %612 = arith.mulf %607, %611 : vector<8x128xf32>
    %613 = arith.index_cast %c13_i32 : i32 to index
    %c0_223 = arith.constant 0 : index
    %c0_224 = arith.constant 0 : index
    %614 = vector.load %arg5[%613, %c0_223, %c0_224] : memref<16x8x128xf32, #tpu.memory_space<vmem>>, vector<1x8x128xf32>
    %615 = vector.shape_cast %614 : vector<1x8x128xf32> to vector<8x128xf32>
    %616 = vector.shape_cast %612 : vector<8x128xf32> to vector<1x8x128xf32>
    tpu.vector_store %arg5[%613, %c0_223, %c0_224], %616 {strides = array<i32>} : memref<16x8x128xf32, #tpu.memory_space<vmem>>, vector<1x8x128xf32>,
    %c16_i32_225 = arith.constant 16 : i32
    %617 = arith.muli %arg0, %c16_i32_225 : i32
    %618 = arith.addi %617, %c13_i32 : i32
    %c15_i32_226 = arith.constant 15 : i32
    %619 = arith.cmpi eq, %618, %c15_i32_226 : i32
    %620 = arith.extui %619 : i1 to i32
    %c0_i32_227 = arith.constant 0 : i32
    %621 = arith.cmpi ne, %620, %c0_i32_227 : i32
    scf.if %621 {
      %c0_266 = arith.constant 0 : index
      %c0_267 = arith.constant 0 : index
      %712 = vector.load %arg6[%c0_266, %c0_267] : memref<8x128xf32, #tpu.memory_space<vmem>>, vector<8x128xf32>
      tpu.vector_store %arg6[%c0_266, %c0_267], %610 {strides = array<i32>} : memref<8x128xf32, #tpu.memory_space<vmem>>, vector<8x128xf32>,
    } else {
    }
    %c14_i32 = arith.constant 14 : i32
    %622 = arith.index_cast %c14_i32 : i32 to index
    %c0_228 = arith.constant 0 : index
    %c0_229 = arith.constant 0 : index
    %623 = vector.load %arg1[%622, %c0_228, %c0_229] : memref<16x8x8xf32, #tpu.memory_space<vmem>>, vector<1x8x8xf32>
    %624 = vector.shape_cast %623 : vector<1x8x8xf32> to vector<8x8xf32>
    %c0_230 = arith.constant 0 : index
    %c0_231 = arith.constant 0 : index
    %625 = vector.load %arg2[%c0_230, %c0_231] : memref<8x512xf32, #tpu.memory_space<vmem>>, vector<8x512xf32>
    %cst_232 = arith.constant dense<0.000000e+00> : vector<8x512xf32>
    %626 = tpu.matmul %624, %625, %cst_232 {dimension_numbers = #tpu.dot_dimension_numbers<[1], [0], [0], [1], [0, 0, 1, 1], [], []>} : vector<8x8xf32>, vector<8x512xf32>, vector<8x512xf32> -> vector<8x512xf32>
    %627 = vector.broadcast %3 : vector<1x512xf32> to vector<8x512xf32>
    %628 = arith.addf %626, %627 : vector<8x512xf32>
    %c0_233 = arith.constant 0 : index
    %c0_234 = arith.constant 0 : index
    %629 = vector.load %arg3[%c0_233, %c0_234] : memref<128x512xf32, #tpu.memory_space<vmem>>, vector<128x512xf32>
    %cst_235 = arith.constant dense<0.000000e+00> : vector<8x512xf32>
    %630 = tpu.matmul %612, %629, %cst_235 {dimension_numbers = #tpu.dot_dimension_numbers<[1], [0], [0], [1], [0, 0, 1, 1], [], []>} : vector<8x128xf32>, vector<128x512xf32>, vector<8x512xf32> -> vector<8x512xf32>
    %631 = arith.addf %628, %630 : vector<8x512xf32>
    %632 = vector.extract_strided_slice %631 {offsets = [0, 0], sizes = [8, 128], strides = [1, 1]} : vector<8x512xf32> to vector<8x128xf32>
    %633 = arith.negf %632 : vector<8x128xf32>
    %634 = math.exp %633 : vector<8x128xf32>
    %cst_236 = arith.constant 1.000000e+00 : f32
    %635 = vector.broadcast %cst_236 : f32 to vector<8x128xf32>
    %636 = arith.addf %635, %634 : vector<8x128xf32>
    %637 = arith.divf %635, %636 : vector<8x128xf32>
    %638 = vector.extract_strided_slice %631 {offsets = [0, 128], sizes = [8, 128], strides = [1, 1]} : vector<8x512xf32> to vector<8x128xf32>
    %639 = arith.negf %638 : vector<8x128xf32>
    %640 = math.exp %639 : vector<8x128xf32>
    %cst_237 = arith.constant 1.000000e+00 : f32
    %641 = vector.broadcast %cst_237 : f32 to vector<8x128xf32>
    %642 = arith.addf %641, %640 : vector<8x128xf32>
    %643 = arith.divf %641, %642 : vector<8x128xf32>
    %644 = vector.extract_strided_slice %631 {offsets = [0, 256], sizes = [8, 128], strides = [1, 1]} : vector<8x512xf32> to vector<8x128xf32>
    %645 = math.tanh %644 : vector<8x128xf32>
    %646 = vector.extract_strided_slice %631 {offsets = [0, 384], sizes = [8, 128], strides = [1, 1]} : vector<8x512xf32> to vector<8x128xf32>
    %647 = arith.negf %646 : vector<8x128xf32>
    %648 = math.exp %647 : vector<8x128xf32>
    %cst_238 = arith.constant 1.000000e+00 : f32
    %649 = vector.broadcast %cst_238 : f32 to vector<8x128xf32>
    %650 = arith.addf %649, %648 : vector<8x128xf32>
    %651 = arith.divf %649, %650 : vector<8x128xf32>
    %652 = arith.mulf %643, %610 : vector<8x128xf32>
    %653 = arith.mulf %637, %645 : vector<8x128xf32>
    %654 = arith.addf %652, %653 : vector<8x128xf32>
    %655 = math.tanh %654 : vector<8x128xf32>
    %656 = arith.mulf %651, %655 : vector<8x128xf32>
    %657 = arith.index_cast %c14_i32 : i32 to index
    %c0_239 = arith.constant 0 : index
    %c0_240 = arith.constant 0 : index
    %658 = vector.load %arg5[%657, %c0_239, %c0_240] : memref<16x8x128xf32, #tpu.memory_space<vmem>>, vector<1x8x128xf32>
    %659 = vector.shape_cast %658 : vector<1x8x128xf32> to vector<8x128xf32>
    %660 = vector.shape_cast %656 : vector<8x128xf32> to vector<1x8x128xf32>
    tpu.vector_store %arg5[%657, %c0_239, %c0_240], %660 {strides = array<i32>} : memref<16x8x128xf32, #tpu.memory_space<vmem>>, vector<1x8x128xf32>,
    %c16_i32_241 = arith.constant 16 : i32
    %661 = arith.muli %arg0, %c16_i32_241 : i32
    %662 = arith.addi %661, %c14_i32 : i32
    %c15_i32_242 = arith.constant 15 : i32
    %663 = arith.cmpi eq, %662, %c15_i32_242 : i32
    %664 = arith.extui %663 : i1 to i32
    %c0_i32_243 = arith.constant 0 : i32
    %665 = arith.cmpi ne, %664, %c0_i32_243 : i32
    scf.if %665 {
      %c0_266 = arith.constant 0 : index
      %c0_267 = arith.constant 0 : index
      %712 = vector.load %arg6[%c0_266, %c0_267] : memref<8x128xf32, #tpu.memory_space<vmem>>, vector<8x128xf32>
      tpu.vector_store %arg6[%c0_266, %c0_267], %654 {strides = array<i32>} : memref<8x128xf32, #tpu.memory_space<vmem>>, vector<8x128xf32>,
    } else {
    }
    %c15_i32_244 = arith.constant 15 : i32
    %666 = arith.index_cast %c15_i32_244 : i32 to index
    %c0_245 = arith.constant 0 : index
    %c0_246 = arith.constant 0 : index
    %667 = vector.load %arg1[%666, %c0_245, %c0_246] : memref<16x8x8xf32, #tpu.memory_space<vmem>>, vector<1x8x8xf32>
    %668 = vector.shape_cast %667 : vector<1x8x8xf32> to vector<8x8xf32>
    %c0_247 = arith.constant 0 : index
    %c0_248 = arith.constant 0 : index
    %669 = vector.load %arg2[%c0_247, %c0_248] : memref<8x512xf32, #tpu.memory_space<vmem>>, vector<8x512xf32>
    %cst_249 = arith.constant dense<0.000000e+00> : vector<8x512xf32>
    %670 = tpu.matmul %668, %669, %cst_249 {dimension_numbers = #tpu.dot_dimension_numbers<[1], [0], [0], [1], [0, 0, 1, 1], [], []>} : vector<8x8xf32>, vector<8x512xf32>, vector<8x512xf32> -> vector<8x512xf32>
    %671 = vector.broadcast %3 : vector<1x512xf32> to vector<8x512xf32>
    %672 = arith.addf %670, %671 : vector<8x512xf32>
    %c0_250 = arith.constant 0 : index
    %c0_251 = arith.constant 0 : index
    %673 = vector.load %arg3[%c0_250, %c0_251] : memref<128x512xf32, #tpu.memory_space<vmem>>, vector<128x512xf32>
    %cst_252 = arith.constant dense<0.000000e+00> : vector<8x512xf32>
    %674 = tpu.matmul %656, %673, %cst_252 {dimension_numbers = #tpu.dot_dimension_numbers<[1], [0], [0], [1], [0, 0, 1, 1], [], []>} : vector<8x128xf32>, vector<128x512xf32>, vector<8x512xf32> -> vector<8x512xf32>
    %675 = arith.addf %672, %674 : vector<8x512xf32>
    %676 = vector.extract_strided_slice %675 {offsets = [0, 0], sizes = [8, 128], strides = [1, 1]} : vector<8x512xf32> to vector<8x128xf32>
    %677 = arith.negf %676 : vector<8x128xf32>
    %678 = math.exp %677 : vector<8x128xf32>
    %cst_253 = arith.constant 1.000000e+00 : f32
    %679 = vector.broadcast %cst_253 : f32 to vector<8x128xf32>
    %680 = arith.addf %679, %678 : vector<8x128xf32>
    %681 = arith.divf %679, %680 : vector<8x128xf32>
    %682 = vector.extract_strided_slice %675 {offsets = [0, 128], sizes = [8, 128], strides = [1, 1]} : vector<8x512xf32> to vector<8x128xf32>
    %683 = arith.negf %682 : vector<8x128xf32>
    %684 = math.exp %683 : vector<8x128xf32>
    %cst_254 = arith.constant 1.000000e+00 : f32
    %685 = vector.broadcast %cst_254 : f32 to vector<8x128xf32>
    %686 = arith.addf %685, %684 : vector<8x128xf32>
    %687 = arith.divf %685, %686 : vector<8x128xf32>
    %688 = vector.extract_strided_slice %675 {offsets = [0, 256], sizes = [8, 128], strides = [1, 1]} : vector<8x512xf32> to vector<8x128xf32>
    %689 = math.tanh %688 : vector<8x128xf32>
    %690 = vector.extract_strided_slice %675 {offsets = [0, 384], sizes = [8, 128], strides = [1, 1]} : vector<8x512xf32> to vector<8x128xf32>
    %691 = arith.negf %690 : vector<8x128xf32>
    %692 = math.exp %691 : vector<8x128xf32>
    %cst_255 = arith.constant 1.000000e+00 : f32
    %693 = vector.broadcast %cst_255 : f32 to vector<8x128xf32>
    %694 = arith.addf %693, %692 : vector<8x128xf32>
    %695 = arith.divf %693, %694 : vector<8x128xf32>
    %696 = arith.mulf %687, %654 : vector<8x128xf32>
    %697 = arith.mulf %681, %689 : vector<8x128xf32>
    %698 = arith.addf %696, %697 : vector<8x128xf32>
    %699 = math.tanh %698 : vector<8x128xf32>
    %700 = arith.mulf %695, %699 : vector<8x128xf32>
    %701 = arith.index_cast %c15_i32_244 : i32 to index
    %c0_256 = arith.constant 0 : index
    %c0_257 = arith.constant 0 : index
    %702 = vector.load %arg5[%701, %c0_256, %c0_257] : memref<16x8x128xf32, #tpu.memory_space<vmem>>, vector<1x8x128xf32>
    %703 = vector.shape_cast %702 : vector<1x8x128xf32> to vector<8x128xf32>
    %704 = vector.shape_cast %700 : vector<8x128xf32> to vector<1x8x128xf32>
    tpu.vector_store %arg5[%701, %c0_256, %c0_257], %704 {strides = array<i32>} : memref<16x8x128xf32, #tpu.memory_space<vmem>>, vector<1x8x128xf32>,
    %c16_i32_258 = arith.constant 16 : i32
    %705 = arith.muli %arg0, %c16_i32_258 : i32
    %706 = arith.addi %705, %c15_i32_244 : i32
    %c15_i32_259 = arith.constant 15 : i32
    %707 = arith.cmpi eq, %706, %c15_i32_259 : i32
    %708 = arith.extui %707 : i1 to i32
    %c0_i32_260 = arith.constant 0 : i32
    %709 = arith.cmpi ne, %708, %c0_i32_260 : i32
    scf.if %709 {
      %c0_266 = arith.constant 0 : index
      %c0_267 = arith.constant 0 : index
      %712 = vector.load %arg6[%c0_266, %c0_267] : memref<8x128xf32, #tpu.memory_space<vmem>>, vector<8x128xf32>
      tpu.vector_store %arg6[%c0_266, %c0_267], %698 {strides = array<i32>} : memref<8x128xf32, #tpu.memory_space<vmem>>, vector<8x128xf32>,
    } else {
    }
    %c16_i32_261 = arith.constant 16 : i32
    %c0_262 = arith.constant 0 : index
    %c0_263 = arith.constant 0 : index
    %710 = vector.load %arg7[%c0_262, %c0_263] : memref<8x128xf32, #tpu.memory_space<vmem>>, vector<8x128xf32>
    tpu.vector_store %arg7[%c0_262, %c0_263], %700 {strides = array<i32>} : memref<8x128xf32, #tpu.memory_space<vmem>>, vector<8x128xf32>,
    %c0_264 = arith.constant 0 : index
    %c0_265 = arith.constant 0 : index
    %711 = vector.load %arg8[%c0_264, %c0_265] : memref<8x128xf32, #tpu.memory_space<vmem>>, vector<8x128xf32>
    tpu.vector_store %arg8[%c0_264, %c0_265], %698 {strides = array<i32>} : memref<8x128xf32, #tpu.memory_space<vmem>>, vector<8x128xf32>,
    return
  }
  func.func @transform_0(%arg0: i32) -> (i32, i32, i32) {
    %c0_i32 = arith.constant 0 : i32
    %c0_i32_0 = arith.constant 0 : i32
    %c0_i32_1 = arith.constant 0 : i32
    return %arg0, %c0_i32, %c0_i32_0 : i32, i32, i32
  }
  func.func @transform_1(%arg0: i32) -> (i32, i32) {
    %c0_i32 = arith.constant 0 : i32
    %c0_i32_0 = arith.constant 0 : i32
    %c0_i32_1 = arith.constant 0 : i32
    return %c0_i32, %c0_i32_0 : i32, i32
  }
  func.func @transform_2(%arg0: i32) -> (i32, i32) {
    %c0_i32 = arith.constant 0 : i32
    %c0_i32_0 = arith.constant 0 : i32
    %c0_i32_1 = arith.constant 0 : i32
    return %c0_i32, %c0_i32_0 : i32, i32
  }
  func.func @transform_3(%arg0: i32) -> (i32, i32) {
    %c0_i32 = arith.constant 0 : i32
    %c0_i32_0 = arith.constant 0 : i32
    %c0_i32_1 = arith.constant 0 : i32
    return %c0_i32, %c0_i32_0 : i32, i32
  }
  func.func @transform_4(%arg0: i32) -> (i32, i32, i32) {
    %c0_i32 = arith.constant 0 : i32
    %c0_i32_0 = arith.constant 0 : i32
    %c0_i32_1 = arith.constant 0 : i32
    return %arg0, %c0_i32, %c0_i32_0 : i32, i32, i32
  }
  func.func @transform_5(%arg0: i32) -> (i32, i32) {
    %c0_i32 = arith.constant 0 : i32
    %c0_i32_0 = arith.constant 0 : i32
    %c0_i32_1 = arith.constant 0 : i32
    return %c0_i32, %c0_i32_0 : i32, i32
  }
}

</mosaic_0001>

<llo_original>
// kernel: lstm_encoder_forward.1
$region0: #{lstm_encoder_forward.1}
  #allocation0 [shape = 'u32[]', space=smem, size = 0x4, offset = 0x4, fixed_abs, tag = 'smem constant byte address 0x4 - core index']
  #allocation1 [shape = 'u32[72,128]{1,0:T(1,128)}', space=vmem, size = 0x9000, scoped, tag = 'internal scratch']
  #allocation2 [shape = 'f32[8,128]{1,0:T(8,128)}', space=vmem, size = 0x1000, scoped, tag = 'scratch operand']
  #allocation3 [shape = 'f32[8,128]{1,0:T(8,128)}', space=vmem, size = 0x1000, scoped, tag = 'scratch operand']
  %s0 = inlined_call_operand.vmem [shape: f32[16,8,8], index: 0, kind: input, shape index: {}]
  %s1 = inlined_call_operand.vmem [shape: f32[8,512], index: 1, kind: input, shape index: {}]
  %s2 = inlined_call_operand.hbm [shape: f32[128,512], index: 2, kind: input, shape index: {}]
  %s3 = inlined_call_operand.vmem [shape: f32[1,512], index: 3, kind: input, shape index: {}]
  %s4 = inlined_call_operand.vmem [shape: f32[16,8,128], index: 4, kind: output, shape index: {0}]
  %s5 = inlined_call_operand.vmem [shape: f32[8,128], index: 5, kind: output, shape index: {1}]
  %6 = xla_tuple %s4, %s5
  %s7 = sld [smem:[#allocation0]]
  $region106: #{lstm_encoder_forward.1} parent=0
    _
  %s9 = ssub.s32 1, %s7
  %s10 = scalar_select 0, %s9, %s7
  $region1: #{lstm_encoder_forward.1} parent=0
    #allocation4 [shape = 'u8[262144]{0}', space=vmem, size = 0x40000, scoped, tag = 'input window, operand 2, single buffered']
    #allocation5 [shape = 's32[1]{0}', space=sflag, size = 0x4, scoped, tag = 'scoped memory for lstm_encoder_forward.1']
    %11 = vsyncpa [#allocation5], 0
    // Predicated region
    $region2: #{lstm_encoder_forward.1} parent=1 // pred_check
      _
    $region3: #{lstm_encoder_forward.1} parent=1 // pred_check_branch
      %13 = sbr.rel (0) target = $region5
    $region4: #{lstm_encoder_forward.1} parent=1 // pred_region
      _
    $region5: #{lstm_encoder_forward.1} parent=1 // pred_fallthru
      _
    // Predicated region
    $region6: #{lstm_encoder_forward.1} parent=1 // pred_check
      _
    $region7: #{lstm_encoder_forward.1} parent=1 // pred_check_branch
      %15 = sbr.rel (0) target = $region9
    $region8: #{lstm_encoder_forward.1} parent=1 // pred_region
      _
    $region9: #{lstm_encoder_forward.1} parent=1 // pred_fallthru
      _
    // Predicated region
    $region10: #{lstm_encoder_forward.1} parent=1 // pred_check
      _
    $region11: #{lstm_encoder_forward.1} parent=1 // pred_check_branch
      %17 = sbr.rel (0) target = $region13
    $region12: #{lstm_encoder_forward.1} parent=1 // pred_region
      %19 = vsyncadd [#allocation5], 0
      %s20 = sshll.u32 %s2, 4
      %s21 = int_to_ptr.hbm [resolvable:$true] %s20
      %s22 = sshll.u32 [#allocation4], 4
      %s23 = int_to_ptr.vmem [resolvable:$true] %s22
      %28 = dma.hbm_to_vmem [thread:$0]  %s21, 8192, %s23, [#allocation5], 512, 512, 32
    $region13: #{lstm_encoder_forward.1} parent=1 // pred_fallthru
      _
    // Predicated region
    $region14: #{lstm_encoder_forward.1} parent=1 // pred_check
      _
    $region15: #{lstm_encoder_forward.1} parent=1 // pred_check_branch
      %30 = sbr.rel (0) target = $region17
    $region16: #{lstm_encoder_forward.1} parent=1 // pred_region
      _
    $region17: #{lstm_encoder_forward.1} parent=1 // pred_fallthru
      _
    // Predicated region
    $region18: #{lstm_encoder_forward.1} parent=1 // pred_check
      _
    $region19: #{lstm_encoder_forward.1} parent=1 // pred_check_branch
      %32 = sbr.rel (0) target = $region21
    $region20: #{lstm_encoder_forward.1} parent=1 // pred_region
      %34 = dma.done [#allocation5], 8192
    $region21: #{lstm_encoder_forward.1} parent=1 // pred_fallthru
      _
    %p35 = scmp.eq.s32.totalorder 0, 0
    // Predicated region
    $region22: #{lstm_encoder_forward.1} parent=1 // pred_check
      %p36 = pneg %p35
    $region23: #{lstm_encoder_forward.1} parent=1 // pred_check_branch
      %38 = sbr.rel (%p36) target = $region25
    $region24: #{lstm_encoder_forward.1} parent=1 // pred_region
      %39 = vst [vmem:[#allocation2] sm:$0xff] 0.0
      %40 = vst [vmem:[#allocation3] sm:$0xff] 0.0
    $region25: #{lstm_encoder_forward.1} parent=1 // pred_fallthru
      _
    %v41 = vld [vmem:[%s3] sm:$0xf]
    %v42 = vld [vmem:[#allocation2] sm:$0xff]
    %v43 = vld [vmem:[#allocation3] sm:$0xff]
    %v44 = vld [vmem:[%s0] sm:$0xff]
    %v45 = vld [vmem:[%s1] sm:$0xff]
    %v46 = vld [vmem:[%s1 + $0x8] sm:$0xff]
    %v47 = vld [vmem:[%s1 + $0x10] sm:$0xff]
    %v48 = vld [vmem:[%s1 + $0x18] sm:$0xff]
    %v50 = vperm.slane %v41, 0
    %v51 = vperm.slane %v41, 1
    %v52 = vperm.slane %v41, 2
    %v53 = vperm.slane %v41, 3
    %vm58 = vcmask 64512
    %v60 = vsel %vm58, %v44, 0
    %62 = vmatpush.msra.mxu0 0.0
    %63 = vmatpush.msra.mxu0 0.0
    %64 = vmatpush.msra.mxu0 0.0
    %65 = vmatpush.msra.mxu0 0.0
    %66 = vmatpush.msra.mxu0 0.0
    %67 = vmatpush.msra.mxu0 0.0
    %68 = vmatpush.msra.mxu0 0.0
    %69 = vmatpush.msra.mxu0 0.0
    %70 = vmatpush.msra.mxu0 0.0
    %71 = vmatpush.msra.mxu0 0.0
    %72 = vmatpush.msra.mxu0 0.0
    %73 = vmatpush.msra.mxu0 0.0
    %74 = vmatpush.msra.mxu0 0.0
    %75 = vmatpush.msra.mxu0 0.0
    %76 = vmatpush.msra.mxu0 0.0
    %77 = vmatpush.msra.mxu0 %v45
    %78 = vmatmul.f32.gmra.mxu0 %v60
    %v79 = vpop.f32.mrf.mxu0
    %v80 = vadd.f32 %v50, %v79
    %81 = vdwg.mxu0
    %82 = vmatpush.msra.mxu0 0.0
    %83 = vmatpush.msra.mxu0 0.0
    %84 = vmatpush.msra.mxu0 0.0
    %85 = vmatpush.msra.mxu0 0.0
    %86 = vmatpush.msra.mxu0 0.0
    %87 = vmatpush.msra.mxu0 0.0
    %88 = vmatpush.msra.mxu0 0.0
    %89 = vmatpush.msra.mxu0 0.0
    %90 = vmatpush.msra.mxu0 0.0
    %91 = vmatpush.msra.mxu0 0.0
    %92 = vmatpush.msra.mxu0 0.0
    %93 = vmatpush.msra.mxu0 0.0
    %94 = vmatpush.msra.mxu0 0.0
    %95 = vmatpush.msra.mxu0 0.0
    %96 = vmatpush.msra.mxu0 0.0
    %97 = vmatpush.msra.mxu0 %v46
    %98 = vmatmul.f32.gmra.mxu0 %v60
    %v99 = vpop.f32.mrf.mxu0
    %v100 = vadd.f32 %v51, %v99
    %101 = vdwg.mxu0
    %102 = vmatpush.msra.mxu0 0.0
    %103 = vmatpush.msra.mxu0 0.0
    %104 = vmatpush.msra.mxu0 0.0
    %105 = vmatpush.msra.mxu0 0.0
    %106 = vmatpush.msra.mxu0 0.0
    %107 = vmatpush.msra.mxu0 0.0
    %108 = vmatpush.msra.mxu0 0.0
    %109 = vmatpush.msra.mxu0 0.0
    %110 = vmatpush.msra.mxu0 0.0
    %111 = vmatpush.msra.mxu0 0.0
    %112 = vmatpush.msra.mxu0 0.0
    %113 = vmatpush.msra.mxu0 0.0
    %114 = vmatpush.msra.mxu0 0.0
    %115 = vmatpush.msra.mxu0 0.0
    %116 = vmatpush.msra.mxu0 0.0
    %117 = vmatpush.msra.mxu0 %v47
    %118 = vmatmul.f32.gmra.mxu0 %v60
    %v119 = vpop.f32.mrf.mxu0
    %v120 = vadd.f32 %v52, %v119
    %121 = vdwg.mxu0
    %122 = vmatpush.msra.mxu0 0.0
    %123 = vmatpush.msra.mxu0 0.0
    %124 = vmatpush.msra.mxu0 0.0
    %125 = vmatpush.msra.mxu0 0.0
    %126 = vmatpush.msra.mxu0 0.0
    %127 = vmatpush.msra.mxu0 0.0
    %128 = vmatpush.msra.mxu0 0.0
    %129 = vmatpush.msra.mxu0 0.0
    %130 = vmatpush.msra.mxu0 0.0
    %131 = vmatpush.msra.mxu0 0.0
    %132 = vmatpush.msra.mxu0 0.0
    %133 = vmatpush.msra.mxu0 0.0
    %134 = vmatpush.msra.mxu0 0.0
    %135 = vmatpush.msra.mxu0 0.0
    %136 = vmatpush.msra.mxu0 0.0
    %137 = vmatpush.msra.mxu0 %v48
    %138 = vmatmul.f32.gmra.mxu0 %v60
    %v139 = vpop.f32.mrf.mxu0
    %v140 = vadd.f32 %v53, %v139
    %141 = vdwg.mxu0
    %v142 = vld [vmem:[#allocation4] sm:$0xff]
    %v143 = vld [vmem:[#allocation4 + $0x8] sm:$0xff]
    %v144 = vld [vmem:[#allocation4 + $0x10] sm:$0xff]
    %v145 = vld [vmem:[#allocation4 + $0x18] sm:$0xff]
    %v146 = vld [vmem:[#allocation4 + $0x20] sm:$0xff]
    %v147 = vld [vmem:[#allocation4 + $0x28] sm:$0xff]
    %v148 = vld [vmem:[#allocation4 + $0x30] sm:$0xff]
    %v149 = vld [vmem:[#allocation4 + $0x38] sm:$0xff]
    %v150 = vld [vmem:[#allocation4 + $0x40] sm:$0xff]
    %v151 = vld [vmem:[#allocation4 + $0x48] sm:$0xff]
    %v152 = vld [vmem:[#allocation4 + $0x50] sm:$0xff]
    %v153 = vld [vmem:[#allocation4 + $0x58] sm:$0xff]
    %v154 = vld [vmem:[#allocation4 + $0x60] sm:$0xff]
    %v155 = vld [vmem:[#allocation4 + $0x68] sm:$0xff]
    %v156 = vld [vmem:[#allocation4 + $0x70] sm:$0xff]
    %v157 = vld [vmem:[#allocation4 + $0x78] sm:$0xff]
    %v158 = vld [vmem:[#allocation4 + $0x80] sm:$0xff]
    %v159 = vld [vmem:[#allocation4 + $0x88] sm:$0xff]
    %v160 = vld [vmem:[#allocation4 + $0x90] sm:$0xff]
    %v161 = vld [vmem:[#allocation4 + $0x98] sm:$0xff]
    %v162 = vld [vmem:[#allocation4 + $0xa0] sm:$0xff]
    %v163 = vld [vmem:[#allocation4 + $0xa8] sm:$0xff]
    %v164 = vld [vmem:[#allocation4 + $0xb0] sm:$0xff]
    %v165 = vld [vmem:[#allocation4 + $0xb8] sm:$0xff]
    %v166 = vld [vmem:[#allocation4 + $0xc0] sm:$0xff]
    %v167 = vld [vmem:[#allocation4 + $0xc8] sm:$0xff]
    %v168 = vld [vmem:[#allocation4 + $0xd0] sm:$0xff]
    %v169 = vld [vmem:[#allocation4 + $0xd8] sm:$0xff]
    %v170 = vld [vmem:[#allocation4 + $0xe0] sm:$0xff]
    %v171 = vld [vmem:[#allocation4 + $0xe8] sm:$0xff]
    %v172 = vld [vmem:[#allocation4 + $0xf0] sm:$0xff]
    %v173 = vld [vmem:[#allocation4 + $0xf8] sm:$0xff]
    %v174 = vld [vmem:[#allocation4 + $0x100] sm:$0xff]
    %v175 = vld [vmem:[#allocation4 + $0x108] sm:$0xff]
    %v176 = vld [vmem:[#allocation4 + $0x110] sm:$0xff]
    %v177 = vld [vmem:[#allocation4 + $0x118] sm:$0xff]
    %v178 = vld [vmem:[#allocation4 + $0x120] sm:$0xff]
    %v179 = vld [vmem:[#allocation4 + $0x128] sm:$0xff]
    %v180 = vld [vmem:[#allocation4 + $0x130] sm:$0xff]
    %v181 = vld [vmem:[#allocation4 + $0x138] sm:$0xff]
    %v182 = vld [vmem:[#allocation4 + $0x140] sm:$0xff]
    %v183 = vld [vmem:[#allocation4 + $0x148] sm:$0xff]
    %v184 = vld [vmem:[#allocation4 + $0x150] sm:$0xff]
    %v185 = vld [vmem:[#allocation4 + $0x158] sm:$0xff]
    %v186 = vld [vmem:[#allocation4 + $0x160] sm:$0xff]
    %v187 = vld [vmem:[#allocation4 + $0x168] sm:$0xff]
    %v188 = vld [vmem:[#allocation4 + $0x170] sm:$0xff]
    %v189 = vld [vmem:[#allocation4 + $0x178] sm:$0xff]
    %v190 = vld [vmem:[#allocation4 + $0x180] sm:$0xff]
    %v191 = vld [vmem:[#allocation4 + $0x188] sm:$0xff]
    %v192 = vld [vmem:[#allocation4 + $0x190] sm:$0xff]
    %v193 = vld [vmem:[#allocation4 + $0x198] sm:$0xff]
    %v194 = vld [vmem:[#allocation4 + $0x1a0] sm:$0xff]
    %v195 = vld [vmem:[#allocation4 + $0x1a8] sm:$0xff]
    %v196 = vld [vmem:[#allocation4 + $0x1b0] sm:$0xff]
    %v197 = vld [vmem:[#allocation4 + $0x1b8] sm:$0xff]
    %v198 = vld [vmem:[#allocation4 + $0x1c0] sm:$0xff]
    %v199 = vld [vmem:[#allocation4 + $0x1c8] sm:$0xff]
    %v200 = vld [vmem:[#allocation4 + $0x1d0] sm:$0xff]
    %v201 = vld [vmem:[#allocation4 + $0x1d8] sm:$0xff]
    %v202 = vld [vmem:[#allocation4 + $0x1e0] sm:$0xff]
    %v203 = vld [vmem:[#allocation4 + $0x1e8] sm:$0xff]
    %v204 = vld [vmem:[#allocation4 + $0x1f0] sm:$0xff]
    %v205 = vld [vmem:[#allocation4 + $0x1f8] sm:$0xff]
    %206 = vmatpush.msra.mxu0 %v202
    %207 = vmatpush.msra.mxu0 %v198
    %208 = vmatpush.msra.mxu0 %v194
    %209 = vmatpush.msra.mxu0 %v190
    %210 = vmatpush.msra.mxu0 %v186
    %211 = vmatpush.msra.mxu0 %v182
    %212 = vmatpush.msra.mxu0 %v178
    %213 = vmatpush.msra.mxu0 %v174
    %214 = vmatpush.msra.mxu0 %v170
    %215 = vmatpush.msra.mxu0 %v166
    %216 = vmatpush.msra.mxu0 %v162
    %217 = vmatpush.msra.mxu0 %v158
    %218 = vmatpush.msra.mxu0 %v154
    %219 = vmatpush.msra.mxu0 %v150
    %220 = vmatpush.msra.mxu0 %v146
    %221 = vmatpush.msra.mxu0 %v142
    %222 = vmatmul.f32.gmra.mxu0 %v42
    %v223 = vpop.f32.mrf.mxu0
    %v224 = vadd.f32 0.0, %v223
    %225 = vdwg.mxu0
    %226 = vmatpush.msra.mxu0 %v203
    %227 = vmatpush.msra.mxu0 %v199
    %228 = vmatpush.msra.mxu0 %v195
    %229 = vmatpush.msra.mxu0 %v191
    %230 = vmatpush.msra.mxu0 %v187
    %231 = vmatpush.msra.mxu0 %v183
    %232 = vmatpush.msra.mxu0 %v179
    %233 = vmatpush.msra.mxu0 %v175
    %234 = vmatpush.msra.mxu0 %v171
    %235 = vmatpush.msra.mxu0 %v167
    %236 = vmatpush.msra.mxu0 %v163
    %237 = vmatpush.msra.mxu0 %v159
    %238 = vmatpush.msra.mxu0 %v155
    %239 = vmatpush.msra.mxu0 %v151
    %240 = vmatpush.msra.mxu0 %v147
    %241 = vmatpush.msra.mxu0 %v143
    %242 = vmatmul.f32.gmra.mxu0 %v42
    %v243 = vpop.f32.mrf.mxu0
    %v244 = vadd.f32 0.0, %v243
    %245 = vdwg.mxu0
    %246 = vmatpush.msra.mxu0 %v204
    %247 = vmatpush.msra.mxu0 %v200
    %248 = vmatpush.msra.mxu0 %v196
    %249 = vmatpush.msra.mxu0 %v192
    %250 = vmatpush.msra.mxu0 %v188
    %251 = vmatpush.msra.mxu0 %v184
    %252 = vmatpush.msra.mxu0 %v180
    %253 = vmatpush.msra.mxu0 %v176
    %254 = vmatpush.msra.mxu0 %v172
    %255 = vmatpush.msra.mxu0 %v168
    %256 = vmatpush.msra.mxu0 %v164
    %257 = vmatpush.msra.mxu0 %v160
    %258 = vmatpush.msra.mxu0 %v156
    %259 = vmatpush.msra.mxu0 %v152
    %260 = vmatpush.msra.mxu0 %v148
    %261 = vmatpush.msra.mxu0 %v144
    %262 = vmatmul.f32.gmra.mxu0 %v42
    %v263 = vpop.f32.mrf.mxu0
    %v264 = vadd.f32 0.0, %v263
    %265 = vdwg.mxu0
    %266 = vmatpush.msra.mxu0 %v205
    %267 = vmatpush.msra.mxu0 %v201
    %268 = vmatpush.msra.mxu0 %v197
    %269 = vmatpush.msra.mxu0 %v193
    %270 = vmatpush.msra.mxu0 %v189
    %271 = vmatpush.msra.mxu0 %v185
    %272 = vmatpush.msra.mxu0 %v181
    %273 = vmatpush.msra.mxu0 %v177
    %274 = vmatpush.msra.mxu0 %v173
    %275 = vmatpush.msra.mxu0 %v169
    %276 = vmatpush.msra.mxu0 %v165
    %277 = vmatpush.msra.mxu0 %v161
    %278 = vmatpush.msra.mxu0 %v157
    %279 = vmatpush.msra.mxu0 %v153
    %280 = vmatpush.msra.mxu0 %v149
    %281 = vmatpush.msra.mxu0 %v145
    %282 = vmatmul.f32.gmra.mxu0 %v42
    %v283 = vpop.f32.mrf.mxu0
    %v284 = vadd.f32 0.0, %v283
    %285 = vdwg.mxu0
    %v286 = vadd.f32 %v80, %v224
    %v287 = vadd.f32 %v100, %v244
    %v288 = vadd.f32 %v120, %v264
    %v289 = vadd.f32 %v140, %v284
    %v290 = vxor.u32 %v286, 2147483648
    %v291 = vmul.f32 %v290, 1.442695
    %v292 = vpow.pop %v291
    %v293 = vadd.f32 %v292, 1.0
    %v294 = vrcp.pop %v293
    %v295 = vmul.f32 %v293, %v294
    %v296 = vsub.f32 1.0, %v295
    %v297 = vmul.f32 %v294, %v296
    %v298 = vadd.f32 %v294, %v297
    %vm299 = vweird.f32 %v293
    %vm300 = vweird.f32 %v294
    %vm301 = vmor %vm299, %vm300
    %v302 = vsel %vm301, %v294, %v298
    %v303 = vand.u32 2147483647, %v293
    %vm304 = vcmp.eq.f32.partialorder %v303, 8.507059e+37
    %v305 = vand.u32 %v293, 2147483648
    %v306 = vor.u32 1.1754944e-38, %v305
    %v307 = vsel %vm304, %v306, %v302
    %v308 = vmul.f32 1.0, %v307
    %v309 = vxor.u32 %v287, 2147483648
    %v310 = vmul.f32 %v309, 1.442695
    %v311 = vpow.pop %v310
    %v312 = vadd.f32 %v311, 1.0
    %v313 = vrcp.pop %v312
    %v314 = vmul.f32 %v312, %v313
    %v315 = vsub.f32 1.0, %v314
    %v316 = vmul.f32 %v313, %v315
    %v317 = vadd.f32 %v313, %v316
    %vm318 = vweird.f32 %v312
    %vm319 = vweird.f32 %v313
    %vm320 = vmor %vm318, %vm319
    %v321 = vsel %vm320, %v313, %v317
    %v322 = vand.u32 2147483647, %v312
    %vm323 = vcmp.eq.f32.partialorder %v322, 8.507059e+37
    %v324 = vand.u32 %v312, 2147483648
    %v325 = vor.u32 1.1754944e-38, %v324
    %v326 = vsel %vm323, %v325, %v321
    %v327 = vmul.f32 1.0, %v326
    %v328 = vtanh.pop %v288
    %v329 = vxor.u32 %v289, 2147483648
    %v330 = vmul.f32 %v329, 1.442695
    %v331 = vpow.pop %v330
    %v332 = vadd.f32 %v331, 1.0
    %v333 = vrcp.pop %v332
    %v334 = vmul.f32 %v332, %v333
    %v335 = vsub.f32 1.0, %v334
    %v336 = vmul.f32 %v333, %v335
    %v337 = vadd.f32 %v333, %v336
    %vm338 = vweird.f32 %v332
    %vm339 = vweird.f32 %v333
    %vm340 = vmor %vm338, %vm339
    %v341 = vsel %vm340, %v333, %v337
    %v342 = vand.u32 2147483647, %v332
    %vm343 = vcmp.eq.f32.partialorder %v342, 8.507059e+37
    %v344 = vand.u32 %v332, 2147483648
    %v345 = vor.u32 1.1754944e-38, %v344
    %v346 = vsel %vm343, %v345, %v341
    %v347 = vmul.f32 1.0, %v346
    %v348 = vmul.f32 %v327, %v43
    %v349 = vmul.f32 %v308, %v328
    %v350 = vadd.f32 %v348, %v349
    %v351 = vtanh.pop %v350
    %v352 = vmul.f32 %v347, %v351
    %353 = vst [vmem:[%s4] sm:$0xff] %v352
    %s354 = smul.u32 0, 16
    %p355 = scmp.eq.s32.totalorder %s354, 15
    // Predicated region
    $region26: #{lstm_encoder_forward.1} parent=1 // pred_check
      %p356 = pneg %p355
    $region27: #{lstm_encoder_forward.1} parent=1 // pred_check_branch
      %358 = sbr.rel (%p356) target = $region29
    $region28: #{lstm_encoder_forward.1} parent=1 // pred_region
      %359 = vst [vmem:[%s5] sm:$0xff] %v350
    $region29: #{lstm_encoder_forward.1} parent=1 // pred_fallthru
      _
    %s360 = scalar_lea.vmem %s0, 8
    %v361 = vld [vmem:[%s360] sm:$0xff]
    %v362 = vld [vmem:[%s1] sm:$0xff]
    %v363 = vld [vmem:[%s1 + $0x8] sm:$0xff]
    %v364 = vld [vmem:[%s1 + $0x10] sm:$0xff]
    %v365 = vld [vmem:[%s1 + $0x18] sm:$0xff]
    %v367 = vsel %vm58, %v361, 0
    %369 = vmatpush.msra.mxu0 0.0
    %370 = vmatpush.msra.mxu0 0.0
    %371 = vmatpush.msra.mxu0 0.0
    %372 = vmatpush.msra.mxu0 0.0
    %373 = vmatpush.msra.mxu0 0.0
    %374 = vmatpush.msra.mxu0 0.0
    %375 = vmatpush.msra.mxu0 0.0
    %376 = vmatpush.msra.mxu0 0.0
    %377 = vmatpush.msra.mxu0 0.0
    %378 = vmatpush.msra.mxu0 0.0
    %379 = vmatpush.msra.mxu0 0.0
    %380 = vmatpush.msra.mxu0 0.0
    %381 = vmatpush.msra.mxu0 0.0
    %382 = vmatpush.msra.mxu0 0.0
    %383 = vmatpush.msra.mxu0 0.0
    %384 = vmatpush.msra.mxu0 %v362
    %385 = vmatmul.f32.gmra.mxu0 %v367
    %v386 = vpop.f32.mrf.mxu0
    %v387 = vadd.f32 %v50, %v386
    %388 = vdwg.mxu0
    %389 = vmatpush.msra.mxu0 0.0
    %390 = vmatpush.msra.mxu0 0.0
    %391 = vmatpush.msra.mxu0 0.0
    %392 = vmatpush.msra.mxu0 0.0
    %393 = vmatpush.msra.mxu0 0.0
    %394 = vmatpush.msra.mxu0 0.0
    %395 = vmatpush.msra.mxu0 0.0
    %396 = vmatpush.msra.mxu0 0.0
    %397 = vmatpush.msra.mxu0 0.0
    %398 = vmatpush.msra.mxu0 0.0
    %399 = vmatpush.msra.mxu0 0.0
    %400 = vmatpush.msra.mxu0 0.0
    %401 = vmatpush.msra.mxu0 0.0
    %402 = vmatpush.msra.mxu0 0.0
    %403 = vmatpush.msra.mxu0 0.0
    %404 = vmatpush.msra.mxu0 %v363
    %405 = vmatmul.f32.gmra.mxu0 %v367
    %v406 = vpop.f32.mrf.mxu0
    %v407 = vadd.f32 %v51, %v406
    %408 = vdwg.mxu0
    %409 = vmatpush.msra.mxu0 0.0
    %410 = vmatpush.msra.mxu0 0.0
    %411 = vmatpush.msra.mxu0 0.0
    %412 = vmatpush.msra.mxu0 0.0
    %413 = vmatpush.msra.mxu0 0.0
    %414 = vmatpush.msra.mxu0 0.0
    %415 = vmatpush.msra.mxu0 0.0
    %416 = vmatpush.msra.mxu0 0.0
    %417 = vmatpush.msra.mxu0 0.0
    %418 = vmatpush.msra.mxu0 0.0
    %419 = vmatpush.msra.mxu0 0.0
    %420 = vmatpush.msra.mxu0 0.0
    %421 = vmatpush.msra.mxu0 0.0
    %422 = vmatpush.msra.mxu0 0.0
    %423 = vmatpush.msra.mxu0 0.0
    %424 = vmatpush.msra.mxu0 %v364
    %425 = vmatmul.f32.gmra.mxu0 %v367
    %v426 = vpop.f32.mrf.mxu0
    %v427 = vadd.f32 %v52, %v426
    %428 = vdwg.mxu0
    %429 = vmatpush.msra.mxu0 0.0
    %430 = vmatpush.msra.mxu0 0.0
    %431 = vmatpush.msra.mxu0 0.0
    %432 = vmatpush.msra.mxu0 0.0
    %433 = vmatpush.msra.mxu0 0.0
    %434 = vmatpush.msra.mxu0 0.0
    %435 = vmatpush.msra.mxu0 0.0
    %436 = vmatpush.msra.mxu0 0.0
    %437 = vmatpush.msra.mxu0 0.0
    %438 = vmatpush.msra.mxu0 0.0
    %439 = vmatpush.msra.mxu0 0.0
    %440 = vmatpush.msra.mxu0 0.0
    %441 = vmatpush.msra.mxu0 0.0
    %442 = vmatpush.msra.mxu0 0.0
    %443 = vmatpush.msra.mxu0 0.0
    %444 = vmatpush.msra.mxu0 %v365
    %445 = vmatmul.f32.gmra.mxu0 %v367
    %v446 = vpop.f32.mrf.mxu0
    %v447 = vadd.f32 %v53, %v446
    %448 = vdwg.mxu0
    %v449 = vld [vmem:[#allocation4] sm:$0xff]
    %v450 = vld [vmem:[#allocation4 + $0x8] sm:$0xff]
    %v451 = vld [vmem:[#allocation4 + $0x10] sm:$0xff]
    %v452 = vld [vmem:[#allocation4 + $0x18] sm:$0xff]
    %v453 = vld [vmem:[#allocation4 + $0x20] sm:$0xff]
    %v454 = vld [vmem:[#allocation4 + $0x28] sm:$0xff]
    %v455 = vld [vmem:[#allocation4 + $0x30] sm:$0xff]
    %v456 = vld [vmem:[#allocation4 + $0x38] sm:$0xff]
    %v457 = vld [vmem:[#allocation4 + $0x40] sm:$0xff]
    %v458 = vld [vmem:[#allocation4 + $0x48] sm:$0xff]
    %v459 = vld [vmem:[#allocation4 + $0x50] sm:$0xff]
    %v460 = vld [vmem:[#allocation4 + $0x58] sm:$0xff]
    %v461 = vld [vmem:[#allocation4 + $0x60] sm:$0xff]
    %v462 = vld [vmem:[#allocation4 + $0x68] sm:$0xff]
    %v463 = vld [vmem:[#allocation4 + $0x70] sm:$0xff]
    %v464 = vld [vmem:[#allocation4 + $0x78] sm:$0xff]
    %v465 = vld [vmem:[#allocation4 + $0x80] sm:$0xff]
    %v466 = vld [vmem:[#allocation4 + $0x88] sm:$0xff]
    %v467 = vld [vmem:[#allocation4 + $0x90] sm:$0xff]
    %v468 = vld [vmem:[#allocation4 + $0x98] sm:$0xff]
    %v469 = vld [vmem:[#allocation4 + $0xa0] sm:$0xff]
    %v470 = vld [vmem:[#allocation4 + $0xa8] sm:$0xff]
    %v471 = vld [vmem:[#allocation4 + $0xb0] sm:$0xff]
    %v472 = vld [vmem:[#allocation4 + $0xb8] sm:$0xff]
    %v473 = vld [vmem:[#allocation4 + $0xc0] sm:$0xff]
    %v474 = vld [vmem:[#allocation4 + $0xc8] sm:$0xff]
    %v475 = vld [vmem:[#allocation4 + $0xd0] sm:$0xff]
    %v476 = vld [vmem:[#allocation4 + $0xd8] sm:$0xff]
    %v477 = vld [vmem:[#allocation4 + $0xe0] sm:$0xff]
    %v478 = vld [vmem:[#allocation4 + $0xe8] sm:$0xff]
    %v479 = vld [vmem:[#allocation4 + $0xf0] sm:$0xff]
    %v480 = vld [vmem:[#allocation4 + $0xf8] sm:$0xff]
    %v481 = vld [vmem:[#allocation4 + $0x100] sm:$0xff]
    %v482 = vld [vmem:[#allocation4 + $0x108] sm:$0xff]
    %v483 = vld [vmem:[#allocation4 + $0x110] sm:$0xff]
    %v484 = vld [vmem:[#allocation4 + $0x118] sm:$0xff]
    %v485 = vld [vmem:[#allocation4 + $0x120] sm:$0xff]
    %v486 = vld [vmem:[#allocation4 + $0x128] sm:$0xff]
    %v487 = vld [vmem:[#allocation4 + $0x130] sm:$0xff]
    %v488 = vld [vmem:[#allocation4 + $0x138] sm:$0xff]
    %v489 = vld [vmem:[#allocation4 + $0x140] sm:$0xff]
    %v490 = vld [vmem:[#allocation4 + $0x148] sm:$0xff]
    %v491 = vld [vmem:[#allocation4 + $0x150] sm:$0xff]
    %v492 = vld [vmem:[#allocation4 + $0x158] sm:$0xff]
    %v493 = vld [vmem:[#allocation4 + $0x160] sm:$0xff]
    %v494 = vld [vmem:[#allocation4 + $0x168] sm:$0xff]
    %v495 = vld [vmem:[#allocation4 + $0x170] sm:$0xff]
    %v496 = vld [vmem:[#allocation4 + $0x178] sm:$0xff]
    %v497 = vld [vmem:[#allocation4 + $0x180] sm:$0xff]
    %v498 = vld [vmem:[#allocation4 + $0x188] sm:$0xff]
    %v499 = vld [vmem:[#allocation4 + $0x190] sm:$0xff]
    %v500 = vld [vmem:[#allocation4 + $0x198] sm:$0xff]
    %v501 = vld [vmem:[#allocation4 + $0x1a0] sm:$0xff]
    %v502 = vld [vmem:[#allocation4 + $0x1a8] sm:$0xff]
    %v503 = vld [vmem:[#allocation4 + $0x1b0] sm:$0xff]
    %v504 = vld [vmem:[#allocation4 + $0x1b8] sm:$0xff]
    %v505 = vld [vmem:[#allocation4 + $0x1c0] sm:$0xff]
    %v506 = vld [vmem:[#allocation4 + $0x1c8] sm:$0xff]
    %v507 = vld [vmem:[#allocation4 + $0x1d0] sm:$0xff]
    %v508 = vld [vmem:[#allocation4 + $0x1d8] sm:$0xff]
    %v509 = vld [vmem:[#allocation4 + $0x1e0] sm:$0xff]
    %v510 = vld [vmem:[#allocation4 + $0x1e8] sm:$0xff]
    %v511 = vld [vmem:[#allocation4 + $0x1f0] sm:$0xff]
    %v512 = vld [vmem:[#allocation4 + $0x1f8] sm:$0xff]
    %513 = vmatpush.msra.mxu0 %v509
    %514 = vmatpush.msra.mxu0 %v505
    %515 = vmatpush.msra.mxu0 %v501
    %516 = vmatpush.msra.mxu0 %v497
    %517 = vmatpush.msra.mxu0 %v493
    %518 = vmatpush.msra.mxu0 %v489
    %519 = vmatpush.msra.mxu0 %v485
    %520 = vmatpush.msra.mxu0 %v481
    %521 = vmatpush.msra.mxu0 %v477
    %522 = vmatpush.msra.mxu0 %v473
    %523 = vmatpush.msra.mxu0 %v469
    %524 = vmatpush.msra.mxu0 %v465
    %525 = vmatpush.msra.mxu0 %v461
    %526 = vmatpush.msra.mxu0 %v457
    %527 = vmatpush.msra.mxu0 %v453
    %528 = vmatpush.msra.mxu0 %v449
    %529 = vmatmul.f32.gmra.mxu0 %v352
    %v530 = vpop.f32.mrf.mxu0
    %v531 = vadd.f32 0.0, %v530
    %532 = vdwg.mxu0
    %533 = vmatpush.msra.mxu0 %v510
    %534 = vmatpush.msra.mxu0 %v506
    %535 = vmatpush.msra.mxu0 %v502
    %536 = vmatpush.msra.mxu0 %v498
    %537 = vmatpush.msra.mxu0 %v494
    %538 = vmatpush.msra.mxu0 %v490
    %539 = vmatpush.msra.mxu0 %v486
    %540 = vmatpush.msra.mxu0 %v482
    %541 = vmatpush.msra.mxu0 %v478
    %542 = vmatpush.msra.mxu0 %v474
    %543 = vmatpush.msra.mxu0 %v470
    %544 = vmatpush.msra.mxu0 %v466
    %545 = vmatpush.msra.mxu0 %v462
    %546 = vmatpush.msra.mxu0 %v458
    %547 = vmatpush.msra.mxu0 %v454
    %548 = vmatpush.msra.mxu0 %v450
    %549 = vmatmul.f32.gmra.mxu0 %v352
    %v550 = vpop.f32.mrf.mxu0
    %v551 = vadd.f32 0.0, %v550
    %552 = vdwg.mxu0
    %553 = vmatpush.msra.mxu0 %v511
    %554 = vmatpush.msra.mxu0 %v507
    %555 = vmatpush.msra.mxu0 %v503
    %556 = vmatpush.msra.mxu0 %v499
    %557 = vmatpush.msra.mxu0 %v495
    %558 = vmatpush.msra.mxu0 %v491
    %559 = vmatpush.msra.mxu0 %v487
    %560 = vmatpush.msra.mxu0 %v483
    %561 = vmatpush.msra.mxu0 %v479
    %562 = vmatpush.msra.mxu0 %v475
    %563 = vmatpush.msra.mxu0 %v471
    %564 = vmatpush.msra.mxu0 %v467
    %565 = vmatpush.msra.mxu0 %v463
    %566 = vmatpush.msra.mxu0 %v459
    %567 = vmatpush.msra.mxu0 %v455
    %568 = vmatpush.msra.mxu0 %v451
    %569 = vmatmul.f32.gmra.mxu0 %v352
    %v570 = vpop.f32.mrf.mxu0
    %v571 = vadd.f32 0.0, %v570
    %572 = vdwg.mxu0
    %573 = vmatpush.msra.mxu0 %v512
    %574 = vmatpush.msra.mxu0 %v508
    %575 = vmatpush.msra.mxu0 %v504
    %576 = vmatpush.msra.mxu0 %v500
    %577 = vmatpush.msra.mxu0 %v496
    %578 = vmatpush.msra.mxu0 %v492
    %579 = vmatpush.msra.mxu0 %v488
    %580 = vmatpush.msra.mxu0 %v484
    %581 = vmatpush.msra.mxu0 %v480
    %582 = vmatpush.msra.mxu0 %v476
    %583 = vmatpush.msra.mxu0 %v472
    %584 = vmatpush.msra.mxu0 %v468
    %585 = vmatpush.msra.mxu0 %v464
    %586 = vmatpush.msra.mxu0 %v460
    %587 = vmatpush.msra.mxu0 %v456
    %588 = vmatpush.msra.mxu0 %v452
    %589 = vmatmul.f32.gmra.mxu0 %v352
    %v590 = vpop.f32.mrf.mxu0
    %v591 = vadd.f32 0.0, %v590
    %592 = vdwg.mxu0
    %v593 = vadd.f32 %v387, %v531
    %v594 = vadd.f32 %v407, %v551
    %v595 = vadd.f32 %v427, %v571
    %v596 = vadd.f32 %v447, %v591
    %v597 = vxor.u32 %v593, 2147483648
    %v598 = vmul.f32 %v597, 1.442695
    %v599 = vpow.pop %v598
    %v600 = vadd.f32 %v599, 1.0
    %v601 = vrcp.pop %v600
    %v602 = vmul.f32 %v600, %v601
    %v603 = vsub.f32 1.0, %v602
    %v604 = vmul.f32 %v601, %v603
    %v605 = vadd.f32 %v601, %v604
    %vm606 = vweird.f32 %v600
    %vm607 = vweird.f32 %v601
    %vm608 = vmor %vm606, %vm607
    %v609 = vsel %vm608, %v601, %v605
    %v610 = vand.u32 2147483647, %v600
    %vm611 = vcmp.eq.f32.partialorder %v610, 8.507059e+37
    %v612 = vand.u32 %v600, 2147483648
    %v613 = vor.u32 1.1754944e-38, %v612
    %v614 = vsel %vm611, %v613, %v609
    %v615 = vmul.f32 1.0, %v614
    %v616 = vxor.u32 %v594, 2147483648
    %v617 = vmul.f32 %v616, 1.442695
    %v618 = vpow.pop %v617
    %v619 = vadd.f32 %v618, 1.0
    %v620 = vrcp.pop %v619
    %v621 = vmul.f32 %v619, %v620
    %v622 = vsub.f32 1.0, %v621
    %v623 = vmul.f32 %v620, %v622
    %v624 = vadd.f32 %v620, %v623
    %vm625 = vweird.f32 %v619
    %vm626 = vweird.f32 %v620
    %vm627 = vmor %vm625, %vm626
    %v628 = vsel %vm627, %v620, %v624
    %v629 = vand.u32 2147483647, %v619
    %vm630 = vcmp.eq.f32.partialorder %v629, 8.507059e+37
    %v631 = vand.u32 %v619, 2147483648
    %v632 = vor.u32 1.1754944e-38, %v631
    %v633 = vsel %vm630, %v632, %v628
    %v634 = vmul.f32 1.0, %v633
    %v635 = vtanh.pop %v595
    %v636 = vxor.u32 %v596, 2147483648
    %v637 = vmul.f32 %v636, 1.442695
    %v638 = vpow.pop %v637
    %v639 = vadd.f32 %v638, 1.0
    %v640 = vrcp.pop %v639
    %v641 = vmul.f32 %v639, %v640
    %v642 = vsub.f32 1.0, %v641
    %v643 = vmul.f32 %v640, %v642
    %v644 = vadd.f32 %v640, %v643
    %vm645 = vweird.f32 %v639
    %vm646 = vweird.f32 %v640
    %vm647 = vmor %vm645, %vm646
    %v648 = vsel %vm647, %v640, %v644
    %v649 = vand.u32 2147483647, %v639
    %vm650 = vcmp.eq.f32.partialorder %v649, 8.507059e+37
    %v651 = vand.u32 %v639, 2147483648
    %v652 = vor.u32 1.1754944e-38, %v651
    %v653 = vsel %vm650, %v652, %v648
    %v654 = vmul.f32 1.0, %v653
    %v655 = vmul.f32 %v634, %v350
    %v656 = vmul.f32 %v615, %v635
    %v657 = vadd.f32 %v655, %v656
    %v658 = vtanh.pop %v657
    %v659 = vmul.f32 %v654, %v658
    %s660 = scalar_lea.vmem %s4, 8
    %661 = vst [vmem:[%s660] sm:$0xff] %v659
    %s662 = sadd.s32 %s354, 1
    %p663 = scmp.eq.s32.totalorder %s662, 15
    // Predicated region
    $region30: #{lstm_encoder_forward.1} parent=1 // pred_check
      %p664 = pneg %p663
    $region31: #{lstm_encoder_forward.1} parent=1 // pred_check_branch
      %666 = sbr.rel (%p664) target = $region33
    $region32: #{lstm_encoder_forward.1} parent=1 // pred_region
      %667 = vst [vmem:[%s5] sm:$0xff] %v657
    $region33: #{lstm_encoder_forward.1} parent=1 // pred_fallthru
      _
    %s668 = scalar_lea.vmem %s0, 16
    %v669 = vld [vmem:[%s668] sm:$0xff]
    %v670 = vld [vmem:[%s1] sm:$0xff]
    %v671 = vld [vmem:[%s1 + $0x8] sm:$0xff]
    %v672 = vld [vmem:[%s1 + $0x10] sm:$0xff]
    %v673 = vld [vmem:[%s1 + $0x18] sm:$0xff]
    %v675 = vsel %vm58, %v669, 0
    %677 = vmatpush.msra.mxu0 0.0
    %678 = vmatpush.msra.mxu0 0.0
    %679 = vmatpush.msra.mxu0 0.0
    %680 = vmatpush.msra.mxu0 0.0
    %681 = vmatpush.msra.mxu0 0.0
    %682 = vmatpush.msra.mxu0 0.0
    %683 = vmatpush.msra.mxu0 0.0
    %684 = vmatpush.msra.mxu0 0.0
    %685 = vmatpush.msra.mxu0 0.0
    %686 = vmatpush.msra.mxu0 0.0
    %687 = vmatpush.msra.mxu0 0.0
    %688 = vmatpush.msra.mxu0 0.0
    %689 = vmatpush.msra.mxu0 0.0
    %690 = vmatpush.msra.mxu0 0.0
    %691 = vmatpush.msra.mxu0 0.0
    %692 = vmatpush.msra.mxu0 %v670
    %693 = vmatmul.f32.gmra.mxu0 %v675
    %v694 = vpop.f32.mrf.mxu0
    %v695 = vadd.f32 %v50, %v694
    %696 = vdwg.mxu0
    %697 = vmatpush.msra.mxu0 0.0
    %698 = vmatpush.msra.mxu0 0.0
    %699 = vmatpush.msra.mxu0 0.0
    %700 = vmatpush.msra.mxu0 0.0
    %701 = vmatpush.msra.mxu0 0.0
    %702 = vmatpush.msra.mxu0 0.0
    %703 = vmatpush.msra.mxu0 0.0
    %704 = vmatpush.msra.mxu0 0.0
    %705 = vmatpush.msra.mxu0 0.0
    %706 = vmatpush.msra.mxu0 0.0
    %707 = vmatpush.msra.mxu0 0.0
    %708 = vmatpush.msra.mxu0 0.0
    %709 = vmatpush.msra.mxu0 0.0
    %710 = vmatpush.msra.mxu0 0.0
    %711 = vmatpush.msra.mxu0 0.0
    %712 = vmatpush.msra.mxu0 %v671
    %713 = vmatmul.f32.gmra.mxu0 %v675
    %v714 = vpop.f32.mrf.mxu0
    %v715 = vadd.f32 %v51, %v714
    %716 = vdwg.mxu0
    %717 = vmatpush.msra.mxu0 0.0
    %718 = vmatpush.msra.mxu0 0.0
    %719 = vmatpush.msra.mxu0 0.0
    %720 = vmatpush.msra.mxu0 0.0
    %721 = vmatpush.msra.mxu0 0.0
    %722 = vmatpush.msra.mxu0 0.0
    %723 = vmatpush.msra.mxu0 0.0
    %724 = vmatpush.msra.mxu0 0.0
    %725 = vmatpush.msra.mxu0 0.0
    %726 = vmatpush.msra.mxu0 0.0
    %727 = vmatpush.msra.mxu0 0.0
    %728 = vmatpush.msra.mxu0 0.0
    %729 = vmatpush.msra.mxu0 0.0
    %730 = vmatpush.msra.mxu0 0.0
    %731 = vmatpush.msra.mxu0 0.0
    %732 = vmatpush.msra.mxu0 %v672
    %733 = vmatmul.f32.gmra.mxu0 %v675
    %v734 = vpop.f32.mrf.mxu0
    %v735 = vadd.f32 %v52, %v734
    %736 = vdwg.mxu0
    %737 = vmatpush.msra.mxu0 0.0
    %738 = vmatpush.msra.mxu0 0.0
    %739 = vmatpush.msra.mxu0 0.0
    %740 = vmatpush.msra.mxu0 0.0
    %741 = vmatpush.msra.mxu0 0.0
    %742 = vmatpush.msra.mxu0 0.0
    %743 = vmatpush.msra.mxu0 0.0
    %744 = vmatpush.msra.mxu0 0.0
    %745 = vmatpush.msra.mxu0 0.0
    %746 = vmatpush.msra.mxu0 0.0
    %747 = vmatpush.msra.mxu0 0.0
    %748 = vmatpush.msra.mxu0 0.0
    %749 = vmatpush.msra.mxu0 0.0
    %750 = vmatpush.msra.mxu0 0.0
    %751 = vmatpush.msra.mxu0 0.0
    %752 = vmatpush.msra.mxu0 %v673
    %753 = vmatmul.f32.gmra.mxu0 %v675
    %v754 = vpop.f32.mrf.mxu0
    %v755 = vadd.f32 %v53, %v754
    %756 = vdwg.mxu0
    %v757 = vld [vmem:[#allocation4] sm:$0xff]
    %v758 = vld [vmem:[#allocation4 + $0x8] sm:$0xff]
    %v759 = vld [vmem:[#allocation4 + $0x10] sm:$0xff]
    %v760 = vld [vmem:[#allocation4 + $0x18] sm:$0xff]
    %v761 = vld [vmem:[#allocation4 + $0x20] sm:$0xff]
    %v762 = vld [vmem:[#allocation4 + $0x28] sm:$0xff]
    %v763 = vld [vmem:[#allocation4 + $0x30] sm:$0xff]
    %v764 = vld [vmem:[#allocation4 + $0x38] sm:$0xff]
    %v765 = vld [vmem:[#allocation4 + $0x40] sm:$0xff]
    %v766 = vld [vmem:[#allocation4 + $0x48] sm:$0xff]
    %v767 = vld [vmem:[#allocation4 + $0x50] sm:$0xff]
    %v768 = vld [vmem:[#allocation4 + $0x58] sm:$0xff]
    %v769 = vld [vmem:[#allocation4 + $0x60] sm:$0xff]
    %v770 = vld [vmem:[#allocation4 + $0x68] sm:$0xff]
    %v771 = vld [vmem:[#allocation4 + $0x70] sm:$0xff]
    %v772 = vld [vmem:[#allocation4 + $0x78] sm:$0xff]
    %v773 = vld [vmem:[#allocation4 + $0x80] sm:$0xff]
    %v774 = vld [vmem:[#allocation4 + $0x88] sm:$0xff]
    %v775 = vld [vmem:[#allocation4 + $0x90] sm:$0xff]
    %v776 = vld [vmem:[#allocation4 + $0x98] sm:$0xff]
    %v777 = vld [vmem:[#allocation4 + $0xa0] sm:$0xff]
    %v778 = vld [vmem:[#allocation4 + $0xa8] sm:$0xff]
    %v779 = vld [vmem:[#allocation4 + $0xb0] sm:$0xff]
    %v780 = vld [vmem:[#allocation4 + $0xb8] sm:$0xff]
    %v781 = vld [vmem:[#allocation4 + $0xc0] sm:$0xff]
    %v782 = vld [vmem:[#allocation4 + $0xc8] sm:$0xff]
    %v783 = vld [vmem:[#allocation4 + $0xd0] sm:$0xff]
    %v784 = vld [vmem:[#allocation4 + $0xd8] sm:$0xff]
    %v785 = vld [vmem:[#allocation4 + $0xe0] sm:$0xff]
    %v786 = vld [vmem:[#allocation4 + $0xe8] sm:$0xff]
    %v787 = vld [vmem:[#allocation4 + $0xf0] sm:$0xff]
    %v788 = vld [vmem:[#allocation4 + $0xf8] sm:$0xff]
    %v789 = vld [vmem:[#allocation4 + $0x100] sm:$0xff]
    %v790 = vld [vmem:[#allocation4 + $0x108] sm:$0xff]
    %v791 = vld [vmem:[#allocation4 + $0x110] sm:$0xff]
    %v792 = vld [vmem:[#allocation4 + $0x118] sm:$0xff]
    %v793 = vld [vmem:[#allocation4 + $0x120] sm:$0xff]
    %v794 = vld [vmem:[#allocation4 + $0x128] sm:$0xff]
    %v795 = vld [vmem:[#allocation4 + $0x130] sm:$0xff]
    %v796 = vld [vmem:[#allocation4 + $0x138] sm:$0xff]
    %v797 = vld [vmem:[#allocation4 + $0x140] sm:$0xff]
    %v798 = vld [vmem:[#allocation4 + $0x148] sm:$0xff]
    %v799 = vld [vmem:[#allocation4 + $0x150] sm:$0xff]
    %v800 = vld [vmem:[#allocation4 + $0x158] sm:$0xff]
    %v801 = vld [vmem:[#allocation4 + $0x160] sm:$0xff]
    %v802 = vld [vmem:[#allocation4 + $0x168] sm:$0xff]
    %v803 = vld [vmem:[#allocation4 + $0x170] sm:$0xff]
    %v804 = vld [vmem:[#allocation4 + $0x178] sm:$0xff]
    %v805 = vld [vmem:[#allocation4 + $0x180] sm:$0xff]
    %v806 = vld [vmem:[#allocation4 + $0x188] sm:$0xff]
    %v807 = vld [vmem:[#allocation4 + $0x190] sm:$0xff]
    %v808 = vld [vmem:[#allocation4 + $0x198] sm:$0xff]
    %v809 = vld [vmem:[#allocation4 + $0x1a0] sm:$0xff]
    %v810 = vld [vmem:[#allocation4 + $0x1a8] sm:$0xff]
    %v811 = vld [vmem:[#allocation4 + $0x1b0] sm:$0xff]
    %v812 = vld [vmem:[#allocation4 + $0x1b8] sm:$0xff]
    %v813 = vld [vmem:[#allocation4 + $0x1c0] sm:$0xff]
    %v814 = vld [vmem:[#allocation4 + $0x1c8] sm:$0xff]
    %v815 = vld [vmem:[#allocation4 + $0x1d0] sm:$0xff]
    %v816 = vld [vmem:[#allocation4 + $0x1d8] sm:$0xff]
    %v817 = vld [vmem:[#allocation4 + $0x1e0] sm:$0xff]
    %v818 = vld [vmem:[#allocation4 + $0x1e8] sm:$0xff]
    %v819 = vld [vmem:[#allocation4 + $0x1f0] sm:$0xff]
    %v820 = vld [vmem:[#allocation4 + $0x1f8] sm:$0xff]
    %821 = vmatpush.msra.mxu0 %v817
    %822 = vmatpush.msra.mxu0 %v813
    %823 = vmatpush.msra.mxu0 %v809
    %824 = vmatpush.msra.mxu0 %v805
    %825 = vmatpush.msra.mxu0 %v801
    %826 = vmatpush.msra.mxu0 %v797
    %827 = vmatpush.msra.mxu0 %v793
    %828 = vmatpush.msra.mxu0 %v789
    %829 = vmatpush.msra.mxu0 %v785
    %830 = vmatpush.msra.mxu0 %v781
    %831 = vmatpush.msra.mxu0 %v777
    %832 = vmatpush.msra.mxu0 %v773
    %833 = vmatpush.msra.mxu0 %v769
    %834 = vmatpush.msra.mxu0 %v765
    %835 = vmatpush.msra.mxu0 %v761
    %836 = vmatpush.msra.mxu0 %v757
    %837 = vmatmul.f32.gmra.mxu0 %v659
    %v838 = vpop.f32.mrf.mxu0
    %v839 = vadd.f32 0.0, %v838
    %840 = vdwg.mxu0
    %841 = vmatpush.msra.mxu0 %v818
    %842 = vmatpush.msra.mxu0 %v814
    %843 = vmatpush.msra.mxu0 %v810
    %844 = vmatpush.msra.mxu0 %v806
    %845 = vmatpush.msra.mxu0 %v802
    %846 = vmatpush.msra.mxu0 %v798
    %847 = vmatpush.msra.mxu0 %v794
    %848 = vmatpush.msra.mxu0 %v790
    %849 = vmatpush.msra.mxu0 %v786
    %850 = vmatpush.msra.mxu0 %v782
    %851 = vmatpush.msra.mxu0 %v778
    %852 = vmatpush.msra.mxu0 %v774
    %853 = vmatpush.msra.mxu0 %v770
    %854 = vmatpush.msra.mxu0 %v766
    %855 = vmatpush.msra.mxu0 %v762
    %856 = vmatpush.msra.mxu0 %v758
    %857 = vmatmul.f32.gmra.mxu0 %v659
    %v858 = vpop.f32.mrf.mxu0
    %v859 = vadd.f32 0.0, %v858
    %860 = vdwg.mxu0
    %861 = vmatpush.msra.mxu0 %v819
    %862 = vmatpush.msra.mxu0 %v815
    %863 = vmatpush.msra.mxu0 %v811
    %864 = vmatpush.msra.mxu0 %v807
    %865 = vmatpush.msra.mxu0 %v803
    %866 = vmatpush.msra.mxu0 %v799
    %867 = vmatpush.msra.mxu0 %v795
    %868 = vmatpush.msra.mxu0 %v791
    %869 = vmatpush.msra.mxu0 %v787
    %870 = vmatpush.msra.mxu0 %v783
    %871 = vmatpush.msra.mxu0 %v779
    %872 = vmatpush.msra.mxu0 %v775
    %873 = vmatpush.msra.mxu0 %v771
    %874 = vmatpush.msra.mxu0 %v767
    %875 = vmatpush.msra.mxu0 %v763
    %876 = vmatpush.msra.mxu0 %v759
    %877 = vmatmul.f32.gmra.mxu0 %v659
    %v878 = vpop.f32.mrf.mxu0
    %v879 = vadd.f32 0.0, %v878
    %880 = vdwg.mxu0
    %881 = vmatpush.msra.mxu0 %v820
    %882 = vmatpush.msra.mxu0 %v816
    %883 = vmatpush.msra.mxu0 %v812
    %884 = vmatpush.msra.mxu0 %v808
    %885 = vmatpush.msra.mxu0 %v804
    %886 = vmatpush.msra.mxu0 %v800
    %887 = vmatpush.msra.mxu0 %v796
    %888 = vmatpush.msra.mxu0 %v792
    %889 = vmatpush.msra.mxu0 %v788
    %890 = vmatpush.msra.mxu0 %v784
    %891 = vmatpush.msra.mxu0 %v780
    %892 = vmatpush.msra.mxu0 %v776
    %893 = vmatpush.msra.mxu0 %v772
    %894 = vmatpush.msra.mxu0 %v768
    %895 = vmatpush.msra.mxu0 %v764
    %896 = vmatpush.msra.mxu0 %v760
    %897 = vmatmul.f32.gmra.mxu0 %v659
    %v898 = vpop.f32.mrf.mxu0
    %v899 = vadd.f32 0.0, %v898
    %900 = vdwg.mxu0
    %v901 = vadd.f32 %v695, %v839
    %v902 = vadd.f32 %v715, %v859
    %v903 = vadd.f32 %v735, %v879
    %v904 = vadd.f32 %v755, %v899
    %v905 = vxor.u32 %v901, 2147483648
    %v906 = vmul.f32 %v905, 1.442695
    %v907 = vpow.pop %v906
    %v908 = vadd.f32 %v907, 1.0
    %v909 = vrcp.pop %v908
    %v910 = vmul.f32 %v908, %v909
    %v911 = vsub.f32 1.0, %v910
    %v912 = vmul.f32 %v909, %v911
    %v913 = vadd.f32 %v909, %v912
    %vm914 = vweird.f32 %v908
    %vm915 = vweird.f32 %v909
    %vm916 = vmor %vm914, %vm915
    %v917 = vsel %vm916, %v909, %v913
    %v918 = vand.u32 2147483647, %v908
    %vm919 = vcmp.eq.f32.partialorder %v918, 8.507059e+37
    %v920 = vand.u32 %v908, 2147483648
    %v921 = vor.u32 1.1754944e-38, %v920
    %v922 = vsel %vm919, %v921, %v917
    %v923 = vmul.f32 1.0, %v922
    %v924 = vxor.u32 %v902, 2147483648
    %v925 = vmul.f32 %v924, 1.442695
    %v926 = vpow.pop %v925
    %v927 = vadd.f32 %v926, 1.0
    %v928 = vrcp.pop %v927
    %v929 = vmul.f32 %v927, %v928
    %v930 = vsub.f32 1.0, %v929
    %v931 = vmul.f32 %v928, %v930
    %v932 = vadd.f32 %v928, %v931
    %vm933 = vweird.f32 %v927
    %vm934 = vweird.f32 %v928
    %vm935 = vmor %vm933, %vm934
    %v936 = vsel %vm935, %v928, %v932
    %v937 = vand.u32 2147483647, %v927
    %vm938 = vcmp.eq.f32.partialorder %v937, 8.507059e+37
    %v939 = vand.u32 %v927, 2147483648
    %v940 = vor.u32 1.1754944e-38, %v939
    %v941 = vsel %vm938, %v940, %v936
    %v942 = vmul.f32 1.0, %v941
    %v943 = vtanh.pop %v903
    %v944 = vxor.u32 %v904, 2147483648
    %v945 = vmul.f32 %v944, 1.442695
    %v946 = vpow.pop %v945
    %v947 = vadd.f32 %v946, 1.0
    %v948 = vrcp.pop %v947
    %v949 = vmul.f32 %v947, %v948
    %v950 = vsub.f32 1.0, %v949
    %v951 = vmul.f32 %v948, %v950
    %v952 = vadd.f32 %v948, %v951
    %vm953 = vweird.f32 %v947
    %vm954 = vweird.f32 %v948
    %vm955 = vmor %vm953, %vm954
    %v956 = vsel %vm955, %v948, %v952
    %v957 = vand.u32 2147483647, %v947
    %vm958 = vcmp.eq.f32.partialorder %v957, 8.507059e+37
    %v959 = vand.u32 %v947, 2147483648
    %v960 = vor.u32 1.1754944e-38, %v959
    %v961 = vsel %vm958, %v960, %v956
    %v962 = vmul.f32 1.0, %v961
    %v963 = vmul.f32 %v942, %v657
    %v964 = vmul.f32 %v923, %v943
    %v965 = vadd.f32 %v963, %v964
    %v966 = vtanh.pop %v965
    %v967 = vmul.f32 %v962, %v966
    %s968 = scalar_lea.vmem %s4, 16
    %969 = vst [vmem:[%s968] sm:$0xff] %v967
    %s970 = sadd.s32 %s354, 2
    %p971 = scmp.eq.s32.totalorder %s970, 15
    // Predicated region
    $region34: #{lstm_encoder_forward.1} parent=1 // pred_check
      %p972 = pneg %p971
    $region35: #{lstm_encoder_forward.1} parent=1 // pred_check_branch
      %974 = sbr.rel (%p972) target = $region37
    $region36: #{lstm_encoder_forward.1} parent=1 // pred_region
      %975 = vst [vmem:[%s5] sm:$0xff] %v965
    $region37: #{lstm_encoder_forward.1} parent=1 // pred_fallthru
      _
    %s976 = scalar_lea.vmem %s0, 24
    %v977 = vld [vmem:[%s976] sm:$0xff]
    %v978 = vld [vmem:[%s1] sm:$0xff]
    %v979 = vld [vmem:[%s1 + $0x8] sm:$0xff]
    %v980 = vld [vmem:[%s1 + $0x10] sm:$0xff]
    %v981 = vld [vmem:[%s1 + $0x18] sm:$0xff]
    %v983 = vsel %vm58, %v977, 0
    %985 = vmatpush.msra.mxu0 0.0
    %986 = vmatpush.msra.mxu0 0.0
    %987 = vmatpush.msra.mxu0 0.0
    %988 = vmatpush.msra.mxu0 0.0
    %989 = vmatpush.msra.mxu0 0.0
    %990 = vmatpush.msra.mxu0 0.0
    %991 = vmatpush.msra.mxu0 0.0
    %992 = vmatpush.msra.mxu0 0.0
    %993 = vmatpush.msra.mxu0 0.0
    %994 = vmatpush.msra.mxu0 0.0
    %995 = vmatpush.msra.mxu0 0.0
    %996 = vmatpush.msra.mxu0 0.0
    %997 = vmatpush.msra.mxu0 0.0
    %998 = vmatpush.msra.mxu0 0.0
    %999 = vmatpush.msra.mxu0 0.0
    %1000 = vmatpush.msra.mxu0 %v978
    %1001 = vmatmul.f32.gmra.mxu0 %v983
    %v1002 = vpop.f32.mrf.mxu0
    %v1003 = vadd.f32 %v50, %v1002
    %1004 = vdwg.mxu0
    %1005 = vmatpush.msra.mxu0 0.0
    %1006 = vmatpush.msra.mxu0 0.0
    %1007 = vmatpush.msra.mxu0 0.0
    %1008 = vmatpush.msra.mxu0 0.0
    %1009 = vmatpush.msra.mxu0 0.0
    %1010 = vmatpush.msra.mxu0 0.0
    %1011 = vmatpush.msra.mxu0 0.0
    %1012 = vmatpush.msra.mxu0 0.0
    %1013 = vmatpush.msra.mxu0 0.0
    %1014 = vmatpush.msra.mxu0 0.0
    %1015 = vmatpush.msra.mxu0 0.0
    %1016 = vmatpush.msra.mxu0 0.0
    %1017 = vmatpush.msra.mxu0 0.0
    %1018 = vmatpush.msra.mxu0 0.0
    %1019 = vmatpush.msra.mxu0 0.0
    %1020 = vmatpush.msra.mxu0 %v979
    %1021 = vmatmul.f32.gmra.mxu0 %v983
    %v1022 = vpop.f32.mrf.mxu0
    %v1023 = vadd.f32 %v51, %v1022
    %1024 = vdwg.mxu0
    %1025 = vmatpush.msra.mxu0 0.0
    %1026 = vmatpush.msra.mxu0 0.0
    %1027 = vmatpush.msra.mxu0 0.0
    %1028 = vmatpush.msra.mxu0 0.0
    %1029 = vmatpush.msra.mxu0 0.0
    %1030 = vmatpush.msra.mxu0 0.0
    %1031 = vmatpush.msra.mxu0 0.0
    %1032 = vmatpush.msra.mxu0 0.0
    %1033 = vmatpush.msra.mxu0 0.0
    %1034 = vmatpush.msra.mxu0 0.0
    %1035 = vmatpush.msra.mxu0 0.0
    %1036 = vmatpush.msra.mxu0 0.0
    %1037 = vmatpush.msra.mxu0 0.0
    %1038 = vmatpush.msra.mxu0 0.0
    %1039 = vmatpush.msra.mxu0 0.0
    %1040 = vmatpush.msra.mxu0 %v980
    %1041 = vmatmul.f32.gmra.mxu0 %v983
    %v1042 = vpop.f32.mrf.mxu0
    %v1043 = vadd.f32 %v52, %v1042
    %1044 = vdwg.mxu0
    %1045 = vmatpush.msra.mxu0 0.0
    %1046 = vmatpush.msra.mxu0 0.0
    %1047 = vmatpush.msra.mxu0 0.0
    %1048 = vmatpush.msra.mxu0 0.0
    %1049 = vmatpush.msra.mxu0 0.0
    %1050 = vmatpush.msra.mxu0 0.0
    %1051 = vmatpush.msra.mxu0 0.0
    %1052 = vmatpush.msra.mxu0 0.0
    %1053 = vmatpush.msra.mxu0 0.0
    %1054 = vmatpush.msra.mxu0 0.0
    %1055 = vmatpush.msra.mxu0 0.0
    %1056 = vmatpush.msra.mxu0 0.0
    %1057 = vmatpush.msra.mxu0 0.0
    %1058 = vmatpush.msra.mxu0 0.0
    %1059 = vmatpush.msra.mxu0 0.0
    %1060 = vmatpush.msra.mxu0 %v981
    %1061 = vmatmul.f32.gmra.mxu0 %v983
    %v1062 = vpop.f32.mrf.mxu0
    %v1063 = vadd.f32 %v53, %v1062
    %1064 = vdwg.mxu0
    %v1065 = vld [vmem:[#allocation4] sm:$0xff]
    %v1066 = vld [vmem:[#allocation4 + $0x8] sm:$0xff]
    %v1067 = vld [vmem:[#allocation4 + $0x10] sm:$0xff]
    %v1068 = vld [vmem:[#allocation4 + $0x18] sm:$0xff]
    %v1069 = vld [vmem:[#allocation4 + $0x20] sm:$0xff]
    %v1070 = vld [vmem:[#allocation4 + $0x28] sm:$0xff]
    %v1071 = vld [vmem:[#allocation4 + $0x30] sm:$0xff]
    %v1072 = vld [vmem:[#allocation4 + $0x38] sm:$0xff]
    %v1073 = vld [vmem:[#allocation4 + $0x40] sm:$0xff]
    %v1074 = vld [vmem:[#allocation4 + $0x48] sm:$0xff]
    %v1075 = vld [vmem:[#allocation4 + $0x50] sm:$0xff]
    %v1076 = vld [vmem:[#allocation4 + $0x58] sm:$0xff]
    %v1077 = vld [vmem:[#allocation4 + $0x60] sm:$0xff]
    %v1078 = vld [vmem:[#allocation4 + $0x68] sm:$0xff]
    %v1079 = vld [vmem:[#allocation4 + $0x70] sm:$0xff]
    %v1080 = vld [vmem:[#allocation4 + $0x78] sm:$0xff]
    %v1081 = vld [vmem:[#allocation4 + $0x80] sm:$0xff]
    %v1082 = vld [vmem:[#allocation4 + $0x88] sm:$0xff]
    %v1083 = vld [vmem:[#allocation4 + $0x90] sm:$0xff]
    %v1084 = vld [vmem:[#allocation4 + $0x98] sm:$0xff]
    %v1085 = vld [vmem:[#allocation4 + $0xa0] sm:$0xff]
    %v1086 = vld [vmem:[#allocation4 + $0xa8] sm:$0xff]
    %v1087 = vld [vmem:[#allocation4 + $0xb0] sm:$0xff]
    %v1088 = vld [vmem:[#allocation4 + $0xb8] sm:$0xff]
    %v1089 = vld [vmem:[#allocation4 + $0xc0] sm:$0xff]
    %v1090 = vld [vmem:[#allocation4 + $0xc8] sm:$0xff]
    %v1091 = vld [vmem:[#allocation4 + $0xd0] sm:$0xff]
    %v1092 = vld [vmem:[#allocation4 + $0xd8] sm:$0xff]
    %v1093 = vld [vmem:[#allocation4 + $0xe0] sm:$0xff]
    %v1094 = vld [vmem:[#allocation4 + $0xe8] sm:$0xff]
    %v1095 = vld [vmem:[#allocation4 + $0xf0] sm:$0xff]
    %v1096 = vld [vmem:[#allocation4 + $0xf8] sm:$0xff]
    %v1097 = vld [vmem:[#allocation4 + $0x100] sm:$0xff]
    %v1098 = vld [vmem:[#allocation4 + $0x108] sm:$0xff]
    %v1099 = vld [vmem:[#allocation4 + $0x110] sm:$0xff]
    %v1100 = vld [vmem:[#allocation4 + $0x118] sm:$0xff]
    %v1101 = vld [vmem:[#allocation4 + $0x120] sm:$0xff]
    %v1102 = vld [vmem:[#allocation4 + $0x128] sm:$0xff]
    %v1103 = vld [vmem:[#allocation4 + $0x130] sm:$0xff]
    %v1104 = vld [vmem:[#allocation4 + $0x138] sm:$0xff]
    %v1105 = vld [vmem:[#allocation4 + $0x140] sm:$0xff]
    %v1106 = vld [vmem:[#allocation4 + $0x148] sm:$0xff]
    %v1107 = vld [vmem:[#allocation4 + $0x150] sm:$0xff]
    %v1108 = vld [vmem:[#allocation4 + $0x158] sm:$0xff]
    %v1109 = vld [vmem:[#allocation4 + $0x160] sm:$0xff]
    %v1110 = vld [vmem:[#allocation4 + $0x168] sm:$0xff]
    %v1111 = vld [vmem:[#allocation4 + $0x170] sm:$0xff]
    %v1112 = vld [vmem:[#allocation4 + $0x178] sm:$0xff]
    %v1113 = vld [vmem:[#allocation4 + $0x180] sm:$0xff]
    %v1114 = vld [vmem:[#allocation4 + $0x188] sm:$0xff]
    %v1115 = vld [vmem:[#allocation4 + $0x190] sm:$0xff]
    %v1116 = vld [vmem:[#allocation4 + $0x198] sm:$0xff]
    %v1117 = vld [vmem:[#allocation4 + $0x1a0] sm:$0xff]
    %v1118 = vld [vmem:[#allocation4 + $0x1a8] sm:$0xff]
    %v1119 = vld [vmem:[#allocation4 + $0x1b0] sm:$0xff]
    %v1120 = vld [vmem:[#allocation4 + $0x1b8] sm:$0xff]
    %v1121 = vld [vmem:[#allocation4 + $0x1c0] sm:$0xff]
    %v1122 = vld [vmem:[#allocation4 + $0x1c8] sm:$0xff]
    %v1123 = vld [vmem:[#allocation4 + $0x1d0] sm:$0xff]
    %v1124 = vld [vmem:[#allocation4 + $0x1d8] sm:$0xff]
    %v1125 = vld [vmem:[#allocation4 + $0x1e0] sm:$0xff]
    %v1126 = vld [vmem:[#allocation4 + $0x1e8] sm:$0xff]
    %v1127 = vld [vmem:[#allocation4 + $0x1f0] sm:$0xff]
    %v1128 = vld [vmem:[#allocation4 + $0x1f8] sm:$0xff]
    %1129 = vmatpush.msra.mxu0 %v1125
    %1130 = vmatpush.msra.mxu0 %v1121
    %1131 = vmatpush.msra.mxu0 %v1117
    %1132 = vmatpush.msra.mxu0 %v1113
    %1133 = vmatpush.msra.mxu0 %v1109
    %1134 = vmatpush.msra.mxu0 %v1105
    %1135 = vmatpush.msra.mxu0 %v1101
    %1136 = vmatpush.msra.mxu0 %v1097
    %1137 = vmatpush.msra.mxu0 %v1093
    %1138 = vmatpush.msra.mxu0 %v1089
    %1139 = vmatpush.msra.mxu0 %v1085
    %1140 = vmatpush.msra.mxu0 %v1081
    %1141 = vmatpush.msra.mxu0 %v1077
    %1142 = vmatpush.msra.mxu0 %v1073
    %1143 = vmatpush.msra.mxu0 %v1069
    %1144 = vmatpush.msra.mxu0 %v1065
    %1145 = vmatmul.f32.gmra.mxu0 %v967
    %v1146 = vpop.f32.mrf.mxu0
    %v1147 = vadd.f32 0.0, %v1146
    %1148 = vdwg.mxu0
    %1149 = vmatpush.msra.mxu0 %v1126
    %1150 = vmatpush.msra.mxu0 %v1122
    %1151 = vmatpush.msra.mxu0 %v1118
    %1152 = vmatpush.msra.mxu0 %v1114
    %1153 = vmatpush.msra.mxu0 %v1110
    %1154 = vmatpush.msra.mxu0 %v1106
    %1155 = vmatpush.msra.mxu0 %v1102
    %1156 = vmatpush.msra.mxu0 %v1098
    %1157 = vmatpush.msra.mxu0 %v1094
    %1158 = vmatpush.msra.mxu0 %v1090
    %1159 = vmatpush.msra.mxu0 %v1086
    %1160 = vmatpush.msra.mxu0 %v1082
    %1161 = vmatpush.msra.mxu0 %v1078
    %1162 = vmatpush.msra.mxu0 %v1074
    %1163 = vmatpush.msra.mxu0 %v1070
    %1164 = vmatpush.msra.mxu0 %v1066
    %1165 = vmatmul.f32.gmra.mxu0 %v967
    %v1166 = vpop.f32.mrf.mxu0
    %v1167 = vadd.f32 0.0, %v1166
    %1168 = vdwg.mxu0
    %1169 = vmatpush.msra.mxu0 %v1127
    %1170 = vmatpush.msra.mxu0 %v1123
    %1171 = vmatpush.msra.mxu0 %v1119
    %1172 = vmatpush.msra.mxu0 %v1115
    %1173 = vmatpush.msra.mxu0 %v1111
    %1174 = vmatpush.msra.mxu0 %v1107
    %1175 = vmatpush.msra.mxu0 %v1103
    %1176 = vmatpush.msra.mxu0 %v1099
    %1177 = vmatpush.msra.mxu0 %v1095
    %1178 = vmatpush.msra.mxu0 %v1091
    %1179 = vmatpush.msra.mxu0 %v1087
    %1180 = vmatpush.msra.mxu0 %v1083
    %1181 = vmatpush.msra.mxu0 %v1079
    %1182 = vmatpush.msra.mxu0 %v1075
    %1183 = vmatpush.msra.mxu0 %v1071
    %1184 = vmatpush.msra.mxu0 %v1067
    %1185 = vmatmul.f32.gmra.mxu0 %v967
    %v1186 = vpop.f32.mrf.mxu0
    %v1187 = vadd.f32 0.0, %v1186
    %1188 = vdwg.mxu0
    %1189 = vmatpush.msra.mxu0 %v1128
    %1190 = vmatpush.msra.mxu0 %v1124
    %1191 = vmatpush.msra.mxu0 %v1120
    %1192 = vmatpush.msra.mxu0 %v1116
    %1193 = vmatpush.msra.mxu0 %v1112
    %1194 = vmatpush.msra.mxu0 %v1108
    %1195 = vmatpush.msra.mxu0 %v1104
    %1196 = vmatpush.msra.mxu0 %v1100
    %1197 = vmatpush.msra.mxu0 %v1096
    %1198 = vmatpush.msra.mxu0 %v1092
    %1199 = vmatpush.msra.mxu0 %v1088
    %1200 = vmatpush.msra.mxu0 %v1084
    %1201 = vmatpush.msra.mxu0 %v1080
    %1202 = vmatpush.msra.mxu0 %v1076
    %1203 = vmatpush.msra.mxu0 %v1072
    %1204 = vmatpush.msra.mxu0 %v1068
    %1205 = vmatmul.f32.gmra.mxu0 %v967
    %v1206 = vpop.f32.mrf.mxu0
    %v1207 = vadd.f32 0.0, %v1206
    %1208 = vdwg.mxu0
    %v1209 = vadd.f32 %v1003, %v1147
    %v1210 = vadd.f32 %v1023, %v1167
    %v1211 = vadd.f32 %v1043, %v1187
    %v1212 = vadd.f32 %v1063, %v1207
    %v1213 = vxor.u32 %v1209, 2147483648
    %v1214 = vmul.f32 %v1213, 1.442695
    %v1215 = vpow.pop %v1214
    %v1216 = vadd.f32 %v1215, 1.0
    %v1217 = vrcp.pop %v1216
    %v1218 = vmul.f32 %v1216, %v1217
    %v1219 = vsub.f32 1.0, %v1218
    %v1220 = vmul.f32 %v1217, %v1219
    %v1221 = vadd.f32 %v1217, %v1220
    %vm1222 = vweird.f32 %v1216
    %vm1223 = vweird.f32 %v1217
    %vm1224 = vmor %vm1222, %vm1223
    %v1225 = vsel %vm1224, %v1217, %v1221
    %v1226 = vand.u32 2147483647, %v1216
    %vm1227 = vcmp.eq.f32.partialorder %v1226, 8.507059e+37
    %v1228 = vand.u32 %v1216, 2147483648
    %v1229 = vor.u32 1.1754944e-38, %v1228
    %v1230 = vsel %vm1227, %v1229, %v1225
    %v1231 = vmul.f32 1.0, %v1230
    %v1232 = vxor.u32 %v1210, 2147483648
    %v1233 = vmul.f32 %v1232, 1.442695
    %v1234 = vpow.pop %v1233
    %v1235 = vadd.f32 %v1234, 1.0
    %v1236 = vrcp.pop %v1235
    %v1237 = vmul.f32 %v1235, %v1236
    %v1238 = vsub.f32 1.0, %v1237
    %v1239 = vmul.f32 %v1236, %v1238
    %v1240 = vadd.f32 %v1236, %v1239
    %vm1241 = vweird.f32 %v1235
    %vm1242 = vweird.f32 %v1236
    %vm1243 = vmor %vm1241, %vm1242
    %v1244 = vsel %vm1243, %v1236, %v1240
    %v1245 = vand.u32 2147483647, %v1235
    %vm1246 = vcmp.eq.f32.partialorder %v1245, 8.507059e+37
    %v1247 = vand.u32 %v1235, 2147483648
    %v1248 = vor.u32 1.1754944e-38, %v1247
    %v1249 = vsel %vm1246, %v1248, %v1244
    %v1250 = vmul.f32 1.0, %v1249
    %v1251 = vtanh.pop %v1211
    %v1252 = vxor.u32 %v1212, 2147483648
    %v1253 = vmul.f32 %v1252, 1.442695
    %v1254 = vpow.pop %v1253
    %v1255 = vadd.f32 %v1254, 1.0
    %v1256 = vrcp.pop %v1255
    %v1257 = vmul.f32 %v1255, %v1256
    %v1258 = vsub.f32 1.0, %v1257
    %v1259 = vmul.f32 %v1256, %v1258
    %v1260 = vadd.f32 %v1256, %v1259
    %vm1261 = vweird.f32 %v1255
    %vm1262 = vweird.f32 %v1256
    %vm1263 = vmor %vm1261, %vm1262
    %v1264 = vsel %vm1263, %v1256, %v1260
    %v1265 = vand.u32 2147483647, %v1255
    %vm1266 = vcmp.eq.f32.partialorder %v1265, 8.507059e+37
    %v1267 = vand.u32 %v1255, 2147483648
    %v1268 = vor.u32 1.1754944e-38, %v1267
    %v1269 = vsel %vm1266, %v1268, %v1264
    %v1270 = vmul.f32 1.0, %v1269
    %v1271 = vmul.f32 %v1250, %v965
    %v1272 = vmul.f32 %v1231, %v1251
    %v1273 = vadd.f32 %v1271, %v1272
    %v1274 = vtanh.pop %v1273
    %v1275 = vmul.f32 %v1270, %v1274
    %s1276 = scalar_lea.vmem %s4, 24
    %1277 = vst [vmem:[%s1276] sm:$0xff] %v1275
    %s1278 = sadd.s32 %s354, 3
    %p1279 = scmp.eq.s32.totalorder %s1278, 15
    // Predicated region
    $region38: #{lstm_encoder_forward.1} parent=1 // pred_check
      %p1280 = pneg %p1279
    $region39: #{lstm_encoder_forward.1} parent=1 // pred_check_branch
      %1282 = sbr.rel (%p1280) target = $region41
    $region40: #{lstm_encoder_forward.1} parent=1 // pred_region
      %1283 = vst [vmem:[%s5] sm:$0xff] %v1273
    $region41: #{lstm_encoder_forward.1} parent=1 // pred_fallthru
      _
    %s1284 = scalar_lea.vmem %s0, 32
    %v1285 = vld [vmem:[%s1284] sm:$0xff]
    %v1286 = vld [vmem:[%s1] sm:$0xff]
    %v1287 = vld [vmem:[%s1 + $0x8] sm:$0xff]
    %v1288 = vld [vmem:[%s1 + $0x10] sm:$0xff]
    %v1289 = vld [vmem:[%s1 + $0x18] sm:$0xff]
    %v1291 = vsel %vm58, %v1285, 0
    %1293 = vmatpush.msra.mxu0 0.0
    %1294 = vmatpush.msra.mxu0 0.0
    %1295 = vmatpush.msra.mxu0 0.0
    %1296 = vmatpush.msra.mxu0 0.0
    %1297 = vmatpush.msra.mxu0 0.0
    %1298 = vmatpush.msra.mxu0 0.0
    %1299 = vmatpush.msra.mxu0 0.0
    %1300 = vmatpush.msra.mxu0 0.0
    %1301 = vmatpush.msra.mxu0 0.0
    %1302 = vmatpush.msra.mxu0 0.0
    %1303 = vmatpush.msra.mxu0 0.0
    %1304 = vmatpush.msra.mxu0 0.0
    %1305 = vmatpush.msra.mxu0 0.0
    %1306 = vmatpush.msra.mxu0 0.0
    %1307 = vmatpush.msra.mxu0 0.0
    %1308 = vmatpush.msra.mxu0 %v1286
    %1309 = vmatmul.f32.gmra.mxu0 %v1291
    %v1310 = vpop.f32.mrf.mxu0
    %v1311 = vadd.f32 %v50, %v1310
    %1312 = vdwg.mxu0
    %1313 = vmatpush.msra.mxu0 0.0
    %1314 = vmatpush.msra.mxu0 0.0
    %1315 = vmatpush.msra.mxu0 0.0
    %1316 = vmatpush.msra.mxu0 0.0
    %1317 = vmatpush.msra.mxu0 0.0
    %1318 = vmatpush.msra.mxu0 0.0
    %1319 = vmatpush.msra.mxu0 0.0
    %1320 = vmatpush.msra.mxu0 0.0
    %1321 = vmatpush.msra.mxu0 0.0
    %1322 = vmatpush.msra.mxu0 0.0
    %1323 = vmatpush.msra.mxu0 0.0
    %1324 = vmatpush.msra.mxu0 0.0
    %1325 = vmatpush.msra.mxu0 0.0
    %1326 = vmatpush.msra.mxu0 0.0
    %1327 = vmatpush.msra.mxu0 0.0
    %1328 = vmatpush.msra.mxu0 %v1287
    %1329 = vmatmul.f32.gmra.mxu0 %v1291
    %v1330 = vpop.f32.mrf.mxu0
    %v1331 = vadd.f32 %v51, %v1330
    %1332 = vdwg.mxu0
    %1333 = vmatpush.msra.mxu0 0.0
    %1334 = vmatpush.msra.mxu0 0.0
    %1335 = vmatpush.msra.mxu0 0.0
    %1336 = vmatpush.msra.mxu0 0.0
    %1337 = vmatpush.msra.mxu0 0.0
    %1338 = vmatpush.msra.mxu0 0.0
    %1339 = vmatpush.msra.mxu0 0.0
    %1340 = vmatpush.msra.mxu0 0.0
    %1341 = vmatpush.msra.mxu0 0.0
    %1342 = vmatpush.msra.mxu0 0.0
    %1343 = vmatpush.msra.mxu0 0.0
    %1344 = vmatpush.msra.mxu0 0.0
    %1345 = vmatpush.msra.mxu0 0.0
    %1346 = vmatpush.msra.mxu0 0.0
    %1347 = vmatpush.msra.mxu0 0.0
    %1348 = vmatpush.msra.mxu0 %v1288
    %1349 = vmatmul.f32.gmra.mxu0 %v1291
    %v1350 = vpop.f32.mrf.mxu0
    %v1351 = vadd.f32 %v52, %v1350
    %1352 = vdwg.mxu0
    %1353 = vmatpush.msra.mxu0 0.0
    %1354 = vmatpush.msra.mxu0 0.0
    %1355 = vmatpush.msra.mxu0 0.0
    %1356 = vmatpush.msra.mxu0 0.0
    %1357 = vmatpush.msra.mxu0 0.0
    %1358 = vmatpush.msra.mxu0 0.0
    %1359 = vmatpush.msra.mxu0 0.0
    %1360 = vmatpush.msra.mxu0 0.0
    %1361 = vmatpush.msra.mxu0 0.0
    %1362 = vmatpush.msra.mxu0 0.0
    %1363 = vmatpush.msra.mxu0 0.0
    %1364 = vmatpush.msra.mxu0 0.0
    %1365 = vmatpush.msra.mxu0 0.0
    %1366 = vmatpush.msra.mxu0 0.0
    %1367 = vmatpush.msra.mxu0 0.0
    %1368 = vmatpush.msra.mxu0 %v1289
    %1369 = vmatmul.f32.gmra.mxu0 %v1291
    %v1370 = vpop.f32.mrf.mxu0
    %v1371 = vadd.f32 %v53, %v1370
    %1372 = vdwg.mxu0
    %v1373 = vld [vmem:[#allocation4] sm:$0xff]
    %v1374 = vld [vmem:[#allocation4 + $0x8] sm:$0xff]
    %v1375 = vld [vmem:[#allocation4 + $0x10] sm:$0xff]
    %v1376 = vld [vmem:[#allocation4 + $0x18] sm:$0xff]
    %v1377 = vld [vmem:[#allocation4 + $0x20] sm:$0xff]
    %v1378 = vld [vmem:[#allocation4 + $0x28] sm:$0xff]
    %v1379 = vld [vmem:[#allocation4 + $0x30] sm:$0xff]
    %v1380 = vld [vmem:[#allocation4 + $0x38] sm:$0xff]
    %v1381 = vld [vmem:[#allocation4 + $0x40] sm:$0xff]
    %v1382 = vld [vmem:[#allocation4 + $0x48] sm:$0xff]
    %v1383 = vld [vmem:[#allocation4 + $0x50] sm:$0xff]
    %v1384 = vld [vmem:[#allocation4 + $0x58] sm:$0xff]
    %v1385 = vld [vmem:[#allocation4 + $0x60] sm:$0xff]
    %v1386 = vld [vmem:[#allocation4 + $0x68] sm:$0xff]
    %v1387 = vld [vmem:[#allocation4 + $0x70] sm:$0xff]
    %v1388 = vld [vmem:[#allocation4 + $0x78] sm:$0xff]
    %v1389 = vld [vmem:[#allocation4 + $0x80] sm:$0xff]
    %v1390 = vld [vmem:[#allocation4 + $0x88] sm:$0xff]
    %v1391 = vld [vmem:[#allocation4 + $0x90] sm:$0xff]
    %v1392 = vld [vmem:[#allocation4 + $0x98] sm:$0xff]
    %v1393 = vld [vmem:[#allocation4 + $0xa0] sm:$0xff]
    %v1394 = vld [vmem:[#allocation4 + $0xa8] sm:$0xff]
    %v1395 = vld [vmem:[#allocation4 + $0xb0] sm:$0xff]
    %v1396 = vld [vmem:[#allocation4 + $0xb8] sm:$0xff]
    %v1397 = vld [vmem:[#allocation4 + $0xc0] sm:$0xff]
    %v1398 = vld [vmem:[#allocation4 + $0xc8] sm:$0xff]
    %v1399 = vld [vmem:[#allocation4 + $0xd0] sm:$0xff]
    %v1400 = vld [vmem:[#allocation4 + $0xd8] sm:$0xff]
    %v1401 = vld [vmem:[#allocation4 + $0xe0] sm:$0xff]
    %v1402 = vld [vmem:[#allocation4 + $0xe8] sm:$0xff]
    %v1403 = vld [vmem:[#allocation4 + $0xf0] sm:$0xff]
    %v1404 = vld [vmem:[#allocation4 + $0xf8] sm:$0xff]
    %v1405 = vld [vmem:[#allocation4 + $0x100] sm:$0xff]
    %v1406 = vld [vmem:[#allocation4 + $0x108] sm:$0xff]
    %v1407 = vld [vmem:[#allocation4 + $0x110] sm:$0xff]
    %v1408 = vld [vmem:[#allocation4 + $0x118] sm:$0xff]
    %v1409 = vld [vmem:[#allocation4 + $0x120] sm:$0xff]
    %v1410 = vld [vmem:[#allocation4 + $0x128] sm:$0xff]
    %v1411 = vld [vmem:[#allocation4 + $0x130] sm:$0xff]
    %v1412 = vld [vmem:[#allocation4 + $0x138] sm:$0xff]
    %v1413 = vld [vmem:[#allocation4 + $0x140] sm:$0xff]
    %v1414 = vld [vmem:[#allocation4 + $0x148] sm:$0xff]
    %v1415 = vld [vmem:[#allocation4 + $0x150] sm:$0xff]
    %v1416 = vld [vmem:[#allocation4 + $0x158] sm:$0xff]
    %v1417 = vld [vmem:[#allocation4 + $0x160] sm:$0xff]
    %v1418 = vld [vmem:[#allocation4 + $0x168] sm:$0xff]
    %v1419 = vld [vmem:[#allocation4 + $0x170] sm:$0xff]
    %v1420 = vld [vmem:[#allocation4 + $0x178] sm:$0xff]
    %v1421 = vld [vmem:[#allocation4 + $0x180] sm:$0xff]
    %v1422 = vld [vmem:[#allocation4 + $0x188] sm:$0xff]
    %v1423 = vld [vmem:[#allocation4 + $0x190] sm:$0xff]
    %v1424 = vld [vmem:[#allocation4 + $0x198] sm:$0xff]
    %v1425 = vld [vmem:[#allocation4 + $0x1a0] sm:$0xff]
    %v1426 = vld [vmem:[#allocation4 + $0x1a8] sm:$0xff]
    %v1427 = vld [vmem:[#allocation4 + $0x1b0] sm:$0xff]
    %v1428 = vld [vmem:[#allocation4 + $0x1b8] sm:$0xff]
    %v1429 = vld [vmem:[#allocation4 + $0x1c0] sm:$0xff]
    %v1430 = vld [vmem:[#allocation4 + $0x1c8] sm:$0xff]
    %v1431 = vld [vmem:[#allocation4 + $0x1d0] sm:$0xff]
    %v1432 = vld [vmem:[#allocation4 + $0x1d8] sm:$0xff]
    %v1433 = vld [vmem:[#allocation4 + $0x1e0] sm:$0xff]
    %v1434 = vld [vmem:[#allocation4 + $0x1e8] sm:$0xff]
    %v1435 = vld [vmem:[#allocation4 + $0x1f0] sm:$0xff]
    %v1436 = vld [vmem:[#allocation4 + $0x1f8] sm:$0xff]
    %1437 = vmatpush.msra.mxu0 %v1433
    %1438 = vmatpush.msra.mxu0 %v1429
    %1439 = vmatpush.msra.mxu0 %v1425
    %1440 = vmatpush.msra.mxu0 %v1421
    %1441 = vmatpush.msra.mxu0 %v1417
    %1442 = vmatpush.msra.mxu0 %v1413
    %1443 = vmatpush.msra.mxu0 %v1409
    %1444 = vmatpush.msra.mxu0 %v1405
    %1445 = vmatpush.msra.mxu0 %v1401
    %1446 = vmatpush.msra.mxu0 %v1397
    %1447 = vmatpush.msra.mxu0 %v1393
    %1448 = vmatpush.msra.mxu0 %v1389
    %1449 = vmatpush.msra.mxu0 %v1385
    %1450 = vmatpush.msra.mxu0 %v1381
    %1451 = vmatpush.msra.mxu0 %v1377
    %1452 = vmatpush.msra.mxu0 %v1373
    %1453 = vmatmul.f32.gmra.mxu0 %v1275
    %v1454 = vpop.f32.mrf.mxu0
    %v1455 = vadd.f32 0.0, %v1454
    %1456 = vdwg.mxu0
    %1457 = vmatpush.msra.mxu0 %v1434
    %1458 = vmatpush.msra.mxu0 %v1430
    %1459 = vmatpush.msra.mxu0 %v1426
    %1460 = vmatpush.msra.mxu0 %v1422
    %1461 = vmatpush.msra.mxu0 %v1418
    %1462 = vmatpush.msra.mxu0 %v1414
    %1463 = vmatpush.msra.mxu0 %v1410
    %1464 = vmatpush.msra.mxu0 %v1406
    %1465 = vmatpush.msra.mxu0 %v1402
    %1466 = vmatpush.msra.mxu0 %v1398
    %1467 = vmatpush.msra.mxu0 %v1394
    %1468 = vmatpush.msra.mxu0 %v1390
    %1469 = vmatpush.msra.mxu0 %v1386
    %1470 = vmatpush.msra.mxu0 %v1382
    %1471 = vmatpush.msra.mxu0 %v1378
    %1472 = vmatpush.msra.mxu0 %v1374
    %1473 = vmatmul.f32.gmra.mxu0 %v1275
    %v1474 = vpop.f32.mrf.mxu0
    %v1475 = vadd.f32 0.0, %v1474
    %1476 = vdwg.mxu0
    %1477 = vmatpush.msra.mxu0 %v1435
    %1478 = vmatpush.msra.mxu0 %v1431
    %1479 = vmatpush.msra.mxu0 %v1427
    %1480 = vmatpush.msra.mxu0 %v1423
    %1481 = vmatpush.msra.mxu0 %v1419
    %1482 = vmatpush.msra.mxu0 %v1415
    %1483 = vmatpush.msra.mxu0 %v1411
    %1484 = vmatpush.msra.mxu0 %v1407
    %1485 = vmatpush.msra.mxu0 %v1403
    %1486 = vmatpush.msra.mxu0 %v1399
    %1487 = vmatpush.msra.mxu0 %v1395
    %1488 = vmatpush.msra.mxu0 %v1391
    %1489 = vmatpush.msra.mxu0 %v1387
    %1490 = vmatpush.msra.mxu0 %v1383
    %1491 = vmatpush.msra.mxu0 %v1379
    %1492 = vmatpush.msra.mxu0 %v1375
    %1493 = vmatmul.f32.gmra.mxu0 %v1275
    %v1494 = vpop.f32.mrf.mxu0
    %v1495 = vadd.f32 0.0, %v1494
    %1496 = vdwg.mxu0
    %1497 = vmatpush.msra.mxu0 %v1436
    %1498 = vmatpush.msra.mxu0 %v1432
    %1499 = vmatpush.msra.mxu0 %v1428
    %1500 = vmatpush.msra.mxu0 %v1424
    %1501 = vmatpush.msra.mxu0 %v1420
    %1502 = vmatpush.msra.mxu0 %v1416
    %1503 = vmatpush.msra.mxu0 %v1412
    %1504 = vmatpush.msra.mxu0 %v1408
    %1505 = vmatpush.msra.mxu0 %v1404
    %1506 = vmatpush.msra.mxu0 %v1400
    %1507 = vmatpush.msra.mxu0 %v1396
    %1508 = vmatpush.msra.mxu0 %v1392
    %1509 = vmatpush.msra.mxu0 %v1388
    %1510 = vmatpush.msra.mxu0 %v1384
    %1511 = vmatpush.msra.mxu0 %v1380
    %1512 = vmatpush.msra.mxu0 %v1376
    %1513 = vmatmul.f32.gmra.mxu0 %v1275
    %v1514 = vpop.f32.mrf.mxu0
    %v1515 = vadd.f32 0.0, %v1514
    %1516 = vdwg.mxu0
    %v1517 = vadd.f32 %v1311, %v1455
    %v1518 = vadd.f32 %v1331, %v1475
    %v1519 = vadd.f32 %v1351, %v1495
    %v1520 = vadd.f32 %v1371, %v1515
    %v1521 = vxor.u32 %v1517, 2147483648
    %v1522 = vmul.f32 %v1521, 1.442695
    %v1523 = vpow.pop %v1522
    %v1524 = vadd.f32 %v1523, 1.0
    %v1525 = vrcp.pop %v1524
    %v1526 = vmul.f32 %v1524, %v1525
    %v1527 = vsub.f32 1.0, %v1526
    %v1528 = vmul.f32 %v1525, %v1527
    %v1529 = vadd.f32 %v1525, %v1528
    %vm1530 = vweird.f32 %v1524
    %vm1531 = vweird.f32 %v1525
    %vm1532 = vmor %vm1530, %vm1531
    %v1533 = vsel %vm1532, %v1525, %v1529
    %v1534 = vand.u32 2147483647, %v1524
    %vm1535 = vcmp.eq.f32.partialorder %v1534, 8.507059e+37
    %v1536 = vand.u32 %v1524, 2147483648
    %v1537 = vor.u32 1.1754944e-38, %v1536
    %v1538 = vsel %vm1535, %v1537, %v1533
    %v1539 = vmul.f32 1.0, %v1538
    %v1540 = vxor.u32 %v1518, 2147483648
    %v1541 = vmul.f32 %v1540, 1.442695
    %v1542 = vpow.pop %v1541
    %v1543 = vadd.f32 %v1542, 1.0
    %v1544 = vrcp.pop %v1543
    %v1545 = vmul.f32 %v1543, %v1544
    %v1546 = vsub.f32 1.0, %v1545
    %v1547 = vmul.f32 %v1544, %v1546
    %v1548 = vadd.f32 %v1544, %v1547
    %vm1549 = vweird.f32 %v1543
    %vm1550 = vweird.f32 %v1544
    %vm1551 = vmor %vm1549, %vm1550
    %v1552 = vsel %vm1551, %v1544, %v1548
    %v1553 = vand.u32 2147483647, %v1543
    %vm1554 = vcmp.eq.f32.partialorder %v1553, 8.507059e+37
    %v1555 = vand.u32 %v1543, 2147483648
    %v1556 = vor.u32 1.1754944e-38, %v1555
    %v1557 = vsel %vm1554, %v1556, %v1552
    %v1558 = vmul.f32 1.0, %v1557
    %v1559 = vtanh.pop %v1519
    %v1560 = vxor.u32 %v1520, 2147483648
    %v1561 = vmul.f32 %v1560, 1.442695
    %v1562 = vpow.pop %v1561
    %v1563 = vadd.f32 %v1562, 1.0
    %v1564 = vrcp.pop %v1563
    %v1565 = vmul.f32 %v1563, %v1564
    %v1566 = vsub.f32 1.0, %v1565
    %v1567 = vmul.f32 %v1564, %v1566
    %v1568 = vadd.f32 %v1564, %v1567
    %vm1569 = vweird.f32 %v1563
    %vm1570 = vweird.f32 %v1564
    %vm1571 = vmor %vm1569, %vm1570
    %v1572 = vsel %vm1571, %v1564, %v1568
    %v1573 = vand.u32 2147483647, %v1563
    %vm1574 = vcmp.eq.f32.partialorder %v1573, 8.507059e+37
    %v1575 = vand.u32 %v1563, 2147483648
    %v1576 = vor.u32 1.1754944e-38, %v1575
    %v1577 = vsel %vm1574, %v1576, %v1572
    %v1578 = vmul.f32 1.0, %v1577
    %v1579 = vmul.f32 %v1558, %v1273
    %v1580 = vmul.f32 %v1539, %v1559
    %v1581 = vadd.f32 %v1579, %v1580
    %v1582 = vtanh.pop %v1581
    %v1583 = vmul.f32 %v1578, %v1582
    %s1584 = scalar_lea.vmem %s4, 32
    %1585 = vst [vmem:[%s1584] sm:$0xff] %v1583
    %s1586 = sadd.s32 %s354, 4
    %p1587 = scmp.eq.s32.totalorder %s1586, 15
    // Predicated region
    $region42: #{lstm_encoder_forward.1} parent=1 // pred_check
      %p1588 = pneg %p1587
    $region43: #{lstm_encoder_forward.1} parent=1 // pred_check_branch
      %1590 = sbr.rel (%p1588) target = $region45
    $region44: #{lstm_encoder_forward.1} parent=1 // pred_region
      %1591 = vst [vmem:[%s5] sm:$0xff] %v1581
    $region45: #{lstm_encoder_forward.1} parent=1 // pred_fallthru
      _
    %s1592 = scalar_lea.vmem %s0, 40
    %v1593 = vld [vmem:[%s1592] sm:$0xff]
    %v1594 = vld [vmem:[%s1] sm:$0xff]
    %v1595 = vld [vmem:[%s1 + $0x8] sm:$0xff]
    %v1596 = vld [vmem:[%s1 + $0x10] sm:$0xff]
    %v1597 = vld [vmem:[%s1 + $0x18] sm:$0xff]
    %v1599 = vsel %vm58, %v1593, 0
    %1601 = vmatpush.msra.mxu0 0.0
    %1602 = vmatpush.msra.mxu0 0.0
    %1603 = vmatpush.msra.mxu0 0.0
    %1604 = vmatpush.msra.mxu0 0.0
    %1605 = vmatpush.msra.mxu0 0.0
    %1606 = vmatpush.msra.mxu0 0.0
    %1607 = vmatpush.msra.mxu0 0.0
    %1608 = vmatpush.msra.mxu0 0.0
    %1609 = vmatpush.msra.mxu0 0.0
    %1610 = vmatpush.msra.mxu0 0.0
    %1611 = vmatpush.msra.mxu0 0.0
    %1612 = vmatpush.msra.mxu0 0.0
    %1613 = vmatpush.msra.mxu0 0.0
    %1614 = vmatpush.msra.mxu0 0.0
    %1615 = vmatpush.msra.mxu0 0.0
    %1616 = vmatpush.msra.mxu0 %v1594
    %1617 = vmatmul.f32.gmra.mxu0 %v1599
    %v1618 = vpop.f32.mrf.mxu0
    %v1619 = vadd.f32 %v50, %v1618
    %1620 = vdwg.mxu0
    %1621 = vmatpush.msra.mxu0 0.0
    %1622 = vmatpush.msra.mxu0 0.0
    %1623 = vmatpush.msra.mxu0 0.0
    %1624 = vmatpush.msra.mxu0 0.0
    %1625 = vmatpush.msra.mxu0 0.0
    %1626 = vmatpush.msra.mxu0 0.0
    %1627 = vmatpush.msra.mxu0 0.0
    %1628 = vmatpush.msra.mxu0 0.0
    %1629 = vmatpush.msra.mxu0 0.0
    %1630 = vmatpush.msra.mxu0 0.0
    %1631 = vmatpush.msra.mxu0 0.0
    %1632 = vmatpush.msra.mxu0 0.0
    %1633 = vmatpush.msra.mxu0 0.0
    %1634 = vmatpush.msra.mxu0 0.0
    %1635 = vmatpush.msra.mxu0 0.0
    %1636 = vmatpush.msra.mxu0 %v1595
    %1637 = vmatmul.f32.gmra.mxu0 %v1599
    %v1638 = vpop.f32.mrf.mxu0
    %v1639 = vadd.f32 %v51, %v1638
    %1640 = vdwg.mxu0
    %1641 = vmatpush.msra.mxu0 0.0
    %1642 = vmatpush.msra.mxu0 0.0
    %1643 = vmatpush.msra.mxu0 0.0
    %1644 = vmatpush.msra.mxu0 0.0
    %1645 = vmatpush.msra.mxu0 0.0
    %1646 = vmatpush.msra.mxu0 0.0
    %1647 = vmatpush.msra.mxu0 0.0
    %1648 = vmatpush.msra.mxu0 0.0
    %1649 = vmatpush.msra.mxu0 0.0
    %1650 = vmatpush.msra.mxu0 0.0
    %1651 = vmatpush.msra.mxu0 0.0
    %1652 = vmatpush.msra.mxu0 0.0
    %1653 = vmatpush.msra.mxu0 0.0
    %1654 = vmatpush.msra.mxu0 0.0
    %1655 = vmatpush.msra.mxu0 0.0
    %1656 = vmatpush.msra.mxu0 %v1596
    %1657 = vmatmul.f32.gmra.mxu0 %v1599
    %v1658 = vpop.f32.mrf.mxu0
    %v1659 = vadd.f32 %v52, %v1658
    %1660 = vdwg.mxu0
    %1661 = vmatpush.msra.mxu0 0.0
    %1662 = vmatpush.msra.mxu0 0.0
    %1663 = vmatpush.msra.mxu0 0.0
    %1664 = vmatpush.msra.mxu0 0.0
    %1665 = vmatpush.msra.mxu0 0.0
    %1666 = vmatpush.msra.mxu0 0.0
    %1667 = vmatpush.msra.mxu0 0.0
    %1668 = vmatpush.msra.mxu0 0.0
    %1669 = vmatpush.msra.mxu0 0.0
    %1670 = vmatpush.msra.mxu0 0.0
    %1671 = vmatpush.msra.mxu0 0.0
    %1672 = vmatpush.msra.mxu0 0.0
    %1673 = vmatpush.msra.mxu0 0.0
    %1674 = vmatpush.msra.mxu0 0.0
    %1675 = vmatpush.msra.mxu0 0.0
    %1676 = vmatpush.msra.mxu0 %v1597
    %1677 = vmatmul.f32.gmra.mxu0 %v1599
    %v1678 = vpop.f32.mrf.mxu0
    %v1679 = vadd.f32 %v53, %v1678
    %1680 = vdwg.mxu0
    %v1681 = vld [vmem:[#allocation4] sm:$0xff]
    %v1682 = vld [vmem:[#allocation4 + $0x8] sm:$0xff]
    %v1683 = vld [vmem:[#allocation4 + $0x10] sm:$0xff]
    %v1684 = vld [vmem:[#allocation4 + $0x18] sm:$0xff]
    %v1685 = vld [vmem:[#allocation4 + $0x20] sm:$0xff]
    %v1686 = vld [vmem:[#allocation4 + $0x28] sm:$0xff]
    %v1687 = vld [vmem:[#allocation4 + $0x30] sm:$0xff]
    %v1688 = vld [vmem:[#allocation4 + $0x38] sm:$0xff]
    %v1689 = vld [vmem:[#allocation4 + $0x40] sm:$0xff]
    %v1690 = vld [vmem:[#allocation4 + $0x48] sm:$0xff]
    %v1691 = vld [vmem:[#allocation4 + $0x50] sm:$0xff]
    %v1692 = vld [vmem:[#allocation4 + $0x58] sm:$0xff]
    %v1693 = vld [vmem:[#allocation4 + $0x60] sm:$0xff]
    %v1694 = vld [vmem:[#allocation4 + $0x68] sm:$0xff]
    %v1695 = vld [vmem:[#allocation4 + $0x70] sm:$0xff]
    %v1696 = vld [vmem:[#allocation4 + $0x78] sm:$0xff]
    %v1697 = vld [vmem:[#allocation4 + $0x80] sm:$0xff]
    %v1698 = vld [vmem:[#allocation4 + $0x88] sm:$0xff]
    %v1699 = vld [vmem:[#allocation4 + $0x90] sm:$0xff]
    %v1700 = vld [vmem:[#allocation4 + $0x98] sm:$0xff]
    %v1701 = vld [vmem:[#allocation4 + $0xa0] sm:$0xff]
    %v1702 = vld [vmem:[#allocation4 + $0xa8] sm:$0xff]
    %v1703 = vld [vmem:[#allocation4 + $0xb0] sm:$0xff]
    %v1704 = vld [vmem:[#allocation4 + $0xb8] sm:$0xff]
    %v1705 = vld [vmem:[#allocation4 + $0xc0] sm:$0xff]
    %v1706 = vld [vmem:[#allocation4 + $0xc8] sm:$0xff]
    %v1707 = vld [vmem:[#allocation4 + $0xd0] sm:$0xff]
    %v1708 = vld [vmem:[#allocation4 + $0xd8] sm:$0xff]
    %v1709 = vld [vmem:[#allocation4 + $0xe0] sm:$0xff]
    %v1710 = vld [vmem:[#allocation4 + $0xe8] sm:$0xff]
    %v1711 = vld [vmem:[#allocation4 + $0xf0] sm:$0xff]
    %v1712 = vld [vmem:[#allocation4 + $0xf8] sm:$0xff]
    %v1713 = vld [vmem:[#allocation4 + $0x100] sm:$0xff]
    %v1714 = vld [vmem:[#allocation4 + $0x108] sm:$0xff]
    %v1715 = vld [vmem:[#allocation4 + $0x110] sm:$0xff]
    %v1716 = vld [vmem:[#allocation4 + $0x118] sm:$0xff]
    %v1717 = vld [vmem:[#allocation4 + $0x120] sm:$0xff]
    %v1718 = vld [vmem:[#allocation4 + $0x128] sm:$0xff]
    %v1719 = vld [vmem:[#allocation4 + $0x130] sm:$0xff]
    %v1720 = vld [vmem:[#allocation4 + $0x138] sm:$0xff]
    %v1721 = vld [vmem:[#allocation4 + $0x140] sm:$0xff]
    %v1722 = vld [vmem:[#allocation4 + $0x148] sm:$0xff]
    %v1723 = vld [vmem:[#allocation4 + $0x150] sm:$0xff]
    %v1724 = vld [vmem:[#allocation4 + $0x158] sm:$0xff]
    %v1725 = vld [vmem:[#allocation4 + $0x160] sm:$0xff]
    %v1726 = vld [vmem:[#allocation4 + $0x168] sm:$0xff]
    %v1727 = vld [vmem:[#allocation4 + $0x170] sm:$0xff]
    %v1728 = vld [vmem:[#allocation4 + $0x178] sm:$0xff]
    %v1729 = vld [vmem:[#allocation4 + $0x180] sm:$0xff]
    %v1730 = vld [vmem:[#allocation4 + $0x188] sm:$0xff]
    %v1731 = vld [vmem:[#allocation4 + $0x190] sm:$0xff]
    %v1732 = vld [vmem:[#allocation4 + $0x198] sm:$0xff]
    %v1733 = vld [vmem:[#allocation4 + $0x1a0] sm:$0xff]
    %v1734 = vld [vmem:[#allocation4 + $0x1a8] sm:$0xff]
    %v1735 = vld [vmem:[#allocation4 + $0x1b0] sm:$0xff]
    %v1736 = vld [vmem:[#allocation4 + $0x1b8] sm:$0xff]
    %v1737 = vld [vmem:[#allocation4 + $0x1c0] sm:$0xff]
    %v1738 = vld [vmem:[#allocation4 + $0x1c8] sm:$0xff]
    %v1739 = vld [vmem:[#allocation4 + $0x1d0] sm:$0xff]
    %v1740 = vld [vmem:[#allocation4 + $0x1d8] sm:$0xff]
    %v1741 = vld [vmem:[#allocation4 + $0x1e0] sm:$0xff]
    %v1742 = vld [vmem:[#allocation4 + $0x1e8] sm:$0xff]
    %v1743 = vld [vmem:[#allocation4 + $0x1f0] sm:$0xff]
    %v1744 = vld [vmem:[#allocation4 + $0x1f8] sm:$0xff]
    %1745 = vmatpush.msra.mxu0 %v1741
    %1746 = vmatpush.msra.mxu0 %v1737
    %1747 = vmatpush.msra.mxu0 %v1733
    %1748 = vmatpush.msra.mxu0 %v1729
    %1749 = vmatpush.msra.mxu0 %v1725
    %1750 = vmatpush.msra.mxu0 %v1721
    %1751 = vmatpush.msra.mxu0 %v1717
    %1752 = vmatpush.msra.mxu0 %v1713
    %1753 = vmatpush.msra.mxu0 %v1709
    %1754 = vmatpush.msra.mxu0 %v1705
    %1755 = vmatpush.msra.mxu0 %v1701
    %1756 = vmatpush.msra.mxu0 %v1697
    %1757 = vmatpush.msra.mxu0 %v1693
    %1758 = vmatpush.msra.mxu0 %v1689
    %1759 = vmatpush.msra.mxu0 %v1685
    %1760 = vmatpush.msra.mxu0 %v1681
    %1761 = vmatmul.f32.gmra.mxu0 %v1583
    %v1762 = vpop.f32.mrf.mxu0
    %v1763 = vadd.f32 0.0, %v1762
    %1764 = vdwg.mxu0
    %1765 = vmatpush.msra.mxu0 %v1742
    %1766 = vmatpush.msra.mxu0 %v1738
    %1767 = vmatpush.msra.mxu0 %v1734
    %1768 = vmatpush.msra.mxu0 %v1730
    %1769 = vmatpush.msra.mxu0 %v1726
    %1770 = vmatpush.msra.mxu0 %v1722
    %1771 = vmatpush.msra.mxu0 %v1718
    %1772 = vmatpush.msra.mxu0 %v1714
    %1773 = vmatpush.msra.mxu0 %v1710
    %1774 = vmatpush.msra.mxu0 %v1706
    %1775 = vmatpush.msra.mxu0 %v1702
    %1776 = vmatpush.msra.mxu0 %v1698
    %1777 = vmatpush.msra.mxu0 %v1694
    %1778 = vmatpush.msra.mxu0 %v1690
    %1779 = vmatpush.msra.mxu0 %v1686
    %1780 = vmatpush.msra.mxu0 %v1682
    %1781 = vmatmul.f32.gmra.mxu0 %v1583
    %v1782 = vpop.f32.mrf.mxu0
    %v1783 = vadd.f32 0.0, %v1782
    %1784 = vdwg.mxu0
    %1785 = vmatpush.msra.mxu0 %v1743
    %1786 = vmatpush.msra.mxu0 %v1739
    %1787 = vmatpush.msra.mxu0 %v1735
    %1788 = vmatpush.msra.mxu0 %v1731
    %1789 = vmatpush.msra.mxu0 %v1727
    %1790 = vmatpush.msra.mxu0 %v1723
    %1791 = vmatpush.msra.mxu0 %v1719
    %1792 = vmatpush.msra.mxu0 %v1715
    %1793 = vmatpush.msra.mxu0 %v1711
    %1794 = vmatpush.msra.mxu0 %v1707
    %1795 = vmatpush.msra.mxu0 %v1703
    %1796 = vmatpush.msra.mxu0 %v1699
    %1797 = vmatpush.msra.mxu0 %v1695
    %1798 = vmatpush.msra.mxu0 %v1691
    %1799 = vmatpush.msra.mxu0 %v1687
    %1800 = vmatpush.msra.mxu0 %v1683
    %1801 = vmatmul.f32.gmra.mxu0 %v1583
    %v1802 = vpop.f32.mrf.mxu0
    %v1803 = vadd.f32 0.0, %v1802
    %1804 = vdwg.mxu0
    %1805 = vmatpush.msra.mxu0 %v1744
    %1806 = vmatpush.msra.mxu0 %v1740
    %1807 = vmatpush.msra.mxu0 %v1736
    %1808 = vmatpush.msra.mxu0 %v1732
    %1809 = vmatpush.msra.mxu0 %v1728
    %1810 = vmatpush.msra.mxu0 %v1724
    %1811 = vmatpush.msra.mxu0 %v1720
    %1812 = vmatpush.msra.mxu0 %v1716
    %1813 = vmatpush.msra.mxu0 %v1712
    %1814 = vmatpush.msra.mxu0 %v1708
    %1815 = vmatpush.msra.mxu0 %v1704
    %1816 = vmatpush.msra.mxu0 %v1700
    %1817 = vmatpush.msra.mxu0 %v1696
    %1818 = vmatpush.msra.mxu0 %v1692
    %1819 = vmatpush.msra.mxu0 %v1688
    %1820 = vmatpush.msra.mxu0 %v1684
    %1821 = vmatmul.f32.gmra.mxu0 %v1583
    %v1822 = vpop.f32.mrf.mxu0
    %v1823 = vadd.f32 0.0, %v1822
    %1824 = vdwg.mxu0
    %v1825 = vadd.f32 %v1619, %v1763
    %v1826 = vadd.f32 %v1639, %v1783
    %v1827 = vadd.f32 %v1659, %v1803
    %v1828 = vadd.f32 %v1679, %v1823
    %v1829 = vxor.u32 %v1825, 2147483648
    %v1830 = vmul.f32 %v1829, 1.442695
    %v1831 = vpow.pop %v1830
    %v1832 = vadd.f32 %v1831, 1.0
    %v1833 = vrcp.pop %v1832
    %v1834 = vmul.f32 %v1832, %v1833
    %v1835 = vsub.f32 1.0, %v1834
    %v1836 = vmul.f32 %v1833, %v1835
    %v1837 = vadd.f32 %v1833, %v1836
    %vm1838 = vweird.f32 %v1832
    %vm1839 = vweird.f32 %v1833
    %vm1840 = vmor %vm1838, %vm1839
    %v1841 = vsel %vm1840, %v1833, %v1837
    %v1842 = vand.u32 2147483647, %v1832
    %vm1843 = vcmp.eq.f32.partialorder %v1842, 8.507059e+37
    %v1844 = vand.u32 %v1832, 2147483648
    %v1845 = vor.u32 1.1754944e-38, %v1844
    %v1846 = vsel %vm1843, %v1845, %v1841
    %v1847 = vmul.f32 1.0, %v1846
    %v1848 = vxor.u32 %v1826, 2147483648
    %v1849 = vmul.f32 %v1848, 1.442695
    %v1850 = vpow.pop %v1849
    %v1851 = vadd.f32 %v1850, 1.0
    %v1852 = vrcp.pop %v1851
    %v1853 = vmul.f32 %v1851, %v1852
    %v1854 = vsub.f32 1.0, %v1853
    %v1855 = vmul.f32 %v1852, %v1854
    %v1856 = vadd.f32 %v1852, %v1855
    %vm1857 = vweird.f32 %v1851
    %vm1858 = vweird.f32 %v1852
    %vm1859 = vmor %vm1857, %vm1858
    %v1860 = vsel %vm1859, %v1852, %v1856
    %v1861 = vand.u32 2147483647, %v1851
    %vm1862 = vcmp.eq.f32.partialorder %v1861, 8.507059e+37
    %v1863 = vand.u32 %v1851, 2147483648
    %v1864 = vor.u32 1.1754944e-38, %v1863
    %v1865 = vsel %vm1862, %v1864, %v1860
    %v1866 = vmul.f32 1.0, %v1865
    %v1867 = vtanh.pop %v1827
    %v1868 = vxor.u32 %v1828, 2147483648
    %v1869 = vmul.f32 %v1868, 1.442695
    %v1870 = vpow.pop %v1869
    %v1871 = vadd.f32 %v1870, 1.0
    %v1872 = vrcp.pop %v1871
    %v1873 = vmul.f32 %v1871, %v1872
    %v1874 = vsub.f32 1.0, %v1873
    %v1875 = vmul.f32 %v1872, %v1874
    %v1876 = vadd.f32 %v1872, %v1875
    %vm1877 = vweird.f32 %v1871
    %vm1878 = vweird.f32 %v1872
    %vm1879 = vmor %vm1877, %vm1878
    %v1880 = vsel %vm1879, %v1872, %v1876
    %v1881 = vand.u32 2147483647, %v1871
    %vm1882 = vcmp.eq.f32.partialorder %v1881, 8.507059e+37
    %v1883 = vand.u32 %v1871, 2147483648
    %v1884 = vor.u32 1.1754944e-38, %v1883
    %v1885 = vsel %vm1882, %v1884, %v1880
    %v1886 = vmul.f32 1.0, %v1885
    %v1887 = vmul.f32 %v1866, %v1581
    %v1888 = vmul.f32 %v1847, %v1867
    %v1889 = vadd.f32 %v1887, %v1888
    %v1890 = vtanh.pop %v1889
    %v1891 = vmul.f32 %v1886, %v1890
    %s1892 = scalar_lea.vmem %s4, 40
    %1893 = vst [vmem:[%s1892] sm:$0xff] %v1891
    %s1894 = sadd.s32 %s354, 5
    %p1895 = scmp.eq.s32.totalorder %s1894, 15
    // Predicated region
    $region46: #{lstm_encoder_forward.1} parent=1 // pred_check
      %p1896 = pneg %p1895
    $region47: #{lstm_encoder_forward.1} parent=1 // pred_check_branch
      %1898 = sbr.rel (%p1896) target = $region49
    $region48: #{lstm_encoder_forward.1} parent=1 // pred_region
      %1899 = vst [vmem:[%s5] sm:$0xff] %v1889
    $region49: #{lstm_encoder_forward.1} parent=1 // pred_fallthru
      _
    %s1900 = scalar_lea.vmem %s0, 48
    %v1901 = vld [vmem:[%s1900] sm:$0xff]
    %v1902 = vld [vmem:[%s1] sm:$0xff]
    %v1903 = vld [vmem:[%s1 + $0x8] sm:$0xff]
    %v1904 = vld [vmem:[%s1 + $0x10] sm:$0xff]
    %v1905 = vld [vmem:[%s1 + $0x18] sm:$0xff]
    %v1907 = vsel %vm58, %v1901, 0
    %1909 = vmatpush.msra.mxu0 0.0
    %1910 = vmatpush.msra.mxu0 0.0
    %1911 = vmatpush.msra.mxu0 0.0
    %1912 = vmatpush.msra.mxu0 0.0
    %1913 = vmatpush.msra.mxu0 0.0
    %1914 = vmatpush.msra.mxu0 0.0
    %1915 = vmatpush.msra.mxu0 0.0
    %1916 = vmatpush.msra.mxu0 0.0
    %1917 = vmatpush.msra.mxu0 0.0
    %1918 = vmatpush.msra.mxu0 0.0
    %1919 = vmatpush.msra.mxu0 0.0
    %1920 = vmatpush.msra.mxu0 0.0
    %1921 = vmatpush.msra.mxu0 0.0
    %1922 = vmatpush.msra.mxu0 0.0
    %1923 = vmatpush.msra.mxu0 0.0
    %1924 = vmatpush.msra.mxu0 %v1902
    %1925 = vmatmul.f32.gmra.mxu0 %v1907
    %v1926 = vpop.f32.mrf.mxu0
    %v1927 = vadd.f32 %v50, %v1926
    %1928 = vdwg.mxu0
    %1929 = vmatpush.msra.mxu0 0.0
    %1930 = vmatpush.msra.mxu0 0.0
    %1931 = vmatpush.msra.mxu0 0.0
    %1932 = vmatpush.msra.mxu0 0.0
    %1933 = vmatpush.msra.mxu0 0.0
    %1934 = vmatpush.msra.mxu0 0.0
    %1935 = vmatpush.msra.mxu0 0.0
    %1936 = vmatpush.msra.mxu0 0.0
    %1937 = vmatpush.msra.mxu0 0.0
    %1938 = vmatpush.msra.mxu0 0.0
    %1939 = vmatpush.msra.mxu0 0.0
    %1940 = vmatpush.msra.mxu0 0.0
    %1941 = vmatpush.msra.mxu0 0.0
    %1942 = vmatpush.msra.mxu0 0.0
    %1943 = vmatpush.msra.mxu0 0.0
    %1944 = vmatpush.msra.mxu0 %v1903
    %1945 = vmatmul.f32.gmra.mxu0 %v1907
    %v1946 = vpop.f32.mrf.mxu0
    %v1947 = vadd.f32 %v51, %v1946
    %1948 = vdwg.mxu0
    %1949 = vmatpush.msra.mxu0 0.0
    %1950 = vmatpush.msra.mxu0 0.0
    %1951 = vmatpush.msra.mxu0 0.0
    %1952 = vmatpush.msra.mxu0 0.0
    %1953 = vmatpush.msra.mxu0 0.0
    %1954 = vmatpush.msra.mxu0 0.0
    %1955 = vmatpush.msra.mxu0 0.0
    %1956 = vmatpush.msra.mxu0 0.0
    %1957 = vmatpush.msra.mxu0 0.0
    %1958 = vmatpush.msra.mxu0 0.0
    %1959 = vmatpush.msra.mxu0 0.0
    %1960 = vmatpush.msra.mxu0 0.0
    %1961 = vmatpush.msra.mxu0 0.0
    %1962 = vmatpush.msra.mxu0 0.0
    %1963 = vmatpush.msra.mxu0 0.0
    %1964 = vmatpush.msra.mxu0 %v1904
    %1965 = vmatmul.f32.gmra.mxu0 %v1907
    %v1966 = vpop.f32.mrf.mxu0
    %v1967 = vadd.f32 %v52, %v1966
    %1968 = vdwg.mxu0
    %1969 = vmatpush.msra.mxu0 0.0
    %1970 = vmatpush.msra.mxu0 0.0
    %1971 = vmatpush.msra.mxu0 0.0
    %1972 = vmatpush.msra.mxu0 0.0
    %1973 = vmatpush.msra.mxu0 0.0
    %1974 = vmatpush.msra.mxu0 0.0
    %1975 = vmatpush.msra.mxu0 0.0
    %1976 = vmatpush.msra.mxu0 0.0
    %1977 = vmatpush.msra.mxu0 0.0
    %1978 = vmatpush.msra.mxu0 0.0
    %1979 = vmatpush.msra.mxu0 0.0
    %1980 = vmatpush.msra.mxu0 0.0
    %1981 = vmatpush.msra.mxu0 0.0
    %1982 = vmatpush.msra.mxu0 0.0
    %1983 = vmatpush.msra.mxu0 0.0
    %1984 = vmatpush.msra.mxu0 %v1905
    %1985 = vmatmul.f32.gmra.mxu0 %v1907
    %v1986 = vpop.f32.mrf.mxu0
    %v1987 = vadd.f32 %v53, %v1986
    %1988 = vdwg.mxu0
    %v1989 = vld [vmem:[#allocation4] sm:$0xff]
    %v1990 = vld [vmem:[#allocation4 + $0x8] sm:$0xff]
    %v1991 = vld [vmem:[#allocation4 + $0x10] sm:$0xff]
    %v1992 = vld [vmem:[#allocation4 + $0x18] sm:$0xff]
    %v1993 = vld [vmem:[#allocation4 + $0x20] sm:$0xff]
    %v1994 = vld [vmem:[#allocation4 + $0x28] sm:$0xff]
    %v1995 = vld [vmem:[#allocation4 + $0x30] sm:$0xff]
    %v1996 = vld [vmem:[#allocation4 + $0x38] sm:$0xff]
    %v1997 = vld [vmem:[#allocation4 + $0x40] sm:$0xff]
    %v1998 = vld [vmem:[#allocation4 + $0x48] sm:$0xff]
    %v1999 = vld [vmem:[#allocation4 + $0x50] sm:$0xff]
    %v2000 = vld [vmem:[#allocation4 + $0x58] sm:$0xff]
    %v2001 = vld [vmem:[#allocation4 + $0x60] sm:$0xff]
    %v2002 = vld [vmem:[#allocation4 + $0x68] sm:$0xff]
    %v2003 = vld [vmem:[#allocation4 + $0x70] sm:$0xff]
    %v2004 = vld [vmem:[#allocation4 + $0x78] sm:$0xff]
    %v2005 = vld [vmem:[#allocation4 + $0x80] sm:$0xff]
    %v2006 = vld [vmem:[#allocation4 + $0x88] sm:$0xff]
    %v2007 = vld [vmem:[#allocation4 + $0x90] sm:$0xff]
    %v2008 = vld [vmem:[#allocation4 + $0x98] sm:$0xff]
    %v2009 = vld [vmem:[#allocation4 + $0xa0] sm:$0xff]
    %v2010 = vld [vmem:[#allocation4 + $0xa8] sm:$0xff]
    %v2011 = vld [vmem:[#allocation4 + $0xb0] sm:$0xff]
    %v2012 = vld [vmem:[#allocation4 + $0xb8] sm:$0xff]
    %v2013 = vld [vmem:[#allocation4 + $0xc0] sm:$0xff]
    %v2014 = vld [vmem:[#allocation4 + $0xc8] sm:$0xff]
    %v2015 = vld [vmem:[#allocation4 + $0xd0] sm:$0xff]
    %v2016 = vld [vmem:[#allocation4 + $0xd8] sm:$0xff]
    %v2017 = vld [vmem:[#allocation4 + $0xe0] sm:$0xff]
    %v2018 = vld [vmem:[#allocation4 + $0xe8] sm:$0xff]
    %v2019 = vld [vmem:[#allocation4 + $0xf0] sm:$0xff]
    %v2020 = vld [vmem:[#allocation4 + $0xf8] sm:$0xff]
    %v2021 = vld [vmem:[#allocation4 + $0x100] sm:$0xff]
    %v2022 = vld [vmem:[#allocation4 + $0x108] sm:$0xff]
    %v2023 = vld [vmem:[#allocation4 + $0x110] sm:$0xff]
    %v2024 = vld [vmem:[#allocation4 + $0x118] sm:$0xff]
    %v2025 = vld [vmem:[#allocation4 + $0x120] sm:$0xff]
    %v2026 = vld [vmem:[#allocation4 + $0x128] sm:$0xff]
    %v2027 = vld [vmem:[#allocation4 + $0x130] sm:$0xff]
    %v2028 = vld [vmem:[#allocation4 + $0x138] sm:$0xff]
    %v2029 = vld [vmem:[#allocation4 + $0x140] sm:$0xff]
    %v2030 = vld [vmem:[#allocation4 + $0x148] sm:$0xff]
    %v2031 = vld [vmem:[#allocation4 + $0x150] sm:$0xff]
    %v2032 = vld [vmem:[#allocation4 + $0x158] sm:$0xff]
    %v2033 = vld [vmem:[#allocation4 + $0x160] sm:$0xff]
    %v2034 = vld [vmem:[#allocation4 + $0x168] sm:$0xff]
    %v2035 = vld [vmem:[#allocation4 + $0x170] sm:$0xff]
    %v2036 = vld [vmem:[#allocation4 + $0x178] sm:$0xff]
    %v2037 = vld [vmem:[#allocation4 + $0x180] sm:$0xff]
    %v2038 = vld [vmem:[#allocation4 + $0x188] sm:$0xff]
    %v2039 = vld [vmem:[#allocation4 + $0x190] sm:$0xff]
    %v2040 = vld [vmem:[#allocation4 + $0x198] sm:$0xff]
    %v2041 = vld [vmem:[#allocation4 + $0x1a0] sm:$0xff]
    %v2042 = vld [vmem:[#allocation4 + $0x1a8] sm:$0xff]
    %v2043 = vld [vmem:[#allocation4 + $0x1b0] sm:$0xff]
    %v2044 = vld [vmem:[#allocation4 + $0x1b8] sm:$0xff]
    %v2045 = vld [vmem:[#allocation4 + $0x1c0] sm:$0xff]
    %v2046 = vld [vmem:[#allocation4 + $0x1c8] sm:$0xff]
    %v2047 = vld [vmem:[#allocation4 + $0x1d0] sm:$0xff]
    %v2048 = vld [vmem:[#allocation4 + $0x1d8] sm:$0xff]
    %v2049 = vld [vmem:[#allocation4 + $0x1e0] sm:$0xff]
    %v2050 = vld [vmem:[#allocation4 + $0x1e8] sm:$0xff]
    %v2051 = vld [vmem:[#allocation4 + $0x1f0] sm:$0xff]
    %v2052 = vld [vmem:[#allocation4 + $0x1f8] sm:$0xff]
    %2053 = vmatpush.msra.mxu0 %v2049
    %2054 = vmatpush.msra.mxu0 %v2045
    %2055 = vmatpush.msra.mxu0 %v2041
    %2056 = vmatpush.msra.mxu0 %v2037
    %2057 = vmatpush.msra.mxu0 %v2033
    %2058 = vmatpush.msra.mxu0 %v2029
    %2059 = vmatpush.msra.mxu0 %v2025
    %2060 = vmatpush.msra.mxu0 %v2021
    %2061 = vmatpush.msra.mxu0 %v2017
    %2062 = vmatpush.msra.mxu0 %v2013
    %2063 = vmatpush.msra.mxu0 %v2009
    %2064 = vmatpush.msra.mxu0 %v2005
    %2065 = vmatpush.msra.mxu0 %v2001
    %2066 = vmatpush.msra.mxu0 %v1997
    %2067 = vmatpush.msra.mxu0 %v1993
    %2068 = vmatpush.msra.mxu0 %v1989
    %2069 = vmatmul.f32.gmra.mxu0 %v1891
    %v2070 = vpop.f32.mrf.mxu0
    %v2071 = vadd.f32 0.0, %v2070
    %2072 = vdwg.mxu0
    %2073 = vmatpush.msra.mxu0 %v2050
    %2074 = vmatpush.msra.mxu0 %v2046
    %2075 = vmatpush.msra.mxu0 %v2042
    %2076 = vmatpush.msra.mxu0 %v2038
    %2077 = vmatpush.msra.mxu0 %v2034
    %2078 = vmatpush.msra.mxu0 %v2030
    %2079 = vmatpush.msra.mxu0 %v2026
    %2080 = vmatpush.msra.mxu0 %v2022
    %2081 = vmatpush.msra.mxu0 %v2018
    %2082 = vmatpush.msra.mxu0 %v2014
    %2083 = vmatpush.msra.mxu0 %v2010
    %2084 = vmatpush.msra.mxu0 %v2006
    %2085 = vmatpush.msra.mxu0 %v2002
    %2086 = vmatpush.msra.mxu0 %v1998
    %2087 = vmatpush.msra.mxu0 %v1994
    %2088 = vmatpush.msra.mxu0 %v1990
    %2089 = vmatmul.f32.gmra.mxu0 %v1891
    %v2090 = vpop.f32.mrf.mxu0
    %v2091 = vadd.f32 0.0, %v2090
    %2092 = vdwg.mxu0
    %2093 = vmatpush.msra.mxu0 %v2051
    %2094 = vmatpush.msra.mxu0 %v2047
    %2095 = vmatpush.msra.mxu0 %v2043
    %2096 = vmatpush.msra.mxu0 %v2039
    %2097 = vmatpush.msra.mxu0 %v2035
    %2098 = vmatpush.msra.mxu0 %v2031
    %2099 = vmatpush.msra.mxu0 %v2027
    %2100 = vmatpush.msra.mxu0 %v2023
    %2101 = vmatpush.msra.mxu0 %v2019
    %2102 = vmatpush.msra.mxu0 %v2015
    %2103 = vmatpush.msra.mxu0 %v2011
    %2104 = vmatpush.msra.mxu0 %v2007
    %2105 = vmatpush.msra.mxu0 %v2003
    %2106 = vmatpush.msra.mxu0 %v1999
    %2107 = vmatpush.msra.mxu0 %v1995
    %2108 = vmatpush.msra.mxu0 %v1991
    %2109 = vmatmul.f32.gmra.mxu0 %v1891
    %v2110 = vpop.f32.mrf.mxu0
    %v2111 = vadd.f32 0.0, %v2110
    %2112 = vdwg.mxu0
    %2113 = vmatpush.msra.mxu0 %v2052
    %2114 = vmatpush.msra.mxu0 %v2048
    %2115 = vmatpush.msra.mxu0 %v2044
    %2116 = vmatpush.msra.mxu0 %v2040
    %2117 = vmatpush.msra.mxu0 %v2036
    %2118 = vmatpush.msra.mxu0 %v2032
    %2119 = vmatpush.msra.mxu0 %v2028
    %2120 = vmatpush.msra.mxu0 %v2024
    %2121 = vmatpush.msra.mxu0 %v2020
    %2122 = vmatpush.msra.mxu0 %v2016
    %2123 = vmatpush.msra.mxu0 %v2012
    %2124 = vmatpush.msra.mxu0 %v2008
    %2125 = vmatpush.msra.mxu0 %v2004
    %2126 = vmatpush.msra.mxu0 %v2000
    %2127 = vmatpush.msra.mxu0 %v1996
    %2128 = vmatpush.msra.mxu0 %v1992
    %2129 = vmatmul.f32.gmra.mxu0 %v1891
    %v2130 = vpop.f32.mrf.mxu0
    %v2131 = vadd.f32 0.0, %v2130
    %2132 = vdwg.mxu0
    %v2133 = vadd.f32 %v1927, %v2071
    %v2134 = vadd.f32 %v1947, %v2091
    %v2135 = vadd.f32 %v1967, %v2111
    %v2136 = vadd.f32 %v1987, %v2131
    %v2137 = vxor.u32 %v2133, 2147483648
    %v2138 = vmul.f32 %v2137, 1.442695
    %v2139 = vpow.pop %v2138
    %v2140 = vadd.f32 %v2139, 1.0
    %v2141 = vrcp.pop %v2140
    %v2142 = vmul.f32 %v2140, %v2141
    %v2143 = vsub.f32 1.0, %v2142
    %v2144 = vmul.f32 %v2141, %v2143
    %v2145 = vadd.f32 %v2141, %v2144
    %vm2146 = vweird.f32 %v2140
    %vm2147 = vweird.f32 %v2141
    %vm2148 = vmor %vm2146, %vm2147
    %v2149 = vsel %vm2148, %v2141, %v2145
    %v2150 = vand.u32 2147483647, %v2140
    %vm2151 = vcmp.eq.f32.partialorder %v2150, 8.507059e+37
    %v2152 = vand.u32 %v2140, 2147483648
    %v2153 = vor.u32 1.1754944e-38, %v2152
    %v2154 = vsel %vm2151, %v2153, %v2149
    %v2155 = vmul.f32 1.0, %v2154
    %v2156 = vxor.u32 %v2134, 2147483648
    %v2157 = vmul.f32 %v2156, 1.442695
    %v2158 = vpow.pop %v2157
    %v2159 = vadd.f32 %v2158, 1.0
    %v2160 = vrcp.pop %v2159
    %v2161 = vmul.f32 %v2159, %v2160
    %v2162 = vsub.f32 1.0, %v2161
    %v2163 = vmul.f32 %v2160, %v2162
    %v2164 = vadd.f32 %v2160, %v2163
    %vm2165 = vweird.f32 %v2159
    %vm2166 = vweird.f32 %v2160
    %vm2167 = vmor %vm2165, %vm2166
    %v2168 = vsel %vm2167, %v2160, %v2164
    %v2169 = vand.u32 2147483647, %v2159
    %vm2170 = vcmp.eq.f32.partialorder %v2169, 8.507059e+37
    %v2171 = vand.u32 %v2159, 2147483648
    %v2172 = vor.u32 1.1754944e-38, %v2171
    %v2173 = vsel %vm2170, %v2172, %v2168
    %v2174 = vmul.f32 1.0, %v2173
    %v2175 = vtanh.pop %v2135
    %v2176 = vxor.u32 %v2136, 2147483648
    %v2177 = vmul.f32 %v2176, 1.442695
    %v2178 = vpow.pop %v2177
    %v2179 = vadd.f32 %v2178, 1.0
    %v2180 = vrcp.pop %v2179
    %v2181 = vmul.f32 %v2179, %v2180
    %v2182 = vsub.f32 1.0, %v2181
    %v2183 = vmul.f32 %v2180, %v2182
    %v2184 = vadd.f32 %v2180, %v2183
    %vm2185 = vweird.f32 %v2179
    %vm2186 = vweird.f32 %v2180
    %vm2187 = vmor %vm2185, %vm2186
    %v2188 = vsel %vm2187, %v2180, %v2184
    %v2189 = vand.u32 2147483647, %v2179
    %vm2190 = vcmp.eq.f32.partialorder %v2189, 8.507059e+37
    %v2191 = vand.u32 %v2179, 2147483648
    %v2192 = vor.u32 1.1754944e-38, %v2191
    %v2193 = vsel %vm2190, %v2192, %v2188
    %v2194 = vmul.f32 1.0, %v2193
    %v2195 = vmul.f32 %v2174, %v1889
    %v2196 = vmul.f32 %v2155, %v2175
    %v2197 = vadd.f32 %v2195, %v2196
    %v2198 = vtanh.pop %v2197
    %v2199 = vmul.f32 %v2194, %v2198
    %s2200 = scalar_lea.vmem %s4, 48
    %2201 = vst [vmem:[%s2200] sm:$0xff] %v2199
    %s2202 = sadd.s32 %s354, 6
    %p2203 = scmp.eq.s32.totalorder %s2202, 15
    // Predicated region
    $region50: #{lstm_encoder_forward.1} parent=1 // pred_check
      %p2204 = pneg %p2203
    $region51: #{lstm_encoder_forward.1} parent=1 // pred_check_branch
      %2206 = sbr.rel (%p2204) target = $region53
    $region52: #{lstm_encoder_forward.1} parent=1 // pred_region
      %2207 = vst [vmem:[%s5] sm:$0xff] %v2197
    $region53: #{lstm_encoder_forward.1} parent=1 // pred_fallthru
      _
    %s2208 = scalar_lea.vmem %s0, 56
    %v2209 = vld [vmem:[%s2208] sm:$0xff]
    %v2210 = vld [vmem:[%s1] sm:$0xff]
    %v2211 = vld [vmem:[%s1 + $0x8] sm:$0xff]
    %v2212 = vld [vmem:[%s1 + $0x10] sm:$0xff]
    %v2213 = vld [vmem:[%s1 + $0x18] sm:$0xff]
    %v2215 = vsel %vm58, %v2209, 0
    %2217 = vmatpush.msra.mxu0 0.0
    %2218 = vmatpush.msra.mxu0 0.0
    %2219 = vmatpush.msra.mxu0 0.0
    %2220 = vmatpush.msra.mxu0 0.0
    %2221 = vmatpush.msra.mxu0 0.0
    %2222 = vmatpush.msra.mxu0 0.0
    %2223 = vmatpush.msra.mxu0 0.0
    %2224 = vmatpush.msra.mxu0 0.0
    %2225 = vmatpush.msra.mxu0 0.0
    %2226 = vmatpush.msra.mxu0 0.0
    %2227 = vmatpush.msra.mxu0 0.0
    %2228 = vmatpush.msra.mxu0 0.0
    %2229 = vmatpush.msra.mxu0 0.0
    %2230 = vmatpush.msra.mxu0 0.0
    %2231 = vmatpush.msra.mxu0 0.0
    %2232 = vmatpush.msra.mxu0 %v2210
    %2233 = vmatmul.f32.gmra.mxu0 %v2215
    %v2234 = vpop.f32.mrf.mxu0
    %v2235 = vadd.f32 %v50, %v2234
    %2236 = vdwg.mxu0
    %2237 = vmatpush.msra.mxu0 0.0
    %2238 = vmatpush.msra.mxu0 0.0
    %2239 = vmatpush.msra.mxu0 0.0
    %2240 = vmatpush.msra.mxu0 0.0
    %2241 = vmatpush.msra.mxu0 0.0
    %2242 = vmatpush.msra.mxu0 0.0
    %2243 = vmatpush.msra.mxu0 0.0
    %2244 = vmatpush.msra.mxu0 0.0
    %2245 = vmatpush.msra.mxu0 0.0
    %2246 = vmatpush.msra.mxu0 0.0
    %2247 = vmatpush.msra.mxu0 0.0
    %2248 = vmatpush.msra.mxu0 0.0
    %2249 = vmatpush.msra.mxu0 0.0
    %2250 = vmatpush.msra.mxu0 0.0
    %2251 = vmatpush.msra.mxu0 0.0
    %2252 = vmatpush.msra.mxu0 %v2211
    %2253 = vmatmul.f32.gmra.mxu0 %v2215
    %v2254 = vpop.f32.mrf.mxu0
    %v2255 = vadd.f32 %v51, %v2254
    %2256 = vdwg.mxu0
    %2257 = vmatpush.msra.mxu0 0.0
    %2258 = vmatpush.msra.mxu0 0.0
    %2259 = vmatpush.msra.mxu0 0.0
    %2260 = vmatpush.msra.mxu0 0.0
    %2261 = vmatpush.msra.mxu0 0.0
    %2262 = vmatpush.msra.mxu0 0.0
    %2263 = vmatpush.msra.mxu0 0.0
    %2264 = vmatpush.msra.mxu0 0.0
    %2265 = vmatpush.msra.mxu0 0.0
    %2266 = vmatpush.msra.mxu0 0.0
    %2267 = vmatpush.msra.mxu0 0.0
    %2268 = vmatpush.msra.mxu0 0.0
    %2269 = vmatpush.msra.mxu0 0.0
    %2270 = vmatpush.msra.mxu0 0.0
    %2271 = vmatpush.msra.mxu0 0.0
    %2272 = vmatpush.msra.mxu0 %v2212
    %2273 = vmatmul.f32.gmra.mxu0 %v2215
    %v2274 = vpop.f32.mrf.mxu0
    %v2275 = vadd.f32 %v52, %v2274
    %2276 = vdwg.mxu0
    %2277 = vmatpush.msra.mxu0 0.0
    %2278 = vmatpush.msra.mxu0 0.0
    %2279 = vmatpush.msra.mxu0 0.0
    %2280 = vmatpush.msra.mxu0 0.0
    %2281 = vmatpush.msra.mxu0 0.0
    %2282 = vmatpush.msra.mxu0 0.0
    %2283 = vmatpush.msra.mxu0 0.0
    %2284 = vmatpush.msra.mxu0 0.0
    %2285 = vmatpush.msra.mxu0 0.0
    %2286 = vmatpush.msra.mxu0 0.0
    %2287 = vmatpush.msra.mxu0 0.0
    %2288 = vmatpush.msra.mxu0 0.0
    %2289 = vmatpush.msra.mxu0 0.0
    %2290 = vmatpush.msra.mxu0 0.0
    %2291 = vmatpush.msra.mxu0 0.0
    %2292 = vmatpush.msra.mxu0 %v2213
    %2293 = vmatmul.f32.gmra.mxu0 %v2215
    %v2294 = vpop.f32.mrf.mxu0
    %v2295 = vadd.f32 %v53, %v2294
    %2296 = vdwg.mxu0
    %v2297 = vld [vmem:[#allocation4] sm:$0xff]
    %v2298 = vld [vmem:[#allocation4 + $0x8] sm:$0xff]
    %v2299 = vld [vmem:[#allocation4 + $0x10] sm:$0xff]
    %v2300 = vld [vmem:[#allocation4 + $0x18] sm:$0xff]
    %v2301 = vld [vmem:[#allocation4 + $0x20] sm:$0xff]
    %v2302 = vld [vmem:[#allocation4 + $0x28] sm:$0xff]
    %v2303 = vld [vmem:[#allocation4 + $0x30] sm:$0xff]
    %v2304 = vld [vmem:[#allocation4 + $0x38] sm:$0xff]
    %v2305 = vld [vmem:[#allocation4 + $0x40] sm:$0xff]
    %v2306 = vld [vmem:[#allocation4 + $0x48] sm:$0xff]
    %v2307 = vld [vmem:[#allocation4 + $0x50] sm:$0xff]
    %v2308 = vld [vmem:[#allocation4 + $0x58] sm:$0xff]
    %v2309 = vld [vmem:[#allocation4 + $0x60] sm:$0xff]
    %v2310 = vld [vmem:[#allocation4 + $0x68] sm:$0xff]
    %v2311 = vld [vmem:[#allocation4 + $0x70] sm:$0xff]
    %v2312 = vld [vmem:[#allocation4 + $0x78] sm:$0xff]
    %v2313 = vld [vmem:[#allocation4 + $0x80] sm:$0xff]
    %v2314 = vld [vmem:[#allocation4 + $0x88] sm:$0xff]
    %v2315 = vld [vmem:[#allocation4 + $0x90] sm:$0xff]
    %v2316 = vld [vmem:[#allocation4 + $0x98] sm:$0xff]
    %v2317 = vld [vmem:[#allocation4 + $0xa0] sm:$0xff]
    %v2318 = vld [vmem:[#allocation4 + $0xa8] sm:$0xff]
    %v2319 = vld [vmem:[#allocation4 + $0xb0] sm:$0xff]
    %v2320 = vld [vmem:[#allocation4 + $0xb8] sm:$0xff]
    %v2321 = vld [vmem:[#allocation4 + $0xc0] sm:$0xff]
    %v2322 = vld [vmem:[#allocation4 + $0xc8] sm:$0xff]
    %v2323 = vld [vmem:[#allocation4 + $0xd0] sm:$0xff]
    %v2324 = vld [vmem:[#allocation4 + $0xd8] sm:$0xff]
    %v2325 = vld [vmem:[#allocation4 + $0xe0] sm:$0xff]
    %v2326 = vld [vmem:[#allocation4 + $0xe8] sm:$0xff]
    %v2327 = vld [vmem:[#allocation4 + $0xf0] sm:$0xff]
    %v2328 = vld [vmem:[#allocation4 + $0xf8] sm:$0xff]
    %v2329 = vld [vmem:[#allocation4 + $0x100] sm:$0xff]
    %v2330 = vld [vmem:[#allocation4 + $0x108] sm:$0xff]
    %v2331 = vld [vmem:[#allocation4 + $0x110] sm:$0xff]
    %v2332 = vld [vmem:[#allocation4 + $0x118] sm:$0xff]
    %v2333 = vld [vmem:[#allocation4 + $0x120] sm:$0xff]
    %v2334 = vld [vmem:[#allocation4 + $0x128] sm:$0xff]
    %v2335 = vld [vmem:[#allocation4 + $0x130] sm:$0xff]
    %v2336 = vld [vmem:[#allocation4 + $0x138] sm:$0xff]
    %v2337 = vld [vmem:[#allocation4 + $0x140] sm:$0xff]
    %v2338 = vld [vmem:[#allocation4 + $0x148] sm:$0xff]
    %v2339 = vld [vmem:[#allocation4 + $0x150] sm:$0xff]
    %v2340 = vld [vmem:[#allocation4 + $0x158] sm:$0xff]
    %v2341 = vld [vmem:[#allocation4 + $0x160] sm:$0xff]
    %v2342 = vld [vmem:[#allocation4 + $0x168] sm:$0xff]
    %v2343 = vld [vmem:[#allocation4 + $0x170] sm:$0xff]
    %v2344 = vld [vmem:[#allocation4 + $0x178] sm:$0xff]
    %v2345 = vld [vmem:[#allocation4 + $0x180] sm:$0xff]
    %v2346 = vld [vmem:[#allocation4 + $0x188] sm:$0xff]
    %v2347 = vld [vmem:[#allocation4 + $0x190] sm:$0xff]
    %v2348 = vld [vmem:[#allocation4 + $0x198] sm:$0xff]
    %v2349 = vld [vmem:[#allocation4 + $0x1a0] sm:$0xff]
    %v2350 = vld [vmem:[#allocation4 + $0x1a8] sm:$0xff]
    %v2351 = vld [vmem:[#allocation4 + $0x1b0] sm:$0xff]
    %v2352 = vld [vmem:[#allocation4 + $0x1b8] sm:$0xff]
    %v2353 = vld [vmem:[#allocation4 + $0x1c0] sm:$0xff]
    %v2354 = vld [vmem:[#allocation4 + $0x1c8] sm:$0xff]
    %v2355 = vld [vmem:[#allocation4 + $0x1d0] sm:$0xff]
    %v2356 = vld [vmem:[#allocation4 + $0x1d8] sm:$0xff]
    %v2357 = vld [vmem:[#allocation4 + $0x1e0] sm:$0xff]
    %v2358 = vld [vmem:[#allocation4 + $0x1e8] sm:$0xff]
    %v2359 = vld [vmem:[#allocation4 + $0x1f0] sm:$0xff]
    %v2360 = vld [vmem:[#allocation4 + $0x1f8] sm:$0xff]
    %2361 = vmatpush.msra.mxu0 %v2357
    %2362 = vmatpush.msra.mxu0 %v2353
    %2363 = vmatpush.msra.mxu0 %v2349
    %2364 = vmatpush.msra.mxu0 %v2345
    %2365 = vmatpush.msra.mxu0 %v2341
    %2366 = vmatpush.msra.mxu0 %v2337
    %2367 = vmatpush.msra.mxu0 %v2333
    %2368 = vmatpush.msra.mxu0 %v2329
    %2369 = vmatpush.msra.mxu0 %v2325
    %2370 = vmatpush.msra.mxu0 %v2321
    %2371 = vmatpush.msra.mxu0 %v2317
    %2372 = vmatpush.msra.mxu0 %v2313
    %2373 = vmatpush.msra.mxu0 %v2309
    %2374 = vmatpush.msra.mxu0 %v2305
    %2375 = vmatpush.msra.mxu0 %v2301
    %2376 = vmatpush.msra.mxu0 %v2297
    %2377 = vmatmul.f32.gmra.mxu0 %v2199
    %v2378 = vpop.f32.mrf.mxu0
    %v2379 = vadd.f32 0.0, %v2378
    %2380 = vdwg.mxu0
    %2381 = vmatpush.msra.mxu0 %v2358
    %2382 = vmatpush.msra.mxu0 %v2354
    %2383 = vmatpush.msra.mxu0 %v2350
    %2384 = vmatpush.msra.mxu0 %v2346
    %2385 = vmatpush.msra.mxu0 %v2342
    %2386 = vmatpush.msra.mxu0 %v2338
    %2387 = vmatpush.msra.mxu0 %v2334
    %2388 = vmatpush.msra.mxu0 %v2330
    %2389 = vmatpush.msra.mxu0 %v2326
    %2390 = vmatpush.msra.mxu0 %v2322
    %2391 = vmatpush.msra.mxu0 %v2318
    %2392 = vmatpush.msra.mxu0 %v2314
    %2393 = vmatpush.msra.mxu0 %v2310
    %2394 = vmatpush.msra.mxu0 %v2306
    %2395 = vmatpush.msra.mxu0 %v2302
    %2396 = vmatpush.msra.mxu0 %v2298
    %2397 = vmatmul.f32.gmra.mxu0 %v2199
    %v2398 = vpop.f32.mrf.mxu0
    %v2399 = vadd.f32 0.0, %v2398
    %2400 = vdwg.mxu0
    %2401 = vmatpush.msra.mxu0 %v2359
    %2402 = vmatpush.msra.mxu0 %v2355
    %2403 = vmatpush.msra.mxu0 %v2351
    %2404 = vmatpush.msra.mxu0 %v2347
    %2405 = vmatpush.msra.mxu0 %v2343
    %2406 = vmatpush.msra.mxu0 %v2339
    %2407 = vmatpush.msra.mxu0 %v2335
    %2408 = vmatpush.msra.mxu0 %v2331
    %2409 = vmatpush.msra.mxu0 %v2327
    %2410 = vmatpush.msra.mxu0 %v2323
    %2411 = vmatpush.msra.mxu0 %v2319
    %2412 = vmatpush.msra.mxu0 %v2315
    %2413 = vmatpush.msra.mxu0 %v2311
    %2414 = vmatpush.msra.mxu0 %v2307
    %2415 = vmatpush.msra.mxu0 %v2303
    %2416 = vmatpush.msra.mxu0 %v2299
    %2417 = vmatmul.f32.gmra.mxu0 %v2199
    %v2418 = vpop.f32.mrf.mxu0
    %v2419 = vadd.f32 0.0, %v2418
    %2420 = vdwg.mxu0
    %2421 = vmatpush.msra.mxu0 %v2360
    %2422 = vmatpush.msra.mxu0 %v2356
    %2423 = vmatpush.msra.mxu0 %v2352
    %2424 = vmatpush.msra.mxu0 %v2348
    %2425 = vmatpush.msra.mxu0 %v2344
    %2426 = vmatpush.msra.mxu0 %v2340
    %2427 = vmatpush.msra.mxu0 %v2336
    %2428 = vmatpush.msra.mxu0 %v2332
    %2429 = vmatpush.msra.mxu0 %v2328
    %2430 = vmatpush.msra.mxu0 %v2324
    %2431 = vmatpush.msra.mxu0 %v2320
    %2432 = vmatpush.msra.mxu0 %v2316
    %2433 = vmatpush.msra.mxu0 %v2312
    %2434 = vmatpush.msra.mxu0 %v2308
    %2435 = vmatpush.msra.mxu0 %v2304
    %2436 = vmatpush.msra.mxu0 %v2300
    %2437 = vmatmul.f32.gmra.mxu0 %v2199
    %v2438 = vpop.f32.mrf.mxu0
    %v2439 = vadd.f32 0.0, %v2438
    %2440 = vdwg.mxu0
    %v2441 = vadd.f32 %v2235, %v2379
    %v2442 = vadd.f32 %v2255, %v2399
    %v2443 = vadd.f32 %v2275, %v2419
    %v2444 = vadd.f32 %v2295, %v2439
    %v2445 = vxor.u32 %v2441, 2147483648
    %v2446 = vmul.f32 %v2445, 1.442695
    %v2447 = vpow.pop %v2446
    %v2448 = vadd.f32 %v2447, 1.0
    %v2449 = vrcp.pop %v2448
    %v2450 = vmul.f32 %v2448, %v2449
    %v2451 = vsub.f32 1.0, %v2450
    %v2452 = vmul.f32 %v2449, %v2451
    %v2453 = vadd.f32 %v2449, %v2452
    %vm2454 = vweird.f32 %v2448
    %vm2455 = vweird.f32 %v2449
    %vm2456 = vmor %vm2454, %vm2455
    %v2457 = vsel %vm2456, %v2449, %v2453
    %v2458 = vand.u32 2147483647, %v2448
    %vm2459 = vcmp.eq.f32.partialorder %v2458, 8.507059e+37
    %v2460 = vand.u32 %v2448, 2147483648
    %v2461 = vor.u32 1.1754944e-38, %v2460
    %v2462 = vsel %vm2459, %v2461, %v2457
    %v2463 = vmul.f32 1.0, %v2462
    %v2464 = vxor.u32 %v2442, 2147483648
    %v2465 = vmul.f32 %v2464, 1.442695
    %v2466 = vpow.pop %v2465
    %v2467 = vadd.f32 %v2466, 1.0
    %v2468 = vrcp.pop %v2467
    %v2469 = vmul.f32 %v2467, %v2468
    %v2470 = vsub.f32 1.0, %v2469
    %v2471 = vmul.f32 %v2468, %v2470
    %v2472 = vadd.f32 %v2468, %v2471
    %vm2473 = vweird.f32 %v2467
    %vm2474 = vweird.f32 %v2468
    %vm2475 = vmor %vm2473, %vm2474
    %v2476 = vsel %vm2475, %v2468, %v2472
    %v2477 = vand.u32 2147483647, %v2467
    %vm2478 = vcmp.eq.f32.partialorder %v2477, 8.507059e+37
    %v2479 = vand.u32 %v2467, 2147483648
    %v2480 = vor.u32 1.1754944e-38, %v2479
    %v2481 = vsel %vm2478, %v2480, %v2476
    %v2482 = vmul.f32 1.0, %v2481
    %v2483 = vtanh.pop %v2443
    %v2484 = vxor.u32 %v2444, 2147483648
    %v2485 = vmul.f32 %v2484, 1.442695
    %v2486 = vpow.pop %v2485
    %v2487 = vadd.f32 %v2486, 1.0
    %v2488 = vrcp.pop %v2487
    %v2489 = vmul.f32 %v2487, %v2488
    %v2490 = vsub.f32 1.0, %v2489
    %v2491 = vmul.f32 %v2488, %v2490
    %v2492 = vadd.f32 %v2488, %v2491
    %vm2493 = vweird.f32 %v2487
    %vm2494 = vweird.f32 %v2488
    %vm2495 = vmor %vm2493, %vm2494
    %v2496 = vsel %vm2495, %v2488, %v2492
    %v2497 = vand.u32 2147483647, %v2487
    %vm2498 = vcmp.eq.f32.partialorder %v2497, 8.507059e+37
    %v2499 = vand.u32 %v2487, 2147483648
    %v2500 = vor.u32 1.1754944e-38, %v2499
    %v2501 = vsel %vm2498, %v2500, %v2496
    %v2502 = vmul.f32 1.0, %v2501
    %v2503 = vmul.f32 %v2482, %v2197
    %v2504 = vmul.f32 %v2463, %v2483
    %v2505 = vadd.f32 %v2503, %v2504
    %v2506 = vtanh.pop %v2505
    %v2507 = vmul.f32 %v2502, %v2506
    %s2508 = scalar_lea.vmem %s4, 56
    %2509 = vst [vmem:[%s2508] sm:$0xff] %v2507
    %s2510 = sadd.s32 %s354, 7
    %p2511 = scmp.eq.s32.totalorder %s2510, 15
    // Predicated region
    $region54: #{lstm_encoder_forward.1} parent=1 // pred_check
      %p2512 = pneg %p2511
    $region55: #{lstm_encoder_forward.1} parent=1 // pred_check_branch
      %2514 = sbr.rel (%p2512) target = $region57
    $region56: #{lstm_encoder_forward.1} parent=1 // pred_region
      %2515 = vst [vmem:[%s5] sm:$0xff] %v2505
    $region57: #{lstm_encoder_forward.1} parent=1 // pred_fallthru
      _
    %s2516 = scalar_lea.vmem %s0, 64
    %v2517 = vld [vmem:[%s2516] sm:$0xff]
    %v2518 = vld [vmem:[%s1] sm:$0xff]
    %v2519 = vld [vmem:[%s1 + $0x8] sm:$0xff]
    %v2520 = vld [vmem:[%s1 + $0x10] sm:$0xff]
    %v2521 = vld [vmem:[%s1 + $0x18] sm:$0xff]
    %v2523 = vsel %vm58, %v2517, 0
    %2525 = vmatpush.msra.mxu0 0.0
    %2526 = vmatpush.msra.mxu0 0.0
    %2527 = vmatpush.msra.mxu0 0.0
    %2528 = vmatpush.msra.mxu0 0.0
    %2529 = vmatpush.msra.mxu0 0.0
    %2530 = vmatpush.msra.mxu0 0.0
    %2531 = vmatpush.msra.mxu0 0.0
    %2532 = vmatpush.msra.mxu0 0.0
    %2533 = vmatpush.msra.mxu0 0.0
    %2534 = vmatpush.msra.mxu0 0.0
    %2535 = vmatpush.msra.mxu0 0.0
    %2536 = vmatpush.msra.mxu0 0.0
    %2537 = vmatpush.msra.mxu0 0.0
    %2538 = vmatpush.msra.mxu0 0.0
    %2539 = vmatpush.msra.mxu0 0.0
    %2540 = vmatpush.msra.mxu0 %v2518
    %2541 = vmatmul.f32.gmra.mxu0 %v2523
    %v2542 = vpop.f32.mrf.mxu0
    %v2543 = vadd.f32 %v50, %v2542
    %2544 = vdwg.mxu0
    %2545 = vmatpush.msra.mxu0 0.0
    %2546 = vmatpush.msra.mxu0 0.0
    %2547 = vmatpush.msra.mxu0 0.0
    %2548 = vmatpush.msra.mxu0 0.0
    %2549 = vmatpush.msra.mxu0 0.0
    %2550 = vmatpush.msra.mxu0 0.0
    %2551 = vmatpush.msra.mxu0 0.0
    %2552 = vmatpush.msra.mxu0 0.0
    %2553 = vmatpush.msra.mxu0 0.0
    %2554 = vmatpush.msra.mxu0 0.0
    %2555 = vmatpush.msra.mxu0 0.0
    %2556 = vmatpush.msra.mxu0 0.0
    %2557 = vmatpush.msra.mxu0 0.0
    %2558 = vmatpush.msra.mxu0 0.0
    %2559 = vmatpush.msra.mxu0 0.0
    %2560 = vmatpush.msra.mxu0 %v2519
    %2561 = vmatmul.f32.gmra.mxu0 %v2523
    %v2562 = vpop.f32.mrf.mxu0
    %v2563 = vadd.f32 %v51, %v2562
    %2564 = vdwg.mxu0
    %2565 = vmatpush.msra.mxu0 0.0
    %2566 = vmatpush.msra.mxu0 0.0
    %2567 = vmatpush.msra.mxu0 0.0
    %2568 = vmatpush.msra.mxu0 0.0
    %2569 = vmatpush.msra.mxu0 0.0
    %2570 = vmatpush.msra.mxu0 0.0
    %2571 = vmatpush.msra.mxu0 0.0
    %2572 = vmatpush.msra.mxu0 0.0
    %2573 = vmatpush.msra.mxu0 0.0
    %2574 = vmatpush.msra.mxu0 0.0
    %2575 = vmatpush.msra.mxu0 0.0
    %2576 = vmatpush.msra.mxu0 0.0
    %2577 = vmatpush.msra.mxu0 0.0
    %2578 = vmatpush.msra.mxu0 0.0
    %2579 = vmatpush.msra.mxu0 0.0
    %2580 = vmatpush.msra.mxu0 %v2520
    %2581 = vmatmul.f32.gmra.mxu0 %v2523
    %v2582 = vpop.f32.mrf.mxu0
    %v2583 = vadd.f32 %v52, %v2582
    %2584 = vdwg.mxu0
    %2585 = vmatpush.msra.mxu0 0.0
    %2586 = vmatpush.msra.mxu0 0.0
    %2587 = vmatpush.msra.mxu0 0.0
    %2588 = vmatpush.msra.mxu0 0.0
    %2589 = vmatpush.msra.mxu0 0.0
    %2590 = vmatpush.msra.mxu0 0.0
    %2591 = vmatpush.msra.mxu0 0.0
    %2592 = vmatpush.msra.mxu0 0.0
    %2593 = vmatpush.msra.mxu0 0.0
    %2594 = vmatpush.msra.mxu0 0.0
    %2595 = vmatpush.msra.mxu0 0.0
    %2596 = vmatpush.msra.mxu0 0.0
    %2597 = vmatpush.msra.mxu0 0.0
    %2598 = vmatpush.msra.mxu0 0.0
    %2599 = vmatpush.msra.mxu0 0.0
    %2600 = vmatpush.msra.mxu0 %v2521
    %2601 = vmatmul.f32.gmra.mxu0 %v2523
    %v2602 = vpop.f32.mrf.mxu0
    %v2603 = vadd.f32 %v53, %v2602
    %2604 = vdwg.mxu0
    %v2605 = vld [vmem:[#allocation4] sm:$0xff]
    %v2606 = vld [vmem:[#allocation4 + $0x8] sm:$0xff]
    %v2607 = vld [vmem:[#allocation4 + $0x10] sm:$0xff]
    %v2608 = vld [vmem:[#allocation4 + $0x18] sm:$0xff]
    %v2609 = vld [vmem:[#allocation4 + $0x20] sm:$0xff]
    %v2610 = vld [vmem:[#allocation4 + $0x28] sm:$0xff]
    %v2611 = vld [vmem:[#allocation4 + $0x30] sm:$0xff]
    %v2612 = vld [vmem:[#allocation4 + $0x38] sm:$0xff]
    %v2613 = vld [vmem:[#allocation4 + $0x40] sm:$0xff]
    %v2614 = vld [vmem:[#allocation4 + $0x48] sm:$0xff]
    %v2615 = vld [vmem:[#allocation4 + $0x50] sm:$0xff]
    %v2616 = vld [vmem:[#allocation4 + $0x58] sm:$0xff]
    %v2617 = vld [vmem:[#allocation4 + $0x60] sm:$0xff]
    %v2618 = vld [vmem:[#allocation4 + $0x68] sm:$0xff]
    %v2619 = vld [vmem:[#allocation4 + $0x70] sm:$0xff]
    %v2620 = vld [vmem:[#allocation4 + $0x78] sm:$0xff]
    %v2621 = vld [vmem:[#allocation4 + $0x80] sm:$0xff]
    %v2622 = vld [vmem:[#allocation4 + $0x88] sm:$0xff]
    %v2623 = vld [vmem:[#allocation4 + $0x90] sm:$0xff]
    %v2624 = vld [vmem:[#allocation4 + $0x98] sm:$0xff]
    %v2625 = vld [vmem:[#allocation4 + $0xa0] sm:$0xff]
    %v2626 = vld [vmem:[#allocation4 + $0xa8] sm:$0xff]
    %v2627 = vld [vmem:[#allocation4 + $0xb0] sm:$0xff]
    %v2628 = vld [vmem:[#allocation4 + $0xb8] sm:$0xff]
    %v2629 = vld [vmem:[#allocation4 + $0xc0] sm:$0xff]
    %v2630 = vld [vmem:[#allocation4 + $0xc8] sm:$0xff]
    %v2631 = vld [vmem:[#allocation4 + $0xd0] sm:$0xff]
    %v2632 = vld [vmem:[#allocation4 + $0xd8] sm:$0xff]
    %v2633 = vld [vmem:[#allocation4 + $0xe0] sm:$0xff]
    %v2634 = vld [vmem:[#allocation4 + $0xe8] sm:$0xff]
    %v2635 = vld [vmem:[#allocation4 + $0xf0] sm:$0xff]
    %v2636 = vld [vmem:[#allocation4 + $0xf8] sm:$0xff]
    %v2637 = vld [vmem:[#allocation4 + $0x100] sm:$0xff]
    %v2638 = vld [vmem:[#allocation4 + $0x108] sm:$0xff]
    %v2639 = vld [vmem:[#allocation4 + $0x110] sm:$0xff]
    %v2640 = vld [vmem:[#allocation4 + $0x118] sm:$0xff]
    %v2641 = vld [vmem:[#allocation4 + $0x120] sm:$0xff]
    %v2642 = vld [vmem:[#allocation4 + $0x128] sm:$0xff]
    %v2643 = vld [vmem:[#allocation4 + $0x130] sm:$0xff]
    %v2644 = vld [vmem:[#allocation4 + $0x138] sm:$0xff]
    %v2645 = vld [vmem:[#allocation4 + $0x140] sm:$0xff]
    %v2646 = vld [vmem:[#allocation4 + $0x148] sm:$0xff]
    %v2647 = vld [vmem:[#allocation4 + $0x150] sm:$0xff]
    %v2648 = vld [vmem:[#allocation4 + $0x158] sm:$0xff]
    %v2649 = vld [vmem:[#allocation4 + $0x160] sm:$0xff]
    %v2650 = vld [vmem:[#allocation4 + $0x168] sm:$0xff]
    %v2651 = vld [vmem:[#allocation4 + $0x170] sm:$0xff]
    %v2652 = vld [vmem:[#allocation4 + $0x178] sm:$0xff]
    %v2653 = vld [vmem:[#allocation4 + $0x180] sm:$0xff]
    %v2654 = vld [vmem:[#allocation4 + $0x188] sm:$0xff]
    %v2655 = vld [vmem:[#allocation4 + $0x190] sm:$0xff]
    %v2656 = vld [vmem:[#allocation4 + $0x198] sm:$0xff]
    %v2657 = vld [vmem:[#allocation4 + $0x1a0] sm:$0xff]
    %v2658 = vld [vmem:[#allocation4 + $0x1a8] sm:$0xff]
    %v2659 = vld [vmem:[#allocation4 + $0x1b0] sm:$0xff]
    %v2660 = vld [vmem:[#allocation4 + $0x1b8] sm:$0xff]
    %v2661 = vld [vmem:[#allocation4 + $0x1c0] sm:$0xff]
    %v2662 = vld [vmem:[#allocation4 + $0x1c8] sm:$0xff]
    %v2663 = vld [vmem:[#allocation4 + $0x1d0] sm:$0xff]
    %v2664 = vld [vmem:[#allocation4 + $0x1d8] sm:$0xff]
    %v2665 = vld [vmem:[#allocation4 + $0x1e0] sm:$0xff]
    %v2666 = vld [vmem:[#allocation4 + $0x1e8] sm:$0xff]
    %v2667 = vld [vmem:[#allocation4 + $0x1f0] sm:$0xff]
    %v2668 = vld [vmem:[#allocation4 + $0x1f8] sm:$0xff]
    %2669 = vmatpush.msra.mxu0 %v2665
    %2670 = vmatpush.msra.mxu0 %v2661
    %2671 = vmatpush.msra.mxu0 %v2657
    %2672 = vmatpush.msra.mxu0 %v2653
    %2673 = vmatpush.msra.mxu0 %v2649
    %2674 = vmatpush.msra.mxu0 %v2645
    %2675 = vmatpush.msra.mxu0 %v2641
    %2676 = vmatpush.msra.mxu0 %v2637
    %2677 = vmatpush.msra.mxu0 %v2633
    %2678 = vmatpush.msra.mxu0 %v2629
    %2679 = vmatpush.msra.mxu0 %v2625
    %2680 = vmatpush.msra.mxu0 %v2621
    %2681 = vmatpush.msra.mxu0 %v2617
    %2682 = vmatpush.msra.mxu0 %v2613
    %2683 = vmatpush.msra.mxu0 %v2609
    %2684 = vmatpush.msra.mxu0 %v2605
    %2685 = vmatmul.f32.gmra.mxu0 %v2507
    %v2686 = vpop.f32.mrf.mxu0
    %v2687 = vadd.f32 0.0, %v2686
    %2688 = vdwg.mxu0
    %2689 = vmatpush.msra.mxu0 %v2666
    %2690 = vmatpush.msra.mxu0 %v2662
    %2691 = vmatpush.msra.mxu0 %v2658
    %2692 = vmatpush.msra.mxu0 %v2654
    %2693 = vmatpush.msra.mxu0 %v2650
    %2694 = vmatpush.msra.mxu0 %v2646
    %2695 = vmatpush.msra.mxu0 %v2642
    %2696 = vmatpush.msra.mxu0 %v2638
    %2697 = vmatpush.msra.mxu0 %v2634
    %2698 = vmatpush.msra.mxu0 %v2630
    %2699 = vmatpush.msra.mxu0 %v2626
    %2700 = vmatpush.msra.mxu0 %v2622
    %2701 = vmatpush.msra.mxu0 %v2618
    %2702 = vmatpush.msra.mxu0 %v2614
    %2703 = vmatpush.msra.mxu0 %v2610
    %2704 = vmatpush.msra.mxu0 %v2606
    %2705 = vmatmul.f32.gmra.mxu0 %v2507
    %v2706 = vpop.f32.mrf.mxu0
    %v2707 = vadd.f32 0.0, %v2706
    %2708 = vdwg.mxu0
    %2709 = vmatpush.msra.mxu0 %v2667
    %2710 = vmatpush.msra.mxu0 %v2663
    %2711 = vmatpush.msra.mxu0 %v2659
    %2712 = vmatpush.msra.mxu0 %v2655
    %2713 = vmatpush.msra.mxu0 %v2651
    %2714 = vmatpush.msra.mxu0 %v2647
    %2715 = vmatpush.msra.mxu0 %v2643
    %2716 = vmatpush.msra.mxu0 %v2639
    %2717 = vmatpush.msra.mxu0 %v2635
    %2718 = vmatpush.msra.mxu0 %v2631
    %2719 = vmatpush.msra.mxu0 %v2627
    %2720 = vmatpush.msra.mxu0 %v2623
    %2721 = vmatpush.msra.mxu0 %v2619
    %2722 = vmatpush.msra.mxu0 %v2615
    %2723 = vmatpush.msra.mxu0 %v2611
    %2724 = vmatpush.msra.mxu0 %v2607
    %2725 = vmatmul.f32.gmra.mxu0 %v2507
    %v2726 = vpop.f32.mrf.mxu0
    %v2727 = vadd.f32 0.0, %v2726
    %2728 = vdwg.mxu0
    %2729 = vmatpush.msra.mxu0 %v2668
    %2730 = vmatpush.msra.mxu0 %v2664
    %2731 = vmatpush.msra.mxu0 %v2660
    %2732 = vmatpush.msra.mxu0 %v2656
    %2733 = vmatpush.msra.mxu0 %v2652
    %2734 = vmatpush.msra.mxu0 %v2648
    %2735 = vmatpush.msra.mxu0 %v2644
    %2736 = vmatpush.msra.mxu0 %v2640
    %2737 = vmatpush.msra.mxu0 %v2636
    %2738 = vmatpush.msra.mxu0 %v2632
    %2739 = vmatpush.msra.mxu0 %v2628
    %2740 = vmatpush.msra.mxu0 %v2624
    %2741 = vmatpush.msra.mxu0 %v2620
    %2742 = vmatpush.msra.mxu0 %v2616
    %2743 = vmatpush.msra.mxu0 %v2612
    %2744 = vmatpush.msra.mxu0 %v2608
    %2745 = vmatmul.f32.gmra.mxu0 %v2507
    %v2746 = vpop.f32.mrf.mxu0
    %v2747 = vadd.f32 0.0, %v2746
    %2748 = vdwg.mxu0
    %v2749 = vadd.f32 %v2543, %v2687
    %v2750 = vadd.f32 %v2563, %v2707
    %v2751 = vadd.f32 %v2583, %v2727
    %v2752 = vadd.f32 %v2603, %v2747
    %v2753 = vxor.u32 %v2749, 2147483648
    %v2754 = vmul.f32 %v2753, 1.442695
    %v2755 = vpow.pop %v2754
    %v2756 = vadd.f32 %v2755, 1.0
    %v2757 = vrcp.pop %v2756
    %v2758 = vmul.f32 %v2756, %v2757
    %v2759 = vsub.f32 1.0, %v2758
    %v2760 = vmul.f32 %v2757, %v2759
    %v2761 = vadd.f32 %v2757, %v2760
    %vm2762 = vweird.f32 %v2756
    %vm2763 = vweird.f32 %v2757
    %vm2764 = vmor %vm2762, %vm2763
    %v2765 = vsel %vm2764, %v2757, %v2761
    %v2766 = vand.u32 2147483647, %v2756
    %vm2767 = vcmp.eq.f32.partialorder %v2766, 8.507059e+37
    %v2768 = vand.u32 %v2756, 2147483648
    %v2769 = vor.u32 1.1754944e-38, %v2768
    %v2770 = vsel %vm2767, %v2769, %v2765
    %v2771 = vmul.f32 1.0, %v2770
    %v2772 = vxor.u32 %v2750, 2147483648
    %v2773 = vmul.f32 %v2772, 1.442695
    %v2774 = vpow.pop %v2773
    %v2775 = vadd.f32 %v2774, 1.0
    %v2776 = vrcp.pop %v2775
    %v2777 = vmul.f32 %v2775, %v2776
    %v2778 = vsub.f32 1.0, %v2777
    %v2779 = vmul.f32 %v2776, %v2778
    %v2780 = vadd.f32 %v2776, %v2779
    %vm2781 = vweird.f32 %v2775
    %vm2782 = vweird.f32 %v2776
    %vm2783 = vmor %vm2781, %vm2782
    %v2784 = vsel %vm2783, %v2776, %v2780
    %v2785 = vand.u32 2147483647, %v2775
    %vm2786 = vcmp.eq.f32.partialorder %v2785, 8.507059e+37
    %v2787 = vand.u32 %v2775, 2147483648
    %v2788 = vor.u32 1.1754944e-38, %v2787
    %v2789 = vsel %vm2786, %v2788, %v2784
    %v2790 = vmul.f32 1.0, %v2789
    %v2791 = vtanh.pop %v2751
    %v2792 = vxor.u32 %v2752, 2147483648
    %v2793 = vmul.f32 %v2792, 1.442695
    %v2794 = vpow.pop %v2793
    %v2795 = vadd.f32 %v2794, 1.0
    %v2796 = vrcp.pop %v2795
    %v2797 = vmul.f32 %v2795, %v2796
    %v2798 = vsub.f32 1.0, %v2797
    %v2799 = vmul.f32 %v2796, %v2798
    %v2800 = vadd.f32 %v2796, %v2799
    %vm2801 = vweird.f32 %v2795
    %vm2802 = vweird.f32 %v2796
    %vm2803 = vmor %vm2801, %vm2802
    %v2804 = vsel %vm2803, %v2796, %v2800
    %v2805 = vand.u32 2147483647, %v2795
    %vm2806 = vcmp.eq.f32.partialorder %v2805, 8.507059e+37
    %v2807 = vand.u32 %v2795, 2147483648
    %v2808 = vor.u32 1.1754944e-38, %v2807
    %v2809 = vsel %vm2806, %v2808, %v2804
    %v2810 = vmul.f32 1.0, %v2809
    %v2811 = vmul.f32 %v2790, %v2505
    %v2812 = vmul.f32 %v2771, %v2791
    %v2813 = vadd.f32 %v2811, %v2812
    %v2814 = vtanh.pop %v2813
    %v2815 = vmul.f32 %v2810, %v2814
    %s2816 = scalar_lea.vmem %s4, 64
    %2817 = vst [vmem:[%s2816] sm:$0xff] %v2815
    %s2818 = sadd.s32 %s354, 8
    %p2819 = scmp.eq.s32.totalorder %s2818, 15
    // Predicated region
    $region58: #{lstm_encoder_forward.1} parent=1 // pred_check
      %p2820 = pneg %p2819
    $region59: #{lstm_encoder_forward.1} parent=1 // pred_check_branch
      %2822 = sbr.rel (%p2820) target = $region61
    $region60: #{lstm_encoder_forward.1} parent=1 // pred_region
      %2823 = vst [vmem:[%s5] sm:$0xff] %v2813
    $region61: #{lstm_encoder_forward.1} parent=1 // pred_fallthru
      _
    %s2824 = scalar_lea.vmem %s0, 72
    %v2825 = vld [vmem:[%s2824] sm:$0xff]
    %v2826 = vld [vmem:[%s1] sm:$0xff]
    %v2827 = vld [vmem:[%s1 + $0x8] sm:$0xff]
    %v2828 = vld [vmem:[%s1 + $0x10] sm:$0xff]
    %v2829 = vld [vmem:[%s1 + $0x18] sm:$0xff]
    %v2831 = vsel %vm58, %v2825, 0
    %2833 = vmatpush.msra.mxu0 0.0
    %2834 = vmatpush.msra.mxu0 0.0
    %2835 = vmatpush.msra.mxu0 0.0
    %2836 = vmatpush.msra.mxu0 0.0
    %2837 = vmatpush.msra.mxu0 0.0
    %2838 = vmatpush.msra.mxu0 0.0
    %2839 = vmatpush.msra.mxu0 0.0
    %2840 = vmatpush.msra.mxu0 0.0
    %2841 = vmatpush.msra.mxu0 0.0
    %2842 = vmatpush.msra.mxu0 0.0
    %2843 = vmatpush.msra.mxu0 0.0
    %2844 = vmatpush.msra.mxu0 0.0
    %2845 = vmatpush.msra.mxu0 0.0
    %2846 = vmatpush.msra.mxu0 0.0
    %2847 = vmatpush.msra.mxu0 0.0
    %2848 = vmatpush.msra.mxu0 %v2826
    %2849 = vmatmul.f32.gmra.mxu0 %v2831
    %v2850 = vpop.f32.mrf.mxu0
    %v2851 = vadd.f32 %v50, %v2850
    %2852 = vdwg.mxu0
    %2853 = vmatpush.msra.mxu0 0.0
    %2854 = vmatpush.msra.mxu0 0.0
    %2855 = vmatpush.msra.mxu0 0.0
    %2856 = vmatpush.msra.mxu0 0.0
    %2857 = vmatpush.msra.mxu0 0.0
    %2858 = vmatpush.msra.mxu0 0.0
    %2859 = vmatpush.msra.mxu0 0.0
    %2860 = vmatpush.msra.mxu0 0.0
    %2861 = vmatpush.msra.mxu0 0.0
    %2862 = vmatpush.msra.mxu0 0.0
    %2863 = vmatpush.msra.mxu0 0.0
    %2864 = vmatpush.msra.mxu0 0.0
    %2865 = vmatpush.msra.mxu0 0.0
    %2866 = vmatpush.msra.mxu0 0.0
    %2867 = vmatpush.msra.mxu0 0.0
    %2868 = vmatpush.msra.mxu0 %v2827
    %2869 = vmatmul.f32.gmra.mxu0 %v2831
    %v2870 = vpop.f32.mrf.mxu0
    %v2871 = vadd.f32 %v51, %v2870
    %2872 = vdwg.mxu0
    %2873 = vmatpush.msra.mxu0 0.0
    %2874 = vmatpush.msra.mxu0 0.0
    %2875 = vmatpush.msra.mxu0 0.0
    %2876 = vmatpush.msra.mxu0 0.0
    %2877 = vmatpush.msra.mxu0 0.0
    %2878 = vmatpush.msra.mxu0 0.0
    %2879 = vmatpush.msra.mxu0 0.0
    %2880 = vmatpush.msra.mxu0 0.0
    %2881 = vmatpush.msra.mxu0 0.0
    %2882 = vmatpush.msra.mxu0 0.0
    %2883 = vmatpush.msra.mxu0 0.0
    %2884 = vmatpush.msra.mxu0 0.0
    %2885 = vmatpush.msra.mxu0 0.0
    %2886 = vmatpush.msra.mxu0 0.0
    %2887 = vmatpush.msra.mxu0 0.0
    %2888 = vmatpush.msra.mxu0 %v2828
    %2889 = vmatmul.f32.gmra.mxu0 %v2831
    %v2890 = vpop.f32.mrf.mxu0
    %v2891 = vadd.f32 %v52, %v2890
    %2892 = vdwg.mxu0
    %2893 = vmatpush.msra.mxu0 0.0
    %2894 = vmatpush.msra.mxu0 0.0
    %2895 = vmatpush.msra.mxu0 0.0
    %2896 = vmatpush.msra.mxu0 0.0
    %2897 = vmatpush.msra.mxu0 0.0
    %2898 = vmatpush.msra.mxu0 0.0
    %2899 = vmatpush.msra.mxu0 0.0
    %2900 = vmatpush.msra.mxu0 0.0
    %2901 = vmatpush.msra.mxu0 0.0
    %2902 = vmatpush.msra.mxu0 0.0
    %2903 = vmatpush.msra.mxu0 0.0
    %2904 = vmatpush.msra.mxu0 0.0
    %2905 = vmatpush.msra.mxu0 0.0
    %2906 = vmatpush.msra.mxu0 0.0
    %2907 = vmatpush.msra.mxu0 0.0
    %2908 = vmatpush.msra.mxu0 %v2829
    %2909 = vmatmul.f32.gmra.mxu0 %v2831
    %v2910 = vpop.f32.mrf.mxu0
    %v2911 = vadd.f32 %v53, %v2910
    %2912 = vdwg.mxu0
    %v2913 = vld [vmem:[#allocation4] sm:$0xff]
    %v2914 = vld [vmem:[#allocation4 + $0x8] sm:$0xff]
    %v2915 = vld [vmem:[#allocation4 + $0x10] sm:$0xff]
    %v2916 = vld [vmem:[#allocation4 + $0x18] sm:$0xff]
    %v2917 = vld [vmem:[#allocation4 + $0x20] sm:$0xff]
    %v2918 = vld [vmem:[#allocation4 + $0x28] sm:$0xff]
    %v2919 = vld [vmem:[#allocation4 + $0x30] sm:$0xff]
    %v2920 = vld [vmem:[#allocation4 + $0x38] sm:$0xff]
    %v2921 = vld [vmem:[#allocation4 + $0x40] sm:$0xff]
    %v2922 = vld [vmem:[#allocation4 + $0x48] sm:$0xff]
    %v2923 = vld [vmem:[#allocation4 + $0x50] sm:$0xff]
    %v2924 = vld [vmem:[#allocation4 + $0x58] sm:$0xff]
    %v2925 = vld [vmem:[#allocation4 + $0x60] sm:$0xff]
    %v2926 = vld [vmem:[#allocation4 + $0x68] sm:$0xff]
    %v2927 = vld [vmem:[#allocation4 + $0x70] sm:$0xff]
    %v2928 = vld [vmem:[#allocation4 + $0x78] sm:$0xff]
    %v2929 = vld [vmem:[#allocation4 + $0x80] sm:$0xff]
    %v2930 = vld [vmem:[#allocation4 + $0x88] sm:$0xff]
    %v2931 = vld [vmem:[#allocation4 + $0x90] sm:$0xff]
    %v2932 = vld [vmem:[#allocation4 + $0x98] sm:$0xff]
    %v2933 = vld [vmem:[#allocation4 + $0xa0] sm:$0xff]
    %v2934 = vld [vmem:[#allocation4 + $0xa8] sm:$0xff]
    %v2935 = vld [vmem:[#allocation4 + $0xb0] sm:$0xff]
    %v2936 = vld [vmem:[#allocation4 + $0xb8] sm:$0xff]
    %v2937 = vld [vmem:[#allocation4 + $0xc0] sm:$0xff]
    %v2938 = vld [vmem:[#allocation4 + $0xc8] sm:$0xff]
    %v2939 = vld [vmem:[#allocation4 + $0xd0] sm:$0xff]
    %v2940 = vld [vmem:[#allocation4 + $0xd8] sm:$0xff]
    %v2941 = vld [vmem:[#allocation4 + $0xe0] sm:$0xff]
    %v2942 = vld [vmem:[#allocation4 + $0xe8] sm:$0xff]
    %v2943 = vld [vmem:[#allocation4 + $0xf0] sm:$0xff]
    %v2944 = vld [vmem:[#allocation4 + $0xf8] sm:$0xff]
    %v2945 = vld [vmem:[#allocation4 + $0x100] sm:$0xff]
    %v2946 = vld [vmem:[#allocation4 + $0x108] sm:$0xff]
    %v2947 = vld [vmem:[#allocation4 + $0x110] sm:$0xff]
    %v2948 = vld [vmem:[#allocation4 + $0x118] sm:$0xff]
    %v2949 = vld [vmem:[#allocation4 + $0x120] sm:$0xff]
    %v2950 = vld [vmem:[#allocation4 + $0x128] sm:$0xff]
    %v2951 = vld [vmem:[#allocation4 + $0x130] sm:$0xff]
    %v2952 = vld [vmem:[#allocation4 + $0x138] sm:$0xff]
    %v2953 = vld [vmem:[#allocation4 + $0x140] sm:$0xff]
    %v2954 = vld [vmem:[#allocation4 + $0x148] sm:$0xff]
    %v2955 = vld [vmem:[#allocation4 + $0x150] sm:$0xff]
    %v2956 = vld [vmem:[#allocation4 + $0x158] sm:$0xff]
    %v2957 = vld [vmem:[#allocation4 + $0x160] sm:$0xff]
    %v2958 = vld [vmem:[#allocation4 + $0x168] sm:$0xff]
    %v2959 = vld [vmem:[#allocation4 + $0x170] sm:$0xff]
    %v2960 = vld [vmem:[#allocation4 + $0x178] sm:$0xff]
    %v2961 = vld [vmem:[#allocation4 + $0x180] sm:$0xff]
    %v2962 = vld [vmem:[#allocation4 + $0x188] sm:$0xff]
    %v2963 = vld [vmem:[#allocation4 + $0x190] sm:$0xff]
    %v2964 = vld [vmem:[#allocation4 + $0x198] sm:$0xff]
    %v2965 = vld [vmem:[#allocation4 + $0x1a0] sm:$0xff]
    %v2966 = vld [vmem:[#allocation4 + $0x1a8] sm:$0xff]
    %v2967 = vld [vmem:[#allocation4 + $0x1b0] sm:$0xff]
    %v2968 = vld [vmem:[#allocation4 + $0x1b8] sm:$0xff]
    %v2969 = vld [vmem:[#allocation4 + $0x1c0] sm:$0xff]
    %v2970 = vld [vmem:[#allocation4 + $0x1c8] sm:$0xff]
    %v2971 = vld [vmem:[#allocation4 + $0x1d0] sm:$0xff]
    %v2972 = vld [vmem:[#allocation4 + $0x1d8] sm:$0xff]
    %v2973 = vld [vmem:[#allocation4 + $0x1e0] sm:$0xff]
    %v2974 = vld [vmem:[#allocation4 + $0x1e8] sm:$0xff]
    %v2975 = vld [vmem:[#allocation4 + $0x1f0] sm:$0xff]
    %v2976 = vld [vmem:[#allocation4 + $0x1f8] sm:$0xff]
    %2977 = vmatpush.msra.mxu0 %v2973
    %2978 = vmatpush.msra.mxu0 %v2969
    %2979 = vmatpush.msra.mxu0 %v2965
    %2980 = vmatpush.msra.mxu0 %v2961
    %2981 = vmatpush.msra.mxu0 %v2957
    %2982 = vmatpush.msra.mxu0 %v2953
    %2983 = vmatpush.msra.mxu0 %v2949
    %2984 = vmatpush.msra.mxu0 %v2945
    %2985 = vmatpush.msra.mxu0 %v2941
    %2986 = vmatpush.msra.mxu0 %v2937
    %2987 = vmatpush.msra.mxu0 %v2933
    %2988 = vmatpush.msra.mxu0 %v2929
    %2989 = vmatpush.msra.mxu0 %v2925
    %2990 = vmatpush.msra.mxu0 %v2921
    %2991 = vmatpush.msra.mxu0 %v2917
    %2992 = vmatpush.msra.mxu0 %v2913
    %2993 = vmatmul.f32.gmra.mxu0 %v2815
    %v2994 = vpop.f32.mrf.mxu0
    %v2995 = vadd.f32 0.0, %v2994
    %2996 = vdwg.mxu0
    %2997 = vmatpush.msra.mxu0 %v2974
    %2998 = vmatpush.msra.mxu0 %v2970
    %2999 = vmatpush.msra.mxu0 %v2966
    %3000 = vmatpush.msra.mxu0 %v2962
    %3001 = vmatpush.msra.mxu0 %v2958
    %3002 = vmatpush.msra.mxu0 %v2954
    %3003 = vmatpush.msra.mxu0 %v2950
    %3004 = vmatpush.msra.mxu0 %v2946
    %3005 = vmatpush.msra.mxu0 %v2942
    %3006 = vmatpush.msra.mxu0 %v2938
    %3007 = vmatpush.msra.mxu0 %v2934
    %3008 = vmatpush.msra.mxu0 %v2930
    %3009 = vmatpush.msra.mxu0 %v2926
    %3010 = vmatpush.msra.mxu0 %v2922
    %3011 = vmatpush.msra.mxu0 %v2918
    %3012 = vmatpush.msra.mxu0 %v2914
    %3013 = vmatmul.f32.gmra.mxu0 %v2815
    %v3014 = vpop.f32.mrf.mxu0
    %v3015 = vadd.f32 0.0, %v3014
    %3016 = vdwg.mxu0
    %3017 = vmatpush.msra.mxu0 %v2975
    %3018 = vmatpush.msra.mxu0 %v2971
    %3019 = vmatpush.msra.mxu0 %v2967
    %3020 = vmatpush.msra.mxu0 %v2963
    %3021 = vmatpush.msra.mxu0 %v2959
    %3022 = vmatpush.msra.mxu0 %v2955
    %3023 = vmatpush.msra.mxu0 %v2951
    %3024 = vmatpush.msra.mxu0 %v2947
    %3025 = vmatpush.msra.mxu0 %v2943
    %3026 = vmatpush.msra.mxu0 %v2939
    %3027 = vmatpush.msra.mxu0 %v2935
    %3028 = vmatpush.msra.mxu0 %v2931
    %3029 = vmatpush.msra.mxu0 %v2927
    %3030 = vmatpush.msra.mxu0 %v2923
    %3031 = vmatpush.msra.mxu0 %v2919
    %3032 = vmatpush.msra.mxu0 %v2915
    %3033 = vmatmul.f32.gmra.mxu0 %v2815
    %v3034 = vpop.f32.mrf.mxu0
    %v3035 = vadd.f32 0.0, %v3034
    %3036 = vdwg.mxu0
    %3037 = vmatpush.msra.mxu0 %v2976
    %3038 = vmatpush.msra.mxu0 %v2972
    %3039 = vmatpush.msra.mxu0 %v2968
    %3040 = vmatpush.msra.mxu0 %v2964
    %3041 = vmatpush.msra.mxu0 %v2960
    %3042 = vmatpush.msra.mxu0 %v2956
    %3043 = vmatpush.msra.mxu0 %v2952
    %3044 = vmatpush.msra.mxu0 %v2948
    %3045 = vmatpush.msra.mxu0 %v2944
    %3046 = vmatpush.msra.mxu0 %v2940
    %3047 = vmatpush.msra.mxu0 %v2936
    %3048 = vmatpush.msra.mxu0 %v2932
    %3049 = vmatpush.msra.mxu0 %v2928
    %3050 = vmatpush.msra.mxu0 %v2924
    %3051 = vmatpush.msra.mxu0 %v2920
    %3052 = vmatpush.msra.mxu0 %v2916
    %3053 = vmatmul.f32.gmra.mxu0 %v2815
    %v3054 = vpop.f32.mrf.mxu0
    %v3055 = vadd.f32 0.0, %v3054
    %3056 = vdwg.mxu0
    %v3057 = vadd.f32 %v2851, %v2995
    %v3058 = vadd.f32 %v2871, %v3015
    %v3059 = vadd.f32 %v2891, %v3035
    %v3060 = vadd.f32 %v2911, %v3055
    %v3061 = vxor.u32 %v3057, 2147483648
    %v3062 = vmul.f32 %v3061, 1.442695
    %v3063 = vpow.pop %v3062
    %v3064 = vadd.f32 %v3063, 1.0
    %v3065 = vrcp.pop %v3064
    %v3066 = vmul.f32 %v3064, %v3065
    %v3067 = vsub.f32 1.0, %v3066
    %v3068 = vmul.f32 %v3065, %v3067
    %v3069 = vadd.f32 %v3065, %v3068
    %vm3070 = vweird.f32 %v3064
    %vm3071 = vweird.f32 %v3065
    %vm3072 = vmor %vm3070, %vm3071
    %v3073 = vsel %vm3072, %v3065, %v3069
    %v3074 = vand.u32 2147483647, %v3064
    %vm3075 = vcmp.eq.f32.partialorder %v3074, 8.507059e+37
    %v3076 = vand.u32 %v3064, 2147483648
    %v3077 = vor.u32 1.1754944e-38, %v3076
    %v3078 = vsel %vm3075, %v3077, %v3073
    %v3079 = vmul.f32 1.0, %v3078
    %v3080 = vxor.u32 %v3058, 2147483648
    %v3081 = vmul.f32 %v3080, 1.442695
    %v3082 = vpow.pop %v3081
    %v3083 = vadd.f32 %v3082, 1.0
    %v3084 = vrcp.pop %v3083
    %v3085 = vmul.f32 %v3083, %v3084
    %v3086 = vsub.f32 1.0, %v3085
    %v3087 = vmul.f32 %v3084, %v3086
    %v3088 = vadd.f32 %v3084, %v3087
    %vm3089 = vweird.f32 %v3083
    %vm3090 = vweird.f32 %v3084
    %vm3091 = vmor %vm3089, %vm3090
    %v3092 = vsel %vm3091, %v3084, %v3088
    %v3093 = vand.u32 2147483647, %v3083
    %vm3094 = vcmp.eq.f32.partialorder %v3093, 8.507059e+37
    %v3095 = vand.u32 %v3083, 2147483648
    %v3096 = vor.u32 1.1754944e-38, %v3095
    %v3097 = vsel %vm3094, %v3096, %v3092
    %v3098 = vmul.f32 1.0, %v3097
    %v3099 = vtanh.pop %v3059
    %v3100 = vxor.u32 %v3060, 2147483648
    %v3101 = vmul.f32 %v3100, 1.442695
    %v3102 = vpow.pop %v3101
    %v3103 = vadd.f32 %v3102, 1.0
    %v3104 = vrcp.pop %v3103
    %v3105 = vmul.f32 %v3103, %v3104
    %v3106 = vsub.f32 1.0, %v3105
    %v3107 = vmul.f32 %v3104, %v3106
    %v3108 = vadd.f32 %v3104, %v3107
    %vm3109 = vweird.f32 %v3103
    %vm3110 = vweird.f32 %v3104
    %vm3111 = vmor %vm3109, %vm3110
    %v3112 = vsel %vm3111, %v3104, %v3108
    %v3113 = vand.u32 2147483647, %v3103
    %vm3114 = vcmp.eq.f32.partialorder %v3113, 8.507059e+37
    %v3115 = vand.u32 %v3103, 2147483648
    %v3116 = vor.u32 1.1754944e-38, %v3115
    %v3117 = vsel %vm3114, %v3116, %v3112
    %v3118 = vmul.f32 1.0, %v3117
    %v3119 = vmul.f32 %v3098, %v2813
    %v3120 = vmul.f32 %v3079, %v3099
    %v3121 = vadd.f32 %v3119, %v3120
    %v3122 = vtanh.pop %v3121
    %v3123 = vmul.f32 %v3118, %v3122
    %s3124 = scalar_lea.vmem %s4, 72
    %3125 = vst [vmem:[%s3124] sm:$0xff] %v3123
    %s3126 = sadd.s32 %s354, 9
    %p3127 = scmp.eq.s32.totalorder %s3126, 15
    // Predicated region
    $region62: #{lstm_encoder_forward.1} parent=1 // pred_check
      %p3128 = pneg %p3127
    $region63: #{lstm_encoder_forward.1} parent=1 // pred_check_branch
      %3130 = sbr.rel (%p3128) target = $region65
    $region64: #{lstm_encoder_forward.1} parent=1 // pred_region
      %3131 = vst [vmem:[%s5] sm:$0xff] %v3121
    $region65: #{lstm_encoder_forward.1} parent=1 // pred_fallthru
      _
    %s3132 = scalar_lea.vmem %s0, 80
    %v3133 = vld [vmem:[%s3132] sm:$0xff]
    %v3134 = vld [vmem:[%s1] sm:$0xff]
    %v3135 = vld [vmem:[%s1 + $0x8] sm:$0xff]
    %v3136 = vld [vmem:[%s1 + $0x10] sm:$0xff]
    %v3137 = vld [vmem:[%s1 + $0x18] sm:$0xff]
    %v3139 = vsel %vm58, %v3133, 0
    %3141 = vmatpush.msra.mxu0 0.0
    %3142 = vmatpush.msra.mxu0 0.0
    %3143 = vmatpush.msra.mxu0 0.0
    %3144 = vmatpush.msra.mxu0 0.0
    %3145 = vmatpush.msra.mxu0 0.0
    %3146 = vmatpush.msra.mxu0 0.0
    %3147 = vmatpush.msra.mxu0 0.0
    %3148 = vmatpush.msra.mxu0 0.0
    %3149 = vmatpush.msra.mxu0 0.0
    %3150 = vmatpush.msra.mxu0 0.0
    %3151 = vmatpush.msra.mxu0 0.0
    %3152 = vmatpush.msra.mxu0 0.0
    %3153 = vmatpush.msra.mxu0 0.0
    %3154 = vmatpush.msra.mxu0 0.0
    %3155 = vmatpush.msra.mxu0 0.0
    %3156 = vmatpush.msra.mxu0 %v3134
    %3157 = vmatmul.f32.gmra.mxu0 %v3139
    %v3158 = vpop.f32.mrf.mxu0
    %v3159 = vadd.f32 %v50, %v3158
    %3160 = vdwg.mxu0
    %3161 = vmatpush.msra.mxu0 0.0
    %3162 = vmatpush.msra.mxu0 0.0
    %3163 = vmatpush.msra.mxu0 0.0
    %3164 = vmatpush.msra.mxu0 0.0
    %3165 = vmatpush.msra.mxu0 0.0
    %3166 = vmatpush.msra.mxu0 0.0
    %3167 = vmatpush.msra.mxu0 0.0
    %3168 = vmatpush.msra.mxu0 0.0
    %3169 = vmatpush.msra.mxu0 0.0
    %3170 = vmatpush.msra.mxu0 0.0
    %3171 = vmatpush.msra.mxu0 0.0
    %3172 = vmatpush.msra.mxu0 0.0
    %3173 = vmatpush.msra.mxu0 0.0
    %3174 = vmatpush.msra.mxu0 0.0
    %3175 = vmatpush.msra.mxu0 0.0
    %3176 = vmatpush.msra.mxu0 %v3135
    %3177 = vmatmul.f32.gmra.mxu0 %v3139
    %v3178 = vpop.f32.mrf.mxu0
    %v3179 = vadd.f32 %v51, %v3178
    %3180 = vdwg.mxu0
    %3181 = vmatpush.msra.mxu0 0.0
    %3182 = vmatpush.msra.mxu0 0.0
    %3183 = vmatpush.msra.mxu0 0.0
    %3184 = vmatpush.msra.mxu0 0.0
    %3185 = vmatpush.msra.mxu0 0.0
    %3186 = vmatpush.msra.mxu0 0.0
    %3187 = vmatpush.msra.mxu0 0.0
    %3188 = vmatpush.msra.mxu0 0.0
    %3189 = vmatpush.msra.mxu0 0.0
    %3190 = vmatpush.msra.mxu0 0.0
    %3191 = vmatpush.msra.mxu0 0.0
    %3192 = vmatpush.msra.mxu0 0.0
    %3193 = vmatpush.msra.mxu0 0.0
    %3194 = vmatpush.msra.mxu0 0.0
    %3195 = vmatpush.msra.mxu0 0.0
    %3196 = vmatpush.msra.mxu0 %v3136
    %3197 = vmatmul.f32.gmra.mxu0 %v3139
    %v3198 = vpop.f32.mrf.mxu0
    %v3199 = vadd.f32 %v52, %v3198
    %3200 = vdwg.mxu0
    %3201 = vmatpush.msra.mxu0 0.0
    %3202 = vmatpush.msra.mxu0 0.0
    %3203 = vmatpush.msra.mxu0 0.0
    %3204 = vmatpush.msra.mxu0 0.0
    %3205 = vmatpush.msra.mxu0 0.0
    %3206 = vmatpush.msra.mxu0 0.0
    %3207 = vmatpush.msra.mxu0 0.0
    %3208 = vmatpush.msra.mxu0 0.0
    %3209 = vmatpush.msra.mxu0 0.0
    %3210 = vmatpush.msra.mxu0 0.0
    %3211 = vmatpush.msra.mxu0 0.0
    %3212 = vmatpush.msra.mxu0 0.0
    %3213 = vmatpush.msra.mxu0 0.0
    %3214 = vmatpush.msra.mxu0 0.0
    %3215 = vmatpush.msra.mxu0 0.0
    %3216 = vmatpush.msra.mxu0 %v3137
    %3217 = vmatmul.f32.gmra.mxu0 %v3139
    %v3218 = vpop.f32.mrf.mxu0
    %v3219 = vadd.f32 %v53, %v3218
    %3220 = vdwg.mxu0
    %v3221 = vld [vmem:[#allocation4] sm:$0xff]
    %v3222 = vld [vmem:[#allocation4 + $0x8] sm:$0xff]
    %v3223 = vld [vmem:[#allocation4 + $0x10] sm:$0xff]
    %v3224 = vld [vmem:[#allocation4 + $0x18] sm:$0xff]
    %v3225 = vld [vmem:[#allocation4 + $0x20] sm:$0xff]
    %v3226 = vld [vmem:[#allocation4 + $0x28] sm:$0xff]
    %v3227 = vld [vmem:[#allocation4 + $0x30] sm:$0xff]
    %v3228 = vld [vmem:[#allocation4 + $0x38] sm:$0xff]
    %v3229 = vld [vmem:[#allocation4 + $0x40] sm:$0xff]
    %v3230 = vld [vmem:[#allocation4 + $0x48] sm:$0xff]
    %v3231 = vld [vmem:[#allocation4 + $0x50] sm:$0xff]
    %v3232 = vld [vmem:[#allocation4 + $0x58] sm:$0xff]
    %v3233 = vld [vmem:[#allocation4 + $0x60] sm:$0xff]
    %v3234 = vld [vmem:[#allocation4 + $0x68] sm:$0xff]
    %v3235 = vld [vmem:[#allocation4 + $0x70] sm:$0xff]
    %v3236 = vld [vmem:[#allocation4 + $0x78] sm:$0xff]
    %v3237 = vld [vmem:[#allocation4 + $0x80] sm:$0xff]
    %v3238 = vld [vmem:[#allocation4 + $0x88] sm:$0xff]
    %v3239 = vld [vmem:[#allocation4 + $0x90] sm:$0xff]
    %v3240 = vld [vmem:[#allocation4 + $0x98] sm:$0xff]
    %v3241 = vld [vmem:[#allocation4 + $0xa0] sm:$0xff]
    %v3242 = vld [vmem:[#allocation4 + $0xa8] sm:$0xff]
    %v3243 = vld [vmem:[#allocation4 + $0xb0] sm:$0xff]
    %v3244 = vld [vmem:[#allocation4 + $0xb8] sm:$0xff]
    %v3245 = vld [vmem:[#allocation4 + $0xc0] sm:$0xff]
    %v3246 = vld [vmem:[#allocation4 + $0xc8] sm:$0xff]
    %v3247 = vld [vmem:[#allocation4 + $0xd0] sm:$0xff]
    %v3248 = vld [vmem:[#allocation4 + $0xd8] sm:$0xff]
    %v3249 = vld [vmem:[#allocation4 + $0xe0] sm:$0xff]
    %v3250 = vld [vmem:[#allocation4 + $0xe8] sm:$0xff]
    %v3251 = vld [vmem:[#allocation4 + $0xf0] sm:$0xff]
    %v3252 = vld [vmem:[#allocation4 + $0xf8] sm:$0xff]
    %v3253 = vld [vmem:[#allocation4 + $0x100] sm:$0xff]
    %v3254 = vld [vmem:[#allocation4 + $0x108] sm:$0xff]
    %v3255 = vld [vmem:[#allocation4 + $0x110] sm:$0xff]
    %v3256 = vld [vmem:[#allocation4 + $0x118] sm:$0xff]
    %v3257 = vld [vmem:[#allocation4 + $0x120] sm:$0xff]
    %v3258 = vld [vmem:[#allocation4 + $0x128] sm:$0xff]
    %v3259 = vld [vmem:[#allocation4 + $0x130] sm:$0xff]
    %v3260 = vld [vmem:[#allocation4 + $0x138] sm:$0xff]
    %v3261 = vld [vmem:[#allocation4 + $0x140] sm:$0xff]
    %v3262 = vld [vmem:[#allocation4 + $0x148] sm:$0xff]
    %v3263 = vld [vmem:[#allocation4 + $0x150] sm:$0xff]
    %v3264 = vld [vmem:[#allocation4 + $0x158] sm:$0xff]
    %v3265 = vld [vmem:[#allocation4 + $0x160] sm:$0xff]
    %v3266 = vld [vmem:[#allocation4 + $0x168] sm:$0xff]
    %v3267 = vld [vmem:[#allocation4 + $0x170] sm:$0xff]
    %v3268 = vld [vmem:[#allocation4 + $0x178] sm:$0xff]
    %v3269 = vld [vmem:[#allocation4 + $0x180] sm:$0xff]
    %v3270 = vld [vmem:[#allocation4 + $0x188] sm:$0xff]
    %v3271 = vld [vmem:[#allocation4 + $0x190] sm:$0xff]
    %v3272 = vld [vmem:[#allocation4 + $0x198] sm:$0xff]
    %v3273 = vld [vmem:[#allocation4 + $0x1a0] sm:$0xff]
    %v3274 = vld [vmem:[#allocation4 + $0x1a8] sm:$0xff]
    %v3275 = vld [vmem:[#allocation4 + $0x1b0] sm:$0xff]
    %v3276 = vld [vmem:[#allocation4 + $0x1b8] sm:$0xff]
    %v3277 = vld [vmem:[#allocation4 + $0x1c0] sm:$0xff]
    %v3278 = vld [vmem:[#allocation4 + $0x1c8] sm:$0xff]
    %v3279 = vld [vmem:[#allocation4 + $0x1d0] sm:$0xff]
    %v3280 = vld [vmem:[#allocation4 + $0x1d8] sm:$0xff]
    %v3281 = vld [vmem:[#allocation4 + $0x1e0] sm:$0xff]
    %v3282 = vld [vmem:[#allocation4 + $0x1e8] sm:$0xff]
    %v3283 = vld [vmem:[#allocation4 + $0x1f0] sm:$0xff]
    %v3284 = vld [vmem:[#allocation4 + $0x1f8] sm:$0xff]
    %3285 = vmatpush.msra.mxu0 %v3281
    %3286 = vmatpush.msra.mxu0 %v3277
    %3287 = vmatpush.msra.mxu0 %v3273
    %3288 = vmatpush.msra.mxu0 %v3269
    %3289 = vmatpush.msra.mxu0 %v3265
    %3290 = vmatpush.msra.mxu0 %v3261
    %3291 = vmatpush.msra.mxu0 %v3257
    %3292 = vmatpush.msra.mxu0 %v3253
    %3293 = vmatpush.msra.mxu0 %v3249
    %3294 = vmatpush.msra.mxu0 %v3245
    %3295 = vmatpush.msra.mxu0 %v3241
    %3296 = vmatpush.msra.mxu0 %v3237
    %3297 = vmatpush.msra.mxu0 %v3233
    %3298 = vmatpush.msra.mxu0 %v3229
    %3299 = vmatpush.msra.mxu0 %v3225
    %3300 = vmatpush.msra.mxu0 %v3221
    %3301 = vmatmul.f32.gmra.mxu0 %v3123
    %v3302 = vpop.f32.mrf.mxu0
    %v3303 = vadd.f32 0.0, %v3302
    %3304 = vdwg.mxu0
    %3305 = vmatpush.msra.mxu0 %v3282
    %3306 = vmatpush.msra.mxu0 %v3278
    %3307 = vmatpush.msra.mxu0 %v3274
    %3308 = vmatpush.msra.mxu0 %v3270
    %3309 = vmatpush.msra.mxu0 %v3266
    %3310 = vmatpush.msra.mxu0 %v3262
    %3311 = vmatpush.msra.mxu0 %v3258
    %3312 = vmatpush.msra.mxu0 %v3254
    %3313 = vmatpush.msra.mxu0 %v3250
    %3314 = vmatpush.msra.mxu0 %v3246
    %3315 = vmatpush.msra.mxu0 %v3242
    %3316 = vmatpush.msra.mxu0 %v3238
    %3317 = vmatpush.msra.mxu0 %v3234
    %3318 = vmatpush.msra.mxu0 %v3230
    %3319 = vmatpush.msra.mxu0 %v3226
    %3320 = vmatpush.msra.mxu0 %v3222
    %3321 = vmatmul.f32.gmra.mxu0 %v3123
    %v3322 = vpop.f32.mrf.mxu0
    %v3323 = vadd.f32 0.0, %v3322
    %3324 = vdwg.mxu0
    %3325 = vmatpush.msra.mxu0 %v3283
    %3326 = vmatpush.msra.mxu0 %v3279
    %3327 = vmatpush.msra.mxu0 %v3275
    %3328 = vmatpush.msra.mxu0 %v3271
    %3329 = vmatpush.msra.mxu0 %v3267
    %3330 = vmatpush.msra.mxu0 %v3263
    %3331 = vmatpush.msra.mxu0 %v3259
    %3332 = vmatpush.msra.mxu0 %v3255
    %3333 = vmatpush.msra.mxu0 %v3251
    %3334 = vmatpush.msra.mxu0 %v3247
    %3335 = vmatpush.msra.mxu0 %v3243
    %3336 = vmatpush.msra.mxu0 %v3239
    %3337 = vmatpush.msra.mxu0 %v3235
    %3338 = vmatpush.msra.mxu0 %v3231
    %3339 = vmatpush.msra.mxu0 %v3227
    %3340 = vmatpush.msra.mxu0 %v3223
    %3341 = vmatmul.f32.gmra.mxu0 %v3123
    %v3342 = vpop.f32.mrf.mxu0
    %v3343 = vadd.f32 0.0, %v3342
    %3344 = vdwg.mxu0
    %3345 = vmatpush.msra.mxu0 %v3284
    %3346 = vmatpush.msra.mxu0 %v3280
    %3347 = vmatpush.msra.mxu0 %v3276
    %3348 = vmatpush.msra.mxu0 %v3272
    %3349 = vmatpush.msra.mxu0 %v3268
    %3350 = vmatpush.msra.mxu0 %v3264
    %3351 = vmatpush.msra.mxu0 %v3260
    %3352 = vmatpush.msra.mxu0 %v3256
    %3353 = vmatpush.msra.mxu0 %v3252
    %3354 = vmatpush.msra.mxu0 %v3248
    %3355 = vmatpush.msra.mxu0 %v3244
    %3356 = vmatpush.msra.mxu0 %v3240
    %3357 = vmatpush.msra.mxu0 %v3236
    %3358 = vmatpush.msra.mxu0 %v3232
    %3359 = vmatpush.msra.mxu0 %v3228
    %3360 = vmatpush.msra.mxu0 %v3224
    %3361 = vmatmul.f32.gmra.mxu0 %v3123
    %v3362 = vpop.f32.mrf.mxu0
    %v3363 = vadd.f32 0.0, %v3362
    %3364 = vdwg.mxu0
    %v3365 = vadd.f32 %v3159, %v3303
    %v3366 = vadd.f32 %v3179, %v3323
    %v3367 = vadd.f32 %v3199, %v3343
    %v3368 = vadd.f32 %v3219, %v3363
    %v3369 = vxor.u32 %v3365, 2147483648
    %v3370 = vmul.f32 %v3369, 1.442695
    %v3371 = vpow.pop %v3370
    %v3372 = vadd.f32 %v3371, 1.0
    %v3373 = vrcp.pop %v3372
    %v3374 = vmul.f32 %v3372, %v3373
    %v3375 = vsub.f32 1.0, %v3374
    %v3376 = vmul.f32 %v3373, %v3375
    %v3377 = vadd.f32 %v3373, %v3376
    %vm3378 = vweird.f32 %v3372
    %vm3379 = vweird.f32 %v3373
    %vm3380 = vmor %vm3378, %vm3379
    %v3381 = vsel %vm3380, %v3373, %v3377
    %v3382 = vand.u32 2147483647, %v3372
    %vm3383 = vcmp.eq.f32.partialorder %v3382, 8.507059e+37
    %v3384 = vand.u32 %v3372, 2147483648
    %v3385 = vor.u32 1.1754944e-38, %v3384
    %v3386 = vsel %vm3383, %v3385, %v3381
    %v3387 = vmul.f32 1.0, %v3386
    %v3388 = vxor.u32 %v3366, 2147483648
    %v3389 = vmul.f32 %v3388, 1.442695
    %v3390 = vpow.pop %v3389
    %v3391 = vadd.f32 %v3390, 1.0
    %v3392 = vrcp.pop %v3391
    %v3393 = vmul.f32 %v3391, %v3392
    %v3394 = vsub.f32 1.0, %v3393
    %v3395 = vmul.f32 %v3392, %v3394
    %v3396 = vadd.f32 %v3392, %v3395
    %vm3397 = vweird.f32 %v3391
    %vm3398 = vweird.f32 %v3392
    %vm3399 = vmor %vm3397, %vm3398
    %v3400 = vsel %vm3399, %v3392, %v3396
    %v3401 = vand.u32 2147483647, %v3391
    %vm3402 = vcmp.eq.f32.partialorder %v3401, 8.507059e+37
    %v3403 = vand.u32 %v3391, 2147483648
    %v3404 = vor.u32 1.1754944e-38, %v3403
    %v3405 = vsel %vm3402, %v3404, %v3400
    %v3406 = vmul.f32 1.0, %v3405
    %v3407 = vtanh.pop %v3367
    %v3408 = vxor.u32 %v3368, 2147483648
    %v3409 = vmul.f32 %v3408, 1.442695
    %v3410 = vpow.pop %v3409
    %v3411 = vadd.f32 %v3410, 1.0
    %v3412 = vrcp.pop %v3411
    %v3413 = vmul.f32 %v3411, %v3412
    %v3414 = vsub.f32 1.0, %v3413
    %v3415 = vmul.f32 %v3412, %v3414
    %v3416 = vadd.f32 %v3412, %v3415
    %vm3417 = vweird.f32 %v3411
    %vm3418 = vweird.f32 %v3412
    %vm3419 = vmor %vm3417, %vm3418
    %v3420 = vsel %vm3419, %v3412, %v3416
    %v3421 = vand.u32 2147483647, %v3411
    %vm3422 = vcmp.eq.f32.partialorder %v3421, 8.507059e+37
    %v3423 = vand.u32 %v3411, 2147483648
    %v3424 = vor.u32 1.1754944e-38, %v3423
    %v3425 = vsel %vm3422, %v3424, %v3420
    %v3426 = vmul.f32 1.0, %v3425
    %v3427 = vmul.f32 %v3406, %v3121
    %v3428 = vmul.f32 %v3387, %v3407
    %v3429 = vadd.f32 %v3427, %v3428
    %v3430 = vtanh.pop %v3429
    %v3431 = vmul.f32 %v3426, %v3430
    %s3432 = scalar_lea.vmem %s4, 80
    %3433 = vst [vmem:[%s3432] sm:$0xff] %v3431
    %s3434 = sadd.s32 %s354, 10
    %p3435 = scmp.eq.s32.totalorder %s3434, 15
    // Predicated region
    $region66: #{lstm_encoder_forward.1} parent=1 // pred_check
      %p3436 = pneg %p3435
    $region67: #{lstm_encoder_forward.1} parent=1 // pred_check_branch
      %3438 = sbr.rel (%p3436) target = $region69
    $region68: #{lstm_encoder_forward.1} parent=1 // pred_region
      %3439 = vst [vmem:[%s5] sm:$0xff] %v3429
    $region69: #{lstm_encoder_forward.1} parent=1 // pred_fallthru
      _
    %s3440 = scalar_lea.vmem %s0, 88
    %v3441 = vld [vmem:[%s3440] sm:$0xff]
    %v3442 = vld [vmem:[%s1] sm:$0xff]
    %v3443 = vld [vmem:[%s1 + $0x8] sm:$0xff]
    %v3444 = vld [vmem:[%s1 + $0x10] sm:$0xff]
    %v3445 = vld [vmem:[%s1 + $0x18] sm:$0xff]
    %v3447 = vsel %vm58, %v3441, 0
    %3449 = vmatpush.msra.mxu0 0.0
    %3450 = vmatpush.msra.mxu0 0.0
    %3451 = vmatpush.msra.mxu0 0.0
    %3452 = vmatpush.msra.mxu0 0.0
    %3453 = vmatpush.msra.mxu0 0.0
    %3454 = vmatpush.msra.mxu0 0.0
    %3455 = vmatpush.msra.mxu0 0.0
    %3456 = vmatpush.msra.mxu0 0.0
    %3457 = vmatpush.msra.mxu0 0.0
    %3458 = vmatpush.msra.mxu0 0.0
    %3459 = vmatpush.msra.mxu0 0.0
    %3460 = vmatpush.msra.mxu0 0.0
    %3461 = vmatpush.msra.mxu0 0.0
    %3462 = vmatpush.msra.mxu0 0.0
    %3463 = vmatpush.msra.mxu0 0.0
    %3464 = vmatpush.msra.mxu0 %v3442
    %3465 = vmatmul.f32.gmra.mxu0 %v3447
    %v3466 = vpop.f32.mrf.mxu0
    %v3467 = vadd.f32 %v50, %v3466
    %3468 = vdwg.mxu0
    %3469 = vmatpush.msra.mxu0 0.0
    %3470 = vmatpush.msra.mxu0 0.0
    %3471 = vmatpush.msra.mxu0 0.0
    %3472 = vmatpush.msra.mxu0 0.0
    %3473 = vmatpush.msra.mxu0 0.0
    %3474 = vmatpush.msra.mxu0 0.0
    %3475 = vmatpush.msra.mxu0 0.0
    %3476 = vmatpush.msra.mxu0 0.0
    %3477 = vmatpush.msra.mxu0 0.0
    %3478 = vmatpush.msra.mxu0 0.0
    %3479 = vmatpush.msra.mxu0 0.0
    %3480 = vmatpush.msra.mxu0 0.0
    %3481 = vmatpush.msra.mxu0 0.0
    %3482 = vmatpush.msra.mxu0 0.0
    %3483 = vmatpush.msra.mxu0 0.0
    %3484 = vmatpush.msra.mxu0 %v3443
    %3485 = vmatmul.f32.gmra.mxu0 %v3447
    %v3486 = vpop.f32.mrf.mxu0
    %v3487 = vadd.f32 %v51, %v3486
    %3488 = vdwg.mxu0
    %3489 = vmatpush.msra.mxu0 0.0
    %3490 = vmatpush.msra.mxu0 0.0
    %3491 = vmatpush.msra.mxu0 0.0
    %3492 = vmatpush.msra.mxu0 0.0
    %3493 = vmatpush.msra.mxu0 0.0
    %3494 = vmatpush.msra.mxu0 0.0
    %3495 = vmatpush.msra.mxu0 0.0
    %3496 = vmatpush.msra.mxu0 0.0
    %3497 = vmatpush.msra.mxu0 0.0
    %3498 = vmatpush.msra.mxu0 0.0
    %3499 = vmatpush.msra.mxu0 0.0
    %3500 = vmatpush.msra.mxu0 0.0
    %3501 = vmatpush.msra.mxu0 0.0
    %3502 = vmatpush.msra.mxu0 0.0
    %3503 = vmatpush.msra.mxu0 0.0
    %3504 = vmatpush.msra.mxu0 %v3444
    %3505 = vmatmul.f32.gmra.mxu0 %v3447
    %v3506 = vpop.f32.mrf.mxu0
    %v3507 = vadd.f32 %v52, %v3506
    %3508 = vdwg.mxu0
    %3509 = vmatpush.msra.mxu0 0.0
    %3510 = vmatpush.msra.mxu0 0.0
    %3511 = vmatpush.msra.mxu0 0.0
    %3512 = vmatpush.msra.mxu0 0.0
    %3513 = vmatpush.msra.mxu0 0.0
    %3514 = vmatpush.msra.mxu0 0.0
    %3515 = vmatpush.msra.mxu0 0.0
    %3516 = vmatpush.msra.mxu0 0.0
    %3517 = vmatpush.msra.mxu0 0.0
    %3518 = vmatpush.msra.mxu0 0.0
    %3519 = vmatpush.msra.mxu0 0.0
    %3520 = vmatpush.msra.mxu0 0.0
    %3521 = vmatpush.msra.mxu0 0.0
    %3522 = vmatpush.msra.mxu0 0.0
    %3523 = vmatpush.msra.mxu0 0.0
    %3524 = vmatpush.msra.mxu0 %v3445
    %3525 = vmatmul.f32.gmra.mxu0 %v3447
    %v3526 = vpop.f32.mrf.mxu0
    %v3527 = vadd.f32 %v53, %v3526
    %3528 = vdwg.mxu0
    %v3529 = vld [vmem:[#allocation4] sm:$0xff]
    %v3530 = vld [vmem:[#allocation4 + $0x8] sm:$0xff]
    %v3531 = vld [vmem:[#allocation4 + $0x10] sm:$0xff]
    %v3532 = vld [vmem:[#allocation4 + $0x18] sm:$0xff]
    %v3533 = vld [vmem:[#allocation4 + $0x20] sm:$0xff]
    %v3534 = vld [vmem:[#allocation4 + $0x28] sm:$0xff]
    %v3535 = vld [vmem:[#allocation4 + $0x30] sm:$0xff]
    %v3536 = vld [vmem:[#allocation4 + $0x38] sm:$0xff]
    %v3537 = vld [vmem:[#allocation4 + $0x40] sm:$0xff]
    %v3538 = vld [vmem:[#allocation4 + $0x48] sm:$0xff]
    %v3539 = vld [vmem:[#allocation4 + $0x50] sm:$0xff]
    %v3540 = vld [vmem:[#allocation4 + $0x58] sm:$0xff]
    %v3541 = vld [vmem:[#allocation4 + $0x60] sm:$0xff]
    %v3542 = vld [vmem:[#allocation4 + $0x68] sm:$0xff]
    %v3543 = vld [vmem:[#allocation4 + $0x70] sm:$0xff]
    %v3544 = vld [vmem:[#allocation4 + $0x78] sm:$0xff]
    %v3545 = vld [vmem:[#allocation4 + $0x80] sm:$0xff]
    %v3546 = vld [vmem:[#allocation4 + $0x88] sm:$0xff]
    %v3547 = vld [vmem:[#allocation4 + $0x90] sm:$0xff]
    %v3548 = vld [vmem:[#allocation4 + $0x98] sm:$0xff]
    %v3549 = vld [vmem:[#allocation4 + $0xa0] sm:$0xff]
    %v3550 = vld [vmem:[#allocation4 + $0xa8] sm:$0xff]
    %v3551 = vld [vmem:[#allocation4 + $0xb0] sm:$0xff]
    %v3552 = vld [vmem:[#allocation4 + $0xb8] sm:$0xff]
    %v3553 = vld [vmem:[#allocation4 + $0xc0] sm:$0xff]
    %v3554 = vld [vmem:[#allocation4 + $0xc8] sm:$0xff]
    %v3555 = vld [vmem:[#allocation4 + $0xd0] sm:$0xff]
    %v3556 = vld [vmem:[#allocation4 + $0xd8] sm:$0xff]
    %v3557 = vld [vmem:[#allocation4 + $0xe0] sm:$0xff]
    %v3558 = vld [vmem:[#allocation4 + $0xe8] sm:$0xff]
    %v3559 = vld [vmem:[#allocation4 + $0xf0] sm:$0xff]
    %v3560 = vld [vmem:[#allocation4 + $0xf8] sm:$0xff]
    %v3561 = vld [vmem:[#allocation4 + $0x100] sm:$0xff]
    %v3562 = vld [vmem:[#allocation4 + $0x108] sm:$0xff]
    %v3563 = vld [vmem:[#allocation4 + $0x110] sm:$0xff]
    %v3564 = vld [vmem:[#allocation4 + $0x118] sm:$0xff]
    %v3565 = vld [vmem:[#allocation4 + $0x120] sm:$0xff]
    %v3566 = vld [vmem:[#allocation4 + $0x128] sm:$0xff]
    %v3567 = vld [vmem:[#allocation4 + $0x130] sm:$0xff]
    %v3568 = vld [vmem:[#allocation4 + $0x138] sm:$0xff]
    %v3569 = vld [vmem:[#allocation4 + $0x140] sm:$0xff]
    %v3570 = vld [vmem:[#allocation4 + $0x148] sm:$0xff]
    %v3571 = vld [vmem:[#allocation4 + $0x150] sm:$0xff]
    %v3572 = vld [vmem:[#allocation4 + $0x158] sm:$0xff]
    %v3573 = vld [vmem:[#allocation4 + $0x160] sm:$0xff]
    %v3574 = vld [vmem:[#allocation4 + $0x168] sm:$0xff]
    %v3575 = vld [vmem:[#allocation4 + $0x170] sm:$0xff]
    %v3576 = vld [vmem:[#allocation4 + $0x178] sm:$0xff]
    %v3577 = vld [vmem:[#allocation4 + $0x180] sm:$0xff]
    %v3578 = vld [vmem:[#allocation4 + $0x188] sm:$0xff]
    %v3579 = vld [vmem:[#allocation4 + $0x190] sm:$0xff]
    %v3580 = vld [vmem:[#allocation4 + $0x198] sm:$0xff]
    %v3581 = vld [vmem:[#allocation4 + $0x1a0] sm:$0xff]
    %v3582 = vld [vmem:[#allocation4 + $0x1a8] sm:$0xff]
    %v3583 = vld [vmem:[#allocation4 + $0x1b0] sm:$0xff]
    %v3584 = vld [vmem:[#allocation4 + $0x1b8] sm:$0xff]
    %v3585 = vld [vmem:[#allocation4 + $0x1c0] sm:$0xff]
    %v3586 = vld [vmem:[#allocation4 + $0x1c8] sm:$0xff]
    %v3587 = vld [vmem:[#allocation4 + $0x1d0] sm:$0xff]
    %v3588 = vld [vmem:[#allocation4 + $0x1d8] sm:$0xff]
    %v3589 = vld [vmem:[#allocation4 + $0x1e0] sm:$0xff]
    %v3590 = vld [vmem:[#allocation4 + $0x1e8] sm:$0xff]
    %v3591 = vld [vmem:[#allocation4 + $0x1f0] sm:$0xff]
    %v3592 = vld [vmem:[#allocation4 + $0x1f8] sm:$0xff]
    %3593 = vmatpush.msra.mxu0 %v3589
    %3594 = vmatpush.msra.mxu0 %v3585
    %3595 = vmatpush.msra.mxu0 %v3581
    %3596 = vmatpush.msra.mxu0 %v3577
    %3597 = vmatpush.msra.mxu0 %v3573
    %3598 = vmatpush.msra.mxu0 %v3569
    %3599 = vmatpush.msra.mxu0 %v3565
    %3600 = vmatpush.msra.mxu0 %v3561
    %3601 = vmatpush.msra.mxu0 %v3557
    %3602 = vmatpush.msra.mxu0 %v3553
    %3603 = vmatpush.msra.mxu0 %v3549
    %3604 = vmatpush.msra.mxu0 %v3545
    %3605 = vmatpush.msra.mxu0 %v3541
    %3606 = vmatpush.msra.mxu0 %v3537
    %3607 = vmatpush.msra.mxu0 %v3533
    %3608 = vmatpush.msra.mxu0 %v3529
    %3609 = vmatmul.f32.gmra.mxu0 %v3431
    %v3610 = vpop.f32.mrf.mxu0
    %v3611 = vadd.f32 0.0, %v3610
    %3612 = vdwg.mxu0
    %3613 = vmatpush.msra.mxu0 %v3590
    %3614 = vmatpush.msra.mxu0 %v3586
    %3615 = vmatpush.msra.mxu0 %v3582
    %3616 = vmatpush.msra.mxu0 %v3578
    %3617 = vmatpush.msra.mxu0 %v3574
    %3618 = vmatpush.msra.mxu0 %v3570
    %3619 = vmatpush.msra.mxu0 %v3566
    %3620 = vmatpush.msra.mxu0 %v3562
    %3621 = vmatpush.msra.mxu0 %v3558
    %3622 = vmatpush.msra.mxu0 %v3554
    %3623 = vmatpush.msra.mxu0 %v3550
    %3624 = vmatpush.msra.mxu0 %v3546
    %3625 = vmatpush.msra.mxu0 %v3542
    %3626 = vmatpush.msra.mxu0 %v3538
    %3627 = vmatpush.msra.mxu0 %v3534
    %3628 = vmatpush.msra.mxu0 %v3530
    %3629 = vmatmul.f32.gmra.mxu0 %v3431
    %v3630 = vpop.f32.mrf.mxu0
    %v3631 = vadd.f32 0.0, %v3630
    %3632 = vdwg.mxu0
    %3633 = vmatpush.msra.mxu0 %v3591
    %3634 = vmatpush.msra.mxu0 %v3587
    %3635 = vmatpush.msra.mxu0 %v3583
    %3636 = vmatpush.msra.mxu0 %v3579
    %3637 = vmatpush.msra.mxu0 %v3575
    %3638 = vmatpush.msra.mxu0 %v3571
    %3639 = vmatpush.msra.mxu0 %v3567
    %3640 = vmatpush.msra.mxu0 %v3563
    %3641 = vmatpush.msra.mxu0 %v3559
    %3642 = vmatpush.msra.mxu0 %v3555
    %3643 = vmatpush.msra.mxu0 %v3551
    %3644 = vmatpush.msra.mxu0 %v3547
    %3645 = vmatpush.msra.mxu0 %v3543
    %3646 = vmatpush.msra.mxu0 %v3539
    %3647 = vmatpush.msra.mxu0 %v3535
    %3648 = vmatpush.msra.mxu0 %v3531
    %3649 = vmatmul.f32.gmra.mxu0 %v3431
    %v3650 = vpop.f32.mrf.mxu0
    %v3651 = vadd.f32 0.0, %v3650
    %3652 = vdwg.mxu0
    %3653 = vmatpush.msra.mxu0 %v3592
    %3654 = vmatpush.msra.mxu0 %v3588
    %3655 = vmatpush.msra.mxu0 %v3584
    %3656 = vmatpush.msra.mxu0 %v3580
    %3657 = vmatpush.msra.mxu0 %v3576
    %3658 = vmatpush.msra.mxu0 %v3572
    %3659 = vmatpush.msra.mxu0 %v3568
    %3660 = vmatpush.msra.mxu0 %v3564
    %3661 = vmatpush.msra.mxu0 %v3560
    %3662 = vmatpush.msra.mxu0 %v3556
    %3663 = vmatpush.msra.mxu0 %v3552
    %3664 = vmatpush.msra.mxu0 %v3548
    %3665 = vmatpush.msra.mxu0 %v3544
    %3666 = vmatpush.msra.mxu0 %v3540
    %3667 = vmatpush.msra.mxu0 %v3536
    %3668 = vmatpush.msra.mxu0 %v3532
    %3669 = vmatmul.f32.gmra.mxu0 %v3431
    %v3670 = vpop.f32.mrf.mxu0
    %v3671 = vadd.f32 0.0, %v3670
    %3672 = vdwg.mxu0
    %v3673 = vadd.f32 %v3467, %v3611
    %v3674 = vadd.f32 %v3487, %v3631
    %v3675 = vadd.f32 %v3507, %v3651
    %v3676 = vadd.f32 %v3527, %v3671
    %v3677 = vxor.u32 %v3673, 2147483648
    %v3678 = vmul.f32 %v3677, 1.442695
    %v3679 = vpow.pop %v3678
    %v3680 = vadd.f32 %v3679, 1.0
    %v3681 = vrcp.pop %v3680
    %v3682 = vmul.f32 %v3680, %v3681
    %v3683 = vsub.f32 1.0, %v3682
    %v3684 = vmul.f32 %v3681, %v3683
    %v3685 = vadd.f32 %v3681, %v3684
    %vm3686 = vweird.f32 %v3680
    %vm3687 = vweird.f32 %v3681
    %vm3688 = vmor %vm3686, %vm3687
    %v3689 = vsel %vm3688, %v3681, %v3685
    %v3690 = vand.u32 2147483647, %v3680
    %vm3691 = vcmp.eq.f32.partialorder %v3690, 8.507059e+37
    %v3692 = vand.u32 %v3680, 2147483648
    %v3693 = vor.u32 1.1754944e-38, %v3692
    %v3694 = vsel %vm3691, %v3693, %v3689
    %v3695 = vmul.f32 1.0, %v3694
    %v3696 = vxor.u32 %v3674, 2147483648
    %v3697 = vmul.f32 %v3696, 1.442695
    %v3698 = vpow.pop %v3697
    %v3699 = vadd.f32 %v3698, 1.0
    %v3700 = vrcp.pop %v3699
    %v3701 = vmul.f32 %v3699, %v3700
    %v3702 = vsub.f32 1.0, %v3701
    %v3703 = vmul.f32 %v3700, %v3702
    %v3704 = vadd.f32 %v3700, %v3703
    %vm3705 = vweird.f32 %v3699
    %vm3706 = vweird.f32 %v3700
    %vm3707 = vmor %vm3705, %vm3706
    %v3708 = vsel %vm3707, %v3700, %v3704
    %v3709 = vand.u32 2147483647, %v3699
    %vm3710 = vcmp.eq.f32.partialorder %v3709, 8.507059e+37
    %v3711 = vand.u32 %v3699, 2147483648
    %v3712 = vor.u32 1.1754944e-38, %v3711
    %v3713 = vsel %vm3710, %v3712, %v3708
    %v3714 = vmul.f32 1.0, %v3713
    %v3715 = vtanh.pop %v3675
    %v3716 = vxor.u32 %v3676, 2147483648
    %v3717 = vmul.f32 %v3716, 1.442695
    %v3718 = vpow.pop %v3717
    %v3719 = vadd.f32 %v3718, 1.0
    %v3720 = vrcp.pop %v3719
    %v3721 = vmul.f32 %v3719, %v3720
    %v3722 = vsub.f32 1.0, %v3721
    %v3723 = vmul.f32 %v3720, %v3722
    %v3724 = vadd.f32 %v3720, %v3723
    %vm3725 = vweird.f32 %v3719
    %vm3726 = vweird.f32 %v3720
    %vm3727 = vmor %vm3725, %vm3726
    %v3728 = vsel %vm3727, %v3720, %v3724
    %v3729 = vand.u32 2147483647, %v3719
    %vm3730 = vcmp.eq.f32.partialorder %v3729, 8.507059e+37
    %v3731 = vand.u32 %v3719, 2147483648
    %v3732 = vor.u32 1.1754944e-38, %v3731
    %v3733 = vsel %vm3730, %v3732, %v3728
    %v3734 = vmul.f32 1.0, %v3733
    %v3735 = vmul.f32 %v3714, %v3429
    %v3736 = vmul.f32 %v3695, %v3715
    %v3737 = vadd.f32 %v3735, %v3736
    %v3738 = vtanh.pop %v3737
    %v3739 = vmul.f32 %v3734, %v3738
    %s3740 = scalar_lea.vmem %s4, 88
    %3741 = vst [vmem:[%s3740] sm:$0xff] %v3739
    %s3742 = sadd.s32 %s354, 11
    %p3743 = scmp.eq.s32.totalorder %s3742, 15
    // Predicated region
    $region70: #{lstm_encoder_forward.1} parent=1 // pred_check
      %p3744 = pneg %p3743
    $region71: #{lstm_encoder_forward.1} parent=1 // pred_check_branch
      %3746 = sbr.rel (%p3744) target = $region73
    $region72: #{lstm_encoder_forward.1} parent=1 // pred_region
      %3747 = vst [vmem:[%s5] sm:$0xff] %v3737
    $region73: #{lstm_encoder_forward.1} parent=1 // pred_fallthru
      _
    %s3748 = scalar_lea.vmem %s0, 96
    %v3749 = vld [vmem:[%s3748] sm:$0xff]
    %v3750 = vld [vmem:[%s1] sm:$0xff]
    %v3751 = vld [vmem:[%s1 + $0x8] sm:$0xff]
    %v3752 = vld [vmem:[%s1 + $0x10] sm:$0xff]
    %v3753 = vld [vmem:[%s1 + $0x18] sm:$0xff]
    %v3755 = vsel %vm58, %v3749, 0
    %3757 = vmatpush.msra.mxu0 0.0
    %3758 = vmatpush.msra.mxu0 0.0
    %3759 = vmatpush.msra.mxu0 0.0
    %3760 = vmatpush.msra.mxu0 0.0
    %3761 = vmatpush.msra.mxu0 0.0
    %3762 = vmatpush.msra.mxu0 0.0
    %3763 = vmatpush.msra.mxu0 0.0
    %3764 = vmatpush.msra.mxu0 0.0
    %3765 = vmatpush.msra.mxu0 0.0
    %3766 = vmatpush.msra.mxu0 0.0
    %3767 = vmatpush.msra.mxu0 0.0
    %3768 = vmatpush.msra.mxu0 0.0
    %3769 = vmatpush.msra.mxu0 0.0
    %3770 = vmatpush.msra.mxu0 0.0
    %3771 = vmatpush.msra.mxu0 0.0
    %3772 = vmatpush.msra.mxu0 %v3750
    %3773 = vmatmul.f32.gmra.mxu0 %v3755
    %v3774 = vpop.f32.mrf.mxu0
    %v3775 = vadd.f32 %v50, %v3774
    %3776 = vdwg.mxu0
    %3777 = vmatpush.msra.mxu0 0.0
    %3778 = vmatpush.msra.mxu0 0.0
    %3779 = vmatpush.msra.mxu0 0.0
    %3780 = vmatpush.msra.mxu0 0.0
    %3781 = vmatpush.msra.mxu0 0.0
    %3782 = vmatpush.msra.mxu0 0.0
    %3783 = vmatpush.msra.mxu0 0.0
    %3784 = vmatpush.msra.mxu0 0.0
    %3785 = vmatpush.msra.mxu0 0.0
    %3786 = vmatpush.msra.mxu0 0.0
    %3787 = vmatpush.msra.mxu0 0.0
    %3788 = vmatpush.msra.mxu0 0.0
    %3789 = vmatpush.msra.mxu0 0.0
    %3790 = vmatpush.msra.mxu0 0.0
    %3791 = vmatpush.msra.mxu0 0.0
    %3792 = vmatpush.msra.mxu0 %v3751
    %3793 = vmatmul.f32.gmra.mxu0 %v3755
    %v3794 = vpop.f32.mrf.mxu0
    %v3795 = vadd.f32 %v51, %v3794
    %3796 = vdwg.mxu0
    %3797 = vmatpush.msra.mxu0 0.0
    %3798 = vmatpush.msra.mxu0 0.0
    %3799 = vmatpush.msra.mxu0 0.0
    %3800 = vmatpush.msra.mxu0 0.0
    %3801 = vmatpush.msra.mxu0 0.0
    %3802 = vmatpush.msra.mxu0 0.0
    %3803 = vmatpush.msra.mxu0 0.0
    %3804 = vmatpush.msra.mxu0 0.0
    %3805 = vmatpush.msra.mxu0 0.0
    %3806 = vmatpush.msra.mxu0 0.0
    %3807 = vmatpush.msra.mxu0 0.0
    %3808 = vmatpush.msra.mxu0 0.0
    %3809 = vmatpush.msra.mxu0 0.0
    %3810 = vmatpush.msra.mxu0 0.0
    %3811 = vmatpush.msra.mxu0 0.0
    %3812 = vmatpush.msra.mxu0 %v3752
    %3813 = vmatmul.f32.gmra.mxu0 %v3755
    %v3814 = vpop.f32.mrf.mxu0
    %v3815 = vadd.f32 %v52, %v3814
    %3816 = vdwg.mxu0
    %3817 = vmatpush.msra.mxu0 0.0
    %3818 = vmatpush.msra.mxu0 0.0
    %3819 = vmatpush.msra.mxu0 0.0
    %3820 = vmatpush.msra.mxu0 0.0
    %3821 = vmatpush.msra.mxu0 0.0
    %3822 = vmatpush.msra.mxu0 0.0
    %3823 = vmatpush.msra.mxu0 0.0
    %3824 = vmatpush.msra.mxu0 0.0
    %3825 = vmatpush.msra.mxu0 0.0
    %3826 = vmatpush.msra.mxu0 0.0
    %3827 = vmatpush.msra.mxu0 0.0
    %3828 = vmatpush.msra.mxu0 0.0
    %3829 = vmatpush.msra.mxu0 0.0
    %3830 = vmatpush.msra.mxu0 0.0
    %3831 = vmatpush.msra.mxu0 0.0
    %3832 = vmatpush.msra.mxu0 %v3753
    %3833 = vmatmul.f32.gmra.mxu0 %v3755
    %v3834 = vpop.f32.mrf.mxu0
    %v3835 = vadd.f32 %v53, %v3834
    %3836 = vdwg.mxu0
    %v3837 = vld [vmem:[#allocation4] sm:$0xff]
    %v3838 = vld [vmem:[#allocation4 + $0x8] sm:$0xff]
    %v3839 = vld [vmem:[#allocation4 + $0x10] sm:$0xff]
    %v3840 = vld [vmem:[#allocation4 + $0x18] sm:$0xff]
    %v3841 = vld [vmem:[#allocation4 + $0x20] sm:$0xff]
    %v3842 = vld [vmem:[#allocation4 + $0x28] sm:$0xff]
    %v3843 = vld [vmem:[#allocation4 + $0x30] sm:$0xff]
    %v3844 = vld [vmem:[#allocation4 + $0x38] sm:$0xff]
    %v3845 = vld [vmem:[#allocation4 + $0x40] sm:$0xff]
    %v3846 = vld [vmem:[#allocation4 + $0x48] sm:$0xff]
    %v3847 = vld [vmem:[#allocation4 + $0x50] sm:$0xff]
    %v3848 = vld [vmem:[#allocation4 + $0x58] sm:$0xff]
    %v3849 = vld [vmem:[#allocation4 + $0x60] sm:$0xff]
    %v3850 = vld [vmem:[#allocation4 + $0x68] sm:$0xff]
    %v3851 = vld [vmem:[#allocation4 + $0x70] sm:$0xff]
    %v3852 = vld [vmem:[#allocation4 + $0x78] sm:$0xff]
    %v3853 = vld [vmem:[#allocation4 + $0x80] sm:$0xff]
    %v3854 = vld [vmem:[#allocation4 + $0x88] sm:$0xff]
    %v3855 = vld [vmem:[#allocation4 + $0x90] sm:$0xff]
    %v3856 = vld [vmem:[#allocation4 + $0x98] sm:$0xff]
    %v3857 = vld [vmem:[#allocation4 + $0xa0] sm:$0xff]
    %v3858 = vld [vmem:[#allocation4 + $0xa8] sm:$0xff]
    %v3859 = vld [vmem:[#allocation4 + $0xb0] sm:$0xff]
    %v3860 = vld [vmem:[#allocation4 + $0xb8] sm:$0xff]
    %v3861 = vld [vmem:[#allocation4 + $0xc0] sm:$0xff]
    %v3862 = vld [vmem:[#allocation4 + $0xc8] sm:$0xff]
    %v3863 = vld [vmem:[#allocation4 + $0xd0] sm:$0xff]
    %v3864 = vld [vmem:[#allocation4 + $0xd8] sm:$0xff]
    %v3865 = vld [vmem:[#allocation4 + $0xe0] sm:$0xff]
    %v3866 = vld [vmem:[#allocation4 + $0xe8] sm:$0xff]
    %v3867 = vld [vmem:[#allocation4 + $0xf0] sm:$0xff]
    %v3868 = vld [vmem:[#allocation4 + $0xf8] sm:$0xff]
    %v3869 = vld [vmem:[#allocation4 + $0x100] sm:$0xff]
    %v3870 = vld [vmem:[#allocation4 + $0x108] sm:$0xff]
    %v3871 = vld [vmem:[#allocation4 + $0x110] sm:$0xff]
    %v3872 = vld [vmem:[#allocation4 + $0x118] sm:$0xff]
    %v3873 = vld [vmem:[#allocation4 + $0x120] sm:$0xff]
    %v3874 = vld [vmem:[#allocation4 + $0x128] sm:$0xff]
    %v3875 = vld [vmem:[#allocation4 + $0x130] sm:$0xff]
    %v3876 = vld [vmem:[#allocation4 + $0x138] sm:$0xff]
    %v3877 = vld [vmem:[#allocation4 + $0x140] sm:$0xff]
    %v3878 = vld [vmem:[#allocation4 + $0x148] sm:$0xff]
    %v3879 = vld [vmem:[#allocation4 + $0x150] sm:$0xff]
    %v3880 = vld [vmem:[#allocation4 + $0x158] sm:$0xff]
    %v3881 = vld [vmem:[#allocation4 + $0x160] sm:$0xff]
    %v3882 = vld [vmem:[#allocation4 + $0x168] sm:$0xff]
    %v3883 = vld [vmem:[#allocation4 + $0x170] sm:$0xff]
    %v3884 = vld [vmem:[#allocation4 + $0x178] sm:$0xff]
    %v3885 = vld [vmem:[#allocation4 + $0x180] sm:$0xff]
    %v3886 = vld [vmem:[#allocation4 + $0x188] sm:$0xff]
    %v3887 = vld [vmem:[#allocation4 + $0x190] sm:$0xff]
    %v3888 = vld [vmem:[#allocation4 + $0x198] sm:$0xff]
    %v3889 = vld [vmem:[#allocation4 + $0x1a0] sm:$0xff]
    %v3890 = vld [vmem:[#allocation4 + $0x1a8] sm:$0xff]
    %v3891 = vld [vmem:[#allocation4 + $0x1b0] sm:$0xff]
    %v3892 = vld [vmem:[#allocation4 + $0x1b8] sm:$0xff]
    %v3893 = vld [vmem:[#allocation4 + $0x1c0] sm:$0xff]
    %v3894 = vld [vmem:[#allocation4 + $0x1c8] sm:$0xff]
    %v3895 = vld [vmem:[#allocation4 + $0x1d0] sm:$0xff]
    %v3896 = vld [vmem:[#allocation4 + $0x1d8] sm:$0xff]
    %v3897 = vld [vmem:[#allocation4 + $0x1e0] sm:$0xff]
    %v3898 = vld [vmem:[#allocation4 + $0x1e8] sm:$0xff]
    %v3899 = vld [vmem:[#allocation4 + $0x1f0] sm:$0xff]
    %v3900 = vld [vmem:[#allocation4 + $0x1f8] sm:$0xff]
    %3901 = vmatpush.msra.mxu0 %v3897
    %3902 = vmatpush.msra.mxu0 %v3893
    %3903 = vmatpush.msra.mxu0 %v3889
    %3904 = vmatpush.msra.mxu0 %v3885
    %3905 = vmatpush.msra.mxu0 %v3881
    %3906 = vmatpush.msra.mxu0 %v3877
    %3907 = vmatpush.msra.mxu0 %v3873
    %3908 = vmatpush.msra.mxu0 %v3869
    %3909 = vmatpush.msra.mxu0 %v3865
    %3910 = vmatpush.msra.mxu0 %v3861
    %3911 = vmatpush.msra.mxu0 %v3857
    %3912 = vmatpush.msra.mxu0 %v3853
    %3913 = vmatpush.msra.mxu0 %v3849
    %3914 = vmatpush.msra.mxu0 %v3845
    %3915 = vmatpush.msra.mxu0 %v3841
    %3916 = vmatpush.msra.mxu0 %v3837
    %3917 = vmatmul.f32.gmra.mxu0 %v3739
    %v3918 = vpop.f32.mrf.mxu0
    %v3919 = vadd.f32 0.0, %v3918
    %3920 = vdwg.mxu0
    %3921 = vmatpush.msra.mxu0 %v3898
    %3922 = vmatpush.msra.mxu0 %v3894
    %3923 = vmatpush.msra.mxu0 %v3890
    %3924 = vmatpush.msra.mxu0 %v3886
    %3925 = vmatpush.msra.mxu0 %v3882
    %3926 = vmatpush.msra.mxu0 %v3878
    %3927 = vmatpush.msra.mxu0 %v3874
    %3928 = vmatpush.msra.mxu0 %v3870
    %3929 = vmatpush.msra.mxu0 %v3866
    %3930 = vmatpush.msra.mxu0 %v3862
    %3931 = vmatpush.msra.mxu0 %v3858
    %3932 = vmatpush.msra.mxu0 %v3854
    %3933 = vmatpush.msra.mxu0 %v3850
    %3934 = vmatpush.msra.mxu0 %v3846
    %3935 = vmatpush.msra.mxu0 %v3842
    %3936 = vmatpush.msra.mxu0 %v3838
    %3937 = vmatmul.f32.gmra.mxu0 %v3739
    %v3938 = vpop.f32.mrf.mxu0
    %v3939 = vadd.f32 0.0, %v3938
    %3940 = vdwg.mxu0
    %3941 = vmatpush.msra.mxu0 %v3899
    %3942 = vmatpush.msra.mxu0 %v3895
    %3943 = vmatpush.msra.mxu0 %v3891
    %3944 = vmatpush.msra.mxu0 %v3887
    %3945 = vmatpush.msra.mxu0 %v3883
    %3946 = vmatpush.msra.mxu0 %v3879
    %3947 = vmatpush.msra.mxu0 %v3875
    %3948 = vmatpush.msra.mxu0 %v3871
    %3949 = vmatpush.msra.mxu0 %v3867
    %3950 = vmatpush.msra.mxu0 %v3863
    %3951 = vmatpush.msra.mxu0 %v3859
    %3952 = vmatpush.msra.mxu0 %v3855
    %3953 = vmatpush.msra.mxu0 %v3851
    %3954 = vmatpush.msra.mxu0 %v3847
    %3955 = vmatpush.msra.mxu0 %v3843
    %3956 = vmatpush.msra.mxu0 %v3839
    %3957 = vmatmul.f32.gmra.mxu0 %v3739
    %v3958 = vpop.f32.mrf.mxu0
    %v3959 = vadd.f32 0.0, %v3958
    %3960 = vdwg.mxu0
    %3961 = vmatpush.msra.mxu0 %v3900
    %3962 = vmatpush.msra.mxu0 %v3896
    %3963 = vmatpush.msra.mxu0 %v3892
    %3964 = vmatpush.msra.mxu0 %v3888
    %3965 = vmatpush.msra.mxu0 %v3884
    %3966 = vmatpush.msra.mxu0 %v3880
    %3967 = vmatpush.msra.mxu0 %v3876
    %3968 = vmatpush.msra.mxu0 %v3872
    %3969 = vmatpush.msra.mxu0 %v3868
    %3970 = vmatpush.msra.mxu0 %v3864
    %3971 = vmatpush.msra.mxu0 %v3860
    %3972 = vmatpush.msra.mxu0 %v3856
    %3973 = vmatpush.msra.mxu0 %v3852
    %3974 = vmatpush.msra.mxu0 %v3848
    %3975 = vmatpush.msra.mxu0 %v3844
    %3976 = vmatpush.msra.mxu0 %v3840
    %3977 = vmatmul.f32.gmra.mxu0 %v3739
    %v3978 = vpop.f32.mrf.mxu0
    %v3979 = vadd.f32 0.0, %v3978
    %3980 = vdwg.mxu0
    %v3981 = vadd.f32 %v3775, %v3919
    %v3982 = vadd.f32 %v3795, %v3939
    %v3983 = vadd.f32 %v3815, %v3959
    %v3984 = vadd.f32 %v3835, %v3979
    %v3985 = vxor.u32 %v3981, 2147483648
    %v3986 = vmul.f32 %v3985, 1.442695
    %v3987 = vpow.pop %v3986
    %v3988 = vadd.f32 %v3987, 1.0
    %v3989 = vrcp.pop %v3988
    %v3990 = vmul.f32 %v3988, %v3989
    %v3991 = vsub.f32 1.0, %v3990
    %v3992 = vmul.f32 %v3989, %v3991
    %v3993 = vadd.f32 %v3989, %v3992
    %vm3994 = vweird.f32 %v3988
    %vm3995 = vweird.f32 %v3989
    %vm3996 = vmor %vm3994, %vm3995
    %v3997 = vsel %vm3996, %v3989, %v3993
    %v3998 = vand.u32 2147483647, %v3988
    %vm3999 = vcmp.eq.f32.partialorder %v3998, 8.507059e+37
    %v4000 = vand.u32 %v3988, 2147483648
    %v4001 = vor.u32 1.1754944e-38, %v4000
    %v4002 = vsel %vm3999, %v4001, %v3997
    %v4003 = vmul.f32 1.0, %v4002
    %v4004 = vxor.u32 %v3982, 2147483648
    %v4005 = vmul.f32 %v4004, 1.442695
    %v4006 = vpow.pop %v4005
    %v4007 = vadd.f32 %v4006, 1.0
    %v4008 = vrcp.pop %v4007
    %v4009 = vmul.f32 %v4007, %v4008
    %v4010 = vsub.f32 1.0, %v4009
    %v4011 = vmul.f32 %v4008, %v4010
    %v4012 = vadd.f32 %v4008, %v4011
    %vm4013 = vweird.f32 %v4007
    %vm4014 = vweird.f32 %v4008
    %vm4015 = vmor %vm4013, %vm4014
    %v4016 = vsel %vm4015, %v4008, %v4012
    %v4017 = vand.u32 2147483647, %v4007
    %vm4018 = vcmp.eq.f32.partialorder %v4017, 8.507059e+37
    %v4019 = vand.u32 %v4007, 2147483648
    %v4020 = vor.u32 1.1754944e-38, %v4019
    %v4021 = vsel %vm4018, %v4020, %v4016
    %v4022 = vmul.f32 1.0, %v4021
    %v4023 = vtanh.pop %v3983
    %v4024 = vxor.u32 %v3984, 2147483648
    %v4025 = vmul.f32 %v4024, 1.442695
    %v4026 = vpow.pop %v4025
    %v4027 = vadd.f32 %v4026, 1.0
    %v4028 = vrcp.pop %v4027
    %v4029 = vmul.f32 %v4027, %v4028
    %v4030 = vsub.f32 1.0, %v4029
    %v4031 = vmul.f32 %v4028, %v4030
    %v4032 = vadd.f32 %v4028, %v4031
    %vm4033 = vweird.f32 %v4027
    %vm4034 = vweird.f32 %v4028
    %vm4035 = vmor %vm4033, %vm4034
    %v4036 = vsel %vm4035, %v4028, %v4032
    %v4037 = vand.u32 2147483647, %v4027
    %vm4038 = vcmp.eq.f32.partialorder %v4037, 8.507059e+37
    %v4039 = vand.u32 %v4027, 2147483648
    %v4040 = vor.u32 1.1754944e-38, %v4039
    %v4041 = vsel %vm4038, %v4040, %v4036
    %v4042 = vmul.f32 1.0, %v4041
    %v4043 = vmul.f32 %v4022, %v3737
    %v4044 = vmul.f32 %v4003, %v4023
    %v4045 = vadd.f32 %v4043, %v4044
    %v4046 = vtanh.pop %v4045
    %v4047 = vmul.f32 %v4042, %v4046
    %s4048 = scalar_lea.vmem %s4, 96
    %4049 = vst [vmem:[%s4048] sm:$0xff] %v4047
    %s4050 = sadd.s32 %s354, 12
    %p4051 = scmp.eq.s32.totalorder %s4050, 15
    // Predicated region
    $region74: #{lstm_encoder_forward.1} parent=1 // pred_check
      %p4052 = pneg %p4051
    $region75: #{lstm_encoder_forward.1} parent=1 // pred_check_branch
      %4054 = sbr.rel (%p4052) target = $region77
    $region76: #{lstm_encoder_forward.1} parent=1 // pred_region
      %4055 = vst [vmem:[%s5] sm:$0xff] %v4045
    $region77: #{lstm_encoder_forward.1} parent=1 // pred_fallthru
      _
    %s4056 = scalar_lea.vmem %s0, 104
    %v4057 = vld [vmem:[%s4056] sm:$0xff]
    %v4058 = vld [vmem:[%s1] sm:$0xff]
    %v4059 = vld [vmem:[%s1 + $0x8] sm:$0xff]
    %v4060 = vld [vmem:[%s1 + $0x10] sm:$0xff]
    %v4061 = vld [vmem:[%s1 + $0x18] sm:$0xff]
    %v4063 = vsel %vm58, %v4057, 0
    %4065 = vmatpush.msra.mxu0 0.0
    %4066 = vmatpush.msra.mxu0 0.0
    %4067 = vmatpush.msra.mxu0 0.0
    %4068 = vmatpush.msra.mxu0 0.0
    %4069 = vmatpush.msra.mxu0 0.0
    %4070 = vmatpush.msra.mxu0 0.0
    %4071 = vmatpush.msra.mxu0 0.0
    %4072 = vmatpush.msra.mxu0 0.0
    %4073 = vmatpush.msra.mxu0 0.0
    %4074 = vmatpush.msra.mxu0 0.0
    %4075 = vmatpush.msra.mxu0 0.0
    %4076 = vmatpush.msra.mxu0 0.0
    %4077 = vmatpush.msra.mxu0 0.0
    %4078 = vmatpush.msra.mxu0 0.0
    %4079 = vmatpush.msra.mxu0 0.0
    %4080 = vmatpush.msra.mxu0 %v4058
    %4081 = vmatmul.f32.gmra.mxu0 %v4063
    %v4082 = vpop.f32.mrf.mxu0
    %v4083 = vadd.f32 %v50, %v4082
    %4084 = vdwg.mxu0
    %4085 = vmatpush.msra.mxu0 0.0
    %4086 = vmatpush.msra.mxu0 0.0
    %4087 = vmatpush.msra.mxu0 0.0
    %4088 = vmatpush.msra.mxu0 0.0
    %4089 = vmatpush.msra.mxu0 0.0
    %4090 = vmatpush.msra.mxu0 0.0
    %4091 = vmatpush.msra.mxu0 0.0
    %4092 = vmatpush.msra.mxu0 0.0
    %4093 = vmatpush.msra.mxu0 0.0
    %4094 = vmatpush.msra.mxu0 0.0
    %4095 = vmatpush.msra.mxu0 0.0
    %4096 = vmatpush.msra.mxu0 0.0
    %4097 = vmatpush.msra.mxu0 0.0
    %4098 = vmatpush.msra.mxu0 0.0
    %4099 = vmatpush.msra.mxu0 0.0
    %4100 = vmatpush.msra.mxu0 %v4059
    %4101 = vmatmul.f32.gmra.mxu0 %v4063
    %v4102 = vpop.f32.mrf.mxu0
    %v4103 = vadd.f32 %v51, %v4102
    %4104 = vdwg.mxu0
    %4105 = vmatpush.msra.mxu0 0.0
    %4106 = vmatpush.msra.mxu0 0.0
    %4107 = vmatpush.msra.mxu0 0.0
    %4108 = vmatpush.msra.mxu0 0.0
    %4109 = vmatpush.msra.mxu0 0.0
    %4110 = vmatpush.msra.mxu0 0.0
    %4111 = vmatpush.msra.mxu0 0.0
    %4112 = vmatpush.msra.mxu0 0.0
    %4113 = vmatpush.msra.mxu0 0.0
    %4114 = vmatpush.msra.mxu0 0.0
    %4115 = vmatpush.msra.mxu0 0.0
    %4116 = vmatpush.msra.mxu0 0.0
    %4117 = vmatpush.msra.mxu0 0.0
    %4118 = vmatpush.msra.mxu0 0.0
    %4119 = vmatpush.msra.mxu0 0.0
    %4120 = vmatpush.msra.mxu0 %v4060
    %4121 = vmatmul.f32.gmra.mxu0 %v4063
    %v4122 = vpop.f32.mrf.mxu0
    %v4123 = vadd.f32 %v52, %v4122
    %4124 = vdwg.mxu0
    %4125 = vmatpush.msra.mxu0 0.0
    %4126 = vmatpush.msra.mxu0 0.0
    %4127 = vmatpush.msra.mxu0 0.0
    %4128 = vmatpush.msra.mxu0 0.0
    %4129 = vmatpush.msra.mxu0 0.0
    %4130 = vmatpush.msra.mxu0 0.0
    %4131 = vmatpush.msra.mxu0 0.0
    %4132 = vmatpush.msra.mxu0 0.0
    %4133 = vmatpush.msra.mxu0 0.0
    %4134 = vmatpush.msra.mxu0 0.0
    %4135 = vmatpush.msra.mxu0 0.0
    %4136 = vmatpush.msra.mxu0 0.0
    %4137 = vmatpush.msra.mxu0 0.0
    %4138 = vmatpush.msra.mxu0 0.0
    %4139 = vmatpush.msra.mxu0 0.0
    %4140 = vmatpush.msra.mxu0 %v4061
    %4141 = vmatmul.f32.gmra.mxu0 %v4063
    %v4142 = vpop.f32.mrf.mxu0
    %v4143 = vadd.f32 %v53, %v4142
    %4144 = vdwg.mxu0
    %v4145 = vld [vmem:[#allocation4] sm:$0xff]
    %v4146 = vld [vmem:[#allocation4 + $0x8] sm:$0xff]
    %v4147 = vld [vmem:[#allocation4 + $0x10] sm:$0xff]
    %v4148 = vld [vmem:[#allocation4 + $0x18] sm:$0xff]
    %v4149 = vld [vmem:[#allocation4 + $0x20] sm:$0xff]
    %v4150 = vld [vmem:[#allocation4 + $0x28] sm:$0xff]
    %v4151 = vld [vmem:[#allocation4 + $0x30] sm:$0xff]
    %v4152 = vld [vmem:[#allocation4 + $0x38] sm:$0xff]
    %v4153 = vld [vmem:[#allocation4 + $0x40] sm:$0xff]
    %v4154 = vld [vmem:[#allocation4 + $0x48] sm:$0xff]
    %v4155 = vld [vmem:[#allocation4 + $0x50] sm:$0xff]
    %v4156 = vld [vmem:[#allocation4 + $0x58] sm:$0xff]
    %v4157 = vld [vmem:[#allocation4 + $0x60] sm:$0xff]
    %v4158 = vld [vmem:[#allocation4 + $0x68] sm:$0xff]
    %v4159 = vld [vmem:[#allocation4 + $0x70] sm:$0xff]
    %v4160 = vld [vmem:[#allocation4 + $0x78] sm:$0xff]
    %v4161 = vld [vmem:[#allocation4 + $0x80] sm:$0xff]
    %v4162 = vld [vmem:[#allocation4 + $0x88] sm:$0xff]
    %v4163 = vld [vmem:[#allocation4 + $0x90] sm:$0xff]
    %v4164 = vld [vmem:[#allocation4 + $0x98] sm:$0xff]
    %v4165 = vld [vmem:[#allocation4 + $0xa0] sm:$0xff]
    %v4166 = vld [vmem:[#allocation4 + $0xa8] sm:$0xff]
    %v4167 = vld [vmem:[#allocation4 + $0xb0] sm:$0xff]
    %v4168 = vld [vmem:[#allocation4 + $0xb8] sm:$0xff]
    %v4169 = vld [vmem:[#allocation4 + $0xc0] sm:$0xff]
    %v4170 = vld [vmem:[#allocation4 + $0xc8] sm:$0xff]
    %v4171 = vld [vmem:[#allocation4 + $0xd0] sm:$0xff]
    %v4172 = vld [vmem:[#allocation4 + $0xd8] sm:$0xff]
    %v4173 = vld [vmem:[#allocation4 + $0xe0] sm:$0xff]
    %v4174 = vld [vmem:[#allocation4 + $0xe8] sm:$0xff]
    %v4175 = vld [vmem:[#allocation4 + $0xf0] sm:$0xff]
    %v4176 = vld [vmem:[#allocation4 + $0xf8] sm:$0xff]
    %v4177 = vld [vmem:[#allocation4 + $0x100] sm:$0xff]
    %v4178 = vld [vmem:[#allocation4 + $0x108] sm:$0xff]
    %v4179 = vld [vmem:[#allocation4 + $0x110] sm:$0xff]
    %v4180 = vld [vmem:[#allocation4 + $0x118] sm:$0xff]
    %v4181 = vld [vmem:[#allocation4 + $0x120] sm:$0xff]
    %v4182 = vld [vmem:[#allocation4 + $0x128] sm:$0xff]
    %v4183 = vld [vmem:[#allocation4 + $0x130] sm:$0xff]
    %v4184 = vld [vmem:[#allocation4 + $0x138] sm:$0xff]
    %v4185 = vld [vmem:[#allocation4 + $0x140] sm:$0xff]
    %v4186 = vld [vmem:[#allocation4 + $0x148] sm:$0xff]
    %v4187 = vld [vmem:[#allocation4 + $0x150] sm:$0xff]
    %v4188 = vld [vmem:[#allocation4 + $0x158] sm:$0xff]
    %v4189 = vld [vmem:[#allocation4 + $0x160] sm:$0xff]
    %v4190 = vld [vmem:[#allocation4 + $0x168] sm:$0xff]
    %v4191 = vld [vmem:[#allocation4 + $0x170] sm:$0xff]
    %v4192 = vld [vmem:[#allocation4 + $0x178] sm:$0xff]
    %v4193 = vld [vmem:[#allocation4 + $0x180] sm:$0xff]
    %v4194 = vld [vmem:[#allocation4 + $0x188] sm:$0xff]
    %v4195 = vld [vmem:[#allocation4 + $0x190] sm:$0xff]
    %v4196 = vld [vmem:[#allocation4 + $0x198] sm:$0xff]
    %v4197 = vld [vmem:[#allocation4 + $0x1a0] sm:$0xff]
    %v4198 = vld [vmem:[#allocation4 + $0x1a8] sm:$0xff]
    %v4199 = vld [vmem:[#allocation4 + $0x1b0] sm:$0xff]
    %v4200 = vld [vmem:[#allocation4 + $0x1b8] sm:$0xff]
    %v4201 = vld [vmem:[#allocation4 + $0x1c0] sm:$0xff]
    %v4202 = vld [vmem:[#allocation4 + $0x1c8] sm:$0xff]
    %v4203 = vld [vmem:[#allocation4 + $0x1d0] sm:$0xff]
    %v4204 = vld [vmem:[#allocation4 + $0x1d8] sm:$0xff]
    %v4205 = vld [vmem:[#allocation4 + $0x1e0] sm:$0xff]
    %v4206 = vld [vmem:[#allocation4 + $0x1e8] sm:$0xff]
    %v4207 = vld [vmem:[#allocation4 + $0x1f0] sm:$0xff]
    %v4208 = vld [vmem:[#allocation4 + $0x1f8] sm:$0xff]
    %4209 = vmatpush.msra.mxu0 %v4205
    %4210 = vmatpush.msra.mxu0 %v4201
    %4211 = vmatpush.msra.mxu0 %v4197
    %4212 = vmatpush.msra.mxu0 %v4193
    %4213 = vmatpush.msra.mxu0 %v4189
    %4214 = vmatpush.msra.mxu0 %v4185
    %4215 = vmatpush.msra.mxu0 %v4181
    %4216 = vmatpush.msra.mxu0 %v4177
    %4217 = vmatpush.msra.mxu0 %v4173
    %4218 = vmatpush.msra.mxu0 %v4169
    %4219 = vmatpush.msra.mxu0 %v4165
    %4220 = vmatpush.msra.mxu0 %v4161
    %4221 = vmatpush.msra.mxu0 %v4157
    %4222 = vmatpush.msra.mxu0 %v4153
    %4223 = vmatpush.msra.mxu0 %v4149
    %4224 = vmatpush.msra.mxu0 %v4145
    %4225 = vmatmul.f32.gmra.mxu0 %v4047
    %v4226 = vpop.f32.mrf.mxu0
    %v4227 = vadd.f32 0.0, %v4226
    %4228 = vdwg.mxu0
    %4229 = vmatpush.msra.mxu0 %v4206
    %4230 = vmatpush.msra.mxu0 %v4202
    %4231 = vmatpush.msra.mxu0 %v4198
    %4232 = vmatpush.msra.mxu0 %v4194
    %4233 = vmatpush.msra.mxu0 %v4190
    %4234 = vmatpush.msra.mxu0 %v4186
    %4235 = vmatpush.msra.mxu0 %v4182
    %4236 = vmatpush.msra.mxu0 %v4178
    %4237 = vmatpush.msra.mxu0 %v4174
    %4238 = vmatpush.msra.mxu0 %v4170
    %4239 = vmatpush.msra.mxu0 %v4166
    %4240 = vmatpush.msra.mxu0 %v4162
    %4241 = vmatpush.msra.mxu0 %v4158
    %4242 = vmatpush.msra.mxu0 %v4154
    %4243 = vmatpush.msra.mxu0 %v4150
    %4244 = vmatpush.msra.mxu0 %v4146
    %4245 = vmatmul.f32.gmra.mxu0 %v4047
    %v4246 = vpop.f32.mrf.mxu0
    %v4247 = vadd.f32 0.0, %v4246
    %4248 = vdwg.mxu0
    %4249 = vmatpush.msra.mxu0 %v4207
    %4250 = vmatpush.msra.mxu0 %v4203
    %4251 = vmatpush.msra.mxu0 %v4199
    %4252 = vmatpush.msra.mxu0 %v4195
    %4253 = vmatpush.msra.mxu0 %v4191
    %4254 = vmatpush.msra.mxu0 %v4187
    %4255 = vmatpush.msra.mxu0 %v4183
    %4256 = vmatpush.msra.mxu0 %v4179
    %4257 = vmatpush.msra.mxu0 %v4175
    %4258 = vmatpush.msra.mxu0 %v4171
    %4259 = vmatpush.msra.mxu0 %v4167
    %4260 = vmatpush.msra.mxu0 %v4163
    %4261 = vmatpush.msra.mxu0 %v4159
    %4262 = vmatpush.msra.mxu0 %v4155
    %4263 = vmatpush.msra.mxu0 %v4151
    %4264 = vmatpush.msra.mxu0 %v4147
    %4265 = vmatmul.f32.gmra.mxu0 %v4047
    %v4266 = vpop.f32.mrf.mxu0
    %v4267 = vadd.f32 0.0, %v4266
    %4268 = vdwg.mxu0
    %4269 = vmatpush.msra.mxu0 %v4208
    %4270 = vmatpush.msra.mxu0 %v4204
    %4271 = vmatpush.msra.mxu0 %v4200
    %4272 = vmatpush.msra.mxu0 %v4196
    %4273 = vmatpush.msra.mxu0 %v4192
    %4274 = vmatpush.msra.mxu0 %v4188
    %4275 = vmatpush.msra.mxu0 %v4184
    %4276 = vmatpush.msra.mxu0 %v4180
    %4277 = vmatpush.msra.mxu0 %v4176
    %4278 = vmatpush.msra.mxu0 %v4172
    %4279 = vmatpush.msra.mxu0 %v4168
    %4280 = vmatpush.msra.mxu0 %v4164
    %4281 = vmatpush.msra.mxu0 %v4160
    %4282 = vmatpush.msra.mxu0 %v4156
    %4283 = vmatpush.msra.mxu0 %v4152
    %4284 = vmatpush.msra.mxu0 %v4148
    %4285 = vmatmul.f32.gmra.mxu0 %v4047
    %v4286 = vpop.f32.mrf.mxu0
    %v4287 = vadd.f32 0.0, %v4286
    %4288 = vdwg.mxu0
    %v4289 = vadd.f32 %v4083, %v4227
    %v4290 = vadd.f32 %v4103, %v4247
    %v4291 = vadd.f32 %v4123, %v4267
    %v4292 = vadd.f32 %v4143, %v4287
    %v4293 = vxor.u32 %v4289, 2147483648
    %v4294 = vmul.f32 %v4293, 1.442695
    %v4295 = vpow.pop %v4294
    %v4296 = vadd.f32 %v4295, 1.0
    %v4297 = vrcp.pop %v4296
    %v4298 = vmul.f32 %v4296, %v4297
    %v4299 = vsub.f32 1.0, %v4298
    %v4300 = vmul.f32 %v4297, %v4299
    %v4301 = vadd.f32 %v4297, %v4300
    %vm4302 = vweird.f32 %v4296
    %vm4303 = vweird.f32 %v4297
    %vm4304 = vmor %vm4302, %vm4303
    %v4305 = vsel %vm4304, %v4297, %v4301
    %v4306 = vand.u32 2147483647, %v4296
    %vm4307 = vcmp.eq.f32.partialorder %v4306, 8.507059e+37
    %v4308 = vand.u32 %v4296, 2147483648
    %v4309 = vor.u32 1.1754944e-38, %v4308
    %v4310 = vsel %vm4307, %v4309, %v4305
    %v4311 = vmul.f32 1.0, %v4310
    %v4312 = vxor.u32 %v4290, 2147483648
    %v4313 = vmul.f32 %v4312, 1.442695
    %v4314 = vpow.pop %v4313
    %v4315 = vadd.f32 %v4314, 1.0
    %v4316 = vrcp.pop %v4315
    %v4317 = vmul.f32 %v4315, %v4316
    %v4318 = vsub.f32 1.0, %v4317
    %v4319 = vmul.f32 %v4316, %v4318
    %v4320 = vadd.f32 %v4316, %v4319
    %vm4321 = vweird.f32 %v4315
    %vm4322 = vweird.f32 %v4316
    %vm4323 = vmor %vm4321, %vm4322
    %v4324 = vsel %vm4323, %v4316, %v4320
    %v4325 = vand.u32 2147483647, %v4315
    %vm4326 = vcmp.eq.f32.partialorder %v4325, 8.507059e+37
    %v4327 = vand.u32 %v4315, 2147483648
    %v4328 = vor.u32 1.1754944e-38, %v4327
    %v4329 = vsel %vm4326, %v4328, %v4324
    %v4330 = vmul.f32 1.0, %v4329
    %v4331 = vtanh.pop %v4291
    %v4332 = vxor.u32 %v4292, 2147483648
    %v4333 = vmul.f32 %v4332, 1.442695
    %v4334 = vpow.pop %v4333
    %v4335 = vadd.f32 %v4334, 1.0
    %v4336 = vrcp.pop %v4335
    %v4337 = vmul.f32 %v4335, %v4336
    %v4338 = vsub.f32 1.0, %v4337
    %v4339 = vmul.f32 %v4336, %v4338
    %v4340 = vadd.f32 %v4336, %v4339
    %vm4341 = vweird.f32 %v4335
    %vm4342 = vweird.f32 %v4336
    %vm4343 = vmor %vm4341, %vm4342
    %v4344 = vsel %vm4343, %v4336, %v4340
    %v4345 = vand.u32 2147483647, %v4335
    %vm4346 = vcmp.eq.f32.partialorder %v4345, 8.507059e+37
    %v4347 = vand.u32 %v4335, 2147483648
    %v4348 = vor.u32 1.1754944e-38, %v4347
    %v4349 = vsel %vm4346, %v4348, %v4344
    %v4350 = vmul.f32 1.0, %v4349
    %v4351 = vmul.f32 %v4330, %v4045
    %v4352 = vmul.f32 %v4311, %v4331
    %v4353 = vadd.f32 %v4351, %v4352
    %v4354 = vtanh.pop %v4353
    %v4355 = vmul.f32 %v4350, %v4354
    %s4356 = scalar_lea.vmem %s4, 104
    %4357 = vst [vmem:[%s4356] sm:$0xff] %v4355
    %s4358 = sadd.s32 %s354, 13
    %p4359 = scmp.eq.s32.totalorder %s4358, 15
    // Predicated region
    $region78: #{lstm_encoder_forward.1} parent=1 // pred_check
      %p4360 = pneg %p4359
    $region79: #{lstm_encoder_forward.1} parent=1 // pred_check_branch
      %4362 = sbr.rel (%p4360) target = $region81
    $region80: #{lstm_encoder_forward.1} parent=1 // pred_region
      %4363 = vst [vmem:[%s5] sm:$0xff] %v4353
    $region81: #{lstm_encoder_forward.1} parent=1 // pred_fallthru
      _
    %s4364 = scalar_lea.vmem %s0, 112
    %v4365 = vld [vmem:[%s4364] sm:$0xff]
    %v4366 = vld [vmem:[%s1] sm:$0xff]
    %v4367 = vld [vmem:[%s1 + $0x8] sm:$0xff]
    %v4368 = vld [vmem:[%s1 + $0x10] sm:$0xff]
    %v4369 = vld [vmem:[%s1 + $0x18] sm:$0xff]
    %v4371 = vsel %vm58, %v4365, 0
    %4373 = vmatpush.msra.mxu0 0.0
    %4374 = vmatpush.msra.mxu0 0.0
    %4375 = vmatpush.msra.mxu0 0.0
    %4376 = vmatpush.msra.mxu0 0.0
    %4377 = vmatpush.msra.mxu0 0.0
    %4378 = vmatpush.msra.mxu0 0.0
    %4379 = vmatpush.msra.mxu0 0.0
    %4380 = vmatpush.msra.mxu0 0.0
    %4381 = vmatpush.msra.mxu0 0.0
    %4382 = vmatpush.msra.mxu0 0.0
    %4383 = vmatpush.msra.mxu0 0.0
    %4384 = vmatpush.msra.mxu0 0.0
    %4385 = vmatpush.msra.mxu0 0.0
    %4386 = vmatpush.msra.mxu0 0.0
    %4387 = vmatpush.msra.mxu0 0.0
    %4388 = vmatpush.msra.mxu0 %v4366
    %4389 = vmatmul.f32.gmra.mxu0 %v4371
    %v4390 = vpop.f32.mrf.mxu0
    %v4391 = vadd.f32 %v50, %v4390
    %4392 = vdwg.mxu0
    %4393 = vmatpush.msra.mxu0 0.0
    %4394 = vmatpush.msra.mxu0 0.0
    %4395 = vmatpush.msra.mxu0 0.0
    %4396 = vmatpush.msra.mxu0 0.0
    %4397 = vmatpush.msra.mxu0 0.0
    %4398 = vmatpush.msra.mxu0 0.0
    %4399 = vmatpush.msra.mxu0 0.0
    %4400 = vmatpush.msra.mxu0 0.0
    %4401 = vmatpush.msra.mxu0 0.0
    %4402 = vmatpush.msra.mxu0 0.0
    %4403 = vmatpush.msra.mxu0 0.0
    %4404 = vmatpush.msra.mxu0 0.0
    %4405 = vmatpush.msra.mxu0 0.0
    %4406 = vmatpush.msra.mxu0 0.0
    %4407 = vmatpush.msra.mxu0 0.0
    %4408 = vmatpush.msra.mxu0 %v4367
    %4409 = vmatmul.f32.gmra.mxu0 %v4371
    %v4410 = vpop.f32.mrf.mxu0
    %v4411 = vadd.f32 %v51, %v4410
    %4412 = vdwg.mxu0
    %4413 = vmatpush.msra.mxu0 0.0
    %4414 = vmatpush.msra.mxu0 0.0
    %4415 = vmatpush.msra.mxu0 0.0
    %4416 = vmatpush.msra.mxu0 0.0
    %4417 = vmatpush.msra.mxu0 0.0
    %4418 = vmatpush.msra.mxu0 0.0
    %4419 = vmatpush.msra.mxu0 0.0
    %4420 = vmatpush.msra.mxu0 0.0
    %4421 = vmatpush.msra.mxu0 0.0
    %4422 = vmatpush.msra.mxu0 0.0
    %4423 = vmatpush.msra.mxu0 0.0
    %4424 = vmatpush.msra.mxu0 0.0
    %4425 = vmatpush.msra.mxu0 0.0
    %4426 = vmatpush.msra.mxu0 0.0
    %4427 = vmatpush.msra.mxu0 0.0
    %4428 = vmatpush.msra.mxu0 %v4368
    %4429 = vmatmul.f32.gmra.mxu0 %v4371
    %v4430 = vpop.f32.mrf.mxu0
    %v4431 = vadd.f32 %v52, %v4430
    %4432 = vdwg.mxu0
    %4433 = vmatpush.msra.mxu0 0.0
    %4434 = vmatpush.msra.mxu0 0.0
    %4435 = vmatpush.msra.mxu0 0.0
    %4436 = vmatpush.msra.mxu0 0.0
    %4437 = vmatpush.msra.mxu0 0.0
    %4438 = vmatpush.msra.mxu0 0.0
    %4439 = vmatpush.msra.mxu0 0.0
    %4440 = vmatpush.msra.mxu0 0.0
    %4441 = vmatpush.msra.mxu0 0.0
    %4442 = vmatpush.msra.mxu0 0.0
    %4443 = vmatpush.msra.mxu0 0.0
    %4444 = vmatpush.msra.mxu0 0.0
    %4445 = vmatpush.msra.mxu0 0.0
    %4446 = vmatpush.msra.mxu0 0.0
    %4447 = vmatpush.msra.mxu0 0.0
    %4448 = vmatpush.msra.mxu0 %v4369
    %4449 = vmatmul.f32.gmra.mxu0 %v4371
    %v4450 = vpop.f32.mrf.mxu0
    %v4451 = vadd.f32 %v53, %v4450
    %4452 = vdwg.mxu0
    %v4453 = vld [vmem:[#allocation4] sm:$0xff]
    %v4454 = vld [vmem:[#allocation4 + $0x8] sm:$0xff]
    %v4455 = vld [vmem:[#allocation4 + $0x10] sm:$0xff]
    %v4456 = vld [vmem:[#allocation4 + $0x18] sm:$0xff]
    %v4457 = vld [vmem:[#allocation4 + $0x20] sm:$0xff]
    %v4458 = vld [vmem:[#allocation4 + $0x28] sm:$0xff]
    %v4459 = vld [vmem:[#allocation4 + $0x30] sm:$0xff]
    %v4460 = vld [vmem:[#allocation4 + $0x38] sm:$0xff]
    %v4461 = vld [vmem:[#allocation4 + $0x40] sm:$0xff]
    %v4462 = vld [vmem:[#allocation4 + $0x48] sm:$0xff]
    %v4463 = vld [vmem:[#allocation4 + $0x50] sm:$0xff]
    %v4464 = vld [vmem:[#allocation4 + $0x58] sm:$0xff]
    %v4465 = vld [vmem:[#allocation4 + $0x60] sm:$0xff]
    %v4466 = vld [vmem:[#allocation4 + $0x68] sm:$0xff]
    %v4467 = vld [vmem:[#allocation4 + $0x70] sm:$0xff]
    %v4468 = vld [vmem:[#allocation4 + $0x78] sm:$0xff]
    %v4469 = vld [vmem:[#allocation4 + $0x80] sm:$0xff]
    %v4470 = vld [vmem:[#allocation4 + $0x88] sm:$0xff]
    %v4471 = vld [vmem:[#allocation4 + $0x90] sm:$0xff]
    %v4472 = vld [vmem:[#allocation4 + $0x98] sm:$0xff]
    %v4473 = vld [vmem:[#allocation4 + $0xa0] sm:$0xff]
    %v4474 = vld [vmem:[#allocation4 + $0xa8] sm:$0xff]
    %v4475 = vld [vmem:[#allocation4 + $0xb0] sm:$0xff]
    %v4476 = vld [vmem:[#allocation4 + $0xb8] sm:$0xff]
    %v4477 = vld [vmem:[#allocation4 + $0xc0] sm:$0xff]
    %v4478 = vld [vmem:[#allocation4 + $0xc8] sm:$0xff]
    %v4479 = vld [vmem:[#allocation4 + $0xd0] sm:$0xff]
    %v4480 = vld [vmem:[#allocation4 + $0xd8] sm:$0xff]
    %v4481 = vld [vmem:[#allocation4 + $0xe0] sm:$0xff]
    %v4482 = vld [vmem:[#allocation4 + $0xe8] sm:$0xff]
    %v4483 = vld [vmem:[#allocation4 + $0xf0] sm:$0xff]
    %v4484 = vld [vmem:[#allocation4 + $0xf8] sm:$0xff]
    %v4485 = vld [vmem:[#allocation4 + $0x100] sm:$0xff]
    %v4486 = vld [vmem:[#allocation4 + $0x108] sm:$0xff]
    %v4487 = vld [vmem:[#allocation4 + $0x110] sm:$0xff]
    %v4488 = vld [vmem:[#allocation4 + $0x118] sm:$0xff]
    %v4489 = vld [vmem:[#allocation4 + $0x120] sm:$0xff]
    %v4490 = vld [vmem:[#allocation4 + $0x128] sm:$0xff]
    %v4491 = vld [vmem:[#allocation4 + $0x130] sm:$0xff]
    %v4492 = vld [vmem:[#allocation4 + $0x138] sm:$0xff]
    %v4493 = vld [vmem:[#allocation4 + $0x140] sm:$0xff]
    %v4494 = vld [vmem:[#allocation4 + $0x148] sm:$0xff]
    %v4495 = vld [vmem:[#allocation4 + $0x150] sm:$0xff]
    %v4496 = vld [vmem:[#allocation4 + $0x158] sm:$0xff]
    %v4497 = vld [vmem:[#allocation4 + $0x160] sm:$0xff]
    %v4498 = vld [vmem:[#allocation4 + $0x168] sm:$0xff]
    %v4499 = vld [vmem:[#allocation4 + $0x170] sm:$0xff]
    %v4500 = vld [vmem:[#allocation4 + $0x178] sm:$0xff]
    %v4501 = vld [vmem:[#allocation4 + $0x180] sm:$0xff]
    %v4502 = vld [vmem:[#allocation4 + $0x188] sm:$0xff]
    %v4503 = vld [vmem:[#allocation4 + $0x190] sm:$0xff]
    %v4504 = vld [vmem:[#allocation4 + $0x198] sm:$0xff]
    %v4505 = vld [vmem:[#allocation4 + $0x1a0] sm:$0xff]
    %v4506 = vld [vmem:[#allocation4 + $0x1a8] sm:$0xff]
    %v4507 = vld [vmem:[#allocation4 + $0x1b0] sm:$0xff]
    %v4508 = vld [vmem:[#allocation4 + $0x1b8] sm:$0xff]
    %v4509 = vld [vmem:[#allocation4 + $0x1c0] sm:$0xff]
    %v4510 = vld [vmem:[#allocation4 + $0x1c8] sm:$0xff]
    %v4511 = vld [vmem:[#allocation4 + $0x1d0] sm:$0xff]
    %v4512 = vld [vmem:[#allocation4 + $0x1d8] sm:$0xff]
    %v4513 = vld [vmem:[#allocation4 + $0x1e0] sm:$0xff]
    %v4514 = vld [vmem:[#allocation4 + $0x1e8] sm:$0xff]
    %v4515 = vld [vmem:[#allocation4 + $0x1f0] sm:$0xff]
    %v4516 = vld [vmem:[#allocation4 + $0x1f8] sm:$0xff]
    %4517 = vmatpush.msra.mxu0 %v4513
    %4518 = vmatpush.msra.mxu0 %v4509
    %4519 = vmatpush.msra.mxu0 %v4505
    %4520 = vmatpush.msra.mxu0 %v4501
    %4521 = vmatpush.msra.mxu0 %v4497
    %4522 = vmatpush.msra.mxu0 %v4493
    %4523 = vmatpush.msra.mxu0 %v4489
    %4524 = vmatpush.msra.mxu0 %v4485
    %4525 = vmatpush.msra.mxu0 %v4481
    %4526 = vmatpush.msra.mxu0 %v4477
    %4527 = vmatpush.msra.mxu0 %v4473
    %4528 = vmatpush.msra.mxu0 %v4469
    %4529 = vmatpush.msra.mxu0 %v4465
    %4530 = vmatpush.msra.mxu0 %v4461
    %4531 = vmatpush.msra.mxu0 %v4457
    %4532 = vmatpush.msra.mxu0 %v4453
    %4533 = vmatmul.f32.gmra.mxu0 %v4355
    %v4534 = vpop.f32.mrf.mxu0
    %v4535 = vadd.f32 0.0, %v4534
    %4536 = vdwg.mxu0
    %4537 = vmatpush.msra.mxu0 %v4514
    %4538 = vmatpush.msra.mxu0 %v4510
    %4539 = vmatpush.msra.mxu0 %v4506
    %4540 = vmatpush.msra.mxu0 %v4502
    %4541 = vmatpush.msra.mxu0 %v4498
    %4542 = vmatpush.msra.mxu0 %v4494
    %4543 = vmatpush.msra.mxu0 %v4490
    %4544 = vmatpush.msra.mxu0 %v4486
    %4545 = vmatpush.msra.mxu0 %v4482
    %4546 = vmatpush.msra.mxu0 %v4478
    %4547 = vmatpush.msra.mxu0 %v4474
    %4548 = vmatpush.msra.mxu0 %v4470
    %4549 = vmatpush.msra.mxu0 %v4466
    %4550 = vmatpush.msra.mxu0 %v4462
    %4551 = vmatpush.msra.mxu0 %v4458
    %4552 = vmatpush.msra.mxu0 %v4454
    %4553 = vmatmul.f32.gmra.mxu0 %v4355
    %v4554 = vpop.f32.mrf.mxu0
    %v4555 = vadd.f32 0.0, %v4554
    %4556 = vdwg.mxu0
    %4557 = vmatpush.msra.mxu0 %v4515
    %4558 = vmatpush.msra.mxu0 %v4511
    %4559 = vmatpush.msra.mxu0 %v4507
    %4560 = vmatpush.msra.mxu0 %v4503
    %4561 = vmatpush.msra.mxu0 %v4499
    %4562 = vmatpush.msra.mxu0 %v4495
    %4563 = vmatpush.msra.mxu0 %v4491
    %4564 = vmatpush.msra.mxu0 %v4487
    %4565 = vmatpush.msra.mxu0 %v4483
    %4566 = vmatpush.msra.mxu0 %v4479
    %4567 = vmatpush.msra.mxu0 %v4475
    %4568 = vmatpush.msra.mxu0 %v4471
    %4569 = vmatpush.msra.mxu0 %v4467
    %4570 = vmatpush.msra.mxu0 %v4463
    %4571 = vmatpush.msra.mxu0 %v4459
    %4572 = vmatpush.msra.mxu0 %v4455
    %4573 = vmatmul.f32.gmra.mxu0 %v4355
    %v4574 = vpop.f32.mrf.mxu0
    %v4575 = vadd.f32 0.0, %v4574
    %4576 = vdwg.mxu0
    %4577 = vmatpush.msra.mxu0 %v4516
    %4578 = vmatpush.msra.mxu0 %v4512
    %4579 = vmatpush.msra.mxu0 %v4508
    %4580 = vmatpush.msra.mxu0 %v4504
    %4581 = vmatpush.msra.mxu0 %v4500
    %4582 = vmatpush.msra.mxu0 %v4496
    %4583 = vmatpush.msra.mxu0 %v4492
    %4584 = vmatpush.msra.mxu0 %v4488
    %4585 = vmatpush.msra.mxu0 %v4484
    %4586 = vmatpush.msra.mxu0 %v4480
    %4587 = vmatpush.msra.mxu0 %v4476
    %4588 = vmatpush.msra.mxu0 %v4472
    %4589 = vmatpush.msra.mxu0 %v4468
    %4590 = vmatpush.msra.mxu0 %v4464
    %4591 = vmatpush.msra.mxu0 %v4460
    %4592 = vmatpush.msra.mxu0 %v4456
    %4593 = vmatmul.f32.gmra.mxu0 %v4355
    %v4594 = vpop.f32.mrf.mxu0
    %v4595 = vadd.f32 0.0, %v4594
    %4596 = vdwg.mxu0
    %v4597 = vadd.f32 %v4391, %v4535
    %v4598 = vadd.f32 %v4411, %v4555
    %v4599 = vadd.f32 %v4431, %v4575
    %v4600 = vadd.f32 %v4451, %v4595
    %v4601 = vxor.u32 %v4597, 2147483648
    %v4602 = vmul.f32 %v4601, 1.442695
    %v4603 = vpow.pop %v4602
    %v4604 = vadd.f32 %v4603, 1.0
    %v4605 = vrcp.pop %v4604
    %v4606 = vmul.f32 %v4604, %v4605
    %v4607 = vsub.f32 1.0, %v4606
    %v4608 = vmul.f32 %v4605, %v4607
    %v4609 = vadd.f32 %v4605, %v4608
    %vm4610 = vweird.f32 %v4604
    %vm4611 = vweird.f32 %v4605
    %vm4612 = vmor %vm4610, %vm4611
    %v4613 = vsel %vm4612, %v4605, %v4609
    %v4614 = vand.u32 2147483647, %v4604
    %vm4615 = vcmp.eq.f32.partialorder %v4614, 8.507059e+37
    %v4616 = vand.u32 %v4604, 2147483648
    %v4617 = vor.u32 1.1754944e-38, %v4616
    %v4618 = vsel %vm4615, %v4617, %v4613
    %v4619 = vmul.f32 1.0, %v4618
    %v4620 = vxor.u32 %v4598, 2147483648
    %v4621 = vmul.f32 %v4620, 1.442695
    %v4622 = vpow.pop %v4621
    %v4623 = vadd.f32 %v4622, 1.0
    %v4624 = vrcp.pop %v4623
    %v4625 = vmul.f32 %v4623, %v4624
    %v4626 = vsub.f32 1.0, %v4625
    %v4627 = vmul.f32 %v4624, %v4626
    %v4628 = vadd.f32 %v4624, %v4627
    %vm4629 = vweird.f32 %v4623
    %vm4630 = vweird.f32 %v4624
    %vm4631 = vmor %vm4629, %vm4630
    %v4632 = vsel %vm4631, %v4624, %v4628
    %v4633 = vand.u32 2147483647, %v4623
    %vm4634 = vcmp.eq.f32.partialorder %v4633, 8.507059e+37
    %v4635 = vand.u32 %v4623, 2147483648
    %v4636 = vor.u32 1.1754944e-38, %v4635
    %v4637 = vsel %vm4634, %v4636, %v4632
    %v4638 = vmul.f32 1.0, %v4637
    %v4639 = vtanh.pop %v4599
    %v4640 = vxor.u32 %v4600, 2147483648
    %v4641 = vmul.f32 %v4640, 1.442695
    %v4642 = vpow.pop %v4641
    %v4643 = vadd.f32 %v4642, 1.0
    %v4644 = vrcp.pop %v4643
    %v4645 = vmul.f32 %v4643, %v4644
    %v4646 = vsub.f32 1.0, %v4645
    %v4647 = vmul.f32 %v4644, %v4646
    %v4648 = vadd.f32 %v4644, %v4647
    %vm4649 = vweird.f32 %v4643
    %vm4650 = vweird.f32 %v4644
    %vm4651 = vmor %vm4649, %vm4650
    %v4652 = vsel %vm4651, %v4644, %v4648
    %v4653 = vand.u32 2147483647, %v4643
    %vm4654 = vcmp.eq.f32.partialorder %v4653, 8.507059e+37
    %v4655 = vand.u32 %v4643, 2147483648
    %v4656 = vor.u32 1.1754944e-38, %v4655
    %v4657 = vsel %vm4654, %v4656, %v4652
    %v4658 = vmul.f32 1.0, %v4657
    %v4659 = vmul.f32 %v4638, %v4353
    %v4660 = vmul.f32 %v4619, %v4639
    %v4661 = vadd.f32 %v4659, %v4660
    %v4662 = vtanh.pop %v4661
    %v4663 = vmul.f32 %v4658, %v4662
    %s4664 = scalar_lea.vmem %s4, 112
    %4665 = vst [vmem:[%s4664] sm:$0xff] %v4663
    %s4666 = sadd.s32 %s354, 14
    %p4667 = scmp.eq.s32.totalorder %s4666, 15
    // Predicated region
    $region82: #{lstm_encoder_forward.1} parent=1 // pred_check
      %p4668 = pneg %p4667
    $region83: #{lstm_encoder_forward.1} parent=1 // pred_check_branch
      %4670 = sbr.rel (%p4668) target = $region85
    $region84: #{lstm_encoder_forward.1} parent=1 // pred_region
      %4671 = vst [vmem:[%s5] sm:$0xff] %v4661
    $region85: #{lstm_encoder_forward.1} parent=1 // pred_fallthru
      _
    %s4672 = scalar_lea.vmem %s0, 120
    %v4673 = vld [vmem:[%s4672] sm:$0xff]
    %v4674 = vld [vmem:[%s1] sm:$0xff]
    %v4675 = vld [vmem:[%s1 + $0x8] sm:$0xff]
    %v4676 = vld [vmem:[%s1 + $0x10] sm:$0xff]
    %v4677 = vld [vmem:[%s1 + $0x18] sm:$0xff]
    %v4679 = vsel %vm58, %v4673, 0
    %4681 = vmatpush.msra.mxu0 0.0
    %4682 = vmatpush.msra.mxu0 0.0
    %4683 = vmatpush.msra.mxu0 0.0
    %4684 = vmatpush.msra.mxu0 0.0
    %4685 = vmatpush.msra.mxu0 0.0
    %4686 = vmatpush.msra.mxu0 0.0
    %4687 = vmatpush.msra.mxu0 0.0
    %4688 = vmatpush.msra.mxu0 0.0
    %4689 = vmatpush.msra.mxu0 0.0
    %4690 = vmatpush.msra.mxu0 0.0
    %4691 = vmatpush.msra.mxu0 0.0
    %4692 = vmatpush.msra.mxu0 0.0
    %4693 = vmatpush.msra.mxu0 0.0
    %4694 = vmatpush.msra.mxu0 0.0
    %4695 = vmatpush.msra.mxu0 0.0
    %4696 = vmatpush.msra.mxu0 %v4674
    %4697 = vmatmul.f32.gmra.mxu0 %v4679
    %v4698 = vpop.f32.mrf.mxu0
    %v4699 = vadd.f32 %v50, %v4698
    %4700 = vdwg.mxu0
    %4701 = vmatpush.msra.mxu0 0.0
    %4702 = vmatpush.msra.mxu0 0.0
    %4703 = vmatpush.msra.mxu0 0.0
    %4704 = vmatpush.msra.mxu0 0.0
    %4705 = vmatpush.msra.mxu0 0.0
    %4706 = vmatpush.msra.mxu0 0.0
    %4707 = vmatpush.msra.mxu0 0.0
    %4708 = vmatpush.msra.mxu0 0.0
    %4709 = vmatpush.msra.mxu0 0.0
    %4710 = vmatpush.msra.mxu0 0.0
    %4711 = vmatpush.msra.mxu0 0.0
    %4712 = vmatpush.msra.mxu0 0.0
    %4713 = vmatpush.msra.mxu0 0.0
    %4714 = vmatpush.msra.mxu0 0.0
    %4715 = vmatpush.msra.mxu0 0.0
    %4716 = vmatpush.msra.mxu0 %v4675
    %4717 = vmatmul.f32.gmra.mxu0 %v4679
    %v4718 = vpop.f32.mrf.mxu0
    %v4719 = vadd.f32 %v51, %v4718
    %4720 = vdwg.mxu0
    %4721 = vmatpush.msra.mxu0 0.0
    %4722 = vmatpush.msra.mxu0 0.0
    %4723 = vmatpush.msra.mxu0 0.0
    %4724 = vmatpush.msra.mxu0 0.0
    %4725 = vmatpush.msra.mxu0 0.0
    %4726 = vmatpush.msra.mxu0 0.0
    %4727 = vmatpush.msra.mxu0 0.0
    %4728 = vmatpush.msra.mxu0 0.0
    %4729 = vmatpush.msra.mxu0 0.0
    %4730 = vmatpush.msra.mxu0 0.0
    %4731 = vmatpush.msra.mxu0 0.0
    %4732 = vmatpush.msra.mxu0 0.0
    %4733 = vmatpush.msra.mxu0 0.0
    %4734 = vmatpush.msra.mxu0 0.0
    %4735 = vmatpush.msra.mxu0 0.0
    %4736 = vmatpush.msra.mxu0 %v4676
    %4737 = vmatmul.f32.gmra.mxu0 %v4679
    %v4738 = vpop.f32.mrf.mxu0
    %v4739 = vadd.f32 %v52, %v4738
    %4740 = vdwg.mxu0
    %4741 = vmatpush.msra.mxu0 0.0
    %4742 = vmatpush.msra.mxu0 0.0
    %4743 = vmatpush.msra.mxu0 0.0
    %4744 = vmatpush.msra.mxu0 0.0
    %4745 = vmatpush.msra.mxu0 0.0
    %4746 = vmatpush.msra.mxu0 0.0
    %4747 = vmatpush.msra.mxu0 0.0
    %4748 = vmatpush.msra.mxu0 0.0
    %4749 = vmatpush.msra.mxu0 0.0
    %4750 = vmatpush.msra.mxu0 0.0
    %4751 = vmatpush.msra.mxu0 0.0
    %4752 = vmatpush.msra.mxu0 0.0
    %4753 = vmatpush.msra.mxu0 0.0
    %4754 = vmatpush.msra.mxu0 0.0
    %4755 = vmatpush.msra.mxu0 0.0
    %4756 = vmatpush.msra.mxu0 %v4677
    %4757 = vmatmul.f32.gmra.mxu0 %v4679
    %v4758 = vpop.f32.mrf.mxu0
    %v4759 = vadd.f32 %v53, %v4758
    %4760 = vdwg.mxu0
    %v4761 = vld [vmem:[#allocation4] sm:$0xff]
    %v4762 = vld [vmem:[#allocation4 + $0x8] sm:$0xff]
    %v4763 = vld [vmem:[#allocation4 + $0x10] sm:$0xff]
    %v4764 = vld [vmem:[#allocation4 + $0x18] sm:$0xff]
    %v4765 = vld [vmem:[#allocation4 + $0x20] sm:$0xff]
    %v4766 = vld [vmem:[#allocation4 + $0x28] sm:$0xff]
    %v4767 = vld [vmem:[#allocation4 + $0x30] sm:$0xff]
    %v4768 = vld [vmem:[#allocation4 + $0x38] sm:$0xff]
    %v4769 = vld [vmem:[#allocation4 + $0x40] sm:$0xff]
    %v4770 = vld [vmem:[#allocation4 + $0x48] sm:$0xff]
    %v4771 = vld [vmem:[#allocation4 + $0x50] sm:$0xff]
    %v4772 = vld [vmem:[#allocation4 + $0x58] sm:$0xff]
    %v4773 = vld [vmem:[#allocation4 + $0x60] sm:$0xff]
    %v4774 = vld [vmem:[#allocation4 + $0x68] sm:$0xff]
    %v4775 = vld [vmem:[#allocation4 + $0x70] sm:$0xff]
    %v4776 = vld [vmem:[#allocation4 + $0x78] sm:$0xff]
    %v4777 = vld [vmem:[#allocation4 + $0x80] sm:$0xff]
    %v4778 = vld [vmem:[#allocation4 + $0x88] sm:$0xff]
    %v4779 = vld [vmem:[#allocation4 + $0x90] sm:$0xff]
    %v4780 = vld [vmem:[#allocation4 + $0x98] sm:$0xff]
    %v4781 = vld [vmem:[#allocation4 + $0xa0] sm:$0xff]
    %v4782 = vld [vmem:[#allocation4 + $0xa8] sm:$0xff]
    %v4783 = vld [vmem:[#allocation4 + $0xb0] sm:$0xff]
    %v4784 = vld [vmem:[#allocation4 + $0xb8] sm:$0xff]
    %v4785 = vld [vmem:[#allocation4 + $0xc0] sm:$0xff]
    %v4786 = vld [vmem:[#allocation4 + $0xc8] sm:$0xff]
    %v4787 = vld [vmem:[#allocation4 + $0xd0] sm:$0xff]
    %v4788 = vld [vmem:[#allocation4 + $0xd8] sm:$0xff]
    %v4789 = vld [vmem:[#allocation4 + $0xe0] sm:$0xff]
    %v4790 = vld [vmem:[#allocation4 + $0xe8] sm:$0xff]
    %v4791 = vld [vmem:[#allocation4 + $0xf0] sm:$0xff]
    %v4792 = vld [vmem:[#allocation4 + $0xf8] sm:$0xff]
    %v4793 = vld [vmem:[#allocation4 + $0x100] sm:$0xff]
    %v4794 = vld [vmem:[#allocation4 + $0x108] sm:$0xff]
    %v4795 = vld [vmem:[#allocation4 + $0x110] sm:$0xff]
    %v4796 = vld [vmem:[#allocation4 + $0x118] sm:$0xff]
    %v4797 = vld [vmem:[#allocation4 + $0x120] sm:$0xff]
    %v4798 = vld [vmem:[#allocation4 + $0x128] sm:$0xff]
    %v4799 = vld [vmem:[#allocation4 + $0x130] sm:$0xff]
    %v4800 = vld [vmem:[#allocation4 + $0x138] sm:$0xff]
    %v4801 = vld [vmem:[#allocation4 + $0x140] sm:$0xff]
    %v4802 = vld [vmem:[#allocation4 + $0x148] sm:$0xff]
    %v4803 = vld [vmem:[#allocation4 + $0x150] sm:$0xff]
    %v4804 = vld [vmem:[#allocation4 + $0x158] sm:$0xff]
    %v4805 = vld [vmem:[#allocation4 + $0x160] sm:$0xff]
    %v4806 = vld [vmem:[#allocation4 + $0x168] sm:$0xff]
    %v4807 = vld [vmem:[#allocation4 + $0x170] sm:$0xff]
    %v4808 = vld [vmem:[#allocation4 + $0x178] sm:$0xff]
    %v4809 = vld [vmem:[#allocation4 + $0x180] sm:$0xff]
    %v4810 = vld [vmem:[#allocation4 + $0x188] sm:$0xff]
    %v4811 = vld [vmem:[#allocation4 + $0x190] sm:$0xff]
    %v4812 = vld [vmem:[#allocation4 + $0x198] sm:$0xff]
    %v4813 = vld [vmem:[#allocation4 + $0x1a0] sm:$0xff]
    %v4814 = vld [vmem:[#allocation4 + $0x1a8] sm:$0xff]
    %v4815 = vld [vmem:[#allocation4 + $0x1b0] sm:$0xff]
    %v4816 = vld [vmem:[#allocation4 + $0x1b8] sm:$0xff]
    %v4817 = vld [vmem:[#allocation4 + $0x1c0] sm:$0xff]
    %v4818 = vld [vmem:[#allocation4 + $0x1c8] sm:$0xff]
    %v4819 = vld [vmem:[#allocation4 + $0x1d0] sm:$0xff]
    %v4820 = vld [vmem:[#allocation4 + $0x1d8] sm:$0xff]
    %v4821 = vld [vmem:[#allocation4 + $0x1e0] sm:$0xff]
    %v4822 = vld [vmem:[#allocation4 + $0x1e8] sm:$0xff]
    %v4823 = vld [vmem:[#allocation4 + $0x1f0] sm:$0xff]
    %v4824 = vld [vmem:[#allocation4 + $0x1f8] sm:$0xff]
    %4825 = vmatpush.msra.mxu0 %v4821
    %4826 = vmatpush.msra.mxu0 %v4817
    %4827 = vmatpush.msra.mxu0 %v4813
    %4828 = vmatpush.msra.mxu0 %v4809
    %4829 = vmatpush.msra.mxu0 %v4805
    %4830 = vmatpush.msra.mxu0 %v4801
    %4831 = vmatpush.msra.mxu0 %v4797
    %4832 = vmatpush.msra.mxu0 %v4793
    %4833 = vmatpush.msra.mxu0 %v4789
    %4834 = vmatpush.msra.mxu0 %v4785
    %4835 = vmatpush.msra.mxu0 %v4781
    %4836 = vmatpush.msra.mxu0 %v4777
    %4837 = vmatpush.msra.mxu0 %v4773
    %4838 = vmatpush.msra.mxu0 %v4769
    %4839 = vmatpush.msra.mxu0 %v4765
    %4840 = vmatpush.msra.mxu0 %v4761
    %4841 = vmatmul.f32.gmra.mxu0 %v4663
    %v4842 = vpop.f32.mrf.mxu0
    %v4843 = vadd.f32 0.0, %v4842
    %4844 = vdwg.mxu0
    %4845 = vmatpush.msra.mxu0 %v4822
    %4846 = vmatpush.msra.mxu0 %v4818
    %4847 = vmatpush.msra.mxu0 %v4814
    %4848 = vmatpush.msra.mxu0 %v4810
    %4849 = vmatpush.msra.mxu0 %v4806
    %4850 = vmatpush.msra.mxu0 %v4802
    %4851 = vmatpush.msra.mxu0 %v4798
    %4852 = vmatpush.msra.mxu0 %v4794
    %4853 = vmatpush.msra.mxu0 %v4790
    %4854 = vmatpush.msra.mxu0 %v4786
    %4855 = vmatpush.msra.mxu0 %v4782
    %4856 = vmatpush.msra.mxu0 %v4778
    %4857 = vmatpush.msra.mxu0 %v4774
    %4858 = vmatpush.msra.mxu0 %v4770
    %4859 = vmatpush.msra.mxu0 %v4766
    %4860 = vmatpush.msra.mxu0 %v4762
    %4861 = vmatmul.f32.gmra.mxu0 %v4663
    %v4862 = vpop.f32.mrf.mxu0
    %v4863 = vadd.f32 0.0, %v4862
    %4864 = vdwg.mxu0
    %4865 = vmatpush.msra.mxu0 %v4823
    %4866 = vmatpush.msra.mxu0 %v4819
    %4867 = vmatpush.msra.mxu0 %v4815
    %4868 = vmatpush.msra.mxu0 %v4811
    %4869 = vmatpush.msra.mxu0 %v4807
    %4870 = vmatpush.msra.mxu0 %v4803
    %4871 = vmatpush.msra.mxu0 %v4799
    %4872 = vmatpush.msra.mxu0 %v4795
    %4873 = vmatpush.msra.mxu0 %v4791
    %4874 = vmatpush.msra.mxu0 %v4787
    %4875 = vmatpush.msra.mxu0 %v4783
    %4876 = vmatpush.msra.mxu0 %v4779
    %4877 = vmatpush.msra.mxu0 %v4775
    %4878 = vmatpush.msra.mxu0 %v4771
    %4879 = vmatpush.msra.mxu0 %v4767
    %4880 = vmatpush.msra.mxu0 %v4763
    %4881 = vmatmul.f32.gmra.mxu0 %v4663
    %v4882 = vpop.f32.mrf.mxu0
    %v4883 = vadd.f32 0.0, %v4882
    %4884 = vdwg.mxu0
    %4885 = vmatpush.msra.mxu0 %v4824
    %4886 = vmatpush.msra.mxu0 %v4820
    %4887 = vmatpush.msra.mxu0 %v4816
    %4888 = vmatpush.msra.mxu0 %v4812
    %4889 = vmatpush.msra.mxu0 %v4808
    %4890 = vmatpush.msra.mxu0 %v4804
    %4891 = vmatpush.msra.mxu0 %v4800
    %4892 = vmatpush.msra.mxu0 %v4796
    %4893 = vmatpush.msra.mxu0 %v4792
    %4894 = vmatpush.msra.mxu0 %v4788
    %4895 = vmatpush.msra.mxu0 %v4784
    %4896 = vmatpush.msra.mxu0 %v4780
    %4897 = vmatpush.msra.mxu0 %v4776
    %4898 = vmatpush.msra.mxu0 %v4772
    %4899 = vmatpush.msra.mxu0 %v4768
    %4900 = vmatpush.msra.mxu0 %v4764
    %4901 = vmatmul.f32.gmra.mxu0 %v4663
    %v4902 = vpop.f32.mrf.mxu0
    %v4903 = vadd.f32 0.0, %v4902
    %4904 = vdwg.mxu0
    %v4905 = vadd.f32 %v4699, %v4843
    %v4906 = vadd.f32 %v4719, %v4863
    %v4907 = vadd.f32 %v4739, %v4883
    %v4908 = vadd.f32 %v4759, %v4903
    %v4909 = vxor.u32 %v4905, 2147483648
    %v4910 = vmul.f32 %v4909, 1.442695
    %v4911 = vpow.pop %v4910
    %v4912 = vadd.f32 %v4911, 1.0
    %v4913 = vrcp.pop %v4912
    %v4914 = vmul.f32 %v4912, %v4913
    %v4915 = vsub.f32 1.0, %v4914
    %v4916 = vmul.f32 %v4913, %v4915
    %v4917 = vadd.f32 %v4913, %v4916
    %vm4918 = vweird.f32 %v4912
    %vm4919 = vweird.f32 %v4913
    %vm4920 = vmor %vm4918, %vm4919
    %v4921 = vsel %vm4920, %v4913, %v4917
    %v4922 = vand.u32 2147483647, %v4912
    %vm4923 = vcmp.eq.f32.partialorder %v4922, 8.507059e+37
    %v4924 = vand.u32 %v4912, 2147483648
    %v4925 = vor.u32 1.1754944e-38, %v4924
    %v4926 = vsel %vm4923, %v4925, %v4921
    %v4927 = vmul.f32 1.0, %v4926
    %v4928 = vxor.u32 %v4906, 2147483648
    %v4929 = vmul.f32 %v4928, 1.442695
    %v4930 = vpow.pop %v4929
    %v4931 = vadd.f32 %v4930, 1.0
    %v4932 = vrcp.pop %v4931
    %v4933 = vmul.f32 %v4931, %v4932
    %v4934 = vsub.f32 1.0, %v4933
    %v4935 = vmul.f32 %v4932, %v4934
    %v4936 = vadd.f32 %v4932, %v4935
    %vm4937 = vweird.f32 %v4931
    %vm4938 = vweird.f32 %v4932
    %vm4939 = vmor %vm4937, %vm4938
    %v4940 = vsel %vm4939, %v4932, %v4936
    %v4941 = vand.u32 2147483647, %v4931
    %vm4942 = vcmp.eq.f32.partialorder %v4941, 8.507059e+37
    %v4943 = vand.u32 %v4931, 2147483648
    %v4944 = vor.u32 1.1754944e-38, %v4943
    %v4945 = vsel %vm4942, %v4944, %v4940
    %v4946 = vmul.f32 1.0, %v4945
    %v4947 = vtanh.pop %v4907
    %v4948 = vxor.u32 %v4908, 2147483648
    %v4949 = vmul.f32 %v4948, 1.442695
    %v4950 = vpow.pop %v4949
    %v4951 = vadd.f32 %v4950, 1.0
    %v4952 = vrcp.pop %v4951
    %v4953 = vmul.f32 %v4951, %v4952
    %v4954 = vsub.f32 1.0, %v4953
    %v4955 = vmul.f32 %v4952, %v4954
    %v4956 = vadd.f32 %v4952, %v4955
    %vm4957 = vweird.f32 %v4951
    %vm4958 = vweird.f32 %v4952
    %vm4959 = vmor %vm4957, %vm4958
    %v4960 = vsel %vm4959, %v4952, %v4956
    %v4961 = vand.u32 2147483647, %v4951
    %vm4962 = vcmp.eq.f32.partialorder %v4961, 8.507059e+37
    %v4963 = vand.u32 %v4951, 2147483648
    %v4964 = vor.u32 1.1754944e-38, %v4963
    %v4965 = vsel %vm4962, %v4964, %v4960
    %v4966 = vmul.f32 1.0, %v4965
    %v4967 = vmul.f32 %v4946, %v4661
    %v4968 = vmul.f32 %v4927, %v4947
    %v4969 = vadd.f32 %v4967, %v4968
    %v4970 = vtanh.pop %v4969
    %v4971 = vmul.f32 %v4966, %v4970
    %s4972 = scalar_lea.vmem %s4, 120
    %4973 = vst [vmem:[%s4972] sm:$0xff] %v4971
    %s4974 = sadd.s32 %s354, 15
    %p4975 = scmp.eq.s32.totalorder %s4974, 15
    // Predicated region
    $region86: #{lstm_encoder_forward.1} parent=1 // pred_check
      %p4976 = pneg %p4975
    $region87: #{lstm_encoder_forward.1} parent=1 // pred_check_branch
      %4978 = sbr.rel (%p4976) target = $region89
    $region88: #{lstm_encoder_forward.1} parent=1 // pred_region
      %4979 = vst [vmem:[%s5] sm:$0xff] %v4969
    $region89: #{lstm_encoder_forward.1} parent=1 // pred_fallthru
      _
    %4980 = vst [vmem:[#allocation2] sm:$0xff] %v4971
    %4981 = vst [vmem:[#allocation3] sm:$0xff] %v4969
    // Predicated region
    $region90: #{lstm_encoder_forward.1} parent=1 // pred_check
      _
    $region91: #{lstm_encoder_forward.1} parent=1 // pred_check_branch
      %4983 = sbr.rel (0) target = $region93
    $region92: #{lstm_encoder_forward.1} parent=1 // pred_region
      _
    $region93: #{lstm_encoder_forward.1} parent=1 // pred_fallthru
      _
    // Predicated region
    $region94: #{lstm_encoder_forward.1} parent=1 // pred_check
      _
    $region95: #{lstm_encoder_forward.1} parent=1 // pred_check_branch
      %4985 = sbr.rel (0) target = $region97
    $region96: #{lstm_encoder_forward.1} parent=1 // pred_region
      _
    $region97: #{lstm_encoder_forward.1} parent=1 // pred_fallthru
      _
    // Predicated region
    $region98: #{lstm_encoder_forward.1} parent=1 // pred_check
      _
    $region99: #{lstm_encoder_forward.1} parent=1 // pred_check_branch
      %4987 = sbr.rel (0) target = $region101
    $region100: #{lstm_encoder_forward.1} parent=1 // pred_region
      _
    $region101: #{lstm_encoder_forward.1} parent=1 // pred_fallthru
      _
    // Predicated region
    $region102: #{lstm_encoder_forward.1} parent=1 // pred_check
      _
    $region103: #{lstm_encoder_forward.1} parent=1 // pred_check_branch
      %4989 = sbr.rel (0) target = $region105
    $region104: #{lstm_encoder_forward.1} parent=1 // pred_region
      _
    $region105: #{lstm_encoder_forward.1} parent=1 // pred_fallthru
      _
    %4990 = vsyncpa [#allocation5], 1

</llo_original>
